<compile_context>
chip_gen: v7x
topology: tpu7x:2x2x1
jax: 0.10.0
libtpu: 0.0.40
codegen_flags: <defaults>
</compile_context>

<pallas_src>
import functools
import math

import jax
import jax.numpy as jnp
from jax import lax
from jax.experimental import pallas as pl
from jax.experimental.pallas import tpu as pltpu


def _round_up(x, m):
    return (x + m - 1) // m * m


def _device_kind():
    try:
        return jax.devices()[0].device_kind.lower()
    except Exception:
        return ""


def _is_v7(kind):
    return ("v7" in kind) or ("7x" in kind)


def _is_v5_or_older(kind):
    return any(t in kind for t in ("v2", "v3", "v4", "v5"))


def _mxu_align():
    # v6e/v7x MXUs are 256-wide (2x256^2); v5e (4x128^2) is already fine at 128.
    return 128 if _is_v5_or_older(_device_kind()) else 256


def _vmem_limit_bytes():
    kind = _device_kind()
    if _is_v7(kind):
        return 56 * 1024 * 1024     # 64 MiB physical per TC; leave room for Mosaic scratch
    return 96 * 1024 * 1024         # v5e/v6e: 128 MiB physical


def _pick_tq(sp, kind):
    """Generation-aware query-tile size (must divide the padded sequence length)."""
    cap = 256 if _is_v7(kind) else 512
    if sp >= 8192:
        cap = min(cap, 128)
    elif sp >= 4096:
        cap = min(cap, 256)
    for t in (512, 256, 128):
        if t <= cap and sp % t == 0:
            return t
    return 128


def _gcl_kernel(
    hs_ref,        # [1, Sp, Hp] bf16  hidden states (full padded sequence, resident/batch)
    wq_ref,        # [Hp, Hp+A]  bf16  fused (scaled Wq.T | Wq.T@gqh | 0)
    bq_ref,        # [1,  Hp+A]  f32   fused (scaled bq | bq.gqh | 0)
    wkv_ref,       # [Hp, 2Hp+A] bf16  fused (Wk.T | Wv.T | Wk.T@gkh | 0)
    bkv_ref,       # [1,  2Hp+A] f32   fused (bk | bv | bk.gkh | 0)
    wc_ref,        # [Hp, 2Hp+A] bf16  fused (scaled Wcq.T | Wck.T | gqc | gkc | 0)
    mask_ref,      # [1, Sp] f32       additive mask: 0 real cols, -1e30 padded cols
    out_ref,       # [1, TQ, Hp] f32
    scores_ref,    # [1, TQ, Sp] f32
    khat_ref,      # VMEM [Sp, Hp] bf16 scratch
    v_ref,         # VMEM [Sp, Hp] bf16 scratch
    ctxpro_ref,    # VMEM [1, 2Hp+A] f32 scratch (ctx_q | ctx_k | ctx.gqc | ctx.gkc)
    *, seq, hp, sp, tq,
):
    j = pl.program_id(1)
    nc = sp // tq   # number of sequence chunks (static)

    # ------------------------------------------------------------------
    # First tile of each batch element: context row + full-sequence k_hat / v
    # ------------------------------------------------------------------
    @pl.when(j == 0)
    def _():
        # Global context = mean over the *real* rows (padded rows are zero, so the
        # ones-row matvec with f32 accumulation followed by 1/seq is exact).
        ones_row = jnp.ones((1, sp), jnp.bfloat16)
        ctx = jnp.dot(ones_row, hs_ref[0],
                      preferred_element_type=jnp.float32) * (1.0 / seq)        # [1, Hp]

        # Fused context projections + both ctx-gate biases in one matmul:
        #   [ctx@Wcq.T * 1/sqrt(H) | ctx@Wck.T | ctx.gqc | ctx.gkc | 0]
        cpro = jnp.dot(ctx.astype(jnp.bfloat16), wc_ref[...],
                       preferred_element_type=jnp.float32)                     # [1, 2Hp+A]
        ctxpro_ref[...] = cpro          # persists across the query-tile axis

        ctx_k = cpro[:, hp:2 * hp]
        ck_b = cpro[:, 2 * hp + 1:2 * hp + 2]
        bias_kv = bkv_ref[...]          # hoisted load (broadcast stays in the add — a
                                        # materialized [TQ, 2Hp+A] copy would just add
                                        # VMEM traffic)

        # Build full-sequence k_hat / v, chunked so the f32 intermediate stays at
        # [TQ, 2Hp+A]; unrolled so the LLO scheduler sees across the chunked matmuls.
        def kv_body(c, carry):
            r0 = pl.multiple_of(c * tq, tq)
            xc = hs_ref[0, pl.ds(r0, tq), :]                                   # [TQ, Hp] bf16
            g = jnp.dot(xc, wkv_ref[...],
                        preferred_element_type=jnp.float32) + bias_kv          # [TQ, 2Hp+A]
            k = g[:, 0:hp]
            v = g[:, hp:2 * hp]
            kg = jax.nn.sigmoid(g[:, 2 * hp:2 * hp + 1] + ck_b)                # [TQ, 1]
            khat_ref[pl.ds(r0, tq), :] = ((1.0 - kg) * k + kg * ctx_k).astype(jnp.bfloat16)
            v_ref[pl.ds(r0, tq), :] = v.astype(jnp.bfloat16)
            return carry

        lax.fori_loop(0, nc, kv_body, 0, unroll=True)

    # ------------------------------------------------------------------
    # Per-tile: q_hat for this tile's rows (q path pre-scaled by 1/sqrt(H)), attention
    # ------------------------------------------------------------------
    r0 = pl.multiple_of(j * tq, tq)
    x_tile = hs_ref[0, pl.ds(r0, tq), :]                                       # [TQ, Hp] bf16
    gq = jnp.dot(x_tile, wq_ref[...],
                 preferred_element_type=jnp.float32) + bq_ref[...]             # [TQ, Hp+A]
    q = gq[:, 0:hp]                                                            # scaled q
    qg = jax.nn.sigmoid(gq[:, hp:hp + 1] + ctxpro_ref[:, 2 * hp:2 * hp + 1])   # [TQ, 1]
    q_hat = (1.0 - qg) * q + qg * ctxpro_ref[:, 0:hp]                          # [TQ, Hp] f32

    # q_hat @ k_hat.T without materializing the transpose (contract last dims).
    s = lax.dot_general(q_hat.astype(jnp.bfloat16), khat_ref[...],
                        dimension_numbers=(((1,), (1,)), ((), ())),
                        preferred_element_type=jnp.float32)                    # [TQ, Sp]
    scores_ref[0] = s.astype(scores_ref.dtype)

    if sp > seq:
        s = s + mask_ref[...]           # single add instead of iota + cmp + select
    m = jnp.max(s, axis=-1, keepdims=True)
    p = jnp.exp(s - m)
    denom = jnp.sum(p, axis=-1, keepdims=True)
    probs = p * pl.reciprocal(denom, approx=True)

    out = jnp.dot(probs.astype(jnp.bfloat16), v_ref[...],
                  preferred_element_type=jnp.float32)                          # [TQ, Hp]
    out_ref[0] = out.astype(out_ref.dtype)


def prepare_params(params, hidden_size):
    """One-time weight fusion / scaling / padding (call OUTSIDE the per-step path).

    1/sqrt(H) is folded into the q-path weights (Wq, bq, Wcq). The gate columns
    (Wq.T@gqh, bq.gqh, gqc) stay UNscaled so the gate logits are unchanged.
    """
    H = hidden_size
    align = _mxu_align()
    Hp = _round_up(H, align)
    QW = Hp + align          # scaled-q | q-gate col | zero pad
    KVW = 2 * Hp + align     # k | v | k-gate col | zero pad
    CW = 2 * Hp + align      # scaled ctx_q | ctx_k | gqc | gkc | zero pad
    inv_s = 1.0 / math.sqrt(float(H))

    def pad_wt(w, scale=1.0):    # torch Linear weight [out,in] -> W.T padded to [Hp, Hp]
        return jnp.pad(w.T * scale, ((0, Hp - H), (0, Hp - H)))

    def pad_col(c):              # [H,1] -> [Hp,1]
        return jnp.pad(c, ((0, Hp - H), (0, 0)))

    w_q = jnp.zeros((Hp, QW), jnp.float32)
    w_q = w_q.at[:, 0:Hp].set(pad_wt(params["wq"], inv_s))
    w_q = w_q.at[:, Hp:Hp + 1].set(pad_col(params["wq"].T @ params["gqh"]))      # unscaled
    b_q = jnp.zeros((QW,), jnp.float32)
    b_q = b_q.at[0:H].set(params["bq"] * inv_s)
    b_q = b_q.at[Hp].set(jnp.dot(params["bq"], params["gqh"][:, 0]))             # unscaled
    b_q = b_q.reshape(1, QW)

    w_kv = jnp.zeros((Hp, KVW), jnp.float32)
    w_kv = w_kv.at[:, 0:Hp].set(pad_wt(params["wk"]))
    w_kv = w_kv.at[:, Hp:2 * Hp].set(pad_wt(params["wv"]))
    w_kv = w_kv.at[:, 2 * Hp:2 * Hp + 1].set(pad_col(params["wk"].T @ params["gkh"]))
    b_kv = jnp.zeros((KVW,), jnp.float32)
    b_kv = b_kv.at[0:H].set(params["bk"])
    b_kv = b_kv.at[Hp:Hp + H].set(params["bv"])
    b_kv = b_kv.at[2 * Hp].set(jnp.dot(params["bk"], params["gkh"][:, 0]))
    b_kv = b_kv.reshape(1, KVW)

    w_c = jnp.zeros((Hp, CW), jnp.float32)
    w_c = w_c.at[:, 0:Hp].set(pad_wt(params["wcq"], inv_s))                      # scaled
    w_c = w_c.at[:, Hp:2 * Hp].set(pad_wt(params["wck"]))
    w_c = w_c.at[:, 2 * Hp:2 * Hp + 1].set(pad_col(params["gqc"]))
    w_c = w_c.at[:, 2 * Hp + 1:2 * Hp + 2].set(pad_col(params["gkc"]))

    return {
        "w_q": w_q.astype(jnp.bfloat16),     # bf16 MXU operands, f32 accumulation
        "b_q": b_q,
        "w_kv": w_kv.astype(jnp.bfloat16),
        "b_kv": b_kv,
        "w_c": w_c.astype(jnp.bfloat16),
    }


def global_context_layer(hidden_states, prepared, single_buffer=True):
    """hidden_states: [B, S, H] f32. prepared: output of prepare_params."""
    B, S, H = hidden_states.shape
    w_q, b_q = prepared["w_q"], prepared["b_q"]
    w_kv, b_kv = prepared["w_kv"], prepared["b_kv"]
    w_c = prepared["w_c"]
    Hp, QW = w_q.shape
    KVW = w_kv.shape[1]
    CW = w_c.shape[1]

    kind = _device_kind()
    Sp = _round_up(S, 128)
    TQ = _pick_tq(Sp, kind)
    NT = Sp // TQ

    # bf16 hidden states (halves the resident block); padded rows/cols are zero.
    hs = hidden_states.astype(jnp.bfloat16)
    if (Sp, Hp) != (S, H):
        hs = jnp.pad(hs, ((0, 0), (0, Sp - S), (0, Hp - H)))
    # Additive softmax mask for padded key columns (built once per call, tiny).
    mask = jnp.where(jnp.arange(Sp) < S, 0.0, -1e30).astype(jnp.float32).reshape(1, Sp)

    def spec(shape, index_map):
        # Grid-invariant / per-batch-resident operands: single buffer (no DMA to overlap).
        if single_buffer:
            return pl.BlockSpec(shape, index_map, pipeline_mode=pl.Buffered(1))
        return pl.BlockSpec(shape, index_map)

    kernel = functools.partial(_gcl_kernel, seq=S, hp=Hp, sp=Sp, tq=TQ)

    out_p, scores_p = pl.pallas_call(
        kernel,
        out_shape=(
            jax.ShapeDtypeStruct((B, Sp, Hp), jnp.float32),
            jax.ShapeDtypeStruct((B, Sp, Sp), jnp.float32),
        ),
        grid_spec=pltpu.PrefetchScalarGridSpec(
            num_scalar_prefetch=0,
            grid=(B, NT),
            in_specs=[
                # full (padded) bf16 sequence, constant in j -> resident per batch element
                spec((1, Sp, Hp), lambda b, j: (b, 0, 0)),
                # grid-invariant fused weights / biases / mask -> DMA'd once
                spec((Hp, QW), lambda b, j: (0, 0)),
                spec((1, QW), lambda b, j: (0, 0)),
                spec((Hp, KVW), lambda b, j: (0, 0)),
                spec((1, KVW), lambda b, j: (0, 0)),
                spec((Hp, CW), lambda b, j: (0, 0)),
                spec((1, Sp), lambda b, j: (0, 0)),
            ],
            out_specs=[
                pl.BlockSpec((1, TQ, Hp), lambda b, j: (b, j, 0)),
                pl.BlockSpec((1, TQ, Sp), lambda b, j: (b, j, 0)),
            ],
            scratch_shapes=[
                pltpu.VMEM((Sp, Hp), jnp.bfloat16),   # k_hat (full sequence)
                pltpu.VMEM((Sp, Hp), jnp.bfloat16),   # v     (full sequence)
                pltpu.VMEM((1, CW), jnp.float32),     # ctx projections + ctx-gate biases
            ],
        ),
        compiler_params=pltpu.CompilerParams(
            # j-axis must stay "arbitrary": k_hat/v/ctx scratch built at j==0, reused later.
            dimension_semantics=("parallel", "arbitrary"),
            vmem_limit_bytes=_vmem_limit_bytes(),
        ),
    )(hs, w_q, b_q, w_kv, b_kv, w_c, mask)

    if (Sp, Hp) != (S, H):
        return out_p[:, :S, :H], scores_p[:, :S, :S]
    return out_p, scores_p


def init_params(key, hidden_size):
    """Deterministic synthetic init matching the PyTorch parameter shapes."""
    ks = jax.random.split(key, 13)
    bound = 1.0 / math.sqrt(hidden_size)
    u = lambda k, shape: jax.random.uniform(k, shape, jnp.float32, -bound, bound)
    n = lambda k, shape: jax.random.normal(k, shape, jnp.float32)
    H = hidden_size
    return {
        "wq": u(ks[0], (H, H)), "bq": u(ks[1], (H,)),
        "wk": u(ks[2], (H, H)), "bk": u(ks[3], (H,)),
        "wv": u(ks[4], (H, H)), "bv": u(ks[5], (H,)),
        "wcq": u(ks[6], (H, H)),
        "wck": u(ks[7], (H, H)),
        "gqh": n(ks[8], (H, 1)),
        "gkh": n(ks[9], (H, 1)),
        "gqc": n(ks[10], (H, 1)),
        "gkc": n(ks[11], (H, 1)),
    }


def _reference(hidden_states, p):
    """Pure-JAX f32 reference mirroring the PyTorch forward exactly."""
    H = hidden_states.shape[-1]
    ctx = jnp.mean(hidden_states, axis=1)                       # [B, H]
    q = hidden_states @ p["wq"].T + p["bq"]
    k = hidden_states @ p["wk"].T + p["bk"]
    v = hidden_states @ p["wv"].T + p["bv"]
    qg = jax.nn.sigmoid(q @ p["gqh"] + (ctx @ p["gqc"])[:, None, :])
    kg = jax.nn.sigmoid(k @ p["gkh"] + (ctx @ p["gkc"])[:, None, :])
    q_hat = (1 - qg) * q + qg * (ctx[:, None, :] @ p["wcq"].T)
    k_hat = (1 - kg) * k + kg * (ctx[:, None, :] @ p["wck"].T)
    scores = jnp.einsum("bqh,bkh->bqk", q_hat, k_hat) / jnp.sqrt(jnp.float32(H))
    probs = jax.nn.softmax(scores, axis=-1)
    out = jnp.einsum("bqk,bkh->bqh", probs, v)
    return out, scores


if __name__ == "__main__":
    B, S, H = 2, 8, 32
    key = jax.random.PRNGKey(0)
    k_x, k_p = jax.random.split(key)
    x = jax.random.normal(k_x, (B, S, H), jnp.float32)
    params = init_params(k_p, H)

    # one-time weight fusion / scale folding / padding — NOT inside the per-step path
    prepared = prepare_params(params, H)

    def run(single_buffer):
        fwd = jax.jit(functools.partial(global_context_layer, single_buffer=single_buffer))
        o, s = fwd(x, prepared)
        return jax.block_until_ready(o), jax.block_until_ready(s)

    try:
        out, scores = run(True)
    except Exception:
        # TODO(synk): pl.Buffered(1) single-buffering unsupported on this Mosaic build;
        # rerun with default double-buffering (identical numerics, slightly more VMEM).
        out, scores = run(False)

    ref_out, ref_scores = _reference(x, params)
    # bf16 MXU operands with f32 accumulation -> relaxed tolerance vs the f32 reference
    assert jnp.allclose(scores, ref_scores, atol=5e-2, rtol=5e-2), "scores mismatch"
    assert jnp.allclose(out, ref_out, atol=5e-2, rtol=5e-2), "output mismatch"

    print("KERNEL_OK")
</pallas_src>

<mosaic_0001>
module attributes {stable_mosaic.version = 11 : i64} {
  func.func @_gcl_kernel(%arg0: i32, %arg1: i32, %arg2: memref<1x128x256xbf16, #tpu.memory_space<vmem>>, %arg3: memref<256x512xbf16, #tpu.memory_space<vmem>>, %arg4: memref<1x512xf32, #tpu.memory_space<vmem>>, %arg5: memref<256x768xbf16, #tpu.memory_space<vmem>>, %arg6: memref<1x768xf32, #tpu.memory_space<vmem>>, %arg7: memref<256x768xbf16, #tpu.memory_space<vmem>>, %arg8: memref<1x128xf32, #tpu.memory_space<vmem>>, %arg9: memref<1x128x256xf32, #tpu.memory_space<vmem>>, %arg10: memref<1x128x128xf32, #tpu.memory_space<vmem>>, %arg11: memref<128x256xbf16, #tpu.memory_space<vmem>>, %arg12: memref<128x256xbf16, #tpu.memory_space<vmem>>, %arg13: memref<1x768xf32, #tpu.memory_space<vmem>>) attributes {dimension_semantics = [#tpu.dimension_semantics<parallel>, #tpu.dimension_semantics<arbitrary>], iteration_bounds = array<i64: 2, 1>, scalar_prefetch = 0 : i64, scratch_operands = 3 : i64, tpu.core_type = #tpu.core_type<tc>, window_params = [{pipeline_mode = #tpu.pipeline_mode<synchronous>, transform_indices = @transform_0, window_bounds = array<i64: 1, 128, 256>}, {pipeline_mode = #tpu.pipeline_mode<synchronous>, transform_indices = @transform_1, window_bounds = array<i64: 256, 512>}, {pipeline_mode = #tpu.pipeline_mode<synchronous>, transform_indices = @transform_2, window_bounds = array<i64: 1, 512>}, {pipeline_mode = #tpu.pipeline_mode<synchronous>, transform_indices = @transform_3, window_bounds = array<i64: 256, 768>}, {pipeline_mode = #tpu.pipeline_mode<synchronous>, transform_indices = @transform_4, window_bounds = array<i64: 1, 768>}, {pipeline_mode = #tpu.pipeline_mode<synchronous>, transform_indices = @transform_5, window_bounds = array<i64: 256, 768>}, {pipeline_mode = #tpu.pipeline_mode<synchronous>, transform_indices = @transform_6, window_bounds = array<i64: 1, 128>}, {transform_indices = @transform_7, window_bounds = array<i64: 1, 128, 256>}, {transform_indices = @transform_8, window_bounds = array<i64: 1, 128, 128>}]} {
    %c0_i32 = arith.constant 0 : i32
    %0 = arith.cmpi eq, %arg1, %c0_i32 : i32
    %1 = arith.extui %0 : i1 to i32
    %c0_i32_0 = arith.constant 0 : i32
    %2 = arith.cmpi ne, %1, %c0_i32_0 : i32
    scf.if %2 {
      %cst_27 = arith.constant 1.000000e+00 : bf16
      %57 = vector.broadcast %cst_27 : bf16 to vector<1x128xbf16>
      %c0_28 = arith.constant 0 : index
      %c0_29 = arith.constant 0 : index
      %c0_30 = arith.constant 0 : index
      %58 = vector.load %arg2[%c0_28, %c0_29, %c0_30] : memref<1x128x256xbf16, #tpu.memory_space<vmem>>, vector<1x128x256xbf16>
      %59 = vector.shape_cast %58 : vector<1x128x256xbf16> to vector<128x256xbf16>
      %cst_31 = arith.constant dense<0.000000e+00> : vector<1x256xf32>
      %60 = tpu.matmul %57, %59, %cst_31 {dimension_numbers = #tpu.dot_dimension_numbers<[1], [0], [0], [1], [0, 0, 1, 1], [], []>} : vector<1x128xbf16>, vector<128x256xbf16>, vector<1x256xf32> -> vector<1x256xf32>
      %cst_32 = arith.constant 1.250000e-01 : f32
      %61 = vector.broadcast %cst_32 : f32 to vector<1x256xf32>
      %62 = arith.mulf %60, %61 : vector<1x256xf32>
      %63 = arith.truncf %62 : vector<1x256xf32> to vector<1x256xbf16>
      %c0_33 = arith.constant 0 : index
      %c0_34 = arith.constant 0 : index
      %64 = vector.load %arg7[%c0_33, %c0_34] : memref<256x768xbf16, #tpu.memory_space<vmem>>, vector<256x768xbf16>
      %cst_35 = arith.constant dense<0.000000e+00> : vector<1x768xf32>
      %65 = tpu.matmul %63, %64, %cst_35 {dimension_numbers = #tpu.dot_dimension_numbers<[1], [0], [0], [1], [0, 0, 1, 1], [], []>} : vector<1x256xbf16>, vector<256x768xbf16>, vector<1x768xf32> -> vector<1x768xf32>
      %c0_36 = arith.constant 0 : index
      %c0_37 = arith.constant 0 : index
      %66 = vector.load %arg13[%c0_36, %c0_37] : memref<1x768xf32, #tpu.memory_space<vmem>>, vector<1x768xf32>
      tpu.vector_store %arg13[%c0_36, %c0_37], %65 {strides = array<i32>} : memref<1x768xf32, #tpu.memory_space<vmem>>, vector<1x768xf32>,
      %67 = vector.extract_strided_slice %65 {offsets = [0, 256], sizes = [1, 256], strides = [1, 1]} : vector<1x768xf32> to vector<1x256xf32>
      %68 = vector.extract_strided_slice %65 {offsets = [0, 513], sizes = [1, 1], strides = [1, 1]} : vector<1x768xf32> to vector<1x1xf32>
      %c0_38 = arith.constant 0 : index
      %c0_39 = arith.constant 0 : index
      %69 = vector.load %arg6[%c0_38, %c0_39] : memref<1x768xf32, #tpu.memory_space<vmem>>, vector<1x768xf32>
      %c0_i32_40 = arith.constant 0 : i32
      %c128_i32_41 = arith.constant 128 : i32
      %70 = arith.muli %c0_i32_40, %c128_i32_41 : i32
      %71 = tpu.assume_multiple %70, 128 : i32
      %c0_42 = arith.constant 0 : index
      %72 = arith.index_cast %71 : i32 to index
      %c0_43 = arith.constant 0 : index
      %73 = vector.load %arg2[%c0_42, %72, %c0_43] : memref<1x128x256xbf16, #tpu.memory_space<vmem>>, vector<1x128x256xbf16>
      %74 = vector.shape_cast %73 : vector<1x128x256xbf16> to vector<128x256xbf16>
      %c0_44 = arith.constant 0 : index
      %c0_45 = arith.constant 0 : index
      %75 = vector.load %arg5[%c0_44, %c0_45] : memref<256x768xbf16, #tpu.memory_space<vmem>>, vector<256x768xbf16>
      %cst_46 = arith.constant dense<0.000000e+00> : vector<128x768xf32>
      %76 = tpu.matmul %74, %75, %cst_46 {dimension_numbers = #tpu.dot_dimension_numbers<[1], [0], [0], [1], [0, 0, 1, 1], [], []>} : vector<128x256xbf16>, vector<256x768xbf16>, vector<128x768xf32> -> vector<128x768xf32>
      %77 = vector.broadcast %69 : vector<1x768xf32> to vector<128x768xf32>
      %78 = arith.addf %76, %77 : vector<128x768xf32>
      %79 = vector.extract_strided_slice %78 {offsets = [0, 0], sizes = [128, 256], strides = [1, 1]} : vector<128x768xf32> to vector<128x256xf32>
      %80 = vector.extract_strided_slice %78 {offsets = [0, 256], sizes = [128, 256], strides = [1, 1]} : vector<128x768xf32> to vector<128x256xf32>
      %81 = vector.extract_strided_slice %78 {offsets = [0, 512], sizes = [128, 1], strides = [1, 1]} : vector<128x768xf32> to vector<128x1xf32>
      %82 = vector.broadcast %68 : vector<1x1xf32> to vector<128x1xf32>
      %83 = arith.addf %81, %82 : vector<128x1xf32>
      %84 = arith.negf %83 : vector<128x1xf32>
      %85 = math.exp %84 : vector<128x1xf32>
      %cst_47 = arith.constant 1.000000e+00 : f32
      %86 = vector.broadcast %cst_47 : f32 to vector<128x1xf32>
      %87 = arith.addf %86, %85 : vector<128x1xf32>
      %88 = arith.divf %86, %87 : vector<128x1xf32>
      %cst_48 = arith.constant 1.000000e+00 : f32
      %89 = vector.broadcast %cst_48 : f32 to vector<128x1xf32>
      %90 = arith.subf %89, %88 : vector<128x1xf32>
      %91 = vector.broadcast %90 : vector<128x1xf32> to vector<128x256xf32>
      %92 = arith.mulf %91, %79 : vector<128x256xf32>
      %93 = vector.broadcast %88 : vector<128x1xf32> to vector<128x256xf32>
      %94 = vector.broadcast %67 : vector<1x256xf32> to vector<128x256xf32>
      %95 = arith.mulf %93, %94 : vector<128x256xf32>
      %96 = arith.addf %92, %95 : vector<128x256xf32>
      %97 = arith.truncf %96 : vector<128x256xf32> to vector<128x256xbf16>
      %98 = arith.index_cast %71 : i32 to index
      %c0_49 = arith.constant 0 : index
      %99 = vector.load %arg11[%98, %c0_49] : memref<128x256xbf16, #tpu.memory_space<vmem>>, vector<128x256xbf16>
      tpu.vector_store %arg11[%98, %c0_49], %97 {strides = array<i32>} : memref<128x256xbf16, #tpu.memory_space<vmem>>, vector<128x256xbf16>,
      %100 = arith.truncf %80 : vector<128x256xf32> to vector<128x256xbf16>
      %101 = arith.index_cast %71 : i32 to index
      %c0_50 = arith.constant 0 : index
      %102 = vector.load %arg12[%101, %c0_50] : memref<128x256xbf16, #tpu.memory_space<vmem>>, vector<128x256xbf16>
      tpu.vector_store %arg12[%101, %c0_50], %100 {strides = array<i32>} : memref<128x256xbf16, #tpu.memory_space<vmem>>, vector<128x256xbf16>,
      %c1_i32 = arith.constant 1 : i32
    } else {
    }
    %c128_i32 = arith.constant 128 : i32
    %3 = arith.muli %arg1, %c128_i32 : i32
    %4 = tpu.assume_multiple %3, 128 : i32
    %c0 = arith.constant 0 : index
    %5 = arith.index_cast %4 : i32 to index
    %c0_1 = arith.constant 0 : index
    %6 = vector.load %arg2[%c0, %5, %c0_1] : memref<1x128x256xbf16, #tpu.memory_space<vmem>>, vector<1x128x256xbf16>
    %7 = vector.shape_cast %6 : vector<1x128x256xbf16> to vector<128x256xbf16>
    %c0_2 = arith.constant 0 : index
    %c0_3 = arith.constant 0 : index
    %8 = vector.load %arg3[%c0_2, %c0_3] : memref<256x512xbf16, #tpu.memory_space<vmem>>, vector<256x512xbf16>
    %cst = arith.constant dense<0.000000e+00> : vector<128x512xf32>
    %9 = tpu.matmul %7, %8, %cst {dimension_numbers = #tpu.dot_dimension_numbers<[1], [0], [0], [1], [0, 0, 1, 1], [], []>} : vector<128x256xbf16>, vector<256x512xbf16>, vector<128x512xf32> -> vector<128x512xf32>
    %c0_4 = arith.constant 0 : index
    %c0_5 = arith.constant 0 : index
    %10 = vector.load %arg4[%c0_4, %c0_5] : memref<1x512xf32, #tpu.memory_space<vmem>>, vector<1x512xf32>
    %11 = vector.broadcast %10 : vector<1x512xf32> to vector<128x512xf32>
    %12 = arith.addf %9, %11 : vector<128x512xf32>
    %13 = vector.extract_strided_slice %12 {offsets = [0, 0], sizes = [128, 256], strides = [1, 1]} : vector<128x512xf32> to vector<128x256xf32>
    %14 = vector.extract_strided_slice %12 {offsets = [0, 256], sizes = [128, 1], strides = [1, 1]} : vector<128x512xf32> to vector<128x1xf32>
    %c0_6 = arith.constant 0 : index
    %c512 = arith.constant 512 : index
    %15 = vector.load %arg13[%c0_6, %c512] : memref<1x768xf32, #tpu.memory_space<vmem>>, vector<1x1xf32>
    %16 = vector.broadcast %15 : vector<1x1xf32> to vector<128x1xf32>
    %17 = arith.addf %14, %16 : vector<128x1xf32>
    %18 = arith.negf %17 : vector<128x1xf32>
    %19 = math.exp %18 : vector<128x1xf32>
    %cst_7 = arith.constant 1.000000e+00 : f32
    %20 = vector.broadcast %cst_7 : f32 to vector<128x1xf32>
    %21 = arith.addf %20, %19 : vector<128x1xf32>
    %22 = arith.divf %20, %21 : vector<128x1xf32>
    %cst_8 = arith.constant 1.000000e+00 : f32
    %23 = vector.broadcast %cst_8 : f32 to vector<128x1xf32>
    %24 = arith.subf %23, %22 : vector<128x1xf32>
    %25 = vector.broadcast %24 : vector<128x1xf32> to vector<128x256xf32>
    %26 = arith.mulf %25, %13 : vector<128x256xf32>
    %c0_9 = arith.constant 0 : index
    %c0_10 = arith.constant 0 : index
    %27 = vector.load %arg13[%c0_9, %c0_10] : memref<1x768xf32, #tpu.memory_space<vmem>>, vector<1x256xf32>
    %28 = vector.broadcast %22 : vector<128x1xf32> to vector<128x256xf32>
    %29 = vector.broadcast %27 : vector<1x256xf32> to vector<128x256xf32>
    %30 = arith.mulf %28, %29 : vector<128x256xf32>
    %31 = arith.addf %26, %30 : vector<128x256xf32>
    %32 = arith.truncf %31 : vector<128x256xf32> to vector<128x256xbf16>
    %c0_11 = arith.constant 0 : index
    %c0_12 = arith.constant 0 : index
    %33 = vector.load %arg11[%c0_11, %c0_12] : memref<128x256xbf16, #tpu.memory_space<vmem>>, vector<128x256xbf16>
    %cst_13 = arith.constant dense<0.000000e+00> : vector<128x128xf32>
    %34 = tpu.matmul %32, %33, %cst_13 {dimension_numbers = #tpu.dot_dimension_numbers<[1], [1], [0], [0], [0, 0, 1, 0], [], []>} : vector<128x256xbf16>, vector<128x256xbf16>, vector<128x128xf32> -> vector<128x128xf32>
    %c0_14 = arith.constant 0 : index
    %c0_15 = arith.constant 0 : index
    %c0_16 = arith.constant 0 : index
    %35 = vector.load %arg10[%c0_14, %c0_15, %c0_16] : memref<1x128x128xf32, #tpu.memory_space<vmem>>, vector<1x128x128xf32>
    %36 = vector.shape_cast %35 : vector<1x128x128xf32> to vector<128x128xf32>
    %37 = vector.shape_cast %34 : vector<128x128xf32> to vector<1x128x128xf32>
    tpu.vector_store %arg10[%c0_14, %c0_15, %c0_16], %37 {strides = array<i32>} : memref<1x128x128xf32, #tpu.memory_space<vmem>>, vector<1x128x128xf32>,
    %c0_17 = arith.constant 0 : index
    %c0_18 = arith.constant 0 : index
    %38 = vector.load %arg8[%c0_17, %c0_18] : memref<1x128xf32, #tpu.memory_space<vmem>>, vector<1x128xf32>
    %39 = vector.broadcast %38 : vector<1x128xf32> to vector<128x128xf32>
    %40 = arith.addf %34, %39 : vector<128x128xf32>
    %cst_19 = arith.constant dense<0xFF800000> : vector<128xf32>
    %41 = vector.multi_reduction <maximumf>, %40, %cst_19 [1] : vector<128x128xf32> to vector<128xf32>
    %42 = vector.shape_cast %41 : vector<128xf32> to vector<128x1xf32>
    %43 = vector.broadcast %42 : vector<128x1xf32> to vector<128x128xf32>
    %44 = arith.subf %40, %43 : vector<128x128xf32>
    %45 = math.exp %44 : vector<128x128xf32>
    %cst_20 = arith.constant dense<0.000000e+00> : vector<128xf32>
    %46 = vector.multi_reduction <add>, %45, %cst_20 [1] : vector<128x128xf32> to vector<128xf32>
    %47 = vector.shape_cast %46 : vector<128xf32> to vector<128x1xf32>
    %48 = tpu.reciprocal %47 {approx = true} : vector<128x1xf32> -> vector<128x1xf32>
    %49 = vector.broadcast %48 : vector<128x1xf32> to vector<128x128xf32>
    %50 = arith.mulf %45, %49 : vector<128x128xf32>
    %51 = arith.truncf %50 : vector<128x128xf32> to vector<128x128xbf16>
    %c0_21 = arith.constant 0 : index
    %c0_22 = arith.constant 0 : index
    %52 = vector.load %arg12[%c0_21, %c0_22] : memref<128x256xbf16, #tpu.memory_space<vmem>>, vector<128x256xbf16>
    %cst_23 = arith.constant dense<0.000000e+00> : vector<128x256xf32>
    %53 = tpu.matmul %51, %52, %cst_23 {dimension_numbers = #tpu.dot_dimension_numbers<[1], [0], [0], [1], [0, 0, 1, 1], [], []>} : vector<128x128xbf16>, vector<128x256xbf16>, vector<128x256xf32> -> vector<128x256xf32>
    %c0_24 = arith.constant 0 : index
    %c0_25 = arith.constant 0 : index
    %c0_26 = arith.constant 0 : index
    %54 = vector.load %arg9[%c0_24, %c0_25, %c0_26] : memref<1x128x256xf32, #tpu.memory_space<vmem>>, vector<1x128x256xf32>
    %55 = vector.shape_cast %54 : vector<1x128x256xf32> to vector<128x256xf32>
    %56 = vector.shape_cast %53 : vector<128x256xf32> to vector<1x128x256xf32>
    tpu.vector_store %arg9[%c0_24, %c0_25, %c0_26], %56 {strides = array<i32>} : memref<1x128x256xf32, #tpu.memory_space<vmem>>, vector<1x128x256xf32>,
    return
  }
  func.func @transform_0(%arg0: i32, %arg1: i32) -> (i32, i32, i32) {
    %c0_i32 = arith.constant 0 : i32
    %c0_i32_0 = arith.constant 0 : i32
    %c0_i32_1 = arith.constant 0 : i32
    return %arg0, %c0_i32, %c0_i32_0 : i32, i32, i32
  }
  func.func @transform_1(%arg0: i32, %arg1: i32) -> (i32, i32) {
    %c0_i32 = arith.constant 0 : i32
    %c0_i32_0 = arith.constant 0 : i32
    %c0_i32_1 = arith.constant 0 : i32
    return %c0_i32, %c0_i32_0 : i32, i32
  }
  func.func @transform_2(%arg0: i32, %arg1: i32) -> (i32, i32) {
    %c0_i32 = arith.constant 0 : i32
    %c0_i32_0 = arith.constant 0 : i32
    %c0_i32_1 = arith.constant 0 : i32
    return %c0_i32, %c0_i32_0 : i32, i32
  }
  func.func @transform_3(%arg0: i32, %arg1: i32) -> (i32, i32) {
    %c0_i32 = arith.constant 0 : i32
    %c0_i32_0 = arith.constant 0 : i32
    %c0_i32_1 = arith.constant 0 : i32
    return %c0_i32, %c0_i32_0 : i32, i32
  }
  func.func @transform_4(%arg0: i32, %arg1: i32) -> (i32, i32) {
    %c0_i32 = arith.constant 0 : i32
    %c0_i32_0 = arith.constant 0 : i32
    %c0_i32_1 = arith.constant 0 : i32
    return %c0_i32, %c0_i32_0 : i32, i32
  }
  func.func @transform_5(%arg0: i32, %arg1: i32) -> (i32, i32) {
    %c0_i32 = arith.constant 0 : i32
    %c0_i32_0 = arith.constant 0 : i32
    %c0_i32_1 = arith.constant 0 : i32
    return %c0_i32, %c0_i32_0 : i32, i32
  }
  func.func @transform_6(%arg0: i32, %arg1: i32) -> (i32, i32) {
    %c0_i32 = arith.constant 0 : i32
    %c0_i32_0 = arith.constant 0 : i32
    %c0_i32_1 = arith.constant 0 : i32
    return %c0_i32, %c0_i32_0 : i32, i32
  }
  func.func @transform_7(%arg0: i32, %arg1: i32) -> (i32, i32, i32) {
    %c0_i32 = arith.constant 0 : i32
    %c0_i32_0 = arith.constant 0 : i32
    return %arg0, %arg1, %c0_i32 : i32, i32, i32
  }
  func.func @transform_8(%arg0: i32, %arg1: i32) -> (i32, i32, i32) {
    %c0_i32 = arith.constant 0 : i32
    %c0_i32_0 = arith.constant 0 : i32
    return %arg0, %arg1, %c0_i32 : i32, i32, i32
  }
}

module attributes {stable_mosaic.version = 11 : i64} {
  func.func @_gcl_kernel(%arg0: i32, %arg1: i32, %arg2: memref<1x128x256xbf16, #tpu.memory_space<vmem>>, %arg3: memref<256x512xbf16, #tpu.memory_space<vmem>>, %arg4: memref<1x512xf32, #tpu.memory_space<vmem>>, %arg5: memref<256x768xbf16, #tpu.memory_space<vmem>>, %arg6: memref<1x768xf32, #tpu.memory_space<vmem>>, %arg7: memref<256x768xbf16, #tpu.memory_space<vmem>>, %arg8: memref<1x128xf32, #tpu.memory_space<vmem>>, %arg9: memref<1x128x256xf32, #tpu.memory_space<vmem>>, %arg10: memref<1x128x128xf32, #tpu.memory_space<vmem>>, %arg11: memref<128x256xbf16, #tpu.memory_space<vmem>>, %arg12: memref<128x256xbf16, #tpu.memory_space<vmem>>, %arg13: memref<1x768xf32, #tpu.memory_space<vmem>>) attributes {dimension_semantics = [#tpu.dimension_semantics<parallel>, #tpu.dimension_semantics<arbitrary>], iteration_bounds = array<i64: 2, 1>, scalar_prefetch = 0 : i64, scratch_operands = 3 : i64, tpu.core_type = #tpu.core_type<tc>, window_params = [{transform_indices = @transform_0, window_bounds = array<i64: 1, 128, 256>}, {pipeline_mode = #tpu.pipeline_mode<synchronous>, transform_indices = @transform_1, window_bounds = array<i64: 256, 512>}, {pipeline_mode = #tpu.pipeline_mode<synchronous>, transform_indices = @transform_2, window_bounds = array<i64: 1, 512>}, {pipeline_mode = #tpu.pipeline_mode<synchronous>, transform_indices = @transform_3, window_bounds = array<i64: 256, 768>}, {pipeline_mode = #tpu.pipeline_mode<synchronous>, transform_indices = @transform_4, window_bounds = array<i64: 1, 768>}, {pipeline_mode = #tpu.pipeline_mode<synchronous>, transform_indices = @transform_5, window_bounds = array<i64: 256, 768>}, {pipeline_mode = #tpu.pipeline_mode<synchronous>, transform_indices = @transform_6, window_bounds = array<i64: 1, 128>}, {transform_indices = @transform_7, window_bounds = array<i64: 1, 128, 256>}, {transform_indices = @transform_8, window_bounds = array<i64: 1, 128, 128>}]} {
    %c0_i32 = arith.constant 0 : i32
    %0 = arith.cmpi eq, %arg1, %c0_i32 : i32
    %1 = arith.extui %0 : i1 to i32
    %c0_i32_0 = arith.constant 0 : i32
    %2 = arith.cmpi ne, %1, %c0_i32_0 : i32
    scf.if %2 {
      %cst_27 = arith.constant 1.000000e+00 : bf16
      %57 = vector.broadcast %cst_27 : bf16 to vector<1x128xbf16>
      %c0_28 = arith.constant 0 : index
      %c0_29 = arith.constant 0 : index
      %c0_30 = arith.constant 0 : index
      %58 = vector.load %arg2[%c0_28, %c0_29, %c0_30] : memref<1x128x256xbf16, #tpu.memory_space<vmem>>, vector<1x128x256xbf16>
      %59 = vector.shape_cast %58 : vector<1x128x256xbf16> to vector<128x256xbf16>
      %cst_31 = arith.constant dense<0.000000e+00> : vector<1x256xf32>
      %60 = tpu.matmul %57, %59, %cst_31 {dimension_numbers = #tpu.dot_dimension_numbers<[1], [0], [0], [1], [0, 0, 1, 1], [], []>} : vector<1x128xbf16>, vector<128x256xbf16>, vector<1x256xf32> -> vector<1x256xf32>
      %cst_32 = arith.constant 1.250000e-01 : f32
      %61 = vector.broadcast %cst_32 : f32 to vector<1x256xf32>
      %62 = arith.mulf %60, %61 : vector<1x256xf32>
      %63 = arith.truncf %62 : vector<1x256xf32> to vector<1x256xbf16>
      %c0_33 = arith.constant 0 : index
      %c0_34 = arith.constant 0 : index
      %64 = vector.load %arg7[%c0_33, %c0_34] : memref<256x768xbf16, #tpu.memory_space<vmem>>, vector<256x768xbf16>
      %cst_35 = arith.constant dense<0.000000e+00> : vector<1x768xf32>
      %65 = tpu.matmul %63, %64, %cst_35 {dimension_numbers = #tpu.dot_dimension_numbers<[1], [0], [0], [1], [0, 0, 1, 1], [], []>} : vector<1x256xbf16>, vector<256x768xbf16>, vector<1x768xf32> -> vector<1x768xf32>
      %c0_36 = arith.constant 0 : index
      %c0_37 = arith.constant 0 : index
      %66 = vector.load %arg13[%c0_36, %c0_37] : memref<1x768xf32, #tpu.memory_space<vmem>>, vector<1x768xf32>
      tpu.vector_store %arg13[%c0_36, %c0_37], %65 {strides = array<i32>} : memref<1x768xf32, #tpu.memory_space<vmem>>, vector<1x768xf32>,
      %67 = vector.extract_strided_slice %65 {offsets = [0, 256], sizes = [1, 256], strides = [1, 1]} : vector<1x768xf32> to vector<1x256xf32>
      %68 = vector.extract_strided_slice %65 {offsets = [0, 513], sizes = [1, 1], strides = [1, 1]} : vector<1x768xf32> to vector<1x1xf32>
      %c0_38 = arith.constant 0 : index
      %c0_39 = arith.constant 0 : index
      %69 = vector.load %arg6[%c0_38, %c0_39] : memref<1x768xf32, #tpu.memory_space<vmem>>, vector<1x768xf32>
      %c0_i32_40 = arith.constant 0 : i32
      %c128_i32_41 = arith.constant 128 : i32
      %70 = arith.muli %c0_i32_40, %c128_i32_41 : i32
      %71 = tpu.assume_multiple %70, 128 : i32
      %c0_42 = arith.constant 0 : index
      %72 = arith.index_cast %71 : i32 to index
      %c0_43 = arith.constant 0 : index
      %73 = vector.load %arg2[%c0_42, %72, %c0_43] : memref<1x128x256xbf16, #tpu.memory_space<vmem>>, vector<1x128x256xbf16>
      %74 = vector.shape_cast %73 : vector<1x128x256xbf16> to vector<128x256xbf16>
      %c0_44 = arith.constant 0 : index
      %c0_45 = arith.constant 0 : index
      %75 = vector.load %arg5[%c0_44, %c0_45] : memref<256x768xbf16, #tpu.memory_space<vmem>>, vector<256x768xbf16>
      %cst_46 = arith.constant dense<0.000000e+00> : vector<128x768xf32>
      %76 = tpu.matmul %74, %75, %cst_46 {dimension_numbers = #tpu.dot_dimension_numbers<[1], [0], [0], [1], [0, 0, 1, 1], [], []>} : vector<128x256xbf16>, vector<256x768xbf16>, vector<128x768xf32> -> vector<128x768xf32>
      %77 = vector.broadcast %69 : vector<1x768xf32> to vector<128x768xf32>
      %78 = arith.addf %76, %77 : vector<128x768xf32>
      %79 = vector.extract_strided_slice %78 {offsets = [0, 0], sizes = [128, 256], strides = [1, 1]} : vector<128x768xf32> to vector<128x256xf32>
      %80 = vector.extract_strided_slice %78 {offsets = [0, 256], sizes = [128, 256], strides = [1, 1]} : vector<128x768xf32> to vector<128x256xf32>
      %81 = vector.extract_strided_slice %78 {offsets = [0, 512], sizes = [128, 1], strides = [1, 1]} : vector<128x768xf32> to vector<128x1xf32>
      %82 = vector.broadcast %68 : vector<1x1xf32> to vector<128x1xf32>
      %83 = arith.addf %81, %82 : vector<128x1xf32>
      %84 = arith.negf %83 : vector<128x1xf32>
      %85 = math.exp %84 : vector<128x1xf32>
      %cst_47 = arith.constant 1.000000e+00 : f32
      %86 = vector.broadcast %cst_47 : f32 to vector<128x1xf32>
      %87 = arith.addf %86, %85 : vector<128x1xf32>
      %88 = arith.divf %86, %87 : vector<128x1xf32>
      %cst_48 = arith.constant 1.000000e+00 : f32
      %89 = vector.broadcast %cst_48 : f32 to vector<128x1xf32>
      %90 = arith.subf %89, %88 : vector<128x1xf32>
      %91 = vector.broadcast %90 : vector<128x1xf32> to vector<128x256xf32>
      %92 = arith.mulf %91, %79 : vector<128x256xf32>
      %93 = vector.broadcast %88 : vector<128x1xf32> to vector<128x256xf32>
      %94 = vector.broadcast %67 : vector<1x256xf32> to vector<128x256xf32>
      %95 = arith.mulf %93, %94 : vector<128x256xf32>
      %96 = arith.addf %92, %95 : vector<128x256xf32>
      %97 = arith.truncf %96 : vector<128x256xf32> to vector<128x256xbf16>
      %98 = arith.index_cast %71 : i32 to index
      %c0_49 = arith.constant 0 : index
      %99 = vector.load %arg11[%98, %c0_49] : memref<128x256xbf16, #tpu.memory_space<vmem>>, vector<128x256xbf16>
      tpu.vector_store %arg11[%98, %c0_49], %97 {strides = array<i32>} : memref<128x256xbf16, #tpu.memory_space<vmem>>, vector<128x256xbf16>,
      %100 = arith.truncf %80 : vector<128x256xf32> to vector<128x256xbf16>
      %101 = arith.index_cast %71 : i32 to index
      %c0_50 = arith.constant 0 : index
      %102 = vector.load %arg12[%101, %c0_50] : memref<128x256xbf16, #tpu.memory_space<vmem>>, vector<128x256xbf16>
      tpu.vector_store %arg12[%101, %c0_50], %100 {strides = array<i32>} : memref<128x256xbf16, #tpu.memory_space<vmem>>, vector<128x256xbf16>,
      %c1_i32 = arith.constant 1 : i32
    } else {
    }
    %c128_i32 = arith.constant 128 : i32
    %3 = arith.muli %arg1, %c128_i32 : i32
    %4 = tpu.assume_multiple %3, 128 : i32
    %c0 = arith.constant 0 : index
    %5 = arith.index_cast %4 : i32 to index
    %c0_1 = arith.constant 0 : index
    %6 = vector.load %arg2[%c0, %5, %c0_1] : memref<1x128x256xbf16, #tpu.memory_space<vmem>>, vector<1x128x256xbf16>
    %7 = vector.shape_cast %6 : vector<1x128x256xbf16> to vector<128x256xbf16>
    %c0_2 = arith.constant 0 : index
    %c0_3 = arith.constant 0 : index
    %8 = vector.load %arg3[%c0_2, %c0_3] : memref<256x512xbf16, #tpu.memory_space<vmem>>, vector<256x512xbf16>
    %cst = arith.constant dense<0.000000e+00> : vector<128x512xf32>
    %9 = tpu.matmul %7, %8, %cst {dimension_numbers = #tpu.dot_dimension_numbers<[1], [0], [0], [1], [0, 0, 1, 1], [], []>} : vector<128x256xbf16>, vector<256x512xbf16>, vector<128x512xf32> -> vector<128x512xf32>
    %c0_4 = arith.constant 0 : index
    %c0_5 = arith.constant 0 : index
    %10 = vector.load %arg4[%c0_4, %c0_5] : memref<1x512xf32, #tpu.memory_space<vmem>>, vector<1x512xf32>
    %11 = vector.broadcast %10 : vector<1x512xf32> to vector<128x512xf32>
    %12 = arith.addf %9, %11 : vector<128x512xf32>
    %13 = vector.extract_strided_slice %12 {offsets = [0, 0], sizes = [128, 256], strides = [1, 1]} : vector<128x512xf32> to vector<128x256xf32>
    %14 = vector.extract_strided_slice %12 {offsets = [0, 256], sizes = [128, 1], strides = [1, 1]} : vector<128x512xf32> to vector<128x1xf32>
    %c0_6 = arith.constant 0 : index
    %c512 = arith.constant 512 : index
    %15 = vector.load %arg13[%c0_6, %c512] : memref<1x768xf32, #tpu.memory_space<vmem>>, vector<1x1xf32>
    %16 = vector.broadcast %15 : vector<1x1xf32> to vector<128x1xf32>
    %17 = arith.addf %14, %16 : vector<128x1xf32>
    %18 = arith.negf %17 : vector<128x1xf32>
    %19 = math.exp %18 : vector<128x1xf32>
    %cst_7 = arith.constant 1.000000e+00 : f32
    %20 = vector.broadcast %cst_7 : f32 to vector<128x1xf32>
    %21 = arith.addf %20, %19 : vector<128x1xf32>
    %22 = arith.divf %20, %21 : vector<128x1xf32>
    %cst_8 = arith.constant 1.000000e+00 : f32
    %23 = vector.broadcast %cst_8 : f32 to vector<128x1xf32>
    %24 = arith.subf %23, %22 : vector<128x1xf32>
    %25 = vector.broadcast %24 : vector<128x1xf32> to vector<128x256xf32>
    %26 = arith.mulf %25, %13 : vector<128x256xf32>
    %c0_9 = arith.constant 0 : index
    %c0_10 = arith.constant 0 : index
    %27 = vector.load %arg13[%c0_9, %c0_10] : memref<1x768xf32, #tpu.memory_space<vmem>>, vector<1x256xf32>
    %28 = vector.broadcast %22 : vector<128x1xf32> to vector<128x256xf32>
    %29 = vector.broadcast %27 : vector<1x256xf32> to vector<128x256xf32>
    %30 = arith.mulf %28, %29 : vector<128x256xf32>
    %31 = arith.addf %26, %30 : vector<128x256xf32>
    %32 = arith.truncf %31 : vector<128x256xf32> to vector<128x256xbf16>
    %c0_11 = arith.constant 0 : index
    %c0_12 = arith.constant 0 : index
    %33 = vector.load %arg11[%c0_11, %c0_12] : memref<128x256xbf16, #tpu.memory_space<vmem>>, vector<128x256xbf16>
    %cst_13 = arith.constant dense<0.000000e+00> : vector<128x128xf32>
    %34 = tpu.matmul %32, %33, %cst_13 {dimension_numbers = #tpu.dot_dimension_numbers<[1], [1], [0], [0], [0, 0, 1, 0], [], []>} : vector<128x256xbf16>, vector<128x256xbf16>, vector<128x128xf32> -> vector<128x128xf32>
    %c0_14 = arith.constant 0 : index
    %c0_15 = arith.constant 0 : index
    %c0_16 = arith.constant 0 : index
    %35 = vector.load %arg10[%c0_14, %c0_15, %c0_16] : memref<1x128x128xf32, #tpu.memory_space<vmem>>, vector<1x128x128xf32>
    %36 = vector.shape_cast %35 : vector<1x128x128xf32> to vector<128x128xf32>
    %37 = vector.shape_cast %34 : vector<128x128xf32> to vector<1x128x128xf32>
    tpu.vector_store %arg10[%c0_14, %c0_15, %c0_16], %37 {strides = array<i32>} : memref<1x128x128xf32, #tpu.memory_space<vmem>>, vector<1x128x128xf32>,
    %c0_17 = arith.constant 0 : index
    %c0_18 = arith.constant 0 : index
    %38 = vector.load %arg8[%c0_17, %c0_18] : memref<1x128xf32, #tpu.memory_space<vmem>>, vector<1x128xf32>
    %39 = vector.broadcast %38 : vector<1x128xf32> to vector<128x128xf32>
    %40 = arith.addf %34, %39 : vector<128x128xf32>
    %cst_19 = arith.constant dense<0xFF800000> : vector<128xf32>
    %41 = vector.multi_reduction <maximumf>, %40, %cst_19 [1] : vector<128x128xf32> to vector<128xf32>
    %42 = vector.shape_cast %41 : vector<128xf32> to vector<128x1xf32>
    %43 = vector.broadcast %42 : vector<128x1xf32> to vector<128x128xf32>
    %44 = arith.subf %40, %43 : vector<128x128xf32>
    %45 = math.exp %44 : vector<128x128xf32>
    %cst_20 = arith.constant dense<0.000000e+00> : vector<128xf32>
    %46 = vector.multi_reduction <add>, %45, %cst_20 [1] : vector<128x128xf32> to vector<128xf32>
    %47 = vector.shape_cast %46 : vector<128xf32> to vector<128x1xf32>
    %48 = tpu.reciprocal %47 {approx = true} : vector<128x1xf32> -> vector<128x1xf32>
    %49 = vector.broadcast %48 : vector<128x1xf32> to vector<128x128xf32>
    %50 = arith.mulf %45, %49 : vector<128x128xf32>
    %51 = arith.truncf %50 : vector<128x128xf32> to vector<128x128xbf16>
    %c0_21 = arith.constant 0 : index
    %c0_22 = arith.constant 0 : index
    %52 = vector.load %arg12[%c0_21, %c0_22] : memref<128x256xbf16, #tpu.memory_space<vmem>>, vector<128x256xbf16>
    %cst_23 = arith.constant dense<0.000000e+00> : vector<128x256xf32>
    %53 = tpu.matmul %51, %52, %cst_23 {dimension_numbers = #tpu.dot_dimension_numbers<[1], [0], [0], [1], [0, 0, 1, 1], [], []>} : vector<128x128xbf16>, vector<128x256xbf16>, vector<128x256xf32> -> vector<128x256xf32>
    %c0_24 = arith.constant 0 : index
    %c0_25 = arith.constant 0 : index
    %c0_26 = arith.constant 0 : index
    %54 = vector.load %arg9[%c0_24, %c0_25, %c0_26] : memref<1x128x256xf32, #tpu.memory_space<vmem>>, vector<1x128x256xf32>
    %55 = vector.shape_cast %54 : vector<1x128x256xf32> to vector<128x256xf32>
    %56 = vector.shape_cast %53 : vector<128x256xf32> to vector<1x128x256xf32>
    tpu.vector_store %arg9[%c0_24, %c0_25, %c0_26], %56 {strides = array<i32>} : memref<1x128x256xf32, #tpu.memory_space<vmem>>, vector<1x128x256xf32>,
    return
  }
  func.func @transform_0(%arg0: i32, %arg1: i32) -> (i32, i32, i32) {
    %c0_i32 = arith.constant 0 : i32
    %c0_i32_0 = arith.constant 0 : i32
    %c0_i32_1 = arith.constant 0 : i32
    return %arg0, %c0_i32, %c0_i32_0 : i32, i32, i32
  }
  func.func @transform_1(%arg0: i32, %arg1: i32) -> (i32, i32) {
    %c0_i32 = arith.constant 0 : i32
    %c0_i32_0 = arith.constant 0 : i32
    %c0_i32_1 = arith.constant 0 : i32
    return %c0_i32, %c0_i32_0 : i32, i32
  }
  func.func @transform_2(%arg0: i32, %arg1: i32) -> (i32, i32) {
    %c0_i32 = arith.constant 0 : i32
    %c0_i32_0 = arith.constant 0 : i32
    %c0_i32_1 = arith.constant 0 : i32
    return %c0_i32, %c0_i32_0 : i32, i32
  }
  func.func @transform_3(%arg0: i32, %arg1: i32) -> (i32, i32) {
    %c0_i32 = arith.constant 0 : i32
    %c0_i32_0 = arith.constant 0 : i32
    %c0_i32_1 = arith.constant 0 : i32
    return %c0_i32, %c0_i32_0 : i32, i32
  }
  func.func @transform_4(%arg0: i32, %arg1: i32) -> (i32, i32) {
    %c0_i32 = arith.constant 0 : i32
    %c0_i32_0 = arith.constant 0 : i32
    %c0_i32_1 = arith.constant 0 : i32
    return %c0_i32, %c0_i32_0 : i32, i32
  }
  func.func @transform_5(%arg0: i32, %arg1: i32) -> (i32, i32) {
    %c0_i32 = arith.constant 0 : i32
    %c0_i32_0 = arith.constant 0 : i32
    %c0_i32_1 = arith.constant 0 : i32
    return %c0_i32, %c0_i32_0 : i32, i32
  }
  func.func @transform_6(%arg0: i32, %arg1: i32) -> (i32, i32) {
    %c0_i32 = arith.constant 0 : i32
    %c0_i32_0 = arith.constant 0 : i32
    %c0_i32_1 = arith.constant 0 : i32
    return %c0_i32, %c0_i32_0 : i32, i32
  }
  func.func @transform_7(%arg0: i32, %arg1: i32) -> (i32, i32, i32) {
    %c0_i32 = arith.constant 0 : i32
    %c0_i32_0 = arith.constant 0 : i32
    return %arg0, %arg1, %c0_i32 : i32, i32, i32
  }
  func.func @transform_8(%arg0: i32, %arg1: i32) -> (i32, i32, i32) {
    %c0_i32 = arith.constant 0 : i32
    %c0_i32_0 = arith.constant 0 : i32
    return %arg0, %arg1, %c0_i32 : i32, i32, i32
  }
}

</mosaic_0001>

<llo_original>
// kernel: global_context_layer.1
$region0: #{global_context_layer.1}
  #allocation0 [shape = 'u32[]', space=smem, size = 0x4, offset = 0x4, fixed_abs, tag = 'smem constant byte address 0x4 - core index']
  #allocation1 [shape = 'u32[144,128]{1,0:T(1,128)}', space=vmem, size = 0x12000, scoped, tag = 'internal scratch']
  #allocation2 [shape = 'bf16[128,256]{1,0:T(16,128)(2,1)}', space=vmem, size = 0x10000, scoped, tag = 'scratch operand']
  #allocation3 [shape = 'bf16[128,256]{1,0:T(16,128)(2,1)}', space=vmem, size = 0x10000, scoped, tag = 'scratch operand']
  #allocation4 [shape = 'f32[1,768]{1,0:T(1,128)}', space=vmem, size = 0xc00, scoped, tag = 'scratch operand']
  %s0 = inlined_call_operand.hbm [shape: bf16[2,128,256], index: 0, kind: input, shape index: {}]
  %s1 = inlined_call_operand.hbm [shape: bf16[256,512], index: 1, kind: input, shape index: {}]
  %s2 = inlined_call_operand.hbm [shape: f32[1,512], index: 2, kind: input, shape index: {}]
  %s3 = inlined_call_operand.hbm [shape: bf16[256,768], index: 3, kind: input, shape index: {}]
  %s4 = inlined_call_operand.hbm [shape: f32[1,768], index: 4, kind: input, shape index: {}]
  %s5 = inlined_call_operand.hbm [shape: bf16[256,768], index: 5, kind: input, shape index: {}]
  %s6 = inlined_call_operand.hbm [shape: f32[1,128], index: 6, kind: input, shape index: {}]
  %s7 = inlined_call_operand.hbm [shape: f32[2,128,256], index: 7, kind: output, shape index: {0}]
  %s8 = inlined_call_operand.hbm [shape: f32[2,128,128], index: 8, kind: output, shape index: {1}]
  %9 = xla_tuple %s7, %s8
  %s10 = sld [smem:[#allocation0]]
  $region101: #{global_context_layer.1} parent=0
    _
  %s12 = ssub.s32 1, %s10
  %s13 = scalar_select 0, %s12, %s10
  $region1: #{global_context_layer.1} parent=0
    #allocation5 [shape = 'u8[65536]{0}', space=vmem, size = 0x10000, scoped, tag = 'input window, operand 0, single buffered']
    #allocation6 [shape = 's32[2]{0}', space=sflag, size = 0x8, scoped, tag = 'scoped memory for global_context_layer.1']
    #allocation7 [shape = 's32[2]{0}', space=sflag, size = 0x8, scoped, tag = 'scoped memory for global_context_layer.1']
    #allocation8 [shape = 'u8[262144]{0}', space=vmem, size = 0x40000, scoped, tag = 'input window, operand 1, single buffered']
    #allocation9 [shape = 's32[1]{0}', space=sflag, size = 0x4, scoped, tag = 'scoped memory for global_context_layer.1']
    #allocation10 [shape = 'u8[2048]{0}', space=vmem, size = 0x800, scoped, tag = 'input window, operand 2, single buffered']
    #allocation11 [shape = 'u8[393216]{0}', space=vmem, size = 0x60000, scoped, tag = 'input window, operand 3, single buffered']
    #allocation12 [shape = 's32[1]{0}', space=sflag, size = 0x4, scoped, tag = 'scoped memory for global_context_layer.1']
    #allocation13 [shape = 'u8[3072]{0}', space=vmem, size = 0xc00, scoped, tag = 'input window, operand 4, single buffered']
    #allocation14 [shape = 'u8[393216]{0}', space=vmem, size = 0x60000, scoped, tag = 'input window, operand 5, single buffered']
    #allocation15 [shape = 's32[1]{0}', space=sflag, size = 0x4, scoped, tag = 'scoped memory for global_context_layer.1']
    #allocation16 [shape = 'u8[512]{0}', space=vmem, size = 0x400, scoped, tag = 'input window, operand 6, single buffered']
    #allocation17 [shape = 'u8[262144]{0}', space=vmem, size = 0x40000, scoped, tag = 'output window, operand 0']
    #allocation18 [shape = 'u8[131072]{0}', space=vmem, size = 0x20000, scoped, tag = 'output window, operand 1']
    #allocation19 [shape = 's32[2]{0}', space=sflag, size = 0x8, scoped, tag = 'scoped memory for global_context_layer.1']
    %14 = vsyncpa [#allocation6], 0
    %15 = vsyncpa [#allocation9], 0
    %16 = vsyncpa [#allocation12], 0
    %17 = vsyncpa [#allocation15], 0
    %18 = vsyncpa [#allocation7], 0
    %s19 = scalar_lea.sflag [#allocation7], 1
    %20 = vsyncpa %s19, 0
    %21 = vsyncpa [#allocation19], 0
    %s22 = scalar_lea.sflag [#allocation19], 1
    %23 = vsyncpa %s22, 0
    loop: start=0, step=1, limit=4
    $region2: #{global_context_layer.1} parent=1 // loop_pre_header
      _
    $region3: #{global_context_layer.1} parent=1 // loop_header
      %s25 = sphi 0, %s29
      %p26 = scmp.ge.s32.totalorder %s25, 4
      %s32 = sphi 0, %s44
      %s33 = sphi 0, %s40
      %s34 = sphi 0, %s32
      %s35 = sphi 0, %s33
      %s36 = sphi 0, %s34
      %s37 = sphi 0, %s35
      %s47 = sphi 0, %s49
      %s50 = sphi 0, %s47
      %s51 = sphi 0, %s50
      %s67 = sphi 0, %s51
      %s71 = sphi 0, %s71
      %s73 = sphi 0, %s71
      %s74 = sphi 0, %s73
      %s88 = sphi 0, %s74
      %s92 = sphi 0, %s92
      %s94 = sphi 0, %s92
      %s95 = sphi 0, %s94
      %s109 = sphi 0, %s95
      %s113 = sphi 0, %s113
      %s115 = sphi 0, %s113
      %s116 = sphi 0, %s115
      %s130 = sphi 0, %s116
      %s134 = sphi 0, %s134
      %s136 = sphi 0, %s134
      %s137 = sphi 0, %s136
      %s151 = sphi 0, %s137
      %s155 = sphi 0, %s155
      %s157 = sphi 0, %s155
      %s158 = sphi 0, %s157
      %s172 = sphi 0, %s158
      %s176 = sphi 0, %s176
      %s178 = sphi 0, %s176
      %s179 = sphi 0, %s178
      %s193 = sphi 0, %s179
      %s201 = sphi 0, %s203
      %s204 = sphi 0, %s201
      %s205 = sphi 0, %s204
      %s221 = sphi 0, %s205
      %s229 = sphi 0, %s231
      %s232 = sphi 0, %s229
      %s233 = sphi 0, %s232
      %s249 = sphi 0, %s233
    $region4: #{global_context_layer.1} parent=1 // loop_header_branch
      %28 = sbr.rel (%p26) target = $region8
    $region5: #{global_context_layer.1} parent=1 // loop_body
      %s30 = ssub.s32 %s25, 1
      %s31 = ssub.s32 %s25, 2
      %s38 = sadd.s32 1, %s33
      %p39 = scmp.ge.s32.totalorder %s38, 1
      %s40 = scalar_select %p39, 0, %s38
      %s41 = sadd.s32 1, %s32
      %s42 = scalar_select %p39, %s41, %s32
      %p43 = scmp.ge.s32.totalorder %s42, 2
      %s44 = scalar_select %p43, 0, %s42
      %s45 = ssub.s32 %s32, %s44
      %p46 = scmp.eq.s32.totalorder %s45, 0
      %s48 = sadd.s32 %s47, 1
      %s49 = scalar_select %p46, %s47, %s48
      %p52 = pneg %p46
      %p53 = scmp.eq.s32.totalorder %s25, 1
      %p54 = por %p52, %p53
      %p55 = scmp.ne.s32.totalorder %s47, %s50
      %p56 = scmp.eq.s32.totalorder %s25, 0
      %p57 = por %p55, %p56
      %p58 = scmp.ne.s32.totalorder %s47, %s50
      %p59 = scmp.eq.s32.totalorder %s30, 1
      %p60 = por %p58, %p59
      %p61 = scmp.ne.s32.totalorder %s50, %s51
      %p62 = scmp.eq.s32.totalorder %s30, 0
      %p63 = por %p61, %p62
      %p64 = scmp.ne.s32.totalorder %s50, %s51
      %p65 = scmp.eq.s32.totalorder %s31, 1
      %p66 = por %p64, %p65
      %p68 = scmp.ne.s32.totalorder %s51, %s67
      %p69 = scmp.eq.s32.totalorder %s31, 0
      %p70 = por %p68, %p69
      %s72 = sadd.s32 %s71, 1
      %p75 = scmp.eq.s32.totalorder %s25, 1
      %p76 = scmp.ne.s32.totalorder %s71, %s73
      %p77 = scmp.eq.s32.totalorder %s25, 0
      %p78 = por %p76, %p77
      %p79 = scmp.ne.s32.totalorder %s71, %s73
      %p80 = scmp.eq.s32.totalorder %s30, 1
      %p81 = por %p79, %p80
      %p82 = scmp.ne.s32.totalorder %s73, %s74
      %p83 = scmp.eq.s32.totalorder %s30, 0
      %p84 = por %p82, %p83
      %p85 = scmp.ne.s32.totalorder %s73, %s74
      %p86 = scmp.eq.s32.totalorder %s31, 1
      %p87 = por %p85, %p86
      %p89 = scmp.ne.s32.totalorder %s74, %s88
      %p90 = scmp.eq.s32.totalorder %s31, 0
      %p91 = por %p89, %p90
      %s93 = sadd.s32 %s92, 1
      %p96 = scmp.eq.s32.totalorder %s25, 1
      %p97 = scmp.ne.s32.totalorder %s92, %s94
      %p98 = scmp.eq.s32.totalorder %s25, 0
      %p99 = por %p97, %p98
      %p100 = scmp.ne.s32.totalorder %s92, %s94
      %p101 = scmp.eq.s32.totalorder %s30, 1
      %p102 = por %p100, %p101
      %p103 = scmp.ne.s32.totalorder %s94, %s95
      %p104 = scmp.eq.s32.totalorder %s30, 0
      %p105 = por %p103, %p104
      %p106 = scmp.ne.s32.totalorder %s94, %s95
      %p107 = scmp.eq.s32.totalorder %s31, 1
      %p108 = por %p106, %p107
      %p110 = scmp.ne.s32.totalorder %s95, %s109
      %p111 = scmp.eq.s32.totalorder %s31, 0
      %p112 = por %p110, %p111
      %s114 = sadd.s32 %s113, 1
      %p117 = scmp.eq.s32.totalorder %s25, 1
      %p118 = scmp.ne.s32.totalorder %s113, %s115
      %p119 = scmp.eq.s32.totalorder %s25, 0
      %p120 = por %p118, %p119
      %p121 = scmp.ne.s32.totalorder %s113, %s115
      %p122 = scmp.eq.s32.totalorder %s30, 1
      %p123 = por %p121, %p122
      %p124 = scmp.ne.s32.totalorder %s115, %s116
      %p125 = scmp.eq.s32.totalorder %s30, 0
      %p126 = por %p124, %p125
      %p127 = scmp.ne.s32.totalorder %s115, %s116
      %p128 = scmp.eq.s32.totalorder %s31, 1
      %p129 = por %p127, %p128
      %p131 = scmp.ne.s32.totalorder %s116, %s130
      %p132 = scmp.eq.s32.totalorder %s31, 0
      %p133 = por %p131, %p132
      %s135 = sadd.s32 %s134, 1
      %p138 = scmp.eq.s32.totalorder %s25, 1
      %p139 = scmp.ne.s32.totalorder %s134, %s136
      %p140 = scmp.eq.s32.totalorder %s25, 0
      %p141 = por %p139, %p140
      %p142 = scmp.ne.s32.totalorder %s134, %s136
      %p143 = scmp.eq.s32.totalorder %s30, 1
      %p144 = por %p142, %p143
      %p145 = scmp.ne.s32.totalorder %s136, %s137
      %p146 = scmp.eq.s32.totalorder %s30, 0
      %p147 = por %p145, %p146
      %p148 = scmp.ne.s32.totalorder %s136, %s137
      %p149 = scmp.eq.s32.totalorder %s31, 1
      %p150 = por %p148, %p149
      %p152 = scmp.ne.s32.totalorder %s137, %s151
      %p153 = scmp.eq.s32.totalorder %s31, 0
      %p154 = por %p152, %p153
      %s156 = sadd.s32 %s155, 1
      %p159 = scmp.eq.s32.totalorder %s25, 1
      %p160 = scmp.ne.s32.totalorder %s155, %s157
      %p161 = scmp.eq.s32.totalorder %s25, 0
      %p162 = por %p160, %p161
      %p163 = scmp.ne.s32.totalorder %s155, %s157
      %p164 = scmp.eq.s32.totalorder %s30, 1
      %p165 = por %p163, %p164
      %p166 = scmp.ne.s32.totalorder %s157, %s158
      %p167 = scmp.eq.s32.totalorder %s30, 0
      %p168 = por %p166, %p167
      %p169 = scmp.ne.s32.totalorder %s157, %s158
      %p170 = scmp.eq.s32.totalorder %s31, 1
      %p171 = por %p169, %p170
      %p173 = scmp.ne.s32.totalorder %s158, %s172
      %p174 = scmp.eq.s32.totalorder %s31, 0
      %p175 = por %p173, %p174
      %s177 = sadd.s32 %s176, 1
      %p180 = scmp.eq.s32.totalorder %s25, 1
      %p181 = scmp.ne.s32.totalorder %s176, %s178
      %p182 = scmp.eq.s32.totalorder %s25, 0
      %p183 = por %p181, %p182
      %p184 = scmp.ne.s32.totalorder %s176, %s178
      %p185 = scmp.eq.s32.totalorder %s30, 1
      %p186 = por %p184, %p185
      %p187 = scmp.ne.s32.totalorder %s178, %s179
      %p188 = scmp.eq.s32.totalorder %s30, 0
      %p189 = por %p187, %p188
      %p190 = scmp.ne.s32.totalorder %s178, %s179
      %p191 = scmp.eq.s32.totalorder %s31, 1
      %p192 = por %p190, %p191
      %p194 = scmp.ne.s32.totalorder %s179, %s193
      %p195 = scmp.eq.s32.totalorder %s31, 0
      %p196 = por %p194, %p195
      %s197 = ssub.s32 %s32, %s44
      %s198 = ssub.s32 %s33, %s40
      %s199 = sor.u32 %s197, %s198
      %p200 = scmp.eq.s32.totalorder %s199, 0
      %s202 = sadd.s32 %s201, 1
      %s203 = scalar_select %p200, %s201, %s202
      %p206 = pneg %p200
      %p207 = scmp.eq.s32.totalorder %s25, 1
      %p208 = por %p206, %p207
      %p209 = scmp.ne.s32.totalorder %s201, %s204
      %p210 = scmp.eq.s32.totalorder %s25, 0
      %p211 = por %p209, %p210
      %p212 = scmp.ne.s32.totalorder %s201, %s204
      %p213 = scmp.eq.s32.totalorder %s30, 1
      %p214 = por %p212, %p213
      %p215 = scmp.ne.s32.totalorder %s204, %s205
      %p216 = scmp.eq.s32.totalorder %s30, 0
      %p217 = por %p215, %p216
      %p218 = scmp.ne.s32.totalorder %s204, %s205
      %p219 = scmp.eq.s32.totalorder %s31, 1
      %p220 = por %p218, %p219
      %p222 = scmp.ne.s32.totalorder %s205, %s221
      %p223 = scmp.eq.s32.totalorder %s31, 0
      %p224 = por %p222, %p223
      %s225 = ssub.s32 %s32, %s44
      %s226 = ssub.s32 %s33, %s40
      %s227 = sor.u32 %s225, %s226
      %p228 = scmp.eq.s32.totalorder %s227, 0
      %s230 = sadd.s32 %s229, 1
      %s231 = scalar_select %p228, %s229, %s230
      %p234 = pneg %p228
      %p235 = scmp.eq.s32.totalorder %s25, 1
      %p236 = por %p234, %p235
      %p237 = scmp.ne.s32.totalorder %s229, %s232
      %p238 = scmp.eq.s32.totalorder %s25, 0
      %p239 = por %p237, %p238
      %p240 = scmp.ne.s32.totalorder %s229, %s232
      %p241 = scmp.eq.s32.totalorder %s30, 1
      %p242 = por %p240, %p241
      %p243 = scmp.ne.s32.totalorder %s232, %s233
      %p244 = scmp.eq.s32.totalorder %s30, 0
      %p245 = por %p243, %p244
      %p246 = scmp.ne.s32.totalorder %s232, %s233
      %p247 = scmp.eq.s32.totalorder %s31, 1
      %p248 = por %p246, %p247
      %p250 = scmp.ne.s32.totalorder %s233, %s249
      %p251 = scmp.eq.s32.totalorder %s31, 0
      %p252 = por %p250, %p251
      %p253 = scmp.le.s32.totalorder 1, %s25
      %p254 = scmp.lt.s32.totalorder %s25, 3
      %p255 = pnand %p253, %p254
      %p256 = pneg %p255
      // Predicated region
      $region9: #{global_context_layer.1} parent=5 // pred_check
        _
      $region10: #{global_context_layer.1} parent=5 // pred_check_branch
        %258 = sbr.rel (%p255) target = $region12
      $region11: #{global_context_layer.1} parent=5 // pred_region
        %s259 = ssub.s32 %s25, 1
        // Predicated region
        $region13: #{global_context_layer.1} parent=11 // pred_check
          %p260 = pneg %p63
        $region14: #{global_context_layer.1} parent=11 // pred_check_branch
          %262 = sbr.rel (%p260) target = $region16
        $region15: #{global_context_layer.1} parent=11 // pred_region
          %s264 = ssub.s32 2048, 2048
          %265 = vsyncadd [#allocation6], %s264
          %s266 = smul.addr %s34, 32
          %s267 = smul.addr %s266, 64
          %s268 = scalar_lea.hbm %s0, %s267
          %s269 = sshll.u32 [#allocation5], 4
          %s270 = int_to_ptr.vmem [resolvable:$true] %s269
          %275 = dma.hbm_to_vmem [thread:$0]  %s268, 2048, %s270, [#allocation6], 128, 128, 8
        $region16: #{global_context_layer.1} parent=11 // pred_fallthru
          _
        // Predicated region
        $region17: #{global_context_layer.1} parent=11 // pred_check
          %p276 = pneg %p84
        $region18: #{global_context_layer.1} parent=11 // pred_check_branch
          %278 = sbr.rel (%p276) target = $region20
        $region19: #{global_context_layer.1} parent=11 // pred_region
          %s280 = ssub.s32 8192, 8192
          %281 = vsyncadd [#allocation9], %s280
          %s282 = sshll.u32 [#allocation8], 4
          %s283 = int_to_ptr.vmem [resolvable:$true] %s282
          %288 = dma.hbm_to_vmem [thread:$0]  %s1, 8192, %s283, [#allocation9], 256, 256, 16
        $region20: #{global_context_layer.1} parent=11 // pred_fallthru
          _
        // Predicated region
        $region21: #{global_context_layer.1} parent=11 // pred_check
          %p289 = pneg %p105
        $region22: #{global_context_layer.1} parent=11 // pred_check_branch
          %291 = sbr.rel (%p289) target = $region24
        $region23: #{global_context_layer.1} parent=11 // pred_region
          %s293 = ssub.s32 64, 64
          %294 = vsyncadd [#allocation9], %s293
          %s296 = sshll.u32 [#allocation10], 4
          %s297 = int_to_ptr.vmem [resolvable:$true] %s296
          %299 = dma.hbm_to_vmem [thread:$0]  %s2, 64, %s297, [#allocation9]
        $region24: #{global_context_layer.1} parent=11 // pred_fallthru
          _
        // Predicated region
        $region25: #{global_context_layer.1} parent=11 // pred_check
          %p300 = pneg %p126
        $region26: #{global_context_layer.1} parent=11 // pred_check_branch
          %302 = sbr.rel (%p300) target = $region28
        $region27: #{global_context_layer.1} parent=11 // pred_region
          %s304 = ssub.s32 12288, 12288
          %305 = vsyncadd [#allocation12], %s304
          %s306 = sshll.u32 [#allocation11], 4
          %s307 = int_to_ptr.vmem [resolvable:$true] %s306
          %312 = dma.hbm_to_vmem [thread:$0]  %s3, 12288, %s307, [#allocation12], 384, 384, 24
        $region28: #{global_context_layer.1} parent=11 // pred_fallthru
          _
        // Predicated region
        $region29: #{global_context_layer.1} parent=11 // pred_check
          %p313 = pneg %p147
        $region30: #{global_context_layer.1} parent=11 // pred_check_branch
          %315 = sbr.rel (%p313) target = $region32
        $region31: #{global_context_layer.1} parent=11 // pred_region
          %s317 = ssub.s32 96, 96
          %318 = vsyncadd [#allocation12], %s317
          %s320 = sshll.u32 [#allocation13], 4
          %s321 = int_to_ptr.vmem [resolvable:$true] %s320
          %323 = dma.hbm_to_vmem [thread:$0]  %s4, 96, %s321, [#allocation12]
        $region32: #{global_context_layer.1} parent=11 // pred_fallthru
          _
        // Predicated region
        $region33: #{global_context_layer.1} parent=11 // pred_check
          %p324 = pneg %p168
        $region34: #{global_context_layer.1} parent=11 // pred_check_branch
          %326 = sbr.rel (%p324) target = $region36
        $region35: #{global_context_layer.1} parent=11 // pred_region
          %s328 = ssub.s32 12288, 12288
          %329 = vsyncadd [#allocation15], %s328
          %s330 = sshll.u32 [#allocation14], 4
          %s331 = int_to_ptr.vmem [resolvable:$true] %s330
          %336 = dma.hbm_to_vmem [thread:$0]  %s5, 12288, %s331, [#allocation15], 384, 384, 24
        $region36: #{global_context_layer.1} parent=11 // pred_fallthru
          _
        // Predicated region
        $region37: #{global_context_layer.1} parent=11 // pred_check
          %p337 = pneg %p189
        $region38: #{global_context_layer.1} parent=11 // pred_check_branch
          %339 = sbr.rel (%p337) target = $region40
        $region39: #{global_context_layer.1} parent=11 // pred_region
          %s341 = ssub.s32 16, 16
          %342 = vsyncadd [#allocation15], %s341
          %s344 = sshll.u32 [#allocation16], 4
          %s345 = int_to_ptr.vmem [resolvable:$true] %s344
          %347 = dma.hbm_to_vmem [thread:$0]  %s6, 16, %s345, [#allocation15]
        $region40: #{global_context_layer.1} parent=11 // pred_fallthru
          _
      $region12: #{global_context_layer.1} parent=5 // pred_fallthru
        _
      %p348 = scmp.lt.s32.totalorder %s25, 2
      // Predicated region
      $region41: #{global_context_layer.1} parent=5 // pred_check
        %p349 = pneg %p348
      $region42: #{global_context_layer.1} parent=5 // pred_check_branch
        %351 = sbr.rel (%p349) target = $region44
      $region43: #{global_context_layer.1} parent=5 // pred_region
        _
      $region44: #{global_context_layer.1} parent=5 // pred_fallthru
        _
      %p352 = scmp.le.s32.totalorder 1, %s25
      %p353 = scmp.lt.s32.totalorder %s25, 3
      %p354 = pnand %p352, %p353
      %p355 = pneg %p354
      // Predicated region
      $region45: #{global_context_layer.1} parent=5 // pred_check
        _
      $region46: #{global_context_layer.1} parent=5 // pred_check_branch
        %357 = sbr.rel (%p354) target = $region48
      $region47: #{global_context_layer.1} parent=5 // pred_region
        %s358 = ssub.s32 %s25, 1
        // Predicated region
        $region49: #{global_context_layer.1} parent=47 // pred_check
          %p359 = pneg %p63
        $region50: #{global_context_layer.1} parent=47 // pred_check_branch
          %361 = sbr.rel (%p359) target = $region52
        $region51: #{global_context_layer.1} parent=47 // pred_region
          %362 = dma.done [#allocation6], 2048
        $region52: #{global_context_layer.1} parent=47 // pred_fallthru
          _
        // Predicated region
        $region53: #{global_context_layer.1} parent=47 // pred_check
          %p363 = pneg %p84
        $region54: #{global_context_layer.1} parent=47 // pred_check_branch
          %365 = sbr.rel (%p363) target = $region56
        $region55: #{global_context_layer.1} parent=47 // pred_region
          %366 = dma.done [#allocation9], 8192
        $region56: #{global_context_layer.1} parent=47 // pred_fallthru
          _
        // Predicated region
        $region57: #{global_context_layer.1} parent=47 // pred_check
          %p367 = pneg %p105
        $region58: #{global_context_layer.1} parent=47 // pred_check_branch
          %369 = sbr.rel (%p367) target = $region60
        $region59: #{global_context_layer.1} parent=47 // pred_region
          %370 = dma.done [#allocation9], 64
        $region60: #{global_context_layer.1} parent=47 // pred_fallthru
          _
        // Predicated region
        $region61: #{global_context_layer.1} parent=47 // pred_check
          %p371 = pneg %p126
        $region62: #{global_context_layer.1} parent=47 // pred_check_branch
          %373 = sbr.rel (%p371) target = $region64
        $region63: #{global_context_layer.1} parent=47 // pred_region
          %374 = dma.done [#allocation12], 12288
        $region64: #{global_context_layer.1} parent=47 // pred_fallthru
          _
        // Predicated region
        $region65: #{global_context_layer.1} parent=47 // pred_check
          %p375 = pneg %p147
        $region66: #{global_context_layer.1} parent=47 // pred_check_branch
          %377 = sbr.rel (%p375) target = $region68
        $region67: #{global_context_layer.1} parent=47 // pred_region
          %378 = dma.done [#allocation12], 96
        $region68: #{global_context_layer.1} parent=47 // pred_fallthru
          _
        // Predicated region
        $region69: #{global_context_layer.1} parent=47 // pred_check
          %p379 = pneg %p168
        $region70: #{global_context_layer.1} parent=47 // pred_check_branch
          %381 = sbr.rel (%p379) target = $region72
        $region71: #{global_context_layer.1} parent=47 // pred_region
          %382 = dma.done [#allocation15], 12288
        $region72: #{global_context_layer.1} parent=47 // pred_fallthru
          _
        // Predicated region
        $region73: #{global_context_layer.1} parent=47 // pred_check
          %p383 = pneg %p189
        $region74: #{global_context_layer.1} parent=47 // pred_check_branch
          %385 = sbr.rel (%p383) target = $region76
        $region75: #{global_context_layer.1} parent=47 // pred_region
          %386 = dma.done [#allocation15], 16
        $region76: #{global_context_layer.1} parent=47 // pred_fallthru
          _
        %p387 = pneg %p63
        %p388 = pneg %p60
        %p389 = pneg %p84
        %p390 = pneg %p81
        %p391 = pneg %p105
        %p392 = pneg %p102
        %p393 = pneg %p126
        %p394 = pneg %p123
        %p395 = pneg %p147
        %p396 = pneg %p144
        %p397 = pneg %p168
        %p398 = pneg %p165
        %p399 = pneg %p189
        %p400 = pneg %p186
        %p401 = pneg %p217
        %p402 = pneg %p214
        %s403 = sand.u32 %s204, 1
        %s404 = scalar_lea.sflag [#allocation7], %s403
        %s405 = sand.u32 %s204, 1
        %s406 = smul.addr %s405, 256
        %s407 = scalar_lea.vmem [#allocation17], %s406
        %p408 = pneg %p245
        %p409 = pneg %p242
        %s410 = sand.u32 %s232, 1
        %s411 = scalar_lea.sflag [#allocation19], %s410
        %s412 = sand.u32 %s232, 1
        %s413 = smul.addr %s412, 128
        %s414 = scalar_lea.vmem [#allocation18], %s413
        %s415 = smul.u32 16, %s35
        %s416 = smul.u32 16, %s35
        %p419 = scmp.eq.s32.totalorder %s35, 0
        // Predicated region
        $region77: #{global_context_layer.1} parent=47 // pred_check
          %p420 = pneg %p419
        $region78: #{global_context_layer.1} parent=47 // pred_check_branch
          %422 = sbr.rel (%p420) target = $region80
        $region79: #{global_context_layer.1} parent=47 // pred_region
          %v423 = vld [vmem:[#allocation5] sm:$0xff]
          %v424 = vld [vmem:[#allocation5 + $0x8] sm:$0xff]
          %v425 = vld [vmem:[#allocation5 + $0x10] sm:$0xff]
          %v426 = vld [vmem:[#allocation5 + $0x18] sm:$0xff]
          %v427 = vld [vmem:[#allocation5 + $0x20] sm:$0xff]
          %v428 = vld [vmem:[#allocation5 + $0x28] sm:$0xff]
          %v429 = vld [vmem:[#allocation5 + $0x30] sm:$0xff]
          %v430 = vld [vmem:[#allocation5 + $0x38] sm:$0xff]
          %v431 = vld [vmem:[#allocation5 + $0x40] sm:$0xff]
          %v432 = vld [vmem:[#allocation5 + $0x48] sm:$0xff]
          %v433 = vld [vmem:[#allocation5 + $0x50] sm:$0xff]
          %v434 = vld [vmem:[#allocation5 + $0x58] sm:$0xff]
          %v435 = vld [vmem:[#allocation5 + $0x60] sm:$0xff]
          %v436 = vld [vmem:[#allocation5 + $0x68] sm:$0xff]
          %v437 = vld [vmem:[#allocation5 + $0x70] sm:$0xff]
          %v438 = vld [vmem:[#allocation5 + $0x78] sm:$0xff]
          %v455 = vunpack.c.l.b16 %v423
          %v456 = vunpack.c.h.b16 %v423
          %v457 = vunpack.c.l.b16 %v424
          %v458 = vunpack.c.h.b16 %v424
          %v459 = vunpack.c.l.b16 %v425
          %v460 = vunpack.c.h.b16 %v425
          %v461 = vunpack.c.l.b16 %v426
          %v462 = vunpack.c.h.b16 %v426
          %v463 = vunpack.c.l.b16 %v427
          %v464 = vunpack.c.h.b16 %v427
          %v465 = vunpack.c.l.b16 %v428
          %v466 = vunpack.c.h.b16 %v428
          %v467 = vunpack.c.l.b16 %v429
          %v468 = vunpack.c.h.b16 %v429
          %v469 = vunpack.c.l.b16 %v430
          %v470 = vunpack.c.h.b16 %v430
          %v471 = vunpack.c.l.b16 %v431
          %v472 = vunpack.c.h.b16 %v431
          %v473 = vunpack.c.l.b16 %v432
          %v474 = vunpack.c.h.b16 %v432
          %v475 = vunpack.c.l.b16 %v433
          %v476 = vunpack.c.h.b16 %v433
          %v477 = vunpack.c.l.b16 %v434
          %v478 = vunpack.c.h.b16 %v434
          %v479 = vunpack.c.l.b16 %v435
          %v480 = vunpack.c.h.b16 %v435
          %v481 = vunpack.c.l.b16 %v436
          %v482 = vunpack.c.h.b16 %v436
          %v483 = vunpack.c.l.b16 %v437
          %v484 = vunpack.c.h.b16 %v437
          %v485 = vunpack.c.l.b16 %v438
          %v486 = vunpack.c.h.b16 %v438
          %v487 = vpack.c.b16 %v457, %v455
          %v488 = vpack.c.b16 %v458, %v456
          %v489 = vpack.c.b16 %v461, %v459
          %v490 = vpack.c.b16 %v462, %v460
          %v491 = vpack.c.b16 %v465, %v463
          %v492 = vpack.c.b16 %v466, %v464
          %v493 = vpack.c.b16 %v469, %v467
          %v494 = vpack.c.b16 %v470, %v468
          %v495 = vpack.c.b16 %v473, %v471
          %v496 = vpack.c.b16 %v474, %v472
          %v497 = vpack.c.b16 %v477, %v475
          %v498 = vpack.c.b16 %v478, %v476
          %v499 = vpack.c.b16 %v481, %v479
          %v500 = vpack.c.b16 %v482, %v480
          %v501 = vpack.c.b16 %v485, %v483
          %v502 = vpack.c.b16 %v486, %v484
          %519 = vmatprep.subr.bf16.mxu0 %v488
          %520 = vmatpush1.bf16.msra.mxu0 %v487
          %521 = vmatprep.subr.bf16.mxu0 %v490
          %522 = vmatpush1.bf16.msra.mxu0 %v489
          %523 = vmatprep.subr.bf16.mxu0 %v492
          %524 = vmatpush1.bf16.msra.mxu0 %v491
          %525 = vmatprep.subr.bf16.mxu0 %v494
          %526 = vmatpush1.bf16.msra.mxu0 %v493
          %527 = vmatprep.subr.bf16.mxu0 %v496
          %528 = vmatpush1.bf16.msra.mxu0 %v495
          %529 = vmatprep.subr.bf16.mxu0 %v498
          %530 = vmatpush1.bf16.msra.mxu0 %v497
          %531 = vmatprep.subr.bf16.mxu0 %v500
          %532 = vmatpush1.bf16.msra.mxu0 %v499
          %533 = vmatprep.subr.bf16.mxu0 %v502
          %534 = vmatpush1.bf16.msra.mxu0 %v501
          %535 = vmatprep.subr.bf16.mxu0 0
          %536 = vmatpush1.bf16.msra.mxu0 0
          %537 = vmatprep.subr.bf16.mxu0 0
          %538 = vmatpush1.bf16.msra.mxu0 0
          %539 = vmatprep.subr.bf16.mxu0 0
          %540 = vmatpush1.bf16.msra.mxu0 0
          %541 = vmatprep.subr.bf16.mxu0 0
          %542 = vmatpush1.bf16.msra.mxu0 0
          %543 = vmatprep.subr.bf16.mxu0 0
          %544 = vmatpush1.bf16.msra.mxu0 0
          %545 = vmatprep.subr.bf16.mxu0 0
          %546 = vmatpush1.bf16.msra.mxu0 0
          %547 = vmatprep.subr.bf16.mxu0 0
          %548 = vmatpush1.bf16.msra.mxu0 0
          %549 = vmatprep.subr.bf16.mxu0 0
          %550 = vmatpush1.bf16.msra.mxu0 0
          %551 = vmatprep.mubr.bf16.mxu0 0
          %552 = vmatmul.mubr.bf16.gmra.mrb[0].mxu0 1065369472
          %v553 = vpop.f32.mrb[0].mxu0
          %v554 = vadd.f32 0.0, %v553
          %v555 = vpop.f32.mrb[0].mxu0
          %v556 = vadd.f32 0.0, %v555
          %v557 = vpop.f32.mrb[0].mxu0
          %v558 = vpop.f32.mrb[0].mxu0
          %559 = vdwg.mxu0
          %v560 = vmul.f32 %v554, 0.125
          %v561 = vmul.f32 %v556, 0.125
          %v562 = vpack.c.bf16 %v560, %v560
          %v563 = vpack.c.bf16 %v561, %v561
          %v564 = vld [vmem:[#allocation14] sm:$0xff]
          %v565 = vld [vmem:[#allocation14 + $0x8] sm:$0xff]
          %v566 = vld [vmem:[#allocation14 + $0x10] sm:$0xff]
          %v567 = vld [vmem:[#allocation14 + $0x18] sm:$0xff]
          %v568 = vld [vmem:[#allocation14 + $0x20] sm:$0xff]
          %v569 = vld [vmem:[#allocation14 + $0x28] sm:$0xff]
          %v570 = vld [vmem:[#allocation14 + $0x30] sm:$0xff]
          %v571 = vld [vmem:[#allocation14 + $0x38] sm:$0xff]
          %v572 = vld [vmem:[#allocation14 + $0x40] sm:$0xff]
          %v573 = vld [vmem:[#allocation14 + $0x48] sm:$0xff]
          %v574 = vld [vmem:[#allocation14 + $0x50] sm:$0xff]
          %v575 = vld [vmem:[#allocation14 + $0x58] sm:$0xff]
          %v576 = vld [vmem:[#allocation14 + $0x60] sm:$0xff]
          %v577 = vld [vmem:[#allocation14 + $0x68] sm:$0xff]
          %v578 = vld [vmem:[#allocation14 + $0x70] sm:$0xff]
          %v579 = vld [vmem:[#allocation14 + $0x78] sm:$0xff]
          %v580 = vld [vmem:[#allocation14 + $0x80] sm:$0xff]
          %v581 = vld [vmem:[#allocation14 + $0x88] sm:$0xff]
          %v582 = vld [vmem:[#allocation14 + $0x90] sm:$0xff]
          %v583 = vld [vmem:[#allocation14 + $0x98] sm:$0xff]
          %v584 = vld [vmem:[#allocation14 + $0xa0] sm:$0xff]
          %v585 = vld [vmem:[#allocation14 + $0xa8] sm:$0xff]
          %v586 = vld [vmem:[#allocation14 + $0xb0] sm:$0xff]
          %v587 = vld [vmem:[#allocation14 + $0xb8] sm:$0xff]
          %v588 = vld [vmem:[#allocation14 + $0xc0] sm:$0xff]
          %v589 = vld [vmem:[#allocation14 + $0xc8] sm:$0xff]
          %v590 = vld [vmem:[#allocation14 + $0xd0] sm:$0xff]
          %v591 = vld [vmem:[#allocation14 + $0xd8] sm:$0xff]
          %v592 = vld [vmem:[#allocation14 + $0xe0] sm:$0xff]
          %v593 = vld [vmem:[#allocation14 + $0xe8] sm:$0xff]
          %v594 = vld [vmem:[#allocation14 + $0xf0] sm:$0xff]
          %v595 = vld [vmem:[#allocation14 + $0xf8] sm:$0xff]
          %v596 = vld [vmem:[#allocation14 + $0x100] sm:$0xff]
          %v597 = vld [vmem:[#allocation14 + $0x108] sm:$0xff]
          %v598 = vld [vmem:[#allocation14 + $0x110] sm:$0xff]
          %v599 = vld [vmem:[#allocation14 + $0x118] sm:$0xff]
          %v600 = vld [vmem:[#allocation14 + $0x120] sm:$0xff]
          %v601 = vld [vmem:[#allocation14 + $0x128] sm:$0xff]
          %v602 = vld [vmem:[#allocation14 + $0x130] sm:$0xff]
          %v603 = vld [vmem:[#allocation14 + $0x138] sm:$0xff]
          %v604 = vld [vmem:[#allocation14 + $0x140] sm:$0xff]
          %v605 = vld [vmem:[#allocation14 + $0x148] sm:$0xff]
          %v606 = vld [vmem:[#allocation14 + $0x150] sm:$0xff]
          %v607 = vld [vmem:[#allocation14 + $0x158] sm:$0xff]
          %v608 = vld [vmem:[#allocation14 + $0x160] sm:$0xff]
          %v609 = vld [vmem:[#allocation14 + $0x168] sm:$0xff]
          %v610 = vld [vmem:[#allocation14 + $0x170] sm:$0xff]
          %v611 = vld [vmem:[#allocation14 + $0x178] sm:$0xff]
          %v612 = vld [vmem:[#allocation14 + $0x180] sm:$0xff]
          %v613 = vld [vmem:[#allocation14 + $0x188] sm:$0xff]
          %v614 = vld [vmem:[#allocation14 + $0x190] sm:$0xff]
          %v615 = vld [vmem:[#allocation14 + $0x198] sm:$0xff]
          %v616 = vld [vmem:[#allocation14 + $0x1a0] sm:$0xff]
          %v617 = vld [vmem:[#allocation14 + $0x1a8] sm:$0xff]
          %v618 = vld [vmem:[#allocation14 + $0x1b0] sm:$0xff]
          %v619 = vld [vmem:[#allocation14 + $0x1b8] sm:$0xff]
          %v620 = vld [vmem:[#allocation14 + $0x1c0] sm:$0xff]
          %v621 = vld [vmem:[#allocation14 + $0x1c8] sm:$0xff]
          %v622 = vld [vmem:[#allocation14 + $0x1d0] sm:$0xff]
          %v623 = vld [vmem:[#allocation14 + $0x1d8] sm:$0xff]
          %v624 = vld [vmem:[#allocation14 + $0x1e0] sm:$0xff]
          %v625 = vld [vmem:[#allocation14 + $0x1e8] sm:$0xff]
          %v626 = vld [vmem:[#allocation14 + $0x1f0] sm:$0xff]
          %v627 = vld [vmem:[#allocation14 + $0x1f8] sm:$0xff]
          %v628 = vld [vmem:[#allocation14 + $0x200] sm:$0xff]
          %v629 = vld [vmem:[#allocation14 + $0x208] sm:$0xff]
          %v630 = vld [vmem:[#allocation14 + $0x210] sm:$0xff]
          %v631 = vld [vmem:[#allocation14 + $0x218] sm:$0xff]
          %v632 = vld [vmem:[#allocation14 + $0x220] sm:$0xff]
          %v633 = vld [vmem:[#allocation14 + $0x228] sm:$0xff]
          %v634 = vld [vmem:[#allocation14 + $0x230] sm:$0xff]
          %v635 = vld [vmem:[#allocation14 + $0x238] sm:$0xff]
          %v636 = vld [vmem:[#allocation14 + $0x240] sm:$0xff]
          %v637 = vld [vmem:[#allocation14 + $0x248] sm:$0xff]
          %v638 = vld [vmem:[#allocation14 + $0x250] sm:$0xff]
          %v639 = vld [vmem:[#allocation14 + $0x258] sm:$0xff]
          %v640 = vld [vmem:[#allocation14 + $0x260] sm:$0xff]
          %v641 = vld [vmem:[#allocation14 + $0x268] sm:$0xff]
          %v642 = vld [vmem:[#allocation14 + $0x270] sm:$0xff]
          %v643 = vld [vmem:[#allocation14 + $0x278] sm:$0xff]
          %v644 = vld [vmem:[#allocation14 + $0x280] sm:$0xff]
          %v645 = vld [vmem:[#allocation14 + $0x288] sm:$0xff]
          %v646 = vld [vmem:[#allocation14 + $0x290] sm:$0xff]
          %v647 = vld [vmem:[#allocation14 + $0x298] sm:$0xff]
          %v648 = vld [vmem:[#allocation14 + $0x2a0] sm:$0xff]
          %v649 = vld [vmem:[#allocation14 + $0x2a8] sm:$0xff]
          %v650 = vld [vmem:[#allocation14 + $0x2b0] sm:$0xff]
          %v651 = vld [vmem:[#allocation14 + $0x2b8] sm:$0xff]
          %v652 = vld [vmem:[#allocation14 + $0x2c0] sm:$0xff]
          %v653 = vld [vmem:[#allocation14 + $0x2c8] sm:$0xff]
          %v654 = vld [vmem:[#allocation14 + $0x2d0] sm:$0xff]
          %v655 = vld [vmem:[#allocation14 + $0x2d8] sm:$0xff]
          %v656 = vld [vmem:[#allocation14 + $0x2e0] sm:$0xff]
          %v657 = vld [vmem:[#allocation14 + $0x2e8] sm:$0xff]
          %v658 = vld [vmem:[#allocation14 + $0x2f0] sm:$0xff]
          %v659 = vld [vmem:[#allocation14 + $0x2f8] sm:$0xff]
          %v756 = vunpack.c.l.b16 %v564
          %v757 = vunpack.c.h.b16 %v564
          %v758 = vunpack.c.l.b16 %v565
          %v759 = vunpack.c.h.b16 %v565
          %v760 = vunpack.c.l.b16 %v566
          %v761 = vunpack.c.h.b16 %v566
          %v762 = vunpack.c.l.b16 %v567
          %v763 = vunpack.c.h.b16 %v567
          %v764 = vunpack.c.l.b16 %v568
          %v765 = vunpack.c.h.b16 %v568
          %v766 = vunpack.c.l.b16 %v569
          %v767 = vunpack.c.h.b16 %v569
          %v768 = vunpack.c.l.b16 %v570
          %v769 = vunpack.c.h.b16 %v570
          %v770 = vunpack.c.l.b16 %v571
          %v771 = vunpack.c.h.b16 %v571
          %v772 = vunpack.c.l.b16 %v572
          %v773 = vunpack.c.h.b16 %v572
          %v774 = vunpack.c.l.b16 %v573
          %v775 = vunpack.c.h.b16 %v573
          %v776 = vunpack.c.l.b16 %v574
          %v777 = vunpack.c.h.b16 %v574
          %v778 = vunpack.c.l.b16 %v575
          %v779 = vunpack.c.h.b16 %v575
          %v780 = vunpack.c.l.b16 %v576
          %v781 = vunpack.c.h.b16 %v576
          %v782 = vunpack.c.l.b16 %v577
          %v783 = vunpack.c.h.b16 %v577
          %v784 = vunpack.c.l.b16 %v578
          %v785 = vunpack.c.h.b16 %v578
          %v786 = vunpack.c.l.b16 %v579
          %v787 = vunpack.c.h.b16 %v579
          %v788 = vunpack.c.l.b16 %v580
          %v789 = vunpack.c.h.b16 %v580
          %v790 = vunpack.c.l.b16 %v581
          %v791 = vunpack.c.h.b16 %v581
          %v792 = vunpack.c.l.b16 %v582
          %v793 = vunpack.c.h.b16 %v582
          %v794 = vunpack.c.l.b16 %v583
          %v795 = vunpack.c.h.b16 %v583
          %v796 = vunpack.c.l.b16 %v584
          %v797 = vunpack.c.h.b16 %v584
          %v798 = vunpack.c.l.b16 %v585
          %v799 = vunpack.c.h.b16 %v585
          %v800 = vunpack.c.l.b16 %v586
          %v801 = vunpack.c.h.b16 %v586
          %v802 = vunpack.c.l.b16 %v587
          %v803 = vunpack.c.h.b16 %v587
          %v804 = vunpack.c.l.b16 %v588
          %v805 = vunpack.c.h.b16 %v588
          %v806 = vunpack.c.l.b16 %v589
          %v807 = vunpack.c.h.b16 %v589
          %v808 = vunpack.c.l.b16 %v590
          %v809 = vunpack.c.h.b16 %v590
          %v810 = vunpack.c.l.b16 %v591
          %v811 = vunpack.c.h.b16 %v591
          %v812 = vunpack.c.l.b16 %v592
          %v813 = vunpack.c.h.b16 %v592
          %v814 = vunpack.c.l.b16 %v593
          %v815 = vunpack.c.h.b16 %v593
          %v816 = vunpack.c.l.b16 %v594
          %v817 = vunpack.c.h.b16 %v594
          %v818 = vunpack.c.l.b16 %v595
          %v819 = vunpack.c.h.b16 %v595
          %v820 = vunpack.c.l.b16 %v596
          %v821 = vunpack.c.h.b16 %v596
          %v822 = vunpack.c.l.b16 %v597
          %v823 = vunpack.c.h.b16 %v597
          %v824 = vunpack.c.l.b16 %v598
          %v825 = vunpack.c.h.b16 %v598
          %v826 = vunpack.c.l.b16 %v599
          %v827 = vunpack.c.h.b16 %v599
          %v828 = vunpack.c.l.b16 %v600
          %v829 = vunpack.c.h.b16 %v600
          %v830 = vunpack.c.l.b16 %v601
          %v831 = vunpack.c.h.b16 %v601
          %v832 = vunpack.c.l.b16 %v602
          %v833 = vunpack.c.h.b16 %v602
          %v834 = vunpack.c.l.b16 %v603
          %v835 = vunpack.c.h.b16 %v603
          %v836 = vunpack.c.l.b16 %v604
          %v837 = vunpack.c.h.b16 %v604
          %v838 = vunpack.c.l.b16 %v605
          %v839 = vunpack.c.h.b16 %v605
          %v840 = vunpack.c.l.b16 %v606
          %v841 = vunpack.c.h.b16 %v606
          %v842 = vunpack.c.l.b16 %v607
          %v843 = vunpack.c.h.b16 %v607
          %v844 = vunpack.c.l.b16 %v608
          %v845 = vunpack.c.h.b16 %v608
          %v846 = vunpack.c.l.b16 %v609
          %v847 = vunpack.c.h.b16 %v609
          %v848 = vunpack.c.l.b16 %v610
          %v849 = vunpack.c.h.b16 %v610
          %v850 = vunpack.c.l.b16 %v611
          %v851 = vunpack.c.h.b16 %v611
          %v852 = vunpack.c.l.b16 %v612
          %v853 = vunpack.c.h.b16 %v612
          %v854 = vunpack.c.l.b16 %v613
          %v855 = vunpack.c.h.b16 %v613
          %v856 = vunpack.c.l.b16 %v614
          %v857 = vunpack.c.h.b16 %v614
          %v858 = vunpack.c.l.b16 %v615
          %v859 = vunpack.c.h.b16 %v615
          %v860 = vunpack.c.l.b16 %v616
          %v861 = vunpack.c.h.b16 %v616
          %v862 = vunpack.c.l.b16 %v617
          %v863 = vunpack.c.h.b16 %v617
          %v864 = vunpack.c.l.b16 %v618
          %v865 = vunpack.c.h.b16 %v618
          %v866 = vunpack.c.l.b16 %v619
          %v867 = vunpack.c.h.b16 %v619
          %v868 = vunpack.c.l.b16 %v620
          %v869 = vunpack.c.h.b16 %v620
          %v870 = vunpack.c.l.b16 %v621
          %v871 = vunpack.c.h.b16 %v621
          %v872 = vunpack.c.l.b16 %v622
          %v873 = vunpack.c.h.b16 %v622
          %v874 = vunpack.c.l.b16 %v623
          %v875 = vunpack.c.h.b16 %v623
          %v876 = vunpack.c.l.b16 %v624
          %v877 = vunpack.c.h.b16 %v624
          %v878 = vunpack.c.l.b16 %v625
          %v879 = vunpack.c.h.b16 %v625
          %v880 = vunpack.c.l.b16 %v626
          %v881 = vunpack.c.h.b16 %v626
          %v882 = vunpack.c.l.b16 %v627
          %v883 = vunpack.c.h.b16 %v627
          %v884 = vunpack.c.l.b16 %v628
          %v885 = vunpack.c.h.b16 %v628
          %v886 = vunpack.c.l.b16 %v629
          %v887 = vunpack.c.h.b16 %v629
          %v888 = vunpack.c.l.b16 %v630
          %v889 = vunpack.c.h.b16 %v630
          %v890 = vunpack.c.l.b16 %v631
          %v891 = vunpack.c.h.b16 %v631
          %v892 = vunpack.c.l.b16 %v632
          %v893 = vunpack.c.h.b16 %v632
          %v894 = vunpack.c.l.b16 %v633
          %v895 = vunpack.c.h.b16 %v633
          %v896 = vunpack.c.l.b16 %v634
          %v897 = vunpack.c.h.b16 %v634
          %v898 = vunpack.c.l.b16 %v635
          %v899 = vunpack.c.h.b16 %v635
          %v900 = vunpack.c.l.b16 %v636
          %v901 = vunpack.c.h.b16 %v636
          %v902 = vunpack.c.l.b16 %v637
          %v903 = vunpack.c.h.b16 %v637
          %v904 = vunpack.c.l.b16 %v638
          %v905 = vunpack.c.h.b16 %v638
          %v906 = vunpack.c.l.b16 %v639
          %v907 = vunpack.c.h.b16 %v639
          %v908 = vunpack.c.l.b16 %v640
          %v909 = vunpack.c.h.b16 %v640
          %v910 = vunpack.c.l.b16 %v641
          %v911 = vunpack.c.h.b16 %v641
          %v912 = vunpack.c.l.b16 %v642
          %v913 = vunpack.c.h.b16 %v642
          %v914 = vunpack.c.l.b16 %v643
          %v915 = vunpack.c.h.b16 %v643
          %v916 = vunpack.c.l.b16 %v644
          %v917 = vunpack.c.h.b16 %v644
          %v918 = vunpack.c.l.b16 %v645
          %v919 = vunpack.c.h.b16 %v645
          %v920 = vunpack.c.l.b16 %v646
          %v921 = vunpack.c.h.b16 %v646
          %v922 = vunpack.c.l.b16 %v647
          %v923 = vunpack.c.h.b16 %v647
          %v924 = vunpack.c.l.b16 %v648
          %v925 = vunpack.c.h.b16 %v648
          %v926 = vunpack.c.l.b16 %v649
          %v927 = vunpack.c.h.b16 %v649
          %v928 = vunpack.c.l.b16 %v650
          %v929 = vunpack.c.h.b16 %v650
          %v930 = vunpack.c.l.b16 %v651
          %v931 = vunpack.c.h.b16 %v651
          %v932 = vunpack.c.l.b16 %v652
          %v933 = vunpack.c.h.b16 %v652
          %v934 = vunpack.c.l.b16 %v653
          %v935 = vunpack.c.h.b16 %v653
          %v936 = vunpack.c.l.b16 %v654
          %v937 = vunpack.c.h.b16 %v654
          %v938 = vunpack.c.l.b16 %v655
          %v939 = vunpack.c.h.b16 %v655
          %v940 = vunpack.c.l.b16 %v656
          %v941 = vunpack.c.h.b16 %v656
          %v942 = vunpack.c.l.b16 %v657
          %v943 = vunpack.c.h.b16 %v657
          %v944 = vunpack.c.l.b16 %v658
          %v945 = vunpack.c.h.b16 %v658
          %v946 = vunpack.c.l.b16 %v659
          %v947 = vunpack.c.h.b16 %v659
          %v948 = vpack.c.b16 %v762, %v756
          %v949 = vpack.c.b16 %v763, %v757
          %v950 = vpack.c.b16 %v764, %v758
          %v951 = vpack.c.b16 %v765, %v759
          %v952 = vpack.c.b16 %v766, %v760
          %v953 = vpack.c.b16 %v767, %v761
          %v954 = vpack.c.b16 %v774, %v768
          %v955 = vpack.c.b16 %v775, %v769
          %v956 = vpack.c.b16 %v776, %v770
          %v957 = vpack.c.b16 %v777, %v771
          %v958 = vpack.c.b16 %v778, %v772
          %v959 = vpack.c.b16 %v779, %v773
          %v960 = vpack.c.b16 %v786, %v780
          %v961 = vpack.c.b16 %v787, %v781
          %v962 = vpack.c.b16 %v788, %v782
          %v963 = vpack.c.b16 %v789, %v783
          %v964 = vpack.c.b16 %v790, %v784
          %v965 = vpack.c.b16 %v791, %v785
          %v966 = vpack.c.b16 %v798, %v792
          %v967 = vpack.c.b16 %v799, %v793
          %v968 = vpack.c.b16 %v800, %v794
          %v969 = vpack.c.b16 %v801, %v795
          %v970 = vpack.c.b16 %v802, %v796
          %v971 = vpack.c.b16 %v803, %v797
          %v972 = vpack.c.b16 %v810, %v804
          %v973 = vpack.c.b16 %v811, %v805
          %v974 = vpack.c.b16 %v812, %v806
          %v975 = vpack.c.b16 %v813, %v807
          %v976 = vpack.c.b16 %v814, %v808
          %v977 = vpack.c.b16 %v815, %v809
          %v978 = vpack.c.b16 %v822, %v816
          %v979 = vpack.c.b16 %v823, %v817
          %v980 = vpack.c.b16 %v824, %v818
          %v981 = vpack.c.b16 %v825, %v819
          %v982 = vpack.c.b16 %v826, %v820
          %v983 = vpack.c.b16 %v827, %v821
          %v984 = vpack.c.b16 %v834, %v828
          %v985 = vpack.c.b16 %v835, %v829
          %v986 = vpack.c.b16 %v836, %v830
          %v987 = vpack.c.b16 %v837, %v831
          %v988 = vpack.c.b16 %v838, %v832
          %v989 = vpack.c.b16 %v839, %v833
          %v990 = vpack.c.b16 %v846, %v840
          %v991 = vpack.c.b16 %v847, %v841
          %v992 = vpack.c.b16 %v848, %v842
          %v993 = vpack.c.b16 %v849, %v843
          %v994 = vpack.c.b16 %v850, %v844
          %v995 = vpack.c.b16 %v851, %v845
          %v996 = vpack.c.b16 %v858, %v852
          %v997 = vpack.c.b16 %v859, %v853
          %v998 = vpack.c.b16 %v860, %v854
          %v999 = vpack.c.b16 %v861, %v855
          %v1000 = vpack.c.b16 %v862, %v856
          %v1001 = vpack.c.b16 %v863, %v857
          %v1002 = vpack.c.b16 %v870, %v864
          %v1003 = vpack.c.b16 %v871, %v865
          %v1004 = vpack.c.b16 %v872, %v866
          %v1005 = vpack.c.b16 %v873, %v867
          %v1006 = vpack.c.b16 %v874, %v868
          %v1007 = vpack.c.b16 %v875, %v869
          %v1008 = vpack.c.b16 %v882, %v876
          %v1009 = vpack.c.b16 %v883, %v877
          %v1010 = vpack.c.b16 %v884, %v878
          %v1011 = vpack.c.b16 %v885, %v879
          %v1012 = vpack.c.b16 %v886, %v880
          %v1013 = vpack.c.b16 %v887, %v881
          %v1014 = vpack.c.b16 %v894, %v888
          %v1015 = vpack.c.b16 %v895, %v889
          %v1016 = vpack.c.b16 %v896, %v890
          %v1017 = vpack.c.b16 %v897, %v891
          %v1018 = vpack.c.b16 %v898, %v892
          %v1019 = vpack.c.b16 %v899, %v893
          %v1020 = vpack.c.b16 %v906, %v900
          %v1021 = vpack.c.b16 %v907, %v901
          %v1022 = vpack.c.b16 %v908, %v902
          %v1023 = vpack.c.b16 %v909, %v903
          %v1024 = vpack.c.b16 %v910, %v904
          %v1025 = vpack.c.b16 %v911, %v905
          %v1026 = vpack.c.b16 %v918, %v912
          %v1027 = vpack.c.b16 %v919, %v913
          %v1028 = vpack.c.b16 %v920, %v914
          %v1029 = vpack.c.b16 %v921, %v915
          %v1030 = vpack.c.b16 %v922, %v916
          %v1031 = vpack.c.b16 %v923, %v917
          %v1032 = vpack.c.b16 %v930, %v924
          %v1033 = vpack.c.b16 %v931, %v925
          %v1034 = vpack.c.b16 %v932, %v926
          %v1035 = vpack.c.b16 %v933, %v927
          %v1036 = vpack.c.b16 %v934, %v928
          %v1037 = vpack.c.b16 %v935, %v929
          %v1038 = vpack.c.b16 %v942, %v936
          %v1039 = vpack.c.b16 %v943, %v937
          %v1040 = vpack.c.b16 %v944, %v938
          %v1041 = vpack.c.b16 %v945, %v939
          %v1042 = vpack.c.b16 %v946, %v940
          %v1043 = vpack.c.b16 %v947, %v941
          %1140 = vmatprep.subr.bf16.mxu0 %v949
          %1141 = vmatpush1.bf16.msra.mxu0 %v948
          %1142 = vmatprep.subr.bf16.mxu0 %v955
          %1143 = vmatpush1.bf16.msra.mxu0 %v954
          %1144 = vmatprep.subr.bf16.mxu0 %v961
          %1145 = vmatpush1.bf16.msra.mxu0 %v960
          %1146 = vmatprep.subr.bf16.mxu0 %v967
          %1147 = vmatpush1.bf16.msra.mxu0 %v966
          %1148 = vmatprep.subr.bf16.mxu0 %v973
          %1149 = vmatpush1.bf16.msra.mxu0 %v972
          %1150 = vmatprep.subr.bf16.mxu0 %v979
          %1151 = vmatpush1.bf16.msra.mxu0 %v978
          %1152 = vmatprep.subr.bf16.mxu0 %v985
          %1153 = vmatpush1.bf16.msra.mxu0 %v984
          %1154 = vmatprep.subr.bf16.mxu0 %v991
          %1155 = vmatpush1.bf16.msra.mxu0 %v990
          %1156 = vmatprep.subr.bf16.mxu0 %v997
          %1157 = vmatpush1.bf16.msra.mxu0 %v996
          %1158 = vmatprep.subr.bf16.mxu0 %v1003
          %1159 = vmatpush1.bf16.msra.mxu0 %v1002
          %1160 = vmatprep.subr.bf16.mxu0 %v1009
          %1161 = vmatpush1.bf16.msra.mxu0 %v1008
          %1162 = vmatprep.subr.bf16.mxu0 %v1015
          %1163 = vmatpush1.bf16.msra.mxu0 %v1014
          %1164 = vmatprep.subr.bf16.mxu0 %v1021
          %1165 = vmatpush1.bf16.msra.mxu0 %v1020
          %1166 = vmatprep.subr.bf16.mxu0 %v1027
          %1167 = vmatpush1.bf16.msra.mxu0 %v1026
          %1168 = vmatprep.subr.bf16.mxu0 %v1033
          %1169 = vmatpush1.bf16.msra.mxu0 %v1032
          %1170 = vmatprep.subr.bf16.mxu0 %v1039
          %1171 = vmatpush1.bf16.msra.mxu0 %v1038
          %1172 = vmatprep.mubr.bf16.mxu0 %v563
          %1173 = vmatmul.mubr.bf16.gmra.mrb[0].mxu0 %v562
          %v1174 = vpop.f32.mrb[0].mxu0
          %v1175 = vadd.f32 0.0, %v1174
          %v1176 = vpop.f32.mrb[0].mxu0
          %v1177 = vadd.f32 0.0, %v1176
          %v1178 = vpop.f32.mrb[0].mxu0
          %v1179 = vpop.f32.mrb[0].mxu0
          %1180 = vdwg.mxu0
          %1181 = vmatprep.subr.bf16.mxu0 %v951
          %1182 = vmatpush1.bf16.msra.mxu0 %v950
          %1183 = vmatprep.subr.bf16.mxu0 %v957
          %1184 = vmatpush1.bf16.msra.mxu0 %v956
          %1185 = vmatprep.subr.bf16.mxu0 %v963
          %1186 = vmatpush1.bf16.msra.mxu0 %v962
          %1187 = vmatprep.subr.bf16.mxu0 %v969
          %1188 = vmatpush1.bf16.msra.mxu0 %v968
          %1189 = vmatprep.subr.bf16.mxu0 %v975
          %1190 = vmatpush1.bf16.msra.mxu0 %v974
          %1191 = vmatprep.subr.bf16.mxu0 %v981
          %1192 = vmatpush1.bf16.msra.mxu0 %v980
          %1193 = vmatprep.subr.bf16.mxu0 %v987
          %1194 = vmatpush1.bf16.msra.mxu0 %v986
          %1195 = vmatprep.subr.bf16.mxu0 %v993
          %1196 = vmatpush1.bf16.msra.mxu0 %v992
          %1197 = vmatprep.subr.bf16.mxu0 %v999
          %1198 = vmatpush1.bf16.msra.mxu0 %v998
          %1199 = vmatprep.subr.bf16.mxu0 %v1005
          %1200 = vmatpush1.bf16.msra.mxu0 %v1004
          %1201 = vmatprep.subr.bf16.mxu0 %v1011
          %1202 = vmatpush1.bf16.msra.mxu0 %v1010
          %1203 = vmatprep.subr.bf16.mxu0 %v1017
          %1204 = vmatpush1.bf16.msra.mxu0 %v1016
          %1205 = vmatprep.subr.bf16.mxu0 %v1023
          %1206 = vmatpush1.bf16.msra.mxu0 %v1022
          %1207 = vmatprep.subr.bf16.mxu0 %v1029
          %1208 = vmatpush1.bf16.msra.mxu0 %v1028
          %1209 = vmatprep.subr.bf16.mxu0 %v1035
          %1210 = vmatpush1.bf16.msra.mxu0 %v1034
          %1211 = vmatprep.subr.bf16.mxu0 %v1041
          %1212 = vmatpush1.bf16.msra.mxu0 %v1040
          %1213 = vmatprep.mubr.bf16.mxu0 %v563
          %1214 = vmatmul.mubr.bf16.gmra.mrb[0].mxu0 %v562
          %v1215 = vpop.f32.mrb[0].mxu0
          %v1216 = vadd.f32 0.0, %v1215
          %v1217 = vpop.f32.mrb[0].mxu0
          %v1218 = vadd.f32 0.0, %v1217
          %v1219 = vpop.f32.mrb[0].mxu0
          %v1220 = vpop.f32.mrb[0].mxu0
          %1221 = vdwg.mxu0
          %1222 = vmatprep.subr.bf16.mxu0 %v953
          %1223 = vmatpush1.bf16.msra.mxu0 %v952
          %1224 = vmatprep.subr.bf16.mxu0 %v959
          %1225 = vmatpush1.bf16.msra.mxu0 %v958
          %1226 = vmatprep.subr.bf16.mxu0 %v965
          %1227 = vmatpush1.bf16.msra.mxu0 %v964
          %1228 = vmatprep.subr.bf16.mxu0 %v971
          %1229 = vmatpush1.bf16.msra.mxu0 %v970
          %1230 = vmatprep.subr.bf16.mxu0 %v977
          %1231 = vmatpush1.bf16.msra.mxu0 %v976
          %1232 = vmatprep.subr.bf16.mxu0 %v983
          %1233 = vmatpush1.bf16.msra.mxu0 %v982
          %1234 = vmatprep.subr.bf16.mxu0 %v989
          %1235 = vmatpush1.bf16.msra.mxu0 %v988
          %1236 = vmatprep.subr.bf16.mxu0 %v995
          %1237 = vmatpush1.bf16.msra.mxu0 %v994
          %1238 = vmatprep.subr.bf16.mxu0 %v1001
          %1239 = vmatpush1.bf16.msra.mxu0 %v1000
          %1240 = vmatprep.subr.bf16.mxu0 %v1007
          %1241 = vmatpush1.bf16.msra.mxu0 %v1006
          %1242 = vmatprep.subr.bf16.mxu0 %v1013
          %1243 = vmatpush1.bf16.msra.mxu0 %v1012
          %1244 = vmatprep.subr.bf16.mxu0 %v1019
          %1245 = vmatpush1.bf16.msra.mxu0 %v1018
          %1246 = vmatprep.subr.bf16.mxu0 %v1025
          %1247 = vmatpush1.bf16.msra.mxu0 %v1024
          %1248 = vmatprep.subr.bf16.mxu0 %v1031
          %1249 = vmatpush1.bf16.msra.mxu0 %v1030
          %1250 = vmatprep.subr.bf16.mxu0 %v1037
          %1251 = vmatpush1.bf16.msra.mxu0 %v1036
          %1252 = vmatprep.subr.bf16.mxu0 %v1043
          %1253 = vmatpush1.bf16.msra.mxu0 %v1042
          %1254 = vmatprep.mubr.bf16.mxu0 %v563
          %1255 = vmatmul.mubr.bf16.gmra.mrb[0].mxu0 %v562
          %v1256 = vpop.f32.mrb[0].mxu0
          %v1257 = vadd.f32 0.0, %v1256
          %v1258 = vpop.f32.mrb[0].mxu0
          %v1259 = vadd.f32 0.0, %v1258
          %v1260 = vpop.f32.mrb[0].mxu0
          %v1261 = vpop.f32.mrb[0].mxu0
          %1262 = vdwg.mxu0
          %v1269 = vcombine.low %v1175, %v1177
          %v1270 = vcombine.low %v1216, %v1218
          %v1271 = vcombine.low %v1257, %v1259
          %v1273 = vunpack.c.l.s4 1966171168
          %v1274 = vunpack.c.0.s8 %v1273
          %v1275 = vlaneseq
          %v1276 = vshrl.u32 %v1275, 7
          %v1277 = vsub.s32 %v1274, %v1276
          %v1278 = vrot.slane %v1269, %v1277
          %v1280 = vunpack.c.l.s4 1966171168
          %v1281 = vunpack.c.0.s8 %v1280
          %v1282 = vlaneseq
          %v1283 = vshrl.u32 %v1282, 7
          %v1284 = vsub.s32 %v1281, %v1283
          %v1285 = vrot.slane %v1270, %v1284
          %v1287 = vunpack.c.l.s4 1966171168
          %v1288 = vunpack.c.0.s8 %v1287
          %v1289 = vlaneseq
          %v1290 = vshrl.u32 %v1289, 7
          %v1291 = vsub.s32 %v1288, %v1290
          %v1292 = vrot.slane %v1271, %v1291
          %v1293 = vcombine.low %v1278, %v1285
          %v1295 = vunpack.c.l.s4 1966171168
          %v1296 = vunpack.c.0.s8 %v1295
          %v1297 = vlaneseq
          %v1298 = vshrl.u32 %v1297, 7
          %v1299 = vsub.s32 %v1296, %v1298
          %v1300 = vrot.slane %v1293, %v1299
          %v1302 = vunpack.c.l.s4 1966171168
          %v1303 = vunpack.c.0.s8 %v1302
          %v1304 = vlaneseq
          %v1305 = vshrl.u32 %v1304, 7
          %v1306 = vsub.s32 %v1303, %v1305
          %v1307 = vrot.slane %v1292, %v1306
          %v1308 = vcombine.low %v1300, %v1307
          %v1310 = vlaneseq
          %vm1311 = vcmp.ge.s32.totalorder %v1310, 0
          %vm1312 = vcmp.lt.s32.totalorder %v1310, 768
          %vm1313 = vmand %vm1311, %vm1312
          %1314 = vst.msk [vmem:[#allocation4] sm:$0x3f] %vm1313, %v1308
          %v1315 = vld [vmem:[#allocation13] sm:$0x3f]
          %s1316 = smul.u32 0, 2
          %s1317 = smul.addr %s1316, 4
          %s1318 = scalar_lea.vmem [#allocation5], %s1317
          %v1319 = vld [vmem:[%s1318] sm:$0xff]
          %v1320 = vld [vmem:[%s1318 + $0x8] sm:$0xff]
          %v1321 = vld [vmem:[%s1318 + $0x10] sm:$0xff]
          %v1322 = vld [vmem:[%s1318 + $0x18] sm:$0xff]
          %v1323 = vld [vmem:[%s1318 + $0x20] sm:$0xff]
          %v1324 = vld [vmem:[%s1318 + $0x28] sm:$0xff]
          %v1325 = vld [vmem:[%s1318 + $0x30] sm:$0xff]
          %v1326 = vld [vmem:[%s1318 + $0x38] sm:$0xff]
          %v1327 = vld [vmem:[%s1318 + $0x40] sm:$0xff]
          %v1328 = vld [vmem:[%s1318 + $0x48] sm:$0xff]
          %v1329 = vld [vmem:[%s1318 + $0x50] sm:$0xff]
          %v1330 = vld [vmem:[%s1318 + $0x58] sm:$0xff]
          %v1331 = vld [vmem:[%s1318 + $0x60] sm:$0xff]
          %v1332 = vld [vmem:[%s1318 + $0x68] sm:$0xff]
          %v1333 = vld [vmem:[%s1318 + $0x70] sm:$0xff]
          %v1334 = vld [vmem:[%s1318 + $0x78] sm:$0xff]
          %v1335 = vld [vmem:[#allocation11] sm:$0xff]
          %v1336 = vld [vmem:[#allocation11 + $0x8] sm:$0xff]
          %v1337 = vld [vmem:[#allocation11 + $0x10] sm:$0xff]
          %v1338 = vld [vmem:[#allocation11 + $0x18] sm:$0xff]
          %v1339 = vld [vmem:[#allocation11 + $0x20] sm:$0xff]
          %v1340 = vld [vmem:[#allocation11 + $0x28] sm:$0xff]
          %v1341 = vld [vmem:[#allocation11 + $0x30] sm:$0xff]
          %v1342 = vld [vmem:[#allocation11 + $0x38] sm:$0xff]
          %v1343 = vld [vmem:[#allocation11 + $0x40] sm:$0xff]
          %v1344 = vld [vmem:[#allocation11 + $0x48] sm:$0xff]
          %v1345 = vld [vmem:[#allocation11 + $0x50] sm:$0xff]
          %v1346 = vld [vmem:[#allocation11 + $0x58] sm:$0xff]
          %v1347 = vld [vmem:[#allocation11 + $0x60] sm:$0xff]
          %v1348 = vld [vmem:[#allocation11 + $0x68] sm:$0xff]
          %v1349 = vld [vmem:[#allocation11 + $0x70] sm:$0xff]
          %v1350 = vld [vmem:[#allocation11 + $0x78] sm:$0xff]
          %v1351 = vld [vmem:[#allocation11 + $0x80] sm:$0xff]
          %v1352 = vld [vmem:[#allocation11 + $0x88] sm:$0xff]
          %v1353 = vld [vmem:[#allocation11 + $0x90] sm:$0xff]
          %v1354 = vld [vmem:[#allocation11 + $0x98] sm:$0xff]
          %v1355 = vld [vmem:[#allocation11 + $0xa0] sm:$0xff]
          %v1356 = vld [vmem:[#allocation11 + $0xa8] sm:$0xff]
          %v1357 = vld [vmem:[#allocation11 + $0xb0] sm:$0xff]
          %v1358 = vld [vmem:[#allocation11 + $0xb8] sm:$0xff]
          %v1359 = vld [vmem:[#allocation11 + $0xc0] sm:$0xff]
          %v1360 = vld [vmem:[#allocation11 + $0xc8] sm:$0xff]
          %v1361 = vld [vmem:[#allocation11 + $0xd0] sm:$0xff]
          %v1362 = vld [vmem:[#allocation11 + $0xd8] sm:$0xff]
          %v1363 = vld [vmem:[#allocation11 + $0xe0] sm:$0xff]
          %v1364 = vld [vmem:[#allocation11 + $0xe8] sm:$0xff]
          %v1365 = vld [vmem:[#allocation11 + $0xf0] sm:$0xff]
          %v1366 = vld [vmem:[#allocation11 + $0xf8] sm:$0xff]
          %v1367 = vld [vmem:[#allocation11 + $0x100] sm:$0xff]
          %v1368 = vld [vmem:[#allocation11 + $0x108] sm:$0xff]
          %v1369 = vld [vmem:[#allocation11 + $0x110] sm:$0xff]
          %v1370 = vld [vmem:[#allocation11 + $0x118] sm:$0xff]
          %v1371 = vld [vmem:[#allocation11 + $0x120] sm:$0xff]
          %v1372 = vld [vmem:[#allocation11 + $0x128] sm:$0xff]
          %v1373 = vld [vmem:[#allocation11 + $0x130] sm:$0xff]
          %v1374 = vld [vmem:[#allocation11 + $0x138] sm:$0xff]
          %v1375 = vld [vmem:[#allocation11 + $0x140] sm:$0xff]
          %v1376 = vld [vmem:[#allocation11 + $0x148] sm:$0xff]
          %v1377 = vld [vmem:[#allocation11 + $0x150] sm:$0xff]
          %v1378 = vld [vmem:[#allocation11 + $0x158] sm:$0xff]
          %v1379 = vld [vmem:[#allocation11 + $0x160] sm:$0xff]
          %v1380 = vld [vmem:[#allocation11 + $0x168] sm:$0xff]
          %v1381 = vld [vmem:[#allocation11 + $0x170] sm:$0xff]
          %v1382 = vld [vmem:[#allocation11 + $0x178] sm:$0xff]
          %v1383 = vld [vmem:[#allocation11 + $0x180] sm:$0xff]
          %v1384 = vld [vmem:[#allocation11 + $0x188] sm:$0xff]
          %v1385 = vld [vmem:[#allocation11 + $0x190] sm:$0xff]
          %v1386 = vld [vmem:[#allocation11 + $0x198] sm:$0xff]
          %v1387 = vld [vmem:[#allocation11 + $0x1a0] sm:$0xff]
          %v1388 = vld [vmem:[#allocation11 + $0x1a8] sm:$0xff]
          %v1389 = vld [vmem:[#allocation11 + $0x1b0] sm:$0xff]
          %v1390 = vld [vmem:[#allocation11 + $0x1b8] sm:$0xff]
          %v1391 = vld [vmem:[#allocation11 + $0x1c0] sm:$0xff]
          %v1392 = vld [vmem:[#allocation11 + $0x1c8] sm:$0xff]
          %v1393 = vld [vmem:[#allocation11 + $0x1d0] sm:$0xff]
          %v1394 = vld [vmem:[#allocation11 + $0x1d8] sm:$0xff]
          %v1395 = vld [vmem:[#allocation11 + $0x1e0] sm:$0xff]
          %v1396 = vld [vmem:[#allocation11 + $0x1e8] sm:$0xff]
          %v1397 = vld [vmem:[#allocation11 + $0x1f0] sm:$0xff]
          %v1398 = vld [vmem:[#allocation11 + $0x1f8] sm:$0xff]
          %v1399 = vld [vmem:[#allocation11 + $0x200] sm:$0xff]
          %v1400 = vld [vmem:[#allocation11 + $0x208] sm:$0xff]
          %v1401 = vld [vmem:[#allocation11 + $0x210] sm:$0xff]
          %v1402 = vld [vmem:[#allocation11 + $0x218] sm:$0xff]
          %v1403 = vld [vmem:[#allocation11 + $0x220] sm:$0xff]
          %v1404 = vld [vmem:[#allocation11 + $0x228] sm:$0xff]
          %v1405 = vld [vmem:[#allocation11 + $0x230] sm:$0xff]
          %v1406 = vld [vmem:[#allocation11 + $0x238] sm:$0xff]
          %v1407 = vld [vmem:[#allocation11 + $0x240] sm:$0xff]
          %v1408 = vld [vmem:[#allocation11 + $0x248] sm:$0xff]
          %v1409 = vld [vmem:[#allocation11 + $0x250] sm:$0xff]
          %v1410 = vld [vmem:[#allocation11 + $0x258] sm:$0xff]
          %v1411 = vld [vmem:[#allocation11 + $0x260] sm:$0xff]
          %v1412 = vld [vmem:[#allocation11 + $0x268] sm:$0xff]
          %v1413 = vld [vmem:[#allocation11 + $0x270] sm:$0xff]
          %v1414 = vld [vmem:[#allocation11 + $0x278] sm:$0xff]
          %v1415 = vld [vmem:[#allocation11 + $0x280] sm:$0xff]
          %v1416 = vld [vmem:[#allocation11 + $0x288] sm:$0xff]
          %v1417 = vld [vmem:[#allocation11 + $0x290] sm:$0xff]
          %v1418 = vld [vmem:[#allocation11 + $0x298] sm:$0xff]
          %v1419 = vld [vmem:[#allocation11 + $0x2a0] sm:$0xff]
          %v1420 = vld [vmem:[#allocation11 + $0x2a8] sm:$0xff]
          %v1421 = vld [vmem:[#allocation11 + $0x2b0] sm:$0xff]
          %v1422 = vld [vmem:[#allocation11 + $0x2b8] sm:$0xff]
          %v1423 = vld [vmem:[#allocation11 + $0x2c0] sm:$0xff]
          %v1424 = vld [vmem:[#allocation11 + $0x2c8] sm:$0xff]
          %v1425 = vld [vmem:[#allocation11 + $0x2d0] sm:$0xff]
          %v1426 = vld [vmem:[#allocation11 + $0x2d8] sm:$0xff]
          %v1427 = vld [vmem:[#allocation11 + $0x2e0] sm:$0xff]
          %v1428 = vld [vmem:[#allocation11 + $0x2e8] sm:$0xff]
          %v1429 = vld [vmem:[#allocation11 + $0x2f0] sm:$0xff]
          %v1430 = vld [vmem:[#allocation11 + $0x2f8] sm:$0xff]
          %v1432 = vlaneseq
          %v1433 = vshrl.u32 %v1432, 7
          %v1434 = vsub.s32 0, %v1433
          %v1435 = vrot.slane %v1315, %v1434
          %v1436 = vlaneseq
          %v1437 = vshrl.u32 %v1436, 7
          %v1438 = vsub.s32 1, %v1437
          %v1439 = vrot.slane %v1315, %v1438
          %v1440 = vlaneseq
          %v1441 = vshrl.u32 %v1440, 7
          %v1442 = vsub.s32 2, %v1441
          %v1443 = vrot.slane %v1315, %v1442
          %v1444 = vlaneseq
          %v1445 = vshrl.u32 %v1444, 7
          %v1446 = vsub.s32 3, %v1445
          %v1447 = vrot.slane %v1315, %v1446
          %v1448 = vlaneseq
          %v1449 = vshrl.u32 %v1448, 7
          %v1450 = vsub.s32 4, %v1449
          %v1451 = vrot.slane %v1315, %v1450
          %v1473 = vunpack.c.l.b16 %v1319
          %v1474 = vunpack.c.h.b16 %v1319
          %v1475 = vunpack.c.l.b16 %v1320
          %v1476 = vunpack.c.h.b16 %v1320
          %v1477 = vunpack.c.l.b16 %v1321
          %v1478 = vunpack.c.h.b16 %v1321
          %v1479 = vunpack.c.l.b16 %v1322
          %v1480 = vunpack.c.h.b16 %v1322
          %v1481 = vunpack.c.l.b16 %v1323
          %v1482 = vunpack.c.h.b16 %v1323
          %v1483 = vunpack.c.l.b16 %v1324
          %v1484 = vunpack.c.h.b16 %v1324
          %v1485 = vunpack.c.l.b16 %v1325
          %v1486 = vunpack.c.h.b16 %v1325
          %v1487 = vunpack.c.l.b16 %v1326
          %v1488 = vunpack.c.h.b16 %v1326
          %v1489 = vunpack.c.l.b16 %v1327
          %v1490 = vunpack.c.h.b16 %v1327
          %v1491 = vunpack.c.l.b16 %v1328
          %v1492 = vunpack.c.h.b16 %v1328
          %v1493 = vunpack.c.l.b16 %v1329
          %v1494 = vunpack.c.h.b16 %v1329
          %v1495 = vunpack.c.l.b16 %v1330
          %v1496 = vunpack.c.h.b16 %v1330
          %v1497 = vunpack.c.l.b16 %v1331
          %v1498 = vunpack.c.h.b16 %v1331
          %v1499 = vunpack.c.l.b16 %v1332
          %v1500 = vunpack.c.h.b16 %v1332
          %v1501 = vunpack.c.l.b16 %v1333
          %v1502 = vunpack.c.h.b16 %v1333
          %v1503 = vunpack.c.l.b16 %v1334
          %v1504 = vunpack.c.h.b16 %v1334
          %v1505 = vpack.c.b16 %v1475, %v1473
          %v1506 = vpack.c.b16 %v1476, %v1474
          %v1507 = vpack.c.b16 %v1479, %v1477
          %v1508 = vpack.c.b16 %v1480, %v1478
          %v1509 = vpack.c.b16 %v1483, %v1481
          %v1510 = vpack.c.b16 %v1484, %v1482
          %v1511 = vpack.c.b16 %v1487, %v1485
          %v1512 = vpack.c.b16 %v1488, %v1486
          %v1513 = vpack.c.b16 %v1491, %v1489
          %v1514 = vpack.c.b16 %v1492, %v1490
          %v1515 = vpack.c.b16 %v1495, %v1493
          %v1516 = vpack.c.b16 %v1496, %v1494
          %v1517 = vpack.c.b16 %v1499, %v1497
          %v1518 = vpack.c.b16 %v1500, %v1498
          %v1519 = vpack.c.b16 %v1503, %v1501
          %v1520 = vpack.c.b16 %v1504, %v1502
          %v1633 = vunpack.c.l.b16 %v1335
          %v1634 = vunpack.c.h.b16 %v1335
          %v1635 = vunpack.c.l.b16 %v1336
          %v1636 = vunpack.c.h.b16 %v1336
          %v1637 = vunpack.c.l.b16 %v1337
          %v1638 = vunpack.c.h.b16 %v1337
          %v1639 = vunpack.c.l.b16 %v1338
          %v1640 = vunpack.c.h.b16 %v1338
          %v1641 = vunpack.c.l.b16 %v1339
          %v1642 = vunpack.c.h.b16 %v1339
          %v1643 = vunpack.c.l.b16 %v1340
          %v1644 = vunpack.c.h.b16 %v1340
          %v1645 = vunpack.c.l.b16 %v1341
          %v1646 = vunpack.c.h.b16 %v1341
          %v1647 = vunpack.c.l.b16 %v1342
          %v1648 = vunpack.c.h.b16 %v1342
          %v1649 = vunpack.c.l.b16 %v1343
          %v1650 = vunpack.c.h.b16 %v1343
          %v1651 = vunpack.c.l.b16 %v1344
          %v1652 = vunpack.c.h.b16 %v1344
          %v1653 = vunpack.c.l.b16 %v1345
          %v1654 = vunpack.c.h.b16 %v1345
          %v1655 = vunpack.c.l.b16 %v1346
          %v1656 = vunpack.c.h.b16 %v1346
          %v1657 = vunpack.c.l.b16 %v1347
          %v1658 = vunpack.c.h.b16 %v1347
          %v1659 = vunpack.c.l.b16 %v1348
          %v1660 = vunpack.c.h.b16 %v1348
          %v1661 = vunpack.c.l.b16 %v1349
          %v1662 = vunpack.c.h.b16 %v1349
          %v1663 = vunpack.c.l.b16 %v1350
          %v1664 = vunpack.c.h.b16 %v1350
          %v1665 = vunpack.c.l.b16 %v1351
          %v1666 = vunpack.c.h.b16 %v1351
          %v1667 = vunpack.c.l.b16 %v1352
          %v1668 = vunpack.c.h.b16 %v1352
          %v1669 = vunpack.c.l.b16 %v1353
          %v1670 = vunpack.c.h.b16 %v1353
          %v1671 = vunpack.c.l.b16 %v1354
          %v1672 = vunpack.c.h.b16 %v1354
          %v1673 = vunpack.c.l.b16 %v1355
          %v1674 = vunpack.c.h.b16 %v1355
          %v1675 = vunpack.c.l.b16 %v1356
          %v1676 = vunpack.c.h.b16 %v1356
          %v1677 = vunpack.c.l.b16 %v1357
          %v1678 = vunpack.c.h.b16 %v1357
          %v1679 = vunpack.c.l.b16 %v1358
          %v1680 = vunpack.c.h.b16 %v1358
          %v1681 = vunpack.c.l.b16 %v1359
          %v1682 = vunpack.c.h.b16 %v1359
          %v1683 = vunpack.c.l.b16 %v1360
          %v1684 = vunpack.c.h.b16 %v1360
          %v1685 = vunpack.c.l.b16 %v1361
          %v1686 = vunpack.c.h.b16 %v1361
          %v1687 = vunpack.c.l.b16 %v1362
          %v1688 = vunpack.c.h.b16 %v1362
          %v1689 = vunpack.c.l.b16 %v1363
          %v1690 = vunpack.c.h.b16 %v1363
          %v1691 = vunpack.c.l.b16 %v1364
          %v1692 = vunpack.c.h.b16 %v1364
          %v1693 = vunpack.c.l.b16 %v1365
          %v1694 = vunpack.c.h.b16 %v1365
          %v1695 = vunpack.c.l.b16 %v1366
          %v1696 = vunpack.c.h.b16 %v1366
          %v1697 = vunpack.c.l.b16 %v1367
          %v1698 = vunpack.c.h.b16 %v1367
          %v1699 = vunpack.c.l.b16 %v1368
          %v1700 = vunpack.c.h.b16 %v1368
          %v1701 = vunpack.c.l.b16 %v1369
          %v1702 = vunpack.c.h.b16 %v1369
          %v1703 = vunpack.c.l.b16 %v1370
          %v1704 = vunpack.c.h.b16 %v1370
          %v1705 = vunpack.c.l.b16 %v1371
          %v1706 = vunpack.c.h.b16 %v1371
          %v1707 = vunpack.c.l.b16 %v1372
          %v1708 = vunpack.c.h.b16 %v1372
          %v1709 = vunpack.c.l.b16 %v1373
          %v1710 = vunpack.c.h.b16 %v1373
          %v1711 = vunpack.c.l.b16 %v1374
          %v1712 = vunpack.c.h.b16 %v1374
          %v1713 = vunpack.c.l.b16 %v1375
          %v1714 = vunpack.c.h.b16 %v1375
          %v1715 = vunpack.c.l.b16 %v1376
          %v1716 = vunpack.c.h.b16 %v1376
          %v1717 = vunpack.c.l.b16 %v1377
          %v1718 = vunpack.c.h.b16 %v1377
          %v1719 = vunpack.c.l.b16 %v1378
          %v1720 = vunpack.c.h.b16 %v1378
          %v1721 = vunpack.c.l.b16 %v1379
          %v1722 = vunpack.c.h.b16 %v1379
          %v1723 = vunpack.c.l.b16 %v1380
          %v1724 = vunpack.c.h.b16 %v1380
          %v1725 = vunpack.c.l.b16 %v1381
          %v1726 = vunpack.c.h.b16 %v1381
          %v1727 = vunpack.c.l.b16 %v1382
          %v1728 = vunpack.c.h.b16 %v1382
          %v1729 = vunpack.c.l.b16 %v1383
          %v1730 = vunpack.c.h.b16 %v1383
          %v1731 = vunpack.c.l.b16 %v1384
          %v1732 = vunpack.c.h.b16 %v1384
          %v1733 = vunpack.c.l.b16 %v1385
          %v1734 = vunpack.c.h.b16 %v1385
          %v1735 = vunpack.c.l.b16 %v1386
          %v1736 = vunpack.c.h.b16 %v1386
          %v1737 = vunpack.c.l.b16 %v1387
          %v1738 = vunpack.c.h.b16 %v1387
          %v1739 = vunpack.c.l.b16 %v1388
          %v1740 = vunpack.c.h.b16 %v1388
          %v1741 = vunpack.c.l.b16 %v1389
          %v1742 = vunpack.c.h.b16 %v1389
          %v1743 = vunpack.c.l.b16 %v1390
          %v1744 = vunpack.c.h.b16 %v1390
          %v1745 = vunpack.c.l.b16 %v1391
          %v1746 = vunpack.c.h.b16 %v1391
          %v1747 = vunpack.c.l.b16 %v1392
          %v1748 = vunpack.c.h.b16 %v1392
          %v1749 = vunpack.c.l.b16 %v1393
          %v1750 = vunpack.c.h.b16 %v1393
          %v1751 = vunpack.c.l.b16 %v1394
          %v1752 = vunpack.c.h.b16 %v1394
          %v1753 = vunpack.c.l.b16 %v1395
          %v1754 = vunpack.c.h.b16 %v1395
          %v1755 = vunpack.c.l.b16 %v1396
          %v1756 = vunpack.c.h.b16 %v1396
          %v1757 = vunpack.c.l.b16 %v1397
          %v1758 = vunpack.c.h.b16 %v1397
          %v1759 = vunpack.c.l.b16 %v1398
          %v1760 = vunpack.c.h.b16 %v1398
          %v1761 = vunpack.c.l.b16 %v1399
          %v1762 = vunpack.c.h.b16 %v1399
          %v1763 = vunpack.c.l.b16 %v1400
          %v1764 = vunpack.c.h.b16 %v1400
          %v1765 = vunpack.c.l.b16 %v1401
          %v1766 = vunpack.c.h.b16 %v1401
          %v1767 = vunpack.c.l.b16 %v1402
          %v1768 = vunpack.c.h.b16 %v1402
          %v1769 = vunpack.c.l.b16 %v1403
          %v1770 = vunpack.c.h.b16 %v1403
          %v1771 = vunpack.c.l.b16 %v1404
          %v1772 = vunpack.c.h.b16 %v1404
          %v1773 = vunpack.c.l.b16 %v1405
          %v1774 = vunpack.c.h.b16 %v1405
          %v1775 = vunpack.c.l.b16 %v1406
          %v1776 = vunpack.c.h.b16 %v1406
          %v1777 = vunpack.c.l.b16 %v1407
          %v1778 = vunpack.c.h.b16 %v1407
          %v1779 = vunpack.c.l.b16 %v1408
          %v1780 = vunpack.c.h.b16 %v1408
          %v1781 = vunpack.c.l.b16 %v1409
          %v1782 = vunpack.c.h.b16 %v1409
          %v1783 = vunpack.c.l.b16 %v1410
          %v1784 = vunpack.c.h.b16 %v1410
          %v1785 = vunpack.c.l.b16 %v1411
          %v1786 = vunpack.c.h.b16 %v1411
          %v1787 = vunpack.c.l.b16 %v1412
          %v1788 = vunpack.c.h.b16 %v1412
          %v1789 = vunpack.c.l.b16 %v1413
          %v1790 = vunpack.c.h.b16 %v1413
          %v1791 = vunpack.c.l.b16 %v1414
          %v1792 = vunpack.c.h.b16 %v1414
          %v1793 = vunpack.c.l.b16 %v1415
          %v1794 = vunpack.c.h.b16 %v1415
          %v1795 = vunpack.c.l.b16 %v1416
          %v1796 = vunpack.c.h.b16 %v1416
          %v1797 = vunpack.c.l.b16 %v1417
          %v1798 = vunpack.c.h.b16 %v1417
          %v1799 = vunpack.c.l.b16 %v1418
          %v1800 = vunpack.c.h.b16 %v1418
          %v1801 = vunpack.c.l.b16 %v1419
          %v1802 = vunpack.c.h.b16 %v1419
          %v1803 = vunpack.c.l.b16 %v1420
          %v1804 = vunpack.c.h.b16 %v1420
          %v1805 = vunpack.c.l.b16 %v1421
          %v1806 = vunpack.c.h.b16 %v1421
          %v1807 = vunpack.c.l.b16 %v1422
          %v1808 = vunpack.c.h.b16 %v1422
          %v1809 = vunpack.c.l.b16 %v1423
          %v1810 = vunpack.c.h.b16 %v1423
          %v1811 = vunpack.c.l.b16 %v1424
          %v1812 = vunpack.c.h.b16 %v1424
          %v1813 = vunpack.c.l.b16 %v1425
          %v1814 = vunpack.c.h.b16 %v1425
          %v1815 = vunpack.c.l.b16 %v1426
          %v1816 = vunpack.c.h.b16 %v1426
          %v1817 = vunpack.c.l.b16 %v1427
          %v1818 = vunpack.c.h.b16 %v1427
          %v1819 = vunpack.c.l.b16 %v1428
          %v1820 = vunpack.c.h.b16 %v1428
          %v1821 = vunpack.c.l.b16 %v1429
          %v1822 = vunpack.c.h.b16 %v1429
          %v1823 = vunpack.c.l.b16 %v1430
          %v1824 = vunpack.c.h.b16 %v1430
          %v1825 = vpack.c.b16 %v1639, %v1633
          %v1826 = vpack.c.b16 %v1640, %v1634
          %v1827 = vpack.c.b16 %v1641, %v1635
          %v1828 = vpack.c.b16 %v1642, %v1636
          %v1829 = vpack.c.b16 %v1643, %v1637
          %v1830 = vpack.c.b16 %v1644, %v1638
          %v1831 = vpack.c.b16 %v1651, %v1645
          %v1832 = vpack.c.b16 %v1652, %v1646
          %v1833 = vpack.c.b16 %v1653, %v1647
          %v1834 = vpack.c.b16 %v1654, %v1648
          %v1835 = vpack.c.b16 %v1655, %v1649
          %v1836 = vpack.c.b16 %v1656, %v1650
          %v1837 = vpack.c.b16 %v1663, %v1657
          %v1838 = vpack.c.b16 %v1664, %v1658
          %v1839 = vpack.c.b16 %v1665, %v1659
          %v1840 = vpack.c.b16 %v1666, %v1660
          %v1841 = vpack.c.b16 %v1667, %v1661
          %v1842 = vpack.c.b16 %v1668, %v1662
          %v1843 = vpack.c.b16 %v1675, %v1669
          %v1844 = vpack.c.b16 %v1676, %v1670
          %v1845 = vpack.c.b16 %v1677, %v1671
          %v1846 = vpack.c.b16 %v1678, %v1672
          %v1847 = vpack.c.b16 %v1679, %v1673
          %v1848 = vpack.c.b16 %v1680, %v1674
          %v1849 = vpack.c.b16 %v1687, %v1681
          %v1850 = vpack.c.b16 %v1688, %v1682
          %v1851 = vpack.c.b16 %v1689, %v1683
          %v1852 = vpack.c.b16 %v1690, %v1684
          %v1853 = vpack.c.b16 %v1691, %v1685
          %v1854 = vpack.c.b16 %v1692, %v1686
          %v1855 = vpack.c.b16 %v1699, %v1693
          %v1856 = vpack.c.b16 %v1700, %v1694
          %v1857 = vpack.c.b16 %v1701, %v1695
          %v1858 = vpack.c.b16 %v1702, %v1696
          %v1859 = vpack.c.b16 %v1703, %v1697
          %v1860 = vpack.c.b16 %v1704, %v1698
          %v1861 = vpack.c.b16 %v1711, %v1705
          %v1862 = vpack.c.b16 %v1712, %v1706
          %v1863 = vpack.c.b16 %v1713, %v1707
          %v1864 = vpack.c.b16 %v1714, %v1708
          %v1865 = vpack.c.b16 %v1715, %v1709
          %v1866 = vpack.c.b16 %v1716, %v1710
          %v1867 = vpack.c.b16 %v1723, %v1717
          %v1868 = vpack.c.b16 %v1724, %v1718
          %v1869 = vpack.c.b16 %v1725, %v1719
          %v1870 = vpack.c.b16 %v1726, %v1720
          %v1871 = vpack.c.b16 %v1727, %v1721
          %v1872 = vpack.c.b16 %v1728, %v1722
          %v1873 = vpack.c.b16 %v1735, %v1729
          %v1874 = vpack.c.b16 %v1736, %v1730
          %v1875 = vpack.c.b16 %v1737, %v1731
          %v1876 = vpack.c.b16 %v1738, %v1732
          %v1877 = vpack.c.b16 %v1739, %v1733
          %v1878 = vpack.c.b16 %v1740, %v1734
          %v1879 = vpack.c.b16 %v1747, %v1741
          %v1880 = vpack.c.b16 %v1748, %v1742
          %v1881 = vpack.c.b16 %v1749, %v1743
          %v1882 = vpack.c.b16 %v1750, %v1744
          %v1883 = vpack.c.b16 %v1751, %v1745
          %v1884 = vpack.c.b16 %v1752, %v1746
          %v1885 = vpack.c.b16 %v1759, %v1753
          %v1886 = vpack.c.b16 %v1760, %v1754
          %v1887 = vpack.c.b16 %v1761, %v1755
          %v1888 = vpack.c.b16 %v1762, %v1756
          %v1889 = vpack.c.b16 %v1763, %v1757
          %v1890 = vpack.c.b16 %v1764, %v1758
          %v1891 = vpack.c.b16 %v1771, %v1765
          %v1892 = vpack.c.b16 %v1772, %v1766
          %v1893 = vpack.c.b16 %v1773, %v1767
          %v1894 = vpack.c.b16 %v1774, %v1768
          %v1895 = vpack.c.b16 %v1775, %v1769
          %v1896 = vpack.c.b16 %v1776, %v1770
          %v1897 = vpack.c.b16 %v1783, %v1777
          %v1898 = vpack.c.b16 %v1784, %v1778
          %v1899 = vpack.c.b16 %v1785, %v1779
          %v1900 = vpack.c.b16 %v1786, %v1780
          %v1901 = vpack.c.b16 %v1787, %v1781
          %v1902 = vpack.c.b16 %v1788, %v1782
          %v1903 = vpack.c.b16 %v1795, %v1789
          %v1904 = vpack.c.b16 %v1796, %v1790
          %v1905 = vpack.c.b16 %v1797, %v1791
          %v1906 = vpack.c.b16 %v1798, %v1792
          %v1907 = vpack.c.b16 %v1799, %v1793
          %v1908 = vpack.c.b16 %v1800, %v1794
          %v1909 = vpack.c.b16 %v1807, %v1801
          %v1910 = vpack.c.b16 %v1808, %v1802
          %v1911 = vpack.c.b16 %v1809, %v1803
          %v1912 = vpack.c.b16 %v1810, %v1804
          %v1913 = vpack.c.b16 %v1811, %v1805
          %v1914 = vpack.c.b16 %v1812, %v1806
          %v1915 = vpack.c.b16 %v1819, %v1813
          %v1916 = vpack.c.b16 %v1820, %v1814
          %v1917 = vpack.c.b16 %v1821, %v1815
          %v1918 = vpack.c.b16 %v1822, %v1816
          %v1919 = vpack.c.b16 %v1823, %v1817
          %v1920 = vpack.c.b16 %v1824, %v1818
          %2017 = vmatprep.subr.bf16.mxu0 %v1826
          %2018 = vmatpush1.bf16.msra.mxu0 %v1825
          %2019 = vmatprep.subr.bf16.mxu0 %v1832
          %2020 = vmatpush1.bf16.msra.mxu0 %v1831
          %2021 = vmatprep.subr.bf16.mxu0 %v1838
          %2022 = vmatpush1.bf16.msra.mxu0 %v1837
          %2023 = vmatprep.subr.bf16.mxu0 %v1844
          %2024 = vmatpush1.bf16.msra.mxu0 %v1843
          %2025 = vmatprep.subr.bf16.mxu0 %v1850
          %2026 = vmatpush1.bf16.msra.mxu0 %v1849
          %2027 = vmatprep.subr.bf16.mxu0 %v1856
          %2028 = vmatpush1.bf16.msra.mxu0 %v1855
          %2029 = vmatprep.subr.bf16.mxu0 %v1862
          %2030 = vmatpush1.bf16.msra.mxu0 %v1861
          %2031 = vmatprep.subr.bf16.mxu0 %v1868
          %2032 = vmatpush1.bf16.msra.mxu0 %v1867
          %2033 = vmatprep.subr.bf16.mxu0 %v1874
          %2034 = vmatpush1.bf16.msra.mxu0 %v1873
          %2035 = vmatprep.subr.bf16.mxu0 %v1880
          %2036 = vmatpush1.bf16.msra.mxu0 %v1879
          %2037 = vmatprep.subr.bf16.mxu0 %v1886
          %2038 = vmatpush1.bf16.msra.mxu0 %v1885
          %2039 = vmatprep.subr.bf16.mxu0 %v1892
          %2040 = vmatpush1.bf16.msra.mxu0 %v1891
          %2041 = vmatprep.subr.bf16.mxu0 %v1898
          %2042 = vmatpush1.bf16.msra.mxu0 %v1897
          %2043 = vmatprep.subr.bf16.mxu0 %v1904
          %2044 = vmatpush1.bf16.msra.mxu0 %v1903
          %2045 = vmatprep.subr.bf16.mxu0 %v1910
          %2046 = vmatpush1.bf16.msra.mxu0 %v1909
          %2047 = vmatprep.subr.bf16.mxu0 %v1916
          %2048 = vmatpush1.bf16.msra.mxu0 %v1915
          %2049 = vmatprep.mubr.bf16.mxu0 %v1506
          %2050 = vmatmul.mubr.bf16.gmra.mrb[0].mxu0 %v1505
          %v2051 = vpop.f32.mrb[0].mxu0
          %v2052 = vadd.f32 %v1435, %v2051
          %v2053 = vpop.f32.mrb[0].mxu0
          %v2054 = vadd.f32 %v1439, %v2053
          %v2055 = vpop.f32.mrb[0].mxu0
          %v2056 = vadd.f32 %v1435, %v2055
          %v2057 = vpop.f32.mrb[0].mxu0
          %v2058 = vadd.f32 %v1439, %v2057
          %2059 = vmatprep.mubr.bf16.mxu0 %v1508
          %2060 = vmatmul.mubr.bf16.gmra.mrb[0].mxu0 %v1507
          %v2061 = vpop.f32.mrb[0].mxu0
          %v2062 = vadd.f32 %v1435, %v2061
          %v2063 = vpop.f32.mrb[0].mxu0
          %v2064 = vadd.f32 %v1439, %v2063
          %v2065 = vpop.f32.mrb[0].mxu0
          %v2066 = vadd.f32 %v1435, %v2065
          %v2067 = vpop.f32.mrb[0].mxu0
          %v2068 = vadd.f32 %v1439, %v2067
          %2069 = vmatprep.mubr.bf16.mxu0 %v1510
          %2070 = vmatmul.mubr.bf16.gmra.mrb[0].mxu0 %v1509
          %v2071 = vpop.f32.mrb[0].mxu0
          %v2072 = vadd.f32 %v1435, %v2071
          %v2073 = vpop.f32.mrb[0].mxu0
          %v2074 = vadd.f32 %v1439, %v2073
          %v2075 = vpop.f32.mrb[0].mxu0
          %v2076 = vadd.f32 %v1435, %v2075
          %v2077 = vpop.f32.mrb[0].mxu0
          %v2078 = vadd.f32 %v1439, %v2077
          %2079 = vmatprep.mubr.bf16.mxu0 %v1512
          %2080 = vmatmul.mubr.bf16.gmra.mrb[0].mxu0 %v1511
          %v2081 = vpop.f32.mrb[0].mxu0
          %v2082 = vadd.f32 %v1435, %v2081
          %v2083 = vpop.f32.mrb[0].mxu0
          %v2084 = vadd.f32 %v1439, %v2083
          %v2085 = vpop.f32.mrb[0].mxu0
          %v2086 = vadd.f32 %v1435, %v2085
          %v2087 = vpop.f32.mrb[0].mxu0
          %v2088 = vadd.f32 %v1439, %v2087
          %2089 = vmatprep.mubr.bf16.mxu0 %v1514
          %2090 = vmatmul.mubr.bf16.gmra.mrb[0].mxu0 %v1513
          %v2091 = vpop.f32.mrb[0].mxu0
          %v2092 = vadd.f32 %v1435, %v2091
          %v2093 = vpop.f32.mrb[0].mxu0
          %v2094 = vadd.f32 %v1439, %v2093
          %v2095 = vpop.f32.mrb[0].mxu0
          %v2096 = vadd.f32 %v1435, %v2095
          %v2097 = vpop.f32.mrb[0].mxu0
          %v2098 = vadd.f32 %v1439, %v2097
          %2099 = vmatprep.mubr.bf16.mxu0 %v1516
          %2100 = vmatmul.mubr.bf16.gmra.mrb[0].mxu0 %v1515
          %v2101 = vpop.f32.mrb[0].mxu0
          %v2102 = vadd.f32 %v1435, %v2101
          %v2103 = vpop.f32.mrb[0].mxu0
          %v2104 = vadd.f32 %v1439, %v2103
          %v2105 = vpop.f32.mrb[0].mxu0
          %v2106 = vadd.f32 %v1435, %v2105
          %v2107 = vpop.f32.mrb[0].mxu0
          %v2108 = vadd.f32 %v1439, %v2107
          %2109 = vmatprep.mubr.bf16.mxu0 %v1518
          %2110 = vmatmul.mubr.bf16.gmra.mrb[0].mxu0 %v1517
          %v2111 = vpop.f32.mrb[0].mxu0
          %v2112 = vadd.f32 %v1435, %v2111
          %v2113 = vpop.f32.mrb[0].mxu0
          %v2114 = vadd.f32 %v1439, %v2113
          %v2115 = vpop.f32.mrb[0].mxu0
          %v2116 = vadd.f32 %v1435, %v2115
          %v2117 = vpop.f32.mrb[0].mxu0
          %v2118 = vadd.f32 %v1439, %v2117
          %2119 = vmatprep.mubr.bf16.mxu0 %v1520
          %2120 = vmatmul.mubr.bf16.gmra.mrb[0].mxu0 %v1519
          %v2121 = vpop.f32.mrb[0].mxu0
          %v2122 = vadd.f32 %v1435, %v2121
          %v2123 = vpop.f32.mrb[0].mxu0
          %v2124 = vadd.f32 %v1439, %v2123
          %v2125 = vpop.f32.mrb[0].mxu0
          %v2126 = vadd.f32 %v1435, %v2125
          %v2127 = vpop.f32.mrb[0].mxu0
          %v2128 = vadd.f32 %v1439, %v2127
          %2129 = vdwg.mxu0
          %2130 = vmatprep.subr.bf16.mxu0 %v1828
          %2131 = vmatpush1.bf16.msra.mxu0 %v1827
          %2132 = vmatprep.subr.bf16.mxu0 %v1834
          %2133 = vmatpush1.bf16.msra.mxu0 %v1833
          %2134 = vmatprep.subr.bf16.mxu0 %v1840
          %2135 = vmatpush1.bf16.msra.mxu0 %v1839
          %2136 = vmatprep.subr.bf16.mxu0 %v1846
          %2137 = vmatpush1.bf16.msra.mxu0 %v1845
          %2138 = vmatprep.subr.bf16.mxu0 %v1852
          %2139 = vmatpush1.bf16.msra.mxu0 %v1851
          %2140 = vmatprep.subr.bf16.mxu0 %v1858
          %2141 = vmatpush1.bf16.msra.mxu0 %v1857
          %2142 = vmatprep.subr.bf16.mxu0 %v1864
          %2143 = vmatpush1.bf16.msra.mxu0 %v1863
          %2144 = vmatprep.subr.bf16.mxu0 %v1870
          %2145 = vmatpush1.bf16.msra.mxu0 %v1869
          %2146 = vmatprep.subr.bf16.mxu0 %v1876
          %2147 = vmatpush1.bf16.msra.mxu0 %v1875
          %2148 = vmatprep.subr.bf16.mxu0 %v1882
          %2149 = vmatpush1.bf16.msra.mxu0 %v1881
          %2150 = vmatprep.subr.bf16.mxu0 %v1888
          %2151 = vmatpush1.bf16.msra.mxu0 %v1887
          %2152 = vmatprep.subr.bf16.mxu0 %v1894
          %2153 = vmatpush1.bf16.msra.mxu0 %v1893
          %2154 = vmatprep.subr.bf16.mxu0 %v1900
          %2155 = vmatpush1.bf16.msra.mxu0 %v1899
          %2156 = vmatprep.subr.bf16.mxu0 %v1906
          %2157 = vmatpush1.bf16.msra.mxu0 %v1905
          %2158 = vmatprep.subr.bf16.mxu0 %v1912
          %2159 = vmatpush1.bf16.msra.mxu0 %v1911
          %2160 = vmatprep.subr.bf16.mxu0 %v1918
          %2161 = vmatpush1.bf16.msra.mxu0 %v1917
          %2162 = vmatprep.mubr.bf16.mxu0 %v1506
          %2163 = vmatmul.mubr.bf16.gmra.mrb[0].mxu0 %v1505
          %v2164 = vpop.f32.mrb[0].mxu0
          %v2165 = vadd.f32 %v1443, %v2164
          %v2166 = vpop.f32.mrb[0].mxu0
          %v2167 = vadd.f32 %v1447, %v2166
          %v2168 = vpop.f32.mrb[0].mxu0
          %v2169 = vadd.f32 %v1443, %v2168
          %v2170 = vpop.f32.mrb[0].mxu0
          %v2171 = vadd.f32 %v1447, %v2170
          %2172 = vmatprep.mubr.bf16.mxu0 %v1508
          %2173 = vmatmul.mubr.bf16.gmra.mrb[0].mxu0 %v1507
          %v2174 = vpop.f32.mrb[0].mxu0
          %v2175 = vadd.f32 %v1443, %v2174
          %v2176 = vpop.f32.mrb[0].mxu0
          %v2177 = vadd.f32 %v1447, %v2176
          %v2178 = vpop.f32.mrb[0].mxu0
          %v2179 = vadd.f32 %v1443, %v2178
          %v2180 = vpop.f32.mrb[0].mxu0
          %v2181 = vadd.f32 %v1447, %v2180
          %2182 = vmatprep.mubr.bf16.mxu0 %v1510
          %2183 = vmatmul.mubr.bf16.gmra.mrb[0].mxu0 %v1509
          %v2184 = vpop.f32.mrb[0].mxu0
          %v2185 = vadd.f32 %v1443, %v2184
          %v2186 = vpop.f32.mrb[0].mxu0
          %v2187 = vadd.f32 %v1447, %v2186
          %v2188 = vpop.f32.mrb[0].mxu0
          %v2189 = vadd.f32 %v1443, %v2188
          %v2190 = vpop.f32.mrb[0].mxu0
          %v2191 = vadd.f32 %v1447, %v2190
          %2192 = vmatprep.mubr.bf16.mxu0 %v1512
          %2193 = vmatmul.mubr.bf16.gmra.mrb[0].mxu0 %v1511
          %v2194 = vpop.f32.mrb[0].mxu0
          %v2195 = vadd.f32 %v1443, %v2194
          %v2196 = vpop.f32.mrb[0].mxu0
          %v2197 = vadd.f32 %v1447, %v2196
          %v2198 = vpop.f32.mrb[0].mxu0
          %v2199 = vadd.f32 %v1443, %v2198
          %v2200 = vpop.f32.mrb[0].mxu0
          %v2201 = vadd.f32 %v1447, %v2200
          %2202 = vmatprep.mubr.bf16.mxu0 %v1514
          %2203 = vmatmul.mubr.bf16.gmra.mrb[0].mxu0 %v1513
          %v2204 = vpop.f32.mrb[0].mxu0
          %v2205 = vadd.f32 %v1443, %v2204
          %v2206 = vpop.f32.mrb[0].mxu0
          %v2207 = vadd.f32 %v1447, %v2206
          %v2208 = vpop.f32.mrb[0].mxu0
          %v2209 = vadd.f32 %v1443, %v2208
          %v2210 = vpop.f32.mrb[0].mxu0
          %v2211 = vadd.f32 %v1447, %v2210
          %2212 = vmatprep.mubr.bf16.mxu0 %v1516
          %2213 = vmatmul.mubr.bf16.gmra.mrb[0].mxu0 %v1515
          %v2214 = vpop.f32.mrb[0].mxu0
          %v2215 = vadd.f32 %v1443, %v2214
          %v2216 = vpop.f32.mrb[0].mxu0
          %v2217 = vadd.f32 %v1447, %v2216
          %v2218 = vpop.f32.mrb[0].mxu0
          %v2219 = vadd.f32 %v1443, %v2218
          %v2220 = vpop.f32.mrb[0].mxu0
          %v2221 = vadd.f32 %v1447, %v2220
          %2222 = vmatprep.mubr.bf16.mxu0 %v1518
          %2223 = vmatmul.mubr.bf16.gmra.mrb[0].mxu0 %v1517
          %v2224 = vpop.f32.mrb[0].mxu0
          %v2225 = vadd.f32 %v1443, %v2224
          %v2226 = vpop.f32.mrb[0].mxu0
          %v2227 = vadd.f32 %v1447, %v2226
          %v2228 = vpop.f32.mrb[0].mxu0
          %v2229 = vadd.f32 %v1443, %v2228
          %v2230 = vpop.f32.mrb[0].mxu0
          %v2231 = vadd.f32 %v1447, %v2230
          %2232 = vmatprep.mubr.bf16.mxu0 %v1520
          %2233 = vmatmul.mubr.bf16.gmra.mrb[0].mxu0 %v1519
          %v2234 = vpop.f32.mrb[0].mxu0
          %v2235 = vadd.f32 %v1443, %v2234
          %v2236 = vpop.f32.mrb[0].mxu0
          %v2237 = vadd.f32 %v1447, %v2236
          %v2238 = vpop.f32.mrb[0].mxu0
          %v2239 = vadd.f32 %v1443, %v2238
          %v2240 = vpop.f32.mrb[0].mxu0
          %v2241 = vadd.f32 %v1447, %v2240
          %2242 = vdwg.mxu0
          %2243 = vmatprep.subr.bf16.mxu0 %v1830
          %2244 = vmatpush1.bf16.msra.mxu0 %v1829
          %2245 = vmatprep.subr.bf16.mxu0 %v1836
          %2246 = vmatpush1.bf16.msra.mxu0 %v1835
          %2247 = vmatprep.subr.bf16.mxu0 %v1842
          %2248 = vmatpush1.bf16.msra.mxu0 %v1841
          %2249 = vmatprep.subr.bf16.mxu0 %v1848
          %2250 = vmatpush1.bf16.msra.mxu0 %v1847
          %2251 = vmatprep.subr.bf16.mxu0 %v1854
          %2252 = vmatpush1.bf16.msra.mxu0 %v1853
          %2253 = vmatprep.subr.bf16.mxu0 %v1860
          %2254 = vmatpush1.bf16.msra.mxu0 %v1859
          %2255 = vmatprep.subr.bf16.mxu0 %v1866
          %2256 = vmatpush1.bf16.msra.mxu0 %v1865
          %2257 = vmatprep.subr.bf16.mxu0 %v1872
          %2258 = vmatpush1.bf16.msra.mxu0 %v1871
          %2259 = vmatprep.subr.bf16.mxu0 %v1878
          %2260 = vmatpush1.bf16.msra.mxu0 %v1877
          %2261 = vmatprep.subr.bf16.mxu0 %v1884
          %2262 = vmatpush1.bf16.msra.mxu0 %v1883
          %2263 = vmatprep.subr.bf16.mxu0 %v1890
          %2264 = vmatpush1.bf16.msra.mxu0 %v1889
          %2265 = vmatprep.subr.bf16.mxu0 %v1896
          %2266 = vmatpush1.bf16.msra.mxu0 %v1895
          %2267 = vmatprep.subr.bf16.mxu0 %v1902
          %2268 = vmatpush1.bf16.msra.mxu0 %v1901
          %2269 = vmatprep.subr.bf16.mxu0 %v1908
          %2270 = vmatpush1.bf16.msra.mxu0 %v1907
          %2271 = vmatprep.subr.bf16.mxu0 %v1914
          %2272 = vmatpush1.bf16.msra.mxu0 %v1913
          %2273 = vmatprep.subr.bf16.mxu0 %v1920
          %2274 = vmatpush1.bf16.msra.mxu0 %v1919
          %2275 = vmatprep.mubr.bf16.mxu0 %v1506
          %2276 = vmatmul.mubr.bf16.gmra.mrb[0].mxu0 %v1505
          %v2277 = vpop.f32.mrb[0].mxu0
          %v2278 = vadd.f32 %v1451, %v2277
          %v2279 = vpop.f32.mrb[0].mxu0
          %v2280 = vpop.f32.mrb[0].mxu0
          %v2281 = vadd.f32 %v1451, %v2280
          %v2282 = vpop.f32.mrb[0].mxu0
          %2283 = vmatprep.mubr.bf16.mxu0 %v1508
          %2284 = vmatmul.mubr.bf16.gmra.mrb[0].mxu0 %v1507
          %v2285 = vpop.f32.mrb[0].mxu0
          %v2286 = vadd.f32 %v1451, %v2285
          %v2287 = vpop.f32.mrb[0].mxu0
          %v2288 = vpop.f32.mrb[0].mxu0
          %v2289 = vadd.f32 %v1451, %v2288
          %v2290 = vpop.f32.mrb[0].mxu0
          %2291 = vmatprep.mubr.bf16.mxu0 %v1510
          %2292 = vmatmul.mubr.bf16.gmra.mrb[0].mxu0 %v1509
          %v2293 = vpop.f32.mrb[0].mxu0
          %v2294 = vadd.f32 %v1451, %v2293
          %v2295 = vpop.f32.mrb[0].mxu0
          %v2296 = vpop.f32.mrb[0].mxu0
          %v2297 = vadd.f32 %v1451, %v2296
          %v2298 = vpop.f32.mrb[0].mxu0
          %2299 = vmatprep.mubr.bf16.mxu0 %v1512
          %2300 = vmatmul.mubr.bf16.gmra.mrb[0].mxu0 %v1511
          %v2301 = vpop.f32.mrb[0].mxu0
          %v2302 = vadd.f32 %v1451, %v2301
          %v2303 = vpop.f32.mrb[0].mxu0
          %v2304 = vpop.f32.mrb[0].mxu0
          %v2305 = vadd.f32 %v1451, %v2304
          %v2306 = vpop.f32.mrb[0].mxu0
          %2307 = vmatprep.mubr.bf16.mxu0 %v1514
          %2308 = vmatmul.mubr.bf16.gmra.mrb[0].mxu0 %v1513
          %v2309 = vpop.f32.mrb[0].mxu0
          %v2310 = vadd.f32 %v1451, %v2309
          %v2311 = vpop.f32.mrb[0].mxu0
          %v2312 = vpop.f32.mrb[0].mxu0
          %v2313 = vadd.f32 %v1451, %v2312
          %v2314 = vpop.f32.mrb[0].mxu0
          %2315 = vmatprep.mubr.bf16.mxu0 %v1516
          %2316 = vmatmul.mubr.bf16.gmra.mrb[0].mxu0 %v1515
          %v2317 = vpop.f32.mrb[0].mxu0
          %v2318 = vadd.f32 %v1451, %v2317
          %v2319 = vpop.f32.mrb[0].mxu0
          %v2320 = vpop.f32.mrb[0].mxu0
          %v2321 = vadd.f32 %v1451, %v2320
          %v2322 = vpop.f32.mrb[0].mxu0
          %2323 = vmatprep.mubr.bf16.mxu0 %v1518
          %2324 = vmatmul.mubr.bf16.gmra.mrb[0].mxu0 %v1517
          %v2325 = vpop.f32.mrb[0].mxu0
          %v2326 = vadd.f32 %v1451, %v2325
          %v2327 = vpop.f32.mrb[0].mxu0
          %v2328 = vpop.f32.mrb[0].mxu0
          %v2329 = vadd.f32 %v1451, %v2328
          %v2330 = vpop.f32.mrb[0].mxu0
          %2331 = vmatprep.mubr.bf16.mxu0 %v1520
          %2332 = vmatmul.mubr.bf16.gmra.mrb[0].mxu0 %v1519
          %v2333 = vpop.f32.mrb[0].mxu0
          %v2334 = vadd.f32 %v1451, %v2333
          %v2335 = vpop.f32.mrb[0].mxu0
          %v2336 = vpop.f32.mrb[0].mxu0
          %v2337 = vadd.f32 %v1451, %v2336
          %v2338 = vpop.f32.mrb[0].mxu0
          %2339 = vdwg.mxu0
          %v2340 = vlaneseq
          %v2341 = vshrl.u32 %v2340, 7
          %v2342 = vsub.s32 0, %v2341
          %v2343 = vrot.slane %v1257, %v2342
          %2345 = vrot.lane.b32.xlu0 %v2343, 127
          %v2346 = vpop.permute.xlu0 %2345
          %v2348 = vadd.f32 %v2278, %v2346
          %v2349 = vadd.f32 %v2281, %v2346
          %v2350 = vadd.f32 %v2286, %v2346
          %v2351 = vadd.f32 %v2289, %v2346
          %v2352 = vadd.f32 %v2294, %v2346
          %v2353 = vadd.f32 %v2297, %v2346
          %v2354 = vadd.f32 %v2302, %v2346
          %v2355 = vadd.f32 %v2305, %v2346
          %v2356 = vadd.f32 %v2310, %v2346
          %v2357 = vadd.f32 %v2313, %v2346
          %v2358 = vadd.f32 %v2318, %v2346
          %v2359 = vadd.f32 %v2321, %v2346
          %v2360 = vadd.f32 %v2326, %v2346
          %v2361 = vadd.f32 %v2329, %v2346
          %v2362 = vadd.f32 %v2334, %v2346
          %v2363 = vadd.f32 %v2337, %v2346
          %v2364 = vxor.u32 %v2348, 2147483648
          %v2365 = vxor.u32 %v2349, 2147483648
          %v2366 = vxor.u32 %v2350, 2147483648
          %v2367 = vxor.u32 %v2351, 2147483648
          %v2368 = vxor.u32 %v2352, 2147483648
          %v2369 = vxor.u32 %v2353, 2147483648
          %v2370 = vxor.u32 %v2354, 2147483648
          %v2371 = vxor.u32 %v2355, 2147483648
          %v2372 = vxor.u32 %v2356, 2147483648
          %v2373 = vxor.u32 %v2357, 2147483648
          %v2374 = vxor.u32 %v2358, 2147483648
          %v2375 = vxor.u32 %v2359, 2147483648
          %v2376 = vxor.u32 %v2360, 2147483648
          %v2377 = vxor.u32 %v2361, 2147483648
          %v2378 = vxor.u32 %v2362, 2147483648
          %v2379 = vxor.u32 %v2363, 2147483648
          %v2380 = vmul.f32 %v2364, 1.442695
          %v2381 = vpow.pop %v2380
          %v2382 = vmul.f32 %v2365, 1.442695
          %v2383 = vpow.pop %v2382
          %v2384 = vmul.f32 %v2366, 1.442695
          %v2385 = vpow.pop %v2384
          %v2386 = vmul.f32 %v2367, 1.442695
          %v2387 = vpow.pop %v2386
          %v2388 = vmul.f32 %v2368, 1.442695
          %v2389 = vpow.pop %v2388
          %v2390 = vmul.f32 %v2369, 1.442695
          %v2391 = vpow.pop %v2390
          %v2392 = vmul.f32 %v2370, 1.442695
          %v2393 = vpow.pop %v2392
          %v2394 = vmul.f32 %v2371, 1.442695
          %v2395 = vpow.pop %v2394
          %v2396 = vmul.f32 %v2372, 1.442695
          %v2397 = vpow.pop %v2396
          %v2398 = vmul.f32 %v2373, 1.442695
          %v2399 = vpow.pop %v2398
          %v2400 = vmul.f32 %v2374, 1.442695
          %v2401 = vpow.pop %v2400
          %v2402 = vmul.f32 %v2375, 1.442695
          %v2403 = vpow.pop %v2402
          %v2404 = vmul.f32 %v2376, 1.442695
          %v2405 = vpow.pop %v2404
          %v2406 = vmul.f32 %v2377, 1.442695
          %v2407 = vpow.pop %v2406
          %v2408 = vmul.f32 %v2378, 1.442695
          %v2409 = vpow.pop %v2408
          %v2410 = vmul.f32 %v2379, 1.442695
          %v2411 = vpow.pop %v2410
          %v2412 = vadd.f32 %v2381, 1.0
          %v2413 = vadd.f32 %v2383, 1.0
          %v2414 = vadd.f32 %v2385, 1.0
          %v2415 = vadd.f32 %v2387, 1.0
          %v2416 = vadd.f32 %v2389, 1.0
          %v2417 = vadd.f32 %v2391, 1.0
          %v2418 = vadd.f32 %v2393, 1.0
          %v2419 = vadd.f32 %v2395, 1.0
          %v2420 = vadd.f32 %v2397, 1.0
          %v2421 = vadd.f32 %v2399, 1.0
          %v2422 = vadd.f32 %v2401, 1.0
          %v2423 = vadd.f32 %v2403, 1.0
          %v2424 = vadd.f32 %v2405, 1.0
          %v2425 = vadd.f32 %v2407, 1.0
          %v2426 = vadd.f32 %v2409, 1.0
          %v2427 = vadd.f32 %v2411, 1.0
          %v2428 = vrcp.pop %v2412
          %v2429 = vmul.f32 1.0, %v2428
          %v2430 = vrcp.pop %v2413
          %v2431 = vmul.f32 1.0, %v2430
          %v2432 = vrcp.pop %v2414
          %v2433 = vmul.f32 1.0, %v2432
          %v2434 = vrcp.pop %v2415
          %v2435 = vmul.f32 1.0, %v2434
          %v2436 = vrcp.pop %v2416
          %v2437 = vmul.f32 1.0, %v2436
          %v2438 = vrcp.pop %v2417
          %v2439 = vmul.f32 1.0, %v2438
          %v2440 = vrcp.pop %v2418
          %v2441 = vmul.f32 1.0, %v2440
          %v2442 = vrcp.pop %v2419
          %v2443 = vmul.f32 1.0, %v2442
          %v2444 = vrcp.pop %v2420
          %v2445 = vmul.f32 1.0, %v2444
          %v2446 = vrcp.pop %v2421
          %v2447 = vmul.f32 1.0, %v2446
          %v2448 = vrcp.pop %v2422
          %v2449 = vmul.f32 1.0, %v2448
          %v2450 = vrcp.pop %v2423
          %v2451 = vmul.f32 1.0, %v2450
          %v2452 = vrcp.pop %v2424
          %v2453 = vmul.f32 1.0, %v2452
          %v2454 = vrcp.pop %v2425
          %v2455 = vmul.f32 1.0, %v2454
          %v2456 = vrcp.pop %v2426
          %v2457 = vmul.f32 1.0, %v2456
          %v2458 = vrcp.pop %v2427
          %v2459 = vmul.f32 1.0, %v2458
          %v2460 = vsub.f32 1.0, %v2429
          %v2461 = vsub.f32 1.0, %v2431
          %v2462 = vsub.f32 1.0, %v2433
          %v2463 = vsub.f32 1.0, %v2435
          %v2464 = vsub.f32 1.0, %v2437
          %v2465 = vsub.f32 1.0, %v2439
          %v2466 = vsub.f32 1.0, %v2441
          %v2467 = vsub.f32 1.0, %v2443
          %v2468 = vsub.f32 1.0, %v2445
          %v2469 = vsub.f32 1.0, %v2447
          %v2470 = vsub.f32 1.0, %v2449
          %v2471 = vsub.f32 1.0, %v2451
          %v2472 = vsub.f32 1.0, %v2453
          %v2473 = vsub.f32 1.0, %v2455
          %v2474 = vsub.f32 1.0, %v2457
          %v2475 = vsub.f32 1.0, %v2459
          %2477 = vset.pattern.permute.xlu0 0
          %2478 = vperm.xlu0 %2477, %v2460
          %v2479 = vpop.permute.xlu0 %2478
          %2482 = vset.pattern.permute.xlu0 0
          %2483 = vperm.xlu0 %2482, %v2461
          %v2484 = vpop.permute.xlu0 %2483
          %2487 = vset.pattern.permute.xlu0 0
          %2488 = vperm.xlu0 %2487, %v2462
          %v2489 = vpop.permute.xlu0 %2488
          %2492 = vset.pattern.permute.xlu0 0
          %2493 = vperm.xlu0 %2492, %v2463
          %v2494 = vpop.permute.xlu0 %2493
          %2497 = vset.pattern.permute.xlu0 0
          %2498 = vperm.xlu0 %2497, %v2464
          %v2499 = vpop.permute.xlu0 %2498
          %2502 = vset.pattern.permute.xlu0 0
          %2503 = vperm.xlu0 %2502, %v2465
          %v2504 = vpop.permute.xlu0 %2503
          %2507 = vset.pattern.permute.xlu0 0
          %2508 = vperm.xlu0 %2507, %v2466
          %v2509 = vpop.permute.xlu0 %2508
          %2512 = vset.pattern.permute.xlu0 0
          %2513 = vperm.xlu0 %2512, %v2467
          %v2514 = vpop.permute.xlu0 %2513
          %2517 = vset.pattern.permute.xlu0 0
          %2518 = vperm.xlu0 %2517, %v2468
          %v2519 = vpop.permute.xlu0 %2518
          %2522 = vset.pattern.permute.xlu0 0
          %2523 = vperm.xlu0 %2522, %v2469
          %v2524 = vpop.permute.xlu0 %2523
          %2527 = vset.pattern.permute.xlu0 0
          %2528 = vperm.xlu0 %2527, %v2470
          %v2529 = vpop.permute.xlu0 %2528
          %2532 = vset.pattern.permute.xlu0 0
          %2533 = vperm.xlu0 %2532, %v2471
          %v2534 = vpop.permute.xlu0 %2533
          %2537 = vset.pattern.permute.xlu0 0
          %2538 = vperm.xlu0 %2537, %v2472
          %v2539 = vpop.permute.xlu0 %2538
          %2542 = vset.pattern.permute.xlu0 0
          %2543 = vperm.xlu0 %2542, %v2473
          %v2544 = vpop.permute.xlu0 %2543
          %2547 = vset.pattern.permute.xlu0 0
          %2548 = vperm.xlu0 %2547, %v2474
          %v2549 = vpop.permute.xlu0 %2548
          %2552 = vset.pattern.permute.xlu0 0
          %2553 = vperm.xlu0 %2552, %v2475
          %v2554 = vpop.permute.xlu0 %2553
          %v2556 = vmul.f32 %v2479, %v2052
          %v2557 = vmul.f32 %v2479, %v2054
          %v2558 = vmul.f32 %v2484, %v2056
          %v2559 = vmul.f32 %v2484, %v2058
          %v2560 = vmul.f32 %v2489, %v2062
          %v2561 = vmul.f32 %v2489, %v2064
          %v2562 = vmul.f32 %v2494, %v2066
          %v2563 = vmul.f32 %v2494, %v2068
          %v2564 = vmul.f32 %v2499, %v2072
          %v2565 = vmul.f32 %v2499, %v2074
          %v2566 = vmul.f32 %v2504, %v2076
          %v2567 = vmul.f32 %v2504, %v2078
          %v2568 = vmul.f32 %v2509, %v2082
          %v2569 = vmul.f32 %v2509, %v2084
          %v2570 = vmul.f32 %v2514, %v2086
          %v2571 = vmul.f32 %v2514, %v2088
          %v2572 = vmul.f32 %v2519, %v2092
          %v2573 = vmul.f32 %v2519, %v2094
          %v2574 = vmul.f32 %v2524, %v2096
          %v2575 = vmul.f32 %v2524, %v2098
          %v2576 = vmul.f32 %v2529, %v2102
          %v2577 = vmul.f32 %v2529, %v2104
          %v2578 = vmul.f32 %v2534, %v2106
          %v2579 = vmul.f32 %v2534, %v2108
          %v2580 = vmul.f32 %v2539, %v2112
          %v2581 = vmul.f32 %v2539, %v2114
          %v2582 = vmul.f32 %v2544, %v2116
          %v2583 = vmul.f32 %v2544, %v2118
          %v2584 = vmul.f32 %v2549, %v2122
          %v2585 = vmul.f32 %v2549, %v2124
          %v2586 = vmul.f32 %v2554, %v2126
          %v2587 = vmul.f32 %v2554, %v2128
          %2589 = vset.pattern.permute.xlu0 0
          %2590 = vperm.xlu0 %2589, %v2429
          %v2591 = vpop.permute.xlu0 %2590
          %2594 = vset.pattern.permute.xlu0 0
          %2595 = vperm.xlu0 %2594, %v2431
          %v2596 = vpop.permute.xlu0 %2595
          %2599 = vset.pattern.permute.xlu0 0
          %2600 = vperm.xlu0 %2599, %v2433
          %v2601 = vpop.permute.xlu0 %2600
          %2604 = vset.pattern.permute.xlu0 0
          %2605 = vperm.xlu0 %2604, %v2435
          %v2606 = vpop.permute.xlu0 %2605
          %2609 = vset.pattern.permute.xlu0 0
          %2610 = vperm.xlu0 %2609, %v2437
          %v2611 = vpop.permute.xlu0 %2610
          %2614 = vset.pattern.permute.xlu0 0
          %2615 = vperm.xlu0 %2614, %v2439
          %v2616 = vpop.permute.xlu0 %2615
          %2619 = vset.pattern.permute.xlu0 0
          %2620 = vperm.xlu0 %2619, %v2441
          %v2621 = vpop.permute.xlu0 %2620
          %2624 = vset.pattern.permute.xlu0 0
          %2625 = vperm.xlu0 %2624, %v2443
          %v2626 = vpop.permute.xlu0 %2625
          %2629 = vset.pattern.permute.xlu0 0
          %2630 = vperm.xlu0 %2629, %v2445
          %v2631 = vpop.permute.xlu0 %2630
          %2634 = vset.pattern.permute.xlu0 0
          %2635 = vperm.xlu0 %2634, %v2447
          %v2636 = vpop.permute.xlu0 %2635
          %2639 = vset.pattern.permute.xlu0 0
          %2640 = vperm.xlu0 %2639, %v2449
          %v2641 = vpop.permute.xlu0 %2640
          %2644 = vset.pattern.permute.xlu0 0
          %2645 = vperm.xlu0 %2644, %v2451
          %v2646 = vpop.permute.xlu0 %2645
          %2649 = vset.pattern.permute.xlu0 0
          %2650 = vperm.xlu0 %2649, %v2453
          %v2651 = vpop.permute.xlu0 %2650
          %2654 = vset.pattern.permute.xlu0 0
          %2655 = vperm.xlu0 %2654, %v2455
          %v2656 = vpop.permute.xlu0 %2655
          %2659 = vset.pattern.permute.xlu0 0
          %2660 = vperm.xlu0 %2659, %v2457
          %v2661 = vpop.permute.xlu0 %2660
          %2664 = vset.pattern.permute.xlu0 0
          %2665 = vperm.xlu0 %2664, %v2459
          %v2666 = vpop.permute.xlu0 %2665
          %v2668 = vlaneseq
          %v2669 = vshrl.u32 %v2668, 7
          %v2670 = vsub.s32 0, %v2669
          %v2671 = vrot.slane %v1216, %v2670
          %v2672 = vlaneseq
          %v2673 = vshrl.u32 %v2672, 7
          %v2674 = vsub.s32 0, %v2673
          %v2675 = vrot.slane %v1218, %v2674
          %v2676 = vmul.f32 %v2591, %v2671
          %v2677 = vmul.f32 %v2591, %v2675
          %v2678 = vmul.f32 %v2596, %v2671
          %v2679 = vmul.f32 %v2596, %v2675
          %v2680 = vmul.f32 %v2601, %v2671
          %v2681 = vmul.f32 %v2601, %v2675
          %v2682 = vmul.f32 %v2606, %v2671
          %v2683 = vmul.f32 %v2606, %v2675
          %v2684 = vmul.f32 %v2611, %v2671
          %v2685 = vmul.f32 %v2611, %v2675
          %v2686 = vmul.f32 %v2616, %v2671
          %v2687 = vmul.f32 %v2616, %v2675
          %v2688 = vmul.f32 %v2621, %v2671
          %v2689 = vmul.f32 %v2621, %v2675
          %v2690 = vmul.f32 %v2626, %v2671
          %v2691 = vmul.f32 %v2626, %v2675
          %v2692 = vmul.f32 %v2631, %v2671
          %v2693 = vmul.f32 %v2631, %v2675
          %v2694 = vmul.f32 %v2636, %v2671
          %v2695 = vmul.f32 %v2636, %v2675
          %v2696 = vmul.f32 %v2641, %v2671
          %v2697 = vmul.f32 %v2641, %v2675
          %v2698 = vmul.f32 %v2646, %v2671
          %v2699 = vmul.f32 %v2646, %v2675
          %v2700 = vmul.f32 %v2651, %v2671
          %v2701 = vmul.f32 %v2651, %v2675
          %v2702 = vmul.f32 %v2656, %v2671
          %v2703 = vmul.f32 %v2656, %v2675
          %v2704 = vmul.f32 %v2661, %v2671
          %v2705 = vmul.f32 %v2661, %v2675
          %v2706 = vmul.f32 %v2666, %v2671
          %v2707 = vmul.f32 %v2666, %v2675
          %v2708 = vadd.f32 %v2556, %v2676
          %v2709 = vadd.f32 %v2557, %v2677
          %v2710 = vadd.f32 %v2558, %v2678
          %v2711 = vadd.f32 %v2559, %v2679
          %v2712 = vadd.f32 %v2560, %v2680
          %v2713 = vadd.f32 %v2561, %v2681
          %v2714 = vadd.f32 %v2562, %v2682
          %v2715 = vadd.f32 %v2563, %v2683
          %v2716 = vadd.f32 %v2564, %v2684
          %v2717 = vadd.f32 %v2565, %v2685
          %v2718 = vadd.f32 %v2566, %v2686
          %v2719 = vadd.f32 %v2567, %v2687
          %v2720 = vadd.f32 %v2568, %v2688
          %v2721 = vadd.f32 %v2569, %v2689
          %v2722 = vadd.f32 %v2570, %v2690
          %v2723 = vadd.f32 %v2571, %v2691
          %v2724 = vadd.f32 %v2572, %v2692
          %v2725 = vadd.f32 %v2573, %v2693
          %v2726 = vadd.f32 %v2574, %v2694
          %v2727 = vadd.f32 %v2575, %v2695
          %v2728 = vadd.f32 %v2576, %v2696
          %v2729 = vadd.f32 %v2577, %v2697
          %v2730 = vadd.f32 %v2578, %v2698
          %v2731 = vadd.f32 %v2579, %v2699
          %v2732 = vadd.f32 %v2580, %v2700
          %v2733 = vadd.f32 %v2581, %v2701
          %v2734 = vadd.f32 %v2582, %v2702
          %v2735 = vadd.f32 %v2583, %v2703
          %v2736 = vadd.f32 %v2584, %v2704
          %v2737 = vadd.f32 %v2585, %v2705
          %v2738 = vadd.f32 %v2586, %v2706
          %v2739 = vadd.f32 %v2587, %v2707
          %v2740 = vpack.c.bf16 %v2710, %v2708
          %v2741 = vpack.c.bf16 %v2711, %v2709
          %v2742 = vpack.c.bf16 %v2714, %v2712
          %v2743 = vpack.c.bf16 %v2715, %v2713
          %v2744 = vpack.c.bf16 %v2718, %v2716
          %v2745 = vpack.c.bf16 %v2719, %v2717
          %v2746 = vpack.c.bf16 %v2722, %v2720
          %v2747 = vpack.c.bf16 %v2723, %v2721
          %v2748 = vpack.c.bf16 %v2726, %v2724
          %v2749 = vpack.c.bf16 %v2727, %v2725
          %v2750 = vpack.c.bf16 %v2730, %v2728
          %v2751 = vpack.c.bf16 %v2731, %v2729
          %v2752 = vpack.c.bf16 %v2734, %v2732
          %v2753 = vpack.c.bf16 %v2735, %v2733
          %v2754 = vpack.c.bf16 %v2738, %v2736
          %v2755 = vpack.c.bf16 %v2739, %v2737
          %s2756 = smul.u32 0, 2
          %s2757 = smul.addr %s2756, 8
          %s2758 = scalar_lea.vmem [#allocation2], %s2757
          %2759 = vst [vmem:[%s2758] sm:$0xff] %v2740
          %2760 = vst [vmem:[%s2758 + $0x8] sm:$0xff] %v2741
          %2761 = vst [vmem:[%s2758 + $0x10] sm:$0xff] %v2742
          %2762 = vst [vmem:[%s2758 + $0x18] sm:$0xff] %v2743
          %2763 = vst [vmem:[%s2758 + $0x20] sm:$0xff] %v2744
          %2764 = vst [vmem:[%s2758 + $0x28] sm:$0xff] %v2745
          %2765 = vst [vmem:[%s2758 + $0x30] sm:$0xff] %v2746
          %2766 = vst [vmem:[%s2758 + $0x38] sm:$0xff] %v2747
          %2767 = vst [vmem:[%s2758 + $0x40] sm:$0xff] %v2748
          %2768 = vst [vmem:[%s2758 + $0x48] sm:$0xff] %v2749
          %2769 = vst [vmem:[%s2758 + $0x50] sm:$0xff] %v2750
          %2770 = vst [vmem:[%s2758 + $0x58] sm:$0xff] %v2751
          %2771 = vst [vmem:[%s2758 + $0x60] sm:$0xff] %v2752
          %2772 = vst [vmem:[%s2758 + $0x68] sm:$0xff] %v2753
          %2773 = vst [vmem:[%s2758 + $0x70] sm:$0xff] %v2754
          %2774 = vst [vmem:[%s2758 + $0x78] sm:$0xff] %v2755
          %v2775 = vpack.c.bf16 %v2169, %v2165
          %v2776 = vpack.c.bf16 %v2171, %v2167
          %v2777 = vpack.c.bf16 %v2179, %v2175
          %v2778 = vpack.c.bf16 %v2181, %v2177
          %v2779 = vpack.c.bf16 %v2189, %v2185
          %v2780 = vpack.c.bf16 %v2191, %v2187
          %v2781 = vpack.c.bf16 %v2199, %v2195
          %v2782 = vpack.c.bf16 %v2201, %v2197
          %v2783 = vpack.c.bf16 %v2209, %v2205
          %v2784 = vpack.c.bf16 %v2211, %v2207
          %v2785 = vpack.c.bf16 %v2219, %v2215
          %v2786 = vpack.c.bf16 %v2221, %v2217
          %v2787 = vpack.c.bf16 %v2229, %v2225
          %v2788 = vpack.c.bf16 %v2231, %v2227
          %v2789 = vpack.c.bf16 %v2239, %v2235
          %v2790 = vpack.c.bf16 %v2241, %v2237
          %s2791 = smul.addr %s2756, 8
          %s2792 = scalar_lea.vmem [#allocation3], %s2791
          %2793 = vst [vmem:[%s2792] sm:$0xff] %v2775
          %2794 = vst [vmem:[%s2792 + $0x8] sm:$0xff] %v2776
          %2795 = vst [vmem:[%s2792 + $0x10] sm:$0xff] %v2777
          %2796 = vst [vmem:[%s2792 + $0x18] sm:$0xff] %v2778
          %2797 = vst [vmem:[%s2792 + $0x20] sm:$0xff] %v2779
          %2798 = vst [vmem:[%s2792 + $0x28] sm:$0xff] %v2780
          %2799 = vst [vmem:[%s2792 + $0x30] sm:$0xff] %v2781
          %2800 = vst [vmem:[%s2792 + $0x38] sm:$0xff] %v2782
          %2801 = vst [vmem:[%s2792 + $0x40] sm:$0xff] %v2783
          %2802 = vst [vmem:[%s2792 + $0x48] sm:$0xff] %v2784
          %2803 = vst [vmem:[%s2792 + $0x50] sm:$0xff] %v2785
          %2804 = vst [vmem:[%s2792 + $0x58] sm:$0xff] %v2786
          %2805 = vst [vmem:[%s2792 + $0x60] sm:$0xff] %v2787
          %2806 = vst [vmem:[%s2792 + $0x68] sm:$0xff] %v2788
          %2807 = vst [vmem:[%s2792 + $0x70] sm:$0xff] %v2789
          %2808 = vst [vmem:[%s2792 + $0x78] sm:$0xff] %v2790
        $region80: #{global_context_layer.1} parent=47 // pred_fallthru
          _
        %s2809 = smul.u32 %s35, 128
        %s2810 = sshra.s32 %s2809, 3
        %s2811 = sand.u32 %s2809, 7
        %s2812 = smul.u32 %s2810, 2
        %s2813 = smul.addr %s2812, 4
        %s2814 = scalar_lea.vmem [#allocation5], %s2813
        %v2815 = vld [vmem:[%s2814] sm:$0xff]
        %v2816 = vld [vmem:[%s2814 + $0x8] sm:$0xff]
        %v2817 = vld [vmem:[%s2814 + $0x10] sm:$0xff]
        %v2818 = vld [vmem:[%s2814 + $0x18] sm:$0xff]
        %v2819 = vld [vmem:[%s2814 + $0x20] sm:$0xff]
        %v2820 = vld [vmem:[%s2814 + $0x28] sm:$0xff]
        %v2821 = vld [vmem:[%s2814 + $0x30] sm:$0xff]
        %v2822 = vld [vmem:[%s2814 + $0x38] sm:$0xff]
        %v2823 = vld [vmem:[%s2814 + $0x40] sm:$0xff]
        %v2824 = vld [vmem:[%s2814 + $0x48] sm:$0xff]
        %v2825 = vld [vmem:[%s2814 + $0x50] sm:$0xff]
        %v2826 = vld [vmem:[%s2814 + $0x58] sm:$0xff]
        %v2827 = vld [vmem:[%s2814 + $0x60] sm:$0xff]
        %v2828 = vld [vmem:[%s2814 + $0x68] sm:$0xff]
        %v2829 = vld [vmem:[%s2814 + $0x70] sm:$0xff]
        %v2830 = vld [vmem:[%s2814 + $0x78] sm:$0xff]
        %v2831 = vld [vmem:[#allocation8] sm:$0xff]
        %v2832 = vld [vmem:[#allocation8 + $0x8] sm:$0xff]
        %v2833 = vld [vmem:[#allocation8 + $0x10] sm:$0xff]
        %v2834 = vld [vmem:[#allocation8 + $0x18] sm:$0xff]
        %v2835 = vld [vmem:[#allocation8 + $0x20] sm:$0xff]
        %v2836 = vld [vmem:[#allocation8 + $0x28] sm:$0xff]
        %v2837 = vld [vmem:[#allocation8 + $0x30] sm:$0xff]
        %v2838 = vld [vmem:[#allocation8 + $0x38] sm:$0xff]
        %v2839 = vld [vmem:[#allocation8 + $0x40] sm:$0xff]
        %v2840 = vld [vmem:[#allocation8 + $0x48] sm:$0xff]
        %v2841 = vld [vmem:[#allocation8 + $0x50] sm:$0xff]
        %v2842 = vld [vmem:[#allocation8 + $0x58] sm:$0xff]
        %v2843 = vld [vmem:[#allocation8 + $0x60] sm:$0xff]
        %v2844 = vld [vmem:[#allocation8 + $0x68] sm:$0xff]
        %v2845 = vld [vmem:[#allocation8 + $0x70] sm:$0xff]
        %v2846 = vld [vmem:[#allocation8 + $0x78] sm:$0xff]
        %v2847 = vld [vmem:[#allocation8 + $0x80] sm:$0xff]
        %v2848 = vld [vmem:[#allocation8 + $0x88] sm:$0xff]
        %v2849 = vld [vmem:[#allocation8 + $0x90] sm:$0xff]
        %v2850 = vld [vmem:[#allocation8 + $0x98] sm:$0xff]
        %v2851 = vld [vmem:[#allocation8 + $0xa0] sm:$0xff]
        %v2852 = vld [vmem:[#allocation8 + $0xa8] sm:$0xff]
        %v2853 = vld [vmem:[#allocation8 + $0xb0] sm:$0xff]
        %v2854 = vld [vmem:[#allocation8 + $0xb8] sm:$0xff]
        %v2855 = vld [vmem:[#allocation8 + $0xc0] sm:$0xff]
        %v2856 = vld [vmem:[#allocation8 + $0xc8] sm:$0xff]
        %v2857 = vld [vmem:[#allocation8 + $0xd0] sm:$0xff]
        %v2858 = vld [vmem:[#allocation8 + $0xd8] sm:$0xff]
        %v2859 = vld [vmem:[#allocation8 + $0xe0] sm:$0xff]
        %v2860 = vld [vmem:[#allocation8 + $0xe8] sm:$0xff]
        %v2861 = vld [vmem:[#allocation8 + $0xf0] sm:$0xff]
        %v2862 = vld [vmem:[#allocation8 + $0xf8] sm:$0xff]
        %v2863 = vld [vmem:[#allocation8 + $0x100] sm:$0xff]
        %v2864 = vld [vmem:[#allocation8 + $0x108] sm:$0xff]
        %v2865 = vld [vmem:[#allocation8 + $0x110] sm:$0xff]
        %v2866 = vld [vmem:[#allocation8 + $0x118] sm:$0xff]
        %v2867 = vld [vmem:[#allocation8 + $0x120] sm:$0xff]
        %v2868 = vld [vmem:[#allocation8 + $0x128] sm:$0xff]
        %v2869 = vld [vmem:[#allocation8 + $0x130] sm:$0xff]
        %v2870 = vld [vmem:[#allocation8 + $0x138] sm:$0xff]
        %v2871 = vld [vmem:[#allocation8 + $0x140] sm:$0xff]
        %v2872 = vld [vmem:[#allocation8 + $0x148] sm:$0xff]
        %v2873 = vld [vmem:[#allocation8 + $0x150] sm:$0xff]
        %v2874 = vld [vmem:[#allocation8 + $0x158] sm:$0xff]
        %v2875 = vld [vmem:[#allocation8 + $0x160] sm:$0xff]
        %v2876 = vld [vmem:[#allocation8 + $0x168] sm:$0xff]
        %v2877 = vld [vmem:[#allocation8 + $0x170] sm:$0xff]
        %v2878 = vld [vmem:[#allocation8 + $0x178] sm:$0xff]
        %v2879 = vld [vmem:[#allocation8 + $0x180] sm:$0xff]
        %v2880 = vld [vmem:[#allocation8 + $0x188] sm:$0xff]
        %v2881 = vld [vmem:[#allocation8 + $0x190] sm:$0xff]
        %v2882 = vld [vmem:[#allocation8 + $0x198] sm:$0xff]
        %v2883 = vld [vmem:[#allocation8 + $0x1a0] sm:$0xff]
        %v2884 = vld [vmem:[#allocation8 + $0x1a8] sm:$0xff]
        %v2885 = vld [vmem:[#allocation8 + $0x1b0] sm:$0xff]
        %v2886 = vld [vmem:[#allocation8 + $0x1b8] sm:$0xff]
        %v2887 = vld [vmem:[#allocation8 + $0x1c0] sm:$0xff]
        %v2888 = vld [vmem:[#allocation8 + $0x1c8] sm:$0xff]
        %v2889 = vld [vmem:[#allocation8 + $0x1d0] sm:$0xff]
        %v2890 = vld [vmem:[#allocation8 + $0x1d8] sm:$0xff]
        %v2891 = vld [vmem:[#allocation8 + $0x1e0] sm:$0xff]
        %v2892 = vld [vmem:[#allocation8 + $0x1e8] sm:$0xff]
        %v2893 = vld [vmem:[#allocation8 + $0x1f0] sm:$0xff]
        %v2894 = vld [vmem:[#allocation8 + $0x1f8] sm:$0xff]
        %v2895 = vld [vmem:[#allocation10] sm:$0xf]
        %v2897 = vlaneseq
        %v2898 = vshrl.u32 %v2897, 7
        %v2899 = vsub.s32 0, %v2898
        %v2900 = vrot.slane %v2895, %v2899
        %v2901 = vlaneseq
        %v2902 = vshrl.u32 %v2901, 7
        %v2903 = vsub.s32 1, %v2902
        %v2904 = vrot.slane %v2895, %v2903
        %v2905 = vlaneseq
        %v2906 = vshrl.u32 %v2905, 7
        %v2907 = vsub.s32 2, %v2906
        %v2908 = vrot.slane %v2895, %v2907
        %v2928 = vunpack.c.l.b16 %v2815
        %v2929 = vunpack.c.h.b16 %v2815
        %v2930 = vunpack.c.l.b16 %v2816
        %v2931 = vunpack.c.h.b16 %v2816
        %v2932 = vunpack.c.l.b16 %v2817
        %v2933 = vunpack.c.h.b16 %v2817
        %v2934 = vunpack.c.l.b16 %v2818
        %v2935 = vunpack.c.h.b16 %v2818
        %v2936 = vunpack.c.l.b16 %v2819
        %v2937 = vunpack.c.h.b16 %v2819
        %v2938 = vunpack.c.l.b16 %v2820
        %v2939 = vunpack.c.h.b16 %v2820
        %v2940 = vunpack.c.l.b16 %v2821
        %v2941 = vunpack.c.h.b16 %v2821
        %v2942 = vunpack.c.l.b16 %v2822
        %v2943 = vunpack.c.h.b16 %v2822
        %v2944 = vunpack.c.l.b16 %v2823
        %v2945 = vunpack.c.h.b16 %v2823
        %v2946 = vunpack.c.l.b16 %v2824
        %v2947 = vunpack.c.h.b16 %v2824
        %v2948 = vunpack.c.l.b16 %v2825
        %v2949 = vunpack.c.h.b16 %v2825
        %v2950 = vunpack.c.l.b16 %v2826
        %v2951 = vunpack.c.h.b16 %v2826
        %v2952 = vunpack.c.l.b16 %v2827
        %v2953 = vunpack.c.h.b16 %v2827
        %v2954 = vunpack.c.l.b16 %v2828
        %v2955 = vunpack.c.h.b16 %v2828
        %v2956 = vunpack.c.l.b16 %v2829
        %v2957 = vunpack.c.h.b16 %v2829
        %v2958 = vunpack.c.l.b16 %v2830
        %v2959 = vunpack.c.h.b16 %v2830
        %v2960 = vpack.c.b16 %v2930, %v2928
        %v2961 = vpack.c.b16 %v2931, %v2929
        %v2962 = vpack.c.b16 %v2934, %v2932
        %v2963 = vpack.c.b16 %v2935, %v2933
        %v2964 = vpack.c.b16 %v2938, %v2936
        %v2965 = vpack.c.b16 %v2939, %v2937
        %v2966 = vpack.c.b16 %v2942, %v2940
        %v2967 = vpack.c.b16 %v2943, %v2941
        %v2968 = vpack.c.b16 %v2946, %v2944
        %v2969 = vpack.c.b16 %v2947, %v2945
        %v2970 = vpack.c.b16 %v2950, %v2948
        %v2971 = vpack.c.b16 %v2951, %v2949
        %v2972 = vpack.c.b16 %v2954, %v2952
        %v2973 = vpack.c.b16 %v2955, %v2953
        %v2974 = vpack.c.b16 %v2958, %v2956
        %v2975 = vpack.c.b16 %v2959, %v2957
        %v3056 = vunpack.c.l.b16 %v2831
        %v3057 = vunpack.c.h.b16 %v2831
        %v3058 = vunpack.c.l.b16 %v2832
        %v3059 = vunpack.c.h.b16 %v2832
        %v3060 = vunpack.c.l.b16 %v2833
        %v3061 = vunpack.c.h.b16 %v2833
        %v3062 = vunpack.c.l.b16 %v2834
        %v3063 = vunpack.c.h.b16 %v2834
        %v3064 = vunpack.c.l.b16 %v2835
        %v3065 = vunpack.c.h.b16 %v2835
        %v3066 = vunpack.c.l.b16 %v2836
        %v3067 = vunpack.c.h.b16 %v2836
        %v3068 = vunpack.c.l.b16 %v2837
        %v3069 = vunpack.c.h.b16 %v2837
        %v3070 = vunpack.c.l.b16 %v2838
        %v3071 = vunpack.c.h.b16 %v2838
        %v3072 = vunpack.c.l.b16 %v2839
        %v3073 = vunpack.c.h.b16 %v2839
        %v3074 = vunpack.c.l.b16 %v2840
        %v3075 = vunpack.c.h.b16 %v2840
        %v3076 = vunpack.c.l.b16 %v2841
        %v3077 = vunpack.c.h.b16 %v2841
        %v3078 = vunpack.c.l.b16 %v2842
        %v3079 = vunpack.c.h.b16 %v2842
        %v3080 = vunpack.c.l.b16 %v2843
        %v3081 = vunpack.c.h.b16 %v2843
        %v3082 = vunpack.c.l.b16 %v2844
        %v3083 = vunpack.c.h.b16 %v2844
        %v3084 = vunpack.c.l.b16 %v2845
        %v3085 = vunpack.c.h.b16 %v2845
        %v3086 = vunpack.c.l.b16 %v2846
        %v3087 = vunpack.c.h.b16 %v2846
        %v3088 = vunpack.c.l.b16 %v2847
        %v3089 = vunpack.c.h.b16 %v2847
        %v3090 = vunpack.c.l.b16 %v2848
        %v3091 = vunpack.c.h.b16 %v2848
        %v3092 = vunpack.c.l.b16 %v2849
        %v3093 = vunpack.c.h.b16 %v2849
        %v3094 = vunpack.c.l.b16 %v2850
        %v3095 = vunpack.c.h.b16 %v2850
        %v3096 = vunpack.c.l.b16 %v2851
        %v3097 = vunpack.c.h.b16 %v2851
        %v3098 = vunpack.c.l.b16 %v2852
        %v3099 = vunpack.c.h.b16 %v2852
        %v3100 = vunpack.c.l.b16 %v2853
        %v3101 = vunpack.c.h.b16 %v2853
        %v3102 = vunpack.c.l.b16 %v2854
        %v3103 = vunpack.c.h.b16 %v2854
        %v3104 = vunpack.c.l.b16 %v2855
        %v3105 = vunpack.c.h.b16 %v2855
        %v3106 = vunpack.c.l.b16 %v2856
        %v3107 = vunpack.c.h.b16 %v2856
        %v3108 = vunpack.c.l.b16 %v2857
        %v3109 = vunpack.c.h.b16 %v2857
        %v3110 = vunpack.c.l.b16 %v2858
        %v3111 = vunpack.c.h.b16 %v2858
        %v3112 = vunpack.c.l.b16 %v2859
        %v3113 = vunpack.c.h.b16 %v2859
        %v3114 = vunpack.c.l.b16 %v2860
        %v3115 = vunpack.c.h.b16 %v2860
        %v3116 = vunpack.c.l.b16 %v2861
        %v3117 = vunpack.c.h.b16 %v2861
        %v3118 = vunpack.c.l.b16 %v2862
        %v3119 = vunpack.c.h.b16 %v2862
        %v3120 = vunpack.c.l.b16 %v2863
        %v3121 = vunpack.c.h.b16 %v2863
        %v3122 = vunpack.c.l.b16 %v2864
        %v3123 = vunpack.c.h.b16 %v2864
        %v3124 = vunpack.c.l.b16 %v2865
        %v3125 = vunpack.c.h.b16 %v2865
        %v3126 = vunpack.c.l.b16 %v2866
        %v3127 = vunpack.c.h.b16 %v2866
        %v3128 = vunpack.c.l.b16 %v2867
        %v3129 = vunpack.c.h.b16 %v2867
        %v3130 = vunpack.c.l.b16 %v2868
        %v3131 = vunpack.c.h.b16 %v2868
        %v3132 = vunpack.c.l.b16 %v2869
        %v3133 = vunpack.c.h.b16 %v2869
        %v3134 = vunpack.c.l.b16 %v2870
        %v3135 = vunpack.c.h.b16 %v2870
        %v3136 = vunpack.c.l.b16 %v2871
        %v3137 = vunpack.c.h.b16 %v2871
        %v3138 = vunpack.c.l.b16 %v2872
        %v3139 = vunpack.c.h.b16 %v2872
        %v3140 = vunpack.c.l.b16 %v2873
        %v3141 = vunpack.c.h.b16 %v2873
        %v3142 = vunpack.c.l.b16 %v2874
        %v3143 = vunpack.c.h.b16 %v2874
        %v3144 = vunpack.c.l.b16 %v2875
        %v3145 = vunpack.c.h.b16 %v2875
        %v3146 = vunpack.c.l.b16 %v2876
        %v3147 = vunpack.c.h.b16 %v2876
        %v3148 = vunpack.c.l.b16 %v2877
        %v3149 = vunpack.c.h.b16 %v2877
        %v3150 = vunpack.c.l.b16 %v2878
        %v3151 = vunpack.c.h.b16 %v2878
        %v3152 = vunpack.c.l.b16 %v2879
        %v3153 = vunpack.c.h.b16 %v2879
        %v3154 = vunpack.c.l.b16 %v2880
        %v3155 = vunpack.c.h.b16 %v2880
        %v3156 = vunpack.c.l.b16 %v2881
        %v3157 = vunpack.c.h.b16 %v2881
        %v3158 = vunpack.c.l.b16 %v2882
        %v3159 = vunpack.c.h.b16 %v2882
        %v3160 = vunpack.c.l.b16 %v2883
        %v3161 = vunpack.c.h.b16 %v2883
        %v3162 = vunpack.c.l.b16 %v2884
        %v3163 = vunpack.c.h.b16 %v2884
        %v3164 = vunpack.c.l.b16 %v2885
        %v3165 = vunpack.c.h.b16 %v2885
        %v3166 = vunpack.c.l.b16 %v2886
        %v3167 = vunpack.c.h.b16 %v2886
        %v3168 = vunpack.c.l.b16 %v2887
        %v3169 = vunpack.c.h.b16 %v2887
        %v3170 = vunpack.c.l.b16 %v2888
        %v3171 = vunpack.c.h.b16 %v2888
        %v3172 = vunpack.c.l.b16 %v2889
        %v3173 = vunpack.c.h.b16 %v2889
        %v3174 = vunpack.c.l.b16 %v2890
        %v3175 = vunpack.c.h.b16 %v2890
        %v3176 = vunpack.c.l.b16 %v2891
        %v3177 = vunpack.c.h.b16 %v2891
        %v3178 = vunpack.c.l.b16 %v2892
        %v3179 = vunpack.c.h.b16 %v2892
        %v3180 = vunpack.c.l.b16 %v2893
        %v3181 = vunpack.c.h.b16 %v2893
        %v3182 = vunpack.c.l.b16 %v2894
        %v3183 = vunpack.c.h.b16 %v2894
        %v3184 = vpack.c.b16 %v3060, %v3056
        %v3185 = vpack.c.b16 %v3061, %v3057
        %v3186 = vpack.c.b16 %v3062, %v3058
        %v3187 = vpack.c.b16 %v3063, %v3059
        %v3188 = vpack.c.b16 %v3068, %v3064
        %v3189 = vpack.c.b16 %v3069, %v3065
        %v3190 = vpack.c.b16 %v3070, %v3066
        %v3191 = vpack.c.b16 %v3071, %v3067
        %v3192 = vpack.c.b16 %v3076, %v3072
        %v3193 = vpack.c.b16 %v3077, %v3073
        %v3194 = vpack.c.b16 %v3078, %v3074
        %v3195 = vpack.c.b16 %v3079, %v3075
        %v3196 = vpack.c.b16 %v3084, %v3080
        %v3197 = vpack.c.b16 %v3085, %v3081
        %v3198 = vpack.c.b16 %v3086, %v3082
        %v3199 = vpack.c.b16 %v3087, %v3083
        %v3200 = vpack.c.b16 %v3092, %v3088
        %v3201 = vpack.c.b16 %v3093, %v3089
        %v3202 = vpack.c.b16 %v3094, %v3090
        %v3203 = vpack.c.b16 %v3095, %v3091
        %v3204 = vpack.c.b16 %v3100, %v3096
        %v3205 = vpack.c.b16 %v3101, %v3097
        %v3206 = vpack.c.b16 %v3102, %v3098
        %v3207 = vpack.c.b16 %v3103, %v3099
        %v3208 = vpack.c.b16 %v3108, %v3104
        %v3209 = vpack.c.b16 %v3109, %v3105
        %v3210 = vpack.c.b16 %v3110, %v3106
        %v3211 = vpack.c.b16 %v3111, %v3107
        %v3212 = vpack.c.b16 %v3116, %v3112
        %v3213 = vpack.c.b16 %v3117, %v3113
        %v3214 = vpack.c.b16 %v3118, %v3114
        %v3215 = vpack.c.b16 %v3119, %v3115
        %v3216 = vpack.c.b16 %v3124, %v3120
        %v3217 = vpack.c.b16 %v3125, %v3121
        %v3218 = vpack.c.b16 %v3126, %v3122
        %v3219 = vpack.c.b16 %v3127, %v3123
        %v3220 = vpack.c.b16 %v3132, %v3128
        %v3221 = vpack.c.b16 %v3133, %v3129
        %v3222 = vpack.c.b16 %v3134, %v3130
        %v3223 = vpack.c.b16 %v3135, %v3131
        %v3224 = vpack.c.b16 %v3140, %v3136
        %v3225 = vpack.c.b16 %v3141, %v3137
        %v3226 = vpack.c.b16 %v3142, %v3138
        %v3227 = vpack.c.b16 %v3143, %v3139
        %v3228 = vpack.c.b16 %v3148, %v3144
        %v3229 = vpack.c.b16 %v3149, %v3145
        %v3230 = vpack.c.b16 %v3150, %v3146
        %v3231 = vpack.c.b16 %v3151, %v3147
        %v3232 = vpack.c.b16 %v3156, %v3152
        %v3233 = vpack.c.b16 %v3157, %v3153
        %v3234 = vpack.c.b16 %v3158, %v3154
        %v3235 = vpack.c.b16 %v3159, %v3155
        %v3236 = vpack.c.b16 %v3164, %v3160
        %v3237 = vpack.c.b16 %v3165, %v3161
        %v3238 = vpack.c.b16 %v3166, %v3162
        %v3239 = vpack.c.b16 %v3167, %v3163
        %v3240 = vpack.c.b16 %v3172, %v3168
        %v3241 = vpack.c.b16 %v3173, %v3169
        %v3242 = vpack.c.b16 %v3174, %v3170
        %v3243 = vpack.c.b16 %v3175, %v3171
        %v3244 = vpack.c.b16 %v3180, %v3176
        %v3245 = vpack.c.b16 %v3181, %v3177
        %v3246 = vpack.c.b16 %v3182, %v3178
        %v3247 = vpack.c.b16 %v3183, %v3179
        %3312 = vmatprep.subr.bf16.mxu0 %v3185
        %3313 = vmatpush1.bf16.msra.mxu0 %v3184
        %3314 = vmatprep.subr.bf16.mxu0 %v3189
        %3315 = vmatpush1.bf16.msra.mxu0 %v3188
        %3316 = vmatprep.subr.bf16.mxu0 %v3193
        %3317 = vmatpush1.bf16.msra.mxu0 %v3192
        %3318 = vmatprep.subr.bf16.mxu0 %v3197
        %3319 = vmatpush1.bf16.msra.mxu0 %v3196
        %3320 = vmatprep.subr.bf16.mxu0 %v3201
        %3321 = vmatpush1.bf16.msra.mxu0 %v3200
        %3322 = vmatprep.subr.bf16.mxu0 %v3205
        %3323 = vmatpush1.bf16.msra.mxu0 %v3204
        %3324 = vmatprep.subr.bf16.mxu0 %v3209
        %3325 = vmatpush1.bf16.msra.mxu0 %v3208
        %3326 = vmatprep.subr.bf16.mxu0 %v3213
        %3327 = vmatpush1.bf16.msra.mxu0 %v3212
        %3328 = vmatprep.subr.bf16.mxu0 %v3217
        %3329 = vmatpush1.bf16.msra.mxu0 %v3216
        %3330 = vmatprep.subr.bf16.mxu0 %v3221
        %3331 = vmatpush1.bf16.msra.mxu0 %v3220
        %3332 = vmatprep.subr.bf16.mxu0 %v3225
        %3333 = vmatpush1.bf16.msra.mxu0 %v3224
        %3334 = vmatprep.subr.bf16.mxu0 %v3229
        %3335 = vmatpush1.bf16.msra.mxu0 %v3228
        %3336 = vmatprep.subr.bf16.mxu0 %v3233
        %3337 = vmatpush1.bf16.msra.mxu0 %v3232
        %3338 = vmatprep.subr.bf16.mxu0 %v3237
        %3339 = vmatpush1.bf16.msra.mxu0 %v3236
        %3340 = vmatprep.subr.bf16.mxu0 %v3241
        %3341 = vmatpush1.bf16.msra.mxu0 %v3240
        %3342 = vmatprep.subr.bf16.mxu0 %v3245
        %3343 = vmatpush1.bf16.msra.mxu0 %v3244
        %3344 = vmatprep.mubr.bf16.mxu0 %v2961
        %3345 = vmatmul.mubr.bf16.gmra.mrb[0].mxu0 %v2960
        %v3346 = vpop.f32.mrb[0].mxu0
        %v3347 = vadd.f32 %v2900, %v3346
        %v3348 = vpop.f32.mrb[0].mxu0
        %v3349 = vadd.f32 %v2904, %v3348
        %v3350 = vpop.f32.mrb[0].mxu0
        %v3351 = vadd.f32 %v2900, %v3350
        %v3352 = vpop.f32.mrb[0].mxu0
        %v3353 = vadd.f32 %v2904, %v3352
        %3354 = vmatprep.mubr.bf16.mxu0 %v2963
        %3355 = vmatmul.mubr.bf16.gmra.mrb[0].mxu0 %v2962
        %v3356 = vpop.f32.mrb[0].mxu0
        %v3357 = vadd.f32 %v2900, %v3356
        %v3358 = vpop.f32.mrb[0].mxu0
        %v3359 = vadd.f32 %v2904, %v3358
        %v3360 = vpop.f32.mrb[0].mxu0
        %v3361 = vadd.f32 %v2900, %v3360
        %v3362 = vpop.f32.mrb[0].mxu0
        %v3363 = vadd.f32 %v2904, %v3362
        %3364 = vmatprep.mubr.bf16.mxu0 %v2965
        %3365 = vmatmul.mubr.bf16.gmra.mrb[0].mxu0 %v2964
        %v3366 = vpop.f32.mrb[0].mxu0
        %v3367 = vadd.f32 %v2900, %v3366
        %v3368 = vpop.f32.mrb[0].mxu0
        %v3369 = vadd.f32 %v2904, %v3368
        %v3370 = vpop.f32.mrb[0].mxu0
        %v3371 = vadd.f32 %v2900, %v3370
        %v3372 = vpop.f32.mrb[0].mxu0
        %v3373 = vadd.f32 %v2904, %v3372
        %3374 = vmatprep.mubr.bf16.mxu0 %v2967
        %3375 = vmatmul.mubr.bf16.gmra.mrb[0].mxu0 %v2966
        %v3376 = vpop.f32.mrb[0].mxu0
        %v3377 = vadd.f32 %v2900, %v3376
        %v3378 = vpop.f32.mrb[0].mxu0
        %v3379 = vadd.f32 %v2904, %v3378
        %v3380 = vpop.f32.mrb[0].mxu0
        %v3381 = vadd.f32 %v2900, %v3380
        %v3382 = vpop.f32.mrb[0].mxu0
        %v3383 = vadd.f32 %v2904, %v3382
        %3384 = vmatprep.mubr.bf16.mxu0 %v2969
        %3385 = vmatmul.mubr.bf16.gmra.mrb[0].mxu0 %v2968
        %v3386 = vpop.f32.mrb[0].mxu0
        %v3387 = vadd.f32 %v2900, %v3386
        %v3388 = vpop.f32.mrb[0].mxu0
        %v3389 = vadd.f32 %v2904, %v3388
        %v3390 = vpop.f32.mrb[0].mxu0
        %v3391 = vadd.f32 %v2900, %v3390
        %v3392 = vpop.f32.mrb[0].mxu0
        %v3393 = vadd.f32 %v2904, %v3392
        %3394 = vmatprep.mubr.bf16.mxu0 %v2971
        %3395 = vmatmul.mubr.bf16.gmra.mrb[0].mxu0 %v2970
        %v3396 = vpop.f32.mrb[0].mxu0
        %v3397 = vadd.f32 %v2900, %v3396
        %v3398 = vpop.f32.mrb[0].mxu0
        %v3399 = vadd.f32 %v2904, %v3398
        %v3400 = vpop.f32.mrb[0].mxu0
        %v3401 = vadd.f32 %v2900, %v3400
        %v3402 = vpop.f32.mrb[0].mxu0
        %v3403 = vadd.f32 %v2904, %v3402
        %3404 = vmatprep.mubr.bf16.mxu0 %v2973
        %3405 = vmatmul.mubr.bf16.gmra.mrb[0].mxu0 %v2972
        %v3406 = vpop.f32.mrb[0].mxu0
        %v3407 = vadd.f32 %v2900, %v3406
        %v3408 = vpop.f32.mrb[0].mxu0
        %v3409 = vadd.f32 %v2904, %v3408
        %v3410 = vpop.f32.mrb[0].mxu0
        %v3411 = vadd.f32 %v2900, %v3410
        %v3412 = vpop.f32.mrb[0].mxu0
        %v3413 = vadd.f32 %v2904, %v3412
        %3414 = vmatprep.mubr.bf16.mxu0 %v2975
        %3415 = vmatmul.mubr.bf16.gmra.mrb[0].mxu0 %v2974
        %v3416 = vpop.f32.mrb[0].mxu0
        %v3417 = vadd.f32 %v2900, %v3416
        %v3418 = vpop.f32.mrb[0].mxu0
        %v3419 = vadd.f32 %v2904, %v3418
        %v3420 = vpop.f32.mrb[0].mxu0
        %v3421 = vadd.f32 %v2900, %v3420
        %v3422 = vpop.f32.mrb[0].mxu0
        %v3423 = vadd.f32 %v2904, %v3422
        %3424 = vdwg.mxu0
        %3425 = vmatprep.subr.bf16.mxu0 %v3187
        %3426 = vmatpush1.bf16.msra.mxu0 %v3186
        %3427 = vmatprep.subr.bf16.mxu0 %v3191
        %3428 = vmatpush1.bf16.msra.mxu0 %v3190
        %3429 = vmatprep.subr.bf16.mxu0 %v3195
        %3430 = vmatpush1.bf16.msra.mxu0 %v3194
        %3431 = vmatprep.subr.bf16.mxu0 %v3199
        %3432 = vmatpush1.bf16.msra.mxu0 %v3198
        %3433 = vmatprep.subr.bf16.mxu0 %v3203
        %3434 = vmatpush1.bf16.msra.mxu0 %v3202
        %3435 = vmatprep.subr.bf16.mxu0 %v3207
        %3436 = vmatpush1.bf16.msra.mxu0 %v3206
        %3437 = vmatprep.subr.bf16.mxu0 %v3211
        %3438 = vmatpush1.bf16.msra.mxu0 %v3210
        %3439 = vmatprep.subr.bf16.mxu0 %v3215
        %3440 = vmatpush1.bf16.msra.mxu0 %v3214
        %3441 = vmatprep.subr.bf16.mxu0 %v3219
        %3442 = vmatpush1.bf16.msra.mxu0 %v3218
        %3443 = vmatprep.subr.bf16.mxu0 %v3223
        %3444 = vmatpush1.bf16.msra.mxu0 %v3222
        %3445 = vmatprep.subr.bf16.mxu0 %v3227
        %3446 = vmatpush1.bf16.msra.mxu0 %v3226
        %3447 = vmatprep.subr.bf16.mxu0 %v3231
        %3448 = vmatpush1.bf16.msra.mxu0 %v3230
        %3449 = vmatprep.subr.bf16.mxu0 %v3235
        %3450 = vmatpush1.bf16.msra.mxu0 %v3234
        %3451 = vmatprep.subr.bf16.mxu0 %v3239
        %3452 = vmatpush1.bf16.msra.mxu0 %v3238
        %3453 = vmatprep.subr.bf16.mxu0 %v3243
        %3454 = vmatpush1.bf16.msra.mxu0 %v3242
        %3455 = vmatprep.subr.bf16.mxu0 %v3247
        %3456 = vmatpush1.bf16.msra.mxu0 %v3246
        %3457 = vmatprep.mubr.bf16.mxu0 %v2961
        %3458 = vmatmul.mubr.bf16.gmra.mrb[0].mxu0 %v2960
        %v3459 = vpop.f32.mrb[0].mxu0
        %v3460 = vadd.f32 %v2908, %v3459
        %v3461 = vpop.f32.mrb[0].mxu0
        %v3462 = vpop.f32.mrb[0].mxu0
        %v3463 = vadd.f32 %v2908, %v3462
        %v3464 = vpop.f32.mrb[0].mxu0
        %3465 = vmatprep.mubr.bf16.mxu0 %v2963
        %3466 = vmatmul.mubr.bf16.gmra.mrb[0].mxu0 %v2962
        %v3467 = vpop.f32.mrb[0].mxu0
        %v3468 = vadd.f32 %v2908, %v3467
        %v3469 = vpop.f32.mrb[0].mxu0
        %v3470 = vpop.f32.mrb[0].mxu0
        %v3471 = vadd.f32 %v2908, %v3470
        %v3472 = vpop.f32.mrb[0].mxu0
        %3473 = vmatprep.mubr.bf16.mxu0 %v2965
        %3474 = vmatmul.mubr.bf16.gmra.mrb[0].mxu0 %v2964
        %v3475 = vpop.f32.mrb[0].mxu0
        %v3476 = vadd.f32 %v2908, %v3475
        %v3477 = vpop.f32.mrb[0].mxu0
        %v3478 = vpop.f32.mrb[0].mxu0
        %v3479 = vadd.f32 %v2908, %v3478
        %v3480 = vpop.f32.mrb[0].mxu0
        %3481 = vmatprep.mubr.bf16.mxu0 %v2967
        %3482 = vmatmul.mubr.bf16.gmra.mrb[0].mxu0 %v2966
        %v3483 = vpop.f32.mrb[0].mxu0
        %v3484 = vadd.f32 %v2908, %v3483
        %v3485 = vpop.f32.mrb[0].mxu0
        %v3486 = vpop.f32.mrb[0].mxu0
        %v3487 = vadd.f32 %v2908, %v3486
        %v3488 = vpop.f32.mrb[0].mxu0
        %3489 = vmatprep.mubr.bf16.mxu0 %v2969
        %3490 = vmatmul.mubr.bf16.gmra.mrb[0].mxu0 %v2968
        %v3491 = vpop.f32.mrb[0].mxu0
        %v3492 = vadd.f32 %v2908, %v3491
        %v3493 = vpop.f32.mrb[0].mxu0
        %v3494 = vpop.f32.mrb[0].mxu0
        %v3495 = vadd.f32 %v2908, %v3494
        %v3496 = vpop.f32.mrb[0].mxu0
        %3497 = vmatprep.mubr.bf16.mxu0 %v2971
        %3498 = vmatmul.mubr.bf16.gmra.mrb[0].mxu0 %v2970
        %v3499 = vpop.f32.mrb[0].mxu0
        %v3500 = vadd.f32 %v2908, %v3499
        %v3501 = vpop.f32.mrb[0].mxu0
        %v3502 = vpop.f32.mrb[0].mxu0
        %v3503 = vadd.f32 %v2908, %v3502
        %v3504 = vpop.f32.mrb[0].mxu0
        %3505 = vmatprep.mubr.bf16.mxu0 %v2973
        %3506 = vmatmul.mubr.bf16.gmra.mrb[0].mxu0 %v2972
        %v3507 = vpop.f32.mrb[0].mxu0
        %v3508 = vadd.f32 %v2908, %v3507
        %v3509 = vpop.f32.mrb[0].mxu0
        %v3510 = vpop.f32.mrb[0].mxu0
        %v3511 = vadd.f32 %v2908, %v3510
        %v3512 = vpop.f32.mrb[0].mxu0
        %3513 = vmatprep.mubr.bf16.mxu0 %v2975
        %3514 = vmatmul.mubr.bf16.gmra.mrb[0].mxu0 %v2974
        %v3515 = vpop.f32.mrb[0].mxu0
        %v3516 = vadd.f32 %v2908, %v3515
        %v3517 = vpop.f32.mrb[0].mxu0
        %v3518 = vpop.f32.mrb[0].mxu0
        %v3519 = vadd.f32 %v2908, %v3518
        %v3520 = vpop.f32.mrb[0].mxu0
        %3521 = vdwg.mxu0
        %v3522 = vld [vmem:[#allocation4 + $0x4] sm:$0x1]
        %v3524 = vlaneseq
        %v3525 = vshrl.u32 %v3524, 7
        %v3526 = vsub.s32 0, %v3525
        %v3527 = vrot.slane %v3522, %v3526
        %v3529 = vadd.f32 %v3460, %v3527
        %v3530 = vadd.f32 %v3463, %v3527
        %v3531 = vadd.f32 %v3468, %v3527
        %v3532 = vadd.f32 %v3471, %v3527
        %v3533 = vadd.f32 %v3476, %v3527
        %v3534 = vadd.f32 %v3479, %v3527
        %v3535 = vadd.f32 %v3484, %v3527
        %v3536 = vadd.f32 %v3487, %v3527
        %v3537 = vadd.f32 %v3492, %v3527
        %v3538 = vadd.f32 %v3495, %v3527
        %v3539 = vadd.f32 %v3500, %v3527
        %v3540 = vadd.f32 %v3503, %v3527
        %v3541 = vadd.f32 %v3508, %v3527
        %v3542 = vadd.f32 %v3511, %v3527
        %v3543 = vadd.f32 %v3516, %v3527
        %v3544 = vadd.f32 %v3519, %v3527
        %v3545 = vxor.u32 %v3529, 2147483648
        %v3546 = vxor.u32 %v3530, 2147483648
        %v3547 = vxor.u32 %v3531, 2147483648
        %v3548 = vxor.u32 %v3532, 2147483648
        %v3549 = vxor.u32 %v3533, 2147483648
        %v3550 = vxor.u32 %v3534, 2147483648
        %v3551 = vxor.u32 %v3535, 2147483648
        %v3552 = vxor.u32 %v3536, 2147483648
        %v3553 = vxor.u32 %v3537, 2147483648
        %v3554 = vxor.u32 %v3538, 2147483648
        %v3555 = vxor.u32 %v3539, 2147483648
        %v3556 = vxor.u32 %v3540, 2147483648
        %v3557 = vxor.u32 %v3541, 2147483648
        %v3558 = vxor.u32 %v3542, 2147483648
        %v3559 = vxor.u32 %v3543, 2147483648
        %v3560 = vxor.u32 %v3544, 2147483648
        %v3561 = vmul.f32 %v3545, 1.442695
        %v3562 = vpow.pop %v3561
        %v3563 = vmul.f32 %v3546, 1.442695
        %v3564 = vpow.pop %v3563
        %v3565 = vmul.f32 %v3547, 1.442695
        %v3566 = vpow.pop %v3565
        %v3567 = vmul.f32 %v3548, 1.442695
        %v3568 = vpow.pop %v3567
        %v3569 = vmul.f32 %v3549, 1.442695
        %v3570 = vpow.pop %v3569
        %v3571 = vmul.f32 %v3550, 1.442695
        %v3572 = vpow.pop %v3571
        %v3573 = vmul.f32 %v3551, 1.442695
        %v3574 = vpow.pop %v3573
        %v3575 = vmul.f32 %v3552, 1.442695
        %v3576 = vpow.pop %v3575
        %v3577 = vmul.f32 %v3553, 1.442695
        %v3578 = vpow.pop %v3577
        %v3579 = vmul.f32 %v3554, 1.442695
        %v3580 = vpow.pop %v3579
        %v3581 = vmul.f32 %v3555, 1.442695
        %v3582 = vpow.pop %v3581
        %v3583 = vmul.f32 %v3556, 1.442695
        %v3584 = vpow.pop %v3583
        %v3585 = vmul.f32 %v3557, 1.442695
        %v3586 = vpow.pop %v3585
        %v3587 = vmul.f32 %v3558, 1.442695
        %v3588 = vpow.pop %v3587
        %v3589 = vmul.f32 %v3559, 1.442695
        %v3590 = vpow.pop %v3589
        %v3591 = vmul.f32 %v3560, 1.442695
        %v3592 = vpow.pop %v3591
        %v3593 = vadd.f32 %v3562, 1.0
        %v3594 = vadd.f32 %v3564, 1.0
        %v3595 = vadd.f32 %v3566, 1.0
        %v3596 = vadd.f32 %v3568, 1.0
        %v3597 = vadd.f32 %v3570, 1.0
        %v3598 = vadd.f32 %v3572, 1.0
        %v3599 = vadd.f32 %v3574, 1.0
        %v3600 = vadd.f32 %v3576, 1.0
        %v3601 = vadd.f32 %v3578, 1.0
        %v3602 = vadd.f32 %v3580, 1.0
        %v3603 = vadd.f32 %v3582, 1.0
        %v3604 = vadd.f32 %v3584, 1.0
        %v3605 = vadd.f32 %v3586, 1.0
        %v3606 = vadd.f32 %v3588, 1.0
        %v3607 = vadd.f32 %v3590, 1.0
        %v3608 = vadd.f32 %v3592, 1.0
        %v3609 = vrcp.pop %v3593
        %v3610 = vmul.f32 1.0, %v3609
        %v3611 = vrcp.pop %v3594
        %v3612 = vmul.f32 1.0, %v3611
        %v3613 = vrcp.pop %v3595
        %v3614 = vmul.f32 1.0, %v3613
        %v3615 = vrcp.pop %v3596
        %v3616 = vmul.f32 1.0, %v3615
        %v3617 = vrcp.pop %v3597
        %v3618 = vmul.f32 1.0, %v3617
        %v3619 = vrcp.pop %v3598
        %v3620 = vmul.f32 1.0, %v3619
        %v3621 = vrcp.pop %v3599
        %v3622 = vmul.f32 1.0, %v3621
        %v3623 = vrcp.pop %v3600
        %v3624 = vmul.f32 1.0, %v3623
        %v3625 = vrcp.pop %v3601
        %v3626 = vmul.f32 1.0, %v3625
        %v3627 = vrcp.pop %v3602
        %v3628 = vmul.f32 1.0, %v3627
        %v3629 = vrcp.pop %v3603
        %v3630 = vmul.f32 1.0, %v3629
        %v3631 = vrcp.pop %v3604
        %v3632 = vmul.f32 1.0, %v3631
        %v3633 = vrcp.pop %v3605
        %v3634 = vmul.f32 1.0, %v3633
        %v3635 = vrcp.pop %v3606
        %v3636 = vmul.f32 1.0, %v3635
        %v3637 = vrcp.pop %v3607
        %v3638 = vmul.f32 1.0, %v3637
        %v3639 = vrcp.pop %v3608
        %v3640 = vmul.f32 1.0, %v3639
        %v3641 = vsub.f32 1.0, %v3610
        %v3642 = vsub.f32 1.0, %v3612
        %v3643 = vsub.f32 1.0, %v3614
        %v3644 = vsub.f32 1.0, %v3616
        %v3645 = vsub.f32 1.0, %v3618
        %v3646 = vsub.f32 1.0, %v3620
        %v3647 = vsub.f32 1.0, %v3622
        %v3648 = vsub.f32 1.0, %v3624
        %v3649 = vsub.f32 1.0, %v3626
        %v3650 = vsub.f32 1.0, %v3628
        %v3651 = vsub.f32 1.0, %v3630
        %v3652 = vsub.f32 1.0, %v3632
        %v3653 = vsub.f32 1.0, %v3634
        %v3654 = vsub.f32 1.0, %v3636
        %v3655 = vsub.f32 1.0, %v3638
        %v3656 = vsub.f32 1.0, %v3640
        %3658 = vset.pattern.permute.xlu0 0
        %3659 = vperm.xlu0 %3658, %v3641
        %v3660 = vpop.permute.xlu0 %3659
        %3663 = vset.pattern.permute.xlu0 0
        %3664 = vperm.xlu0 %3663, %v3642
        %v3665 = vpop.permute.xlu0 %3664
        %3668 = vset.pattern.permute.xlu0 0
        %3669 = vperm.xlu0 %3668, %v3643
        %v3670 = vpop.permute.xlu0 %3669
        %3673 = vset.pattern.permute.xlu0 0
        %3674 = vperm.xlu0 %3673, %v3644
        %v3675 = vpop.permute.xlu0 %3674
        %3678 = vset.pattern.permute.xlu0 0
        %3679 = vperm.xlu0 %3678, %v3645
        %v3680 = vpop.permute.xlu0 %3679
        %3683 = vset.pattern.permute.xlu0 0
        %3684 = vperm.xlu0 %3683, %v3646
        %v3685 = vpop.permute.xlu0 %3684
        %3688 = vset.pattern.permute.xlu0 0
        %3689 = vperm.xlu0 %3688, %v3647
        %v3690 = vpop.permute.xlu0 %3689
        %3693 = vset.pattern.permute.xlu0 0
        %3694 = vperm.xlu0 %3693, %v3648
        %v3695 = vpop.permute.xlu0 %3694
        %3698 = vset.pattern.permute.xlu0 0
        %3699 = vperm.xlu0 %3698, %v3649
        %v3700 = vpop.permute.xlu0 %3699
        %3703 = vset.pattern.permute.xlu0 0
        %3704 = vperm.xlu0 %3703, %v3650
        %v3705 = vpop.permute.xlu0 %3704
        %3708 = vset.pattern.permute.xlu0 0
        %3709 = vperm.xlu0 %3708, %v3651
        %v3710 = vpop.permute.xlu0 %3709
        %3713 = vset.pattern.permute.xlu0 0
        %3714 = vperm.xlu0 %3713, %v3652
        %v3715 = vpop.permute.xlu0 %3714
        %3718 = vset.pattern.permute.xlu0 0
        %3719 = vperm.xlu0 %3718, %v3653
        %v3720 = vpop.permute.xlu0 %3719
        %3723 = vset.pattern.permute.xlu0 0
        %3724 = vperm.xlu0 %3723, %v3654
        %v3725 = vpop.permute.xlu0 %3724
        %3728 = vset.pattern.permute.xlu0 0
        %3729 = vperm.xlu0 %3728, %v3655
        %v3730 = vpop.permute.xlu0 %3729
        %3733 = vset.pattern.permute.xlu0 0
        %3734 = vperm.xlu0 %3733, %v3656
        %v3735 = vpop.permute.xlu0 %3734
        %v3737 = vmul.f32 %v3660, %v3347
        %v3738 = vmul.f32 %v3660, %v3349
        %v3739 = vmul.f32 %v3665, %v3351
        %v3740 = vmul.f32 %v3665, %v3353
        %v3741 = vmul.f32 %v3670, %v3357
        %v3742 = vmul.f32 %v3670, %v3359
        %v3743 = vmul.f32 %v3675, %v3361
        %v3744 = vmul.f32 %v3675, %v3363
        %v3745 = vmul.f32 %v3680, %v3367
        %v3746 = vmul.f32 %v3680, %v3369
        %v3747 = vmul.f32 %v3685, %v3371
        %v3748 = vmul.f32 %v3685, %v3373
        %v3749 = vmul.f32 %v3690, %v3377
        %v3750 = vmul.f32 %v3690, %v3379
        %v3751 = vmul.f32 %v3695, %v3381
        %v3752 = vmul.f32 %v3695, %v3383
        %v3753 = vmul.f32 %v3700, %v3387
        %v3754 = vmul.f32 %v3700, %v3389
        %v3755 = vmul.f32 %v3705, %v3391
        %v3756 = vmul.f32 %v3705, %v3393
        %v3757 = vmul.f32 %v3710, %v3397
        %v3758 = vmul.f32 %v3710, %v3399
        %v3759 = vmul.f32 %v3715, %v3401
        %v3760 = vmul.f32 %v3715, %v3403
        %v3761 = vmul.f32 %v3720, %v3407
        %v3762 = vmul.f32 %v3720, %v3409
        %v3763 = vmul.f32 %v3725, %v3411
        %v3764 = vmul.f32 %v3725, %v3413
        %v3765 = vmul.f32 %v3730, %v3417
        %v3766 = vmul.f32 %v3730, %v3419
        %v3767 = vmul.f32 %v3735, %v3421
        %v3768 = vmul.f32 %v3735, %v3423
        %v3769 = vld [vmem:[#allocation4] sm:$0x3]
        %3771 = vset.pattern.permute.xlu0 0
        %3772 = vperm.xlu0 %3771, %v3610
        %v3773 = vpop.permute.xlu0 %3772
        %3776 = vset.pattern.permute.xlu0 0
        %3777 = vperm.xlu0 %3776, %v3612
        %v3778 = vpop.permute.xlu0 %3777
        %3781 = vset.pattern.permute.xlu0 0
        %3782 = vperm.xlu0 %3781, %v3614
        %v3783 = vpop.permute.xlu0 %3782
        %3786 = vset.pattern.permute.xlu0 0
        %3787 = vperm.xlu0 %3786, %v3616
        %v3788 = vpop.permute.xlu0 %3787
        %3791 = vset.pattern.permute.xlu0 0
        %3792 = vperm.xlu0 %3791, %v3618
        %v3793 = vpop.permute.xlu0 %3792
        %3796 = vset.pattern.permute.xlu0 0
        %3797 = vperm.xlu0 %3796, %v3620
        %v3798 = vpop.permute.xlu0 %3797
        %3801 = vset.pattern.permute.xlu0 0
        %3802 = vperm.xlu0 %3801, %v3622
        %v3803 = vpop.permute.xlu0 %3802
        %3806 = vset.pattern.permute.xlu0 0
        %3807 = vperm.xlu0 %3806, %v3624
        %v3808 = vpop.permute.xlu0 %3807
        %3811 = vset.pattern.permute.xlu0 0
        %3812 = vperm.xlu0 %3811, %v3626
        %v3813 = vpop.permute.xlu0 %3812
        %3816 = vset.pattern.permute.xlu0 0
        %3817 = vperm.xlu0 %3816, %v3628
        %v3818 = vpop.permute.xlu0 %3817
        %3821 = vset.pattern.permute.xlu0 0
        %3822 = vperm.xlu0 %3821, %v3630
        %v3823 = vpop.permute.xlu0 %3822
        %3826 = vset.pattern.permute.xlu0 0
        %3827 = vperm.xlu0 %3826, %v3632
        %v3828 = vpop.permute.xlu0 %3827
        %3831 = vset.pattern.permute.xlu0 0
        %3832 = vperm.xlu0 %3831, %v3634
        %v3833 = vpop.permute.xlu0 %3832
        %3836 = vset.pattern.permute.xlu0 0
        %3837 = vperm.xlu0 %3836, %v3636
        %v3838 = vpop.permute.xlu0 %3837
        %3841 = vset.pattern.permute.xlu0 0
        %3842 = vperm.xlu0 %3841, %v3638
        %v3843 = vpop.permute.xlu0 %3842
        %3846 = vset.pattern.permute.xlu0 0
        %3847 = vperm.xlu0 %3846, %v3640
        %v3848 = vpop.permute.xlu0 %3847
        %v3851 = vlaneseq
        %v3852 = vshrl.u32 %v3851, 7
        %v3853 = vsub.s32 0, %v3852
        %v3854 = vrot.slane %v3769, %v3853
        %v3855 = vlaneseq
        %v3856 = vshrl.u32 %v3855, 7
        %v3857 = vsub.s32 1, %v3856
        %v3858 = vrot.slane %v3769, %v3857
        %v3861 = vmul.f32 %v3773, %v3854
        %v3862 = vmul.f32 %v3773, %v3858
        %v3863 = vmul.f32 %v3778, %v3854
        %v3864 = vmul.f32 %v3778, %v3858
        %v3865 = vmul.f32 %v3783, %v3854
        %v3866 = vmul.f32 %v3783, %v3858
        %v3867 = vmul.f32 %v3788, %v3854
        %v3868 = vmul.f32 %v3788, %v3858
        %v3869 = vmul.f32 %v3793, %v3854
        %v3870 = vmul.f32 %v3793, %v3858
        %v3871 = vmul.f32 %v3798, %v3854
        %v3872 = vmul.f32 %v3798, %v3858
        %v3873 = vmul.f32 %v3803, %v3854
        %v3874 = vmul.f32 %v3803, %v3858
        %v3875 = vmul.f32 %v3808, %v3854
        %v3876 = vmul.f32 %v3808, %v3858
        %v3877 = vmul.f32 %v3813, %v3854
        %v3878 = vmul.f32 %v3813, %v3858
        %v3879 = vmul.f32 %v3818, %v3854
        %v3880 = vmul.f32 %v3818, %v3858
        %v3881 = vmul.f32 %v3823, %v3854
        %v3882 = vmul.f32 %v3823, %v3858
        %v3883 = vmul.f32 %v3828, %v3854
        %v3884 = vmul.f32 %v3828, %v3858
        %v3885 = vmul.f32 %v3833, %v3854
        %v3886 = vmul.f32 %v3833, %v3858
        %v3887 = vmul.f32 %v3838, %v3854
        %v3888 = vmul.f32 %v3838, %v3858
        %v3889 = vmul.f32 %v3843, %v3854
        %v3890 = vmul.f32 %v3843, %v3858
        %v3891 = vmul.f32 %v3848, %v3854
        %v3892 = vmul.f32 %v3848, %v3858
        %v3893 = vadd.f32 %v3737, %v3861
        %v3894 = vadd.f32 %v3738, %v3862
        %v3895 = vadd.f32 %v3739, %v3863
        %v3896 = vadd.f32 %v3740, %v3864
        %v3897 = vadd.f32 %v3741, %v3865
        %v3898 = vadd.f32 %v3742, %v3866
        %v3899 = vadd.f32 %v3743, %v3867
        %v3900 = vadd.f32 %v3744, %v3868
        %v3901 = vadd.f32 %v3745, %v3869
        %v3902 = vadd.f32 %v3746, %v3870
        %v3903 = vadd.f32 %v3747, %v3871
        %v3904 = vadd.f32 %v3748, %v3872
        %v3905 = vadd.f32 %v3749, %v3873
        %v3906 = vadd.f32 %v3750, %v3874
        %v3907 = vadd.f32 %v3751, %v3875
        %v3908 = vadd.f32 %v3752, %v3876
        %v3909 = vadd.f32 %v3753, %v3877
        %v3910 = vadd.f32 %v3754, %v3878
        %v3911 = vadd.f32 %v3755, %v3879
        %v3912 = vadd.f32 %v3756, %v3880
        %v3913 = vadd.f32 %v3757, %v3881
        %v3914 = vadd.f32 %v3758, %v3882
        %v3915 = vadd.f32 %v3759, %v3883
        %v3916 = vadd.f32 %v3760, %v3884
        %v3917 = vadd.f32 %v3761, %v3885
        %v3918 = vadd.f32 %v3762, %v3886
        %v3919 = vadd.f32 %v3763, %v3887
        %v3920 = vadd.f32 %v3764, %v3888
        %v3921 = vadd.f32 %v3765, %v3889
        %v3922 = vadd.f32 %v3766, %v3890
        %v3923 = vadd.f32 %v3767, %v3891
        %v3924 = vadd.f32 %v3768, %v3892
        %v3925 = vpack.c.bf16 %v3895, %v3893
        %v3926 = vpack.c.bf16 %v3896, %v3894
        %v3927 = vpack.c.bf16 %v3899, %v3897
        %v3928 = vpack.c.bf16 %v3900, %v3898
        %v3929 = vpack.c.bf16 %v3903, %v3901
        %v3930 = vpack.c.bf16 %v3904, %v3902
        %v3931 = vpack.c.bf16 %v3907, %v3905
        %v3932 = vpack.c.bf16 %v3908, %v3906
        %v3933 = vpack.c.bf16 %v3911, %v3909
        %v3934 = vpack.c.bf16 %v3912, %v3910
        %v3935 = vpack.c.bf16 %v3915, %v3913
        %v3936 = vpack.c.bf16 %v3916, %v3914
        %v3937 = vpack.c.bf16 %v3919, %v3917
        %v3938 = vpack.c.bf16 %v3920, %v3918
        %v3939 = vpack.c.bf16 %v3923, %v3921
        %v3940 = vpack.c.bf16 %v3924, %v3922
        %v3941 = vld [vmem:[#allocation2] sm:$0xff]
        %v3942 = vld [vmem:[#allocation2 + $0x8] sm:$0xff]
        %v3943 = vld [vmem:[#allocation2 + $0x10] sm:$0xff]
        %v3944 = vld [vmem:[#allocation2 + $0x18] sm:$0xff]
        %v3945 = vld [vmem:[#allocation2 + $0x20] sm:$0xff]
        %v3946 = vld [vmem:[#allocation2 + $0x28] sm:$0xff]
        %v3947 = vld [vmem:[#allocation2 + $0x30] sm:$0xff]
        %v3948 = vld [vmem:[#allocation2 + $0x38] sm:$0xff]
        %v3949 = vld [vmem:[#allocation2 + $0x40] sm:$0xff]
        %v3950 = vld [vmem:[#allocation2 + $0x48] sm:$0xff]
        %v3951 = vld [vmem:[#allocation2 + $0x50] sm:$0xff]
        %v3952 = vld [vmem:[#allocation2 + $0x58] sm:$0xff]
        %v3953 = vld [vmem:[#allocation2 + $0x60] sm:$0xff]
        %v3954 = vld [vmem:[#allocation2 + $0x68] sm:$0xff]
        %v3955 = vld [vmem:[#allocation2 + $0x70] sm:$0xff]
        %v3956 = vld [vmem:[#allocation2 + $0x78] sm:$0xff]
        %3957 = vmatprep.subr.bf16.mxu0 %v3942
        %3958 = vmatpush1.bf16.xpose.msra.mxu0 %v3941
        %3959 = vmatprep.subr.bf16.mxu0 %v3944
        %3960 = vmatpush1.bf16.xpose.msra.mxu0 %v3943
        %3961 = vmatprep.subr.bf16.mxu0 %v3946
        %3962 = vmatpush1.bf16.xpose.msra.mxu0 %v3945
        %3963 = vmatprep.subr.bf16.mxu0 %v3948
        %3964 = vmatpush1.bf16.xpose.msra.mxu0 %v3947
        %3965 = vmatprep.subr.bf16.mxu0 %v3950
        %3966 = vmatpush1.bf16.xpose.msra.mxu0 %v3949
        %3967 = vmatprep.subr.bf16.mxu0 %v3952
        %3968 = vmatpush1.bf16.xpose.msra.mxu0 %v3951
        %3969 = vmatprep.subr.bf16.mxu0 %v3954
        %3970 = vmatpush1.bf16.xpose.msra.mxu0 %v3953
        %3971 = vmatprep.subr.bf16.mxu0 %v3956
        %3972 = vmatpush1.bf16.xpose.msra.mxu0 %v3955
        %3973 = vmatprep.subr.bf16.mxu0 0
        %3974 = vmatpush1.bf16.xpose.msra.mxu0 0
        %3975 = vmatprep.subr.bf16.mxu0 0
        %3976 = vmatpush1.bf16.xpose.msra.mxu0 0
        %3977 = vmatprep.subr.bf16.mxu0 0
        %3978 = vmatpush1.bf16.xpose.msra.mxu0 0
        %3979 = vmatprep.subr.bf16.mxu0 0
        %3980 = vmatpush1.bf16.xpose.msra.mxu0 0
        %3981 = vmatprep.subr.bf16.mxu0 0
        %3982 = vmatpush1.bf16.xpose.msra.mxu0 0
        %3983 = vmatprep.subr.bf16.mxu0 0
        %3984 = vmatpush1.bf16.xpose.msra.mxu0 0
        %3985 = vmatprep.subr.bf16.mxu0 0
        %3986 = vmatpush1.bf16.xpose.msra.mxu0 0
        %3987 = vmatprep.subr.bf16.mxu0 0
        %3988 = vmatpush1.bf16.xpose.msra.mxu0 0
        %3989 = vmatprep.mubr.bf16.mxu0 %v3926
        %3990 = vmatmul.mubr.bf16.gmra.mrb[0].mxu0 %v3925
        %v3991 = vpop.f32.mrb[0].mxu0
        %v3992 = vadd.f32 0.0, %v3991
        %v3993 = vpop.f32.mrb[0].mxu0
        %v3994 = vpop.f32.mrb[0].mxu0
        %v3995 = vadd.f32 0.0, %v3994
        %v3996 = vpop.f32.mrb[0].mxu0
        %3997 = vmatprep.mubr.bf16.mxu0 %v3928
        %3998 = vmatmul.mubr.bf16.gmra.mrb[0].mxu0 %v3927
        %v3999 = vpop.f32.mrb[0].mxu0
        %v4000 = vadd.f32 0.0, %v3999
        %v4001 = vpop.f32.mrb[0].mxu0
        %v4002 = vpop.f32.mrb[0].mxu0
        %v4003 = vadd.f32 0.0, %v4002
        %v4004 = vpop.f32.mrb[0].mxu0
        %4005 = vmatprep.mubr.bf16.mxu0 %v3930
        %4006 = vmatmul.mubr.bf16.gmra.mrb[0].mxu0 %v3929
        %v4007 = vpop.f32.mrb[0].mxu0
        %v4008 = vadd.f32 0.0, %v4007
        %v4009 = vpop.f32.mrb[0].mxu0
        %v4010 = vpop.f32.mrb[0].mxu0
        %v4011 = vadd.f32 0.0, %v4010
        %v4012 = vpop.f32.mrb[0].mxu0
        %4013 = vmatprep.mubr.bf16.mxu0 %v3932
        %4014 = vmatmul.mubr.bf16.gmra.mrb[0].mxu0 %v3931
        %v4015 = vpop.f32.mrb[0].mxu0
        %v4016 = vadd.f32 0.0, %v4015
        %v4017 = vpop.f32.mrb[0].mxu0
        %v4018 = vpop.f32.mrb[0].mxu0
        %v4019 = vadd.f32 0.0, %v4018
        %v4020 = vpop.f32.mrb[0].mxu0
        %4021 = vmatprep.mubr.bf16.mxu0 %v3934
        %4022 = vmatmul.mubr.bf16.gmra.mrb[0].mxu0 %v3933
        %v4023 = vpop.f32.mrb[0].mxu0
        %v4024 = vadd.f32 0.0, %v4023
        %v4025 = vpop.f32.mrb[0].mxu0
        %v4026 = vpop.f32.mrb[0].mxu0
        %v4027 = vadd.f32 0.0, %v4026
        %v4028 = vpop.f32.mrb[0].mxu0
        %4029 = vmatprep.mubr.bf16.mxu0 %v3936
        %4030 = vmatmul.mubr.bf16.gmra.mrb[0].mxu0 %v3935
        %v4031 = vpop.f32.mrb[0].mxu0
        %v4032 = vadd.f32 0.0, %v4031
        %v4033 = vpop.f32.mrb[0].mxu0
        %v4034 = vpop.f32.mrb[0].mxu0
        %v4035 = vadd.f32 0.0, %v4034
        %v4036 = vpop.f32.mrb[0].mxu0
        %4037 = vmatprep.mubr.bf16.mxu0 %v3938
        %4038 = vmatmul.mubr.bf16.gmra.mrb[0].mxu0 %v3937
        %v4039 = vpop.f32.mrb[0].mxu0
        %v4040 = vadd.f32 0.0, %v4039
        %v4041 = vpop.f32.mrb[0].mxu0
        %v4042 = vpop.f32.mrb[0].mxu0
        %v4043 = vadd.f32 0.0, %v4042
        %v4044 = vpop.f32.mrb[0].mxu0
        %4045 = vmatprep.mubr.bf16.mxu0 %v3940
        %4046 = vmatmul.mubr.bf16.gmra.mrb[0].mxu0 %v3939
        %v4047 = vpop.f32.mrb[0].mxu0
        %v4048 = vadd.f32 0.0, %v4047
        %v4049 = vpop.f32.mrb[0].mxu0
        %v4050 = vpop.f32.mrb[0].mxu0
        %v4051 = vadd.f32 0.0, %v4050
        %v4052 = vpop.f32.mrb[0].mxu0
        %4053 = vdwg.mxu0
        %4054 = vst [vmem:[%s414] sm:$0xff] %v3992
        %4055 = vst [vmem:[%s414 + $0x8] sm:$0xff] %v3995
        %4056 = vst [vmem:[%s414 + $0x10] sm:$0xff] %v4000
        %4057 = vst [vmem:[%s414 + $0x18] sm:$0xff] %v4003
        %4058 = vst [vmem:[%s414 + $0x20] sm:$0xff] %v4008
        %4059 = vst [vmem:[%s414 + $0x28] sm:$0xff] %v4011
        %4060 = vst [vmem:[%s414 + $0x30] sm:$0xff] %v4016
        %4061 = vst [vmem:[%s414 + $0x38] sm:$0xff] %v4019
        %4062 = vst [vmem:[%s414 + $0x40] sm:$0xff] %v4024
        %4063 = vst [vmem:[%s414 + $0x48] sm:$0xff] %v4027
        %4064 = vst [vmem:[%s414 + $0x50] sm:$0xff] %v4032
        %4065 = vst [vmem:[%s414 + $0x58] sm:$0xff] %v4035
        %4066 = vst [vmem:[%s414 + $0x60] sm:$0xff] %v4040
        %4067 = vst [vmem:[%s414 + $0x68] sm:$0xff] %v4043
        %4068 = vst [vmem:[%s414 + $0x70] sm:$0xff] %v4048
        %4069 = vst [vmem:[%s414 + $0x78] sm:$0xff] %v4051
        %v4070 = vld [vmem:[#allocation16] sm:$0x1]
        %v4072 = vlaneseq
        %v4073 = vshrl.u32 %v4072, 7
        %v4074 = vsub.s32 0, %v4073
        %v4075 = vrot.slane %v4070, %v4074
        %v4077 = vadd.f32 %v3992, %v4075
        %v4078 = vadd.f32 %v3995, %v4075
        %v4079 = vadd.f32 %v4000, %v4075
        %v4080 = vadd.f32 %v4003, %v4075
        %v4081 = vadd.f32 %v4008, %v4075
        %v4082 = vadd.f32 %v4011, %v4075
        %v4083 = vadd.f32 %v4016, %v4075
        %v4084 = vadd.f32 %v4019, %v4075
        %v4085 = vadd.f32 %v4024, %v4075
        %v4086 = vadd.f32 %v4027, %v4075
        %v4087 = vadd.f32 %v4032, %v4075
        %v4088 = vadd.f32 %v4035, %v4075
        %v4089 = vadd.f32 %v4040, %v4075
        %v4090 = vadd.f32 %v4043, %v4075
        %v4091 = vadd.f32 %v4048, %v4075
        %v4092 = vadd.f32 %v4051, %v4075
        %4093 = vmax.xlane.f32.xlu0 %v4077
        %v4094 = vpop.xlane.xlu0 %4093
        %4095 = vmax.xlane.f32.xlu0 %v4078
        %v4096 = vpop.xlane.xlu0 %4095
        %4097 = vmax.xlane.f32.xlu0 %v4079
        %v4098 = vpop.xlane.xlu0 %4097
        %4099 = vmax.xlane.f32.xlu0 %v4080
        %v4100 = vpop.xlane.xlu0 %4099
        %4101 = vmax.xlane.f32.xlu0 %v4081
        %v4102 = vpop.xlane.xlu0 %4101
        %4103 = vmax.xlane.f32.xlu0 %v4082
        %v4104 = vpop.xlane.xlu0 %4103
        %4105 = vmax.xlane.f32.xlu0 %v4083
        %v4106 = vpop.xlane.xlu0 %4105
        %4107 = vmax.xlane.f32.xlu0 %v4084
        %v4108 = vpop.xlane.xlu0 %4107
        %4109 = vmax.xlane.f32.xlu0 %v4085
        %v4110 = vpop.xlane.xlu0 %4109
        %4111 = vmax.xlane.f32.xlu0 %v4086
        %v4112 = vpop.xlane.xlu0 %4111
        %4113 = vmax.xlane.f32.xlu0 %v4087
        %v4114 = vpop.xlane.xlu0 %4113
        %4115 = vmax.xlane.f32.xlu0 %v4088
        %v4116 = vpop.xlane.xlu0 %4115
        %4117 = vmax.xlane.f32.xlu0 %v4089
        %v4118 = vpop.xlane.xlu0 %4117
        %4119 = vmax.xlane.f32.xlu0 %v4090
        %v4120 = vpop.xlane.xlu0 %4119
        %4121 = vmax.xlane.f32.xlu0 %v4091
        %v4122 = vpop.xlane.xlu0 %4121
        %4123 = vmax.xlane.f32.xlu0 %v4092
        %v4124 = vpop.xlane.xlu0 %4123
        %v4125 = vsub.f32 %v4077, %v4094
        %v4126 = vsub.f32 %v4078, %v4096
        %v4127 = vsub.f32 %v4079, %v4098
        %v4128 = vsub.f32 %v4080, %v4100
        %v4129 = vsub.f32 %v4081, %v4102
        %v4130 = vsub.f32 %v4082, %v4104
        %v4131 = vsub.f32 %v4083, %v4106
        %v4132 = vsub.f32 %v4084, %v4108
        %v4133 = vsub.f32 %v4085, %v4110
        %v4134 = vsub.f32 %v4086, %v4112
        %v4135 = vsub.f32 %v4087, %v4114
        %v4136 = vsub.f32 %v4088, %v4116
        %v4137 = vsub.f32 %v4089, %v4118
        %v4138 = vsub.f32 %v4090, %v4120
        %v4139 = vsub.f32 %v4091, %v4122
        %v4140 = vsub.f32 %v4092, %v4124
        %v4141 = vmul.f32 %v4125, 1.442695
        %v4142 = vpow.pop %v4141
        %v4143 = vmul.f32 %v4126, 1.442695
        %v4144 = vpow.pop %v4143
        %v4145 = vmul.f32 %v4127, 1.442695
        %v4146 = vpow.pop %v4145
        %v4147 = vmul.f32 %v4128, 1.442695
        %v4148 = vpow.pop %v4147
        %v4149 = vmul.f32 %v4129, 1.442695
        %v4150 = vpow.pop %v4149
        %v4151 = vmul.f32 %v4130, 1.442695
        %v4152 = vpow.pop %v4151
        %v4153 = vmul.f32 %v4131, 1.442695
        %v4154 = vpow.pop %v4153
        %v4155 = vmul.f32 %v4132, 1.442695
        %v4156 = vpow.pop %v4155
        %v4157 = vmul.f32 %v4133, 1.442695
        %v4158 = vpow.pop %v4157
        %v4159 = vmul.f32 %v4134, 1.442695
        %v4160 = vpow.pop %v4159
        %v4161 = vmul.f32 %v4135, 1.442695
        %v4162 = vpow.pop %v4161
        %v4163 = vmul.f32 %v4136, 1.442695
        %v4164 = vpow.pop %v4163
        %v4165 = vmul.f32 %v4137, 1.442695
        %v4166 = vpow.pop %v4165
        %v4167 = vmul.f32 %v4138, 1.442695
        %v4168 = vpow.pop %v4167
        %v4169 = vmul.f32 %v4139, 1.442695
        %v4170 = vpow.pop %v4169
        %v4171 = vmul.f32 %v4140, 1.442695
        %v4172 = vpow.pop %v4171
        %4173 = vadd.xlane.f32.xlu0 %v4142
        %v4174 = vpop.xlane.xlu0 %4173
        %4175 = vadd.xlane.f32.xlu0 %v4144
        %v4176 = vpop.xlane.xlu0 %4175
        %4177 = vadd.xlane.f32.xlu0 %v4146
        %v4178 = vpop.xlane.xlu0 %4177
        %4179 = vadd.xlane.f32.xlu0 %v4148
        %v4180 = vpop.xlane.xlu0 %4179
        %4181 = vadd.xlane.f32.xlu0 %v4150
        %v4182 = vpop.xlane.xlu0 %4181
        %4183 = vadd.xlane.f32.xlu0 %v4152
        %v4184 = vpop.xlane.xlu0 %4183
        %4185 = vadd.xlane.f32.xlu0 %v4154
        %v4186 = vpop.xlane.xlu0 %4185
        %4187 = vadd.xlane.f32.xlu0 %v4156
        %v4188 = vpop.xlane.xlu0 %4187
        %4189 = vadd.xlane.f32.xlu0 %v4158
        %v4190 = vpop.xlane.xlu0 %4189
        %4191 = vadd.xlane.f32.xlu0 %v4160
        %v4192 = vpop.xlane.xlu0 %4191
        %4193 = vadd.xlane.f32.xlu0 %v4162
        %v4194 = vpop.xlane.xlu0 %4193
        %4195 = vadd.xlane.f32.xlu0 %v4164
        %v4196 = vpop.xlane.xlu0 %4195
        %4197 = vadd.xlane.f32.xlu0 %v4166
        %v4198 = vpop.xlane.xlu0 %4197
        %4199 = vadd.xlane.f32.xlu0 %v4168
        %v4200 = vpop.xlane.xlu0 %4199
        %4201 = vadd.xlane.f32.xlu0 %v4170
        %v4202 = vpop.xlane.xlu0 %4201
        %4203 = vadd.xlane.f32.xlu0 %v4172
        %v4204 = vpop.xlane.xlu0 %4203
        %v4205 = vrcp.pop %v4174
        %v4206 = vrcp.pop %v4176
        %v4207 = vrcp.pop %v4178
        %v4208 = vrcp.pop %v4180
        %v4209 = vrcp.pop %v4182
        %v4210 = vrcp.pop %v4184
        %v4211 = vrcp.pop %v4186
        %v4212 = vrcp.pop %v4188
        %v4213 = vrcp.pop %v4190
        %v4214 = vrcp.pop %v4192
        %v4215 = vrcp.pop %v4194
        %v4216 = vrcp.pop %v4196
        %v4217 = vrcp.pop %v4198
        %v4218 = vrcp.pop %v4200
        %v4219 = vrcp.pop %v4202
        %v4220 = vrcp.pop %v4204
        %v4221 = vmul.f32 %v4142, %v4205
        %v4222 = vmul.f32 %v4144, %v4206
        %v4223 = vmul.f32 %v4146, %v4207
        %v4224 = vmul.f32 %v4148, %v4208
        %v4225 = vmul.f32 %v4150, %v4209
        %v4226 = vmul.f32 %v4152, %v4210
        %v4227 = vmul.f32 %v4154, %v4211
        %v4228 = vmul.f32 %v4156, %v4212
        %v4229 = vmul.f32 %v4158, %v4213
        %v4230 = vmul.f32 %v4160, %v4214
        %v4231 = vmul.f32 %v4162, %v4215
        %v4232 = vmul.f32 %v4164, %v4216
        %v4233 = vmul.f32 %v4166, %v4217
        %v4234 = vmul.f32 %v4168, %v4218
        %v4235 = vmul.f32 %v4170, %v4219
        %v4236 = vmul.f32 %v4172, %v4220
        %v4237 = vpack.c.bf16 %v4222, %v4221
        %v4238 = vpack.c.bf16 %v4224, %v4223
        %v4239 = vpack.c.bf16 %v4226, %v4225
        %v4240 = vpack.c.bf16 %v4228, %v4227
        %v4241 = vpack.c.bf16 %v4230, %v4229
        %v4242 = vpack.c.bf16 %v4232, %v4231
        %v4243 = vpack.c.bf16 %v4234, %v4233
        %v4244 = vpack.c.bf16 %v4236, %v4235
        %v4245 = vld [vmem:[#allocation3] sm:$0xff]
        %v4246 = vld [vmem:[#allocation3 + $0x8] sm:$0xff]
        %v4247 = vld [vmem:[#allocation3 + $0x10] sm:$0xff]
        %v4248 = vld [vmem:[#allocation3 + $0x18] sm:$0xff]
        %v4249 = vld [vmem:[#allocation3 + $0x20] sm:$0xff]
        %v4250 = vld [vmem:[#allocation3 + $0x28] sm:$0xff]
        %v4251 = vld [vmem:[#allocation3 + $0x30] sm:$0xff]
        %v4252 = vld [vmem:[#allocation3 + $0x38] sm:$0xff]
        %v4253 = vld [vmem:[#allocation3 + $0x40] sm:$0xff]
        %v4254 = vld [vmem:[#allocation3 + $0x48] sm:$0xff]
        %v4255 = vld [vmem:[#allocation3 + $0x50] sm:$0xff]
        %v4256 = vld [vmem:[#allocation3 + $0x58] sm:$0xff]
        %v4257 = vld [vmem:[#allocation3 + $0x60] sm:$0xff]
        %v4258 = vld [vmem:[#allocation3 + $0x68] sm:$0xff]
        %v4259 = vld [vmem:[#allocation3 + $0x70] sm:$0xff]
        %v4260 = vld [vmem:[#allocation3 + $0x78] sm:$0xff]
        %4261 = vmatprep.subr.bf16.mxu0 %v4246
        %4262 = vmatpush1.bf16.msra.mxu0 %v4245
        %4263 = vmatprep.subr.bf16.mxu0 %v4248
        %4264 = vmatpush1.bf16.msra.mxu0 %v4247
        %4265 = vmatprep.subr.bf16.mxu0 %v4250
        %4266 = vmatpush1.bf16.msra.mxu0 %v4249
        %4267 = vmatprep.subr.bf16.mxu0 %v4252
        %4268 = vmatpush1.bf16.msra.mxu0 %v4251
        %4269 = vmatprep.subr.bf16.mxu0 %v4254
        %4270 = vmatpush1.bf16.msra.mxu0 %v4253
        %4271 = vmatprep.subr.bf16.mxu0 %v4256
        %4272 = vmatpush1.bf16.msra.mxu0 %v4255
        %4273 = vmatprep.subr.bf16.mxu0 %v4258
        %4274 = vmatpush1.bf16.msra.mxu0 %v4257
        %4275 = vmatprep.subr.bf16.mxu0 %v4260
        %4276 = vmatpush1.bf16.msra.mxu0 %v4259
        %4277 = vmatprep.subr.bf16.mxu0 0
        %4278 = vmatpush1.bf16.msra.mxu0 0
        %4279 = vmatprep.subr.bf16.mxu0 0
        %4280 = vmatpush1.bf16.msra.mxu0 0
        %4281 = vmatprep.subr.bf16.mxu0 0
        %4282 = vmatpush1.bf16.msra.mxu0 0
        %4283 = vmatprep.subr.bf16.mxu0 0
        %4284 = vmatpush1.bf16.msra.mxu0 0
        %4285 = vmatprep.subr.bf16.mxu0 0
        %4286 = vmatpush1.bf16.msra.mxu0 0
        %4287 = vmatprep.subr.bf16.mxu0 0
        %4288 = vmatpush1.bf16.msra.mxu0 0
        %4289 = vmatprep.subr.bf16.mxu0 0
        %4290 = vmatpush1.bf16.msra.mxu0 0
        %4291 = vmatprep.subr.bf16.mxu0 0
        %4292 = vmatpush1.bf16.msra.mxu0 0
        %4293 = vmatprep.mubr.bf16.mxu0 0
        %4294 = vmatmul.mubr.bf16.gmra.mrb[0].mxu0 %v4237
        %v4295 = vpop.f32.mrb[0].mxu0
        %v4296 = vadd.f32 0.0, %v4295
        %v4297 = vpop.f32.mrb[0].mxu0
        %v4298 = vadd.f32 0.0, %v4297
        %v4299 = vpop.f32.mrb[0].mxu0
        %v4300 = vadd.f32 0.0, %v4299
        %v4301 = vpop.f32.mrb[0].mxu0
        %v4302 = vadd.f32 0.0, %v4301
        %4303 = vmatprep.mubr.bf16.mxu0 0
        %4304 = vmatmul.mubr.bf16.gmra.mrb[0].mxu0 %v4238
        %v4305 = vpop.f32.mrb[0].mxu0
        %v4306 = vadd.f32 0.0, %v4305
        %v4307 = vpop.f32.mrb[0].mxu0
        %v4308 = vadd.f32 0.0, %v4307
        %v4309 = vpop.f32.mrb[0].mxu0
        %v4310 = vadd.f32 0.0, %v4309
        %v4311 = vpop.f32.mrb[0].mxu0
        %v4312 = vadd.f32 0.0, %v4311
        %4313 = vmatprep.mubr.bf16.mxu0 0
        %4314 = vmatmul.mubr.bf16.gmra.mrb[0].mxu0 %v4239
        %v4315 = vpop.f32.mrb[0].mxu0
        %v4316 = vadd.f32 0.0, %v4315
        %v4317 = vpop.f32.mrb[0].mxu0
        %v4318 = vadd.f32 0.0, %v4317
        %v4319 = vpop.f32.mrb[0].mxu0
        %v4320 = vadd.f32 0.0, %v4319
        %v4321 = vpop.f32.mrb[0].mxu0
        %v4322 = vadd.f32 0.0, %v4321
        %4323 = vmatprep.mubr.bf16.mxu0 0
        %4324 = vmatmul.mubr.bf16.gmra.mrb[0].mxu0 %v4240
        %v4325 = vpop.f32.mrb[0].mxu0
        %v4326 = vadd.f32 0.0, %v4325
        %v4327 = vpop.f32.mrb[0].mxu0
        %v4328 = vadd.f32 0.0, %v4327
        %v4329 = vpop.f32.mrb[0].mxu0
        %v4330 = vadd.f32 0.0, %v4329
        %v4331 = vpop.f32.mrb[0].mxu0
        %v4332 = vadd.f32 0.0, %v4331
        %4333 = vmatprep.mubr.bf16.mxu0 0
        %4334 = vmatmul.mubr.bf16.gmra.mrb[0].mxu0 %v4241
        %v4335 = vpop.f32.mrb[0].mxu0
        %v4336 = vadd.f32 0.0, %v4335
        %v4337 = vpop.f32.mrb[0].mxu0
        %v4338 = vadd.f32 0.0, %v4337
        %v4339 = vpop.f32.mrb[0].mxu0
        %v4340 = vadd.f32 0.0, %v4339
        %v4341 = vpop.f32.mrb[0].mxu0
        %v4342 = vadd.f32 0.0, %v4341
        %4343 = vmatprep.mubr.bf16.mxu0 0
        %4344 = vmatmul.mubr.bf16.gmra.mrb[0].mxu0 %v4242
        %v4345 = vpop.f32.mrb[0].mxu0
        %v4346 = vadd.f32 0.0, %v4345
        %v4347 = vpop.f32.mrb[0].mxu0
        %v4348 = vadd.f32 0.0, %v4347
        %v4349 = vpop.f32.mrb[0].mxu0
        %v4350 = vadd.f32 0.0, %v4349
        %v4351 = vpop.f32.mrb[0].mxu0
        %v4352 = vadd.f32 0.0, %v4351
        %4353 = vmatprep.mubr.bf16.mxu0 0
        %4354 = vmatmul.mubr.bf16.gmra.mrb[0].mxu0 %v4243
        %v4355 = vpop.f32.mrb[0].mxu0
        %v4356 = vadd.f32 0.0, %v4355
        %v4357 = vpop.f32.mrb[0].mxu0
        %v4358 = vadd.f32 0.0, %v4357
        %v4359 = vpop.f32.mrb[0].mxu0
        %v4360 = vadd.f32 0.0, %v4359
        %v4361 = vpop.f32.mrb[0].mxu0
        %v4362 = vadd.f32 0.0, %v4361
        %4363 = vmatprep.mubr.bf16.mxu0 0
        %4364 = vmatmul.mubr.bf16.gmra.mrb[0].mxu0 %v4244
        %v4365 = vpop.f32.mrb[0].mxu0
        %v4366 = vadd.f32 0.0, %v4365
        %v4367 = vpop.f32.mrb[0].mxu0
        %v4368 = vadd.f32 0.0, %v4367
        %v4369 = vpop.f32.mrb[0].mxu0
        %v4370 = vadd.f32 0.0, %v4369
        %v4371 = vpop.f32.mrb[0].mxu0
        %v4372 = vadd.f32 0.0, %v4371
        %4373 = vdwg.mxu0
        %4374 = vst [vmem:[%s407] sm:$0xff] %v4296
        %4375 = vst [vmem:[%s407 + $0x8] sm:$0xff] %v4298
        %4376 = vst [vmem:[%s407 + $0x10] sm:$0xff] %v4300
        %4377 = vst [vmem:[%s407 + $0x18] sm:$0xff] %v4302
        %4378 = vst [vmem:[%s407 + $0x20] sm:$0xff] %v4306
        %4379 = vst [vmem:[%s407 + $0x28] sm:$0xff] %v4308
        %4380 = vst [vmem:[%s407 + $0x30] sm:$0xff] %v4310
        %4381 = vst [vmem:[%s407 + $0x38] sm:$0xff] %v4312
        %4382 = vst [vmem:[%s407 + $0x40] sm:$0xff] %v4316
        %4383 = vst [vmem:[%s407 + $0x48] sm:$0xff] %v4318
        %4384 = vst [vmem:[%s407 + $0x50] sm:$0xff] %v4320
        %4385 = vst [vmem:[%s407 + $0x58] sm:$0xff] %v4322
        %4386 = vst [vmem:[%s407 + $0x60] sm:$0xff] %v4326
        %4387 = vst [vmem:[%s407 + $0x68] sm:$0xff] %v4328
        %4388 = vst [vmem:[%s407 + $0x70] sm:$0xff] %v4330
        %4389 = vst [vmem:[%s407 + $0x78] sm:$0xff] %v4332
        %4390 = vst [vmem:[%s407 + $0x80] sm:$0xff] %v4336
        %4391 = vst [vmem:[%s407 + $0x88] sm:$0xff] %v4338
        %4392 = vst [vmem:[%s407 + $0x90] sm:$0xff] %v4340
        %4393 = vst [vmem:[%s407 + $0x98] sm:$0xff] %v4342
        %4394 = vst [vmem:[%s407 + $0xa0] sm:$0xff] %v4346
        %4395 = vst [vmem:[%s407 + $0xa8] sm:$0xff] %v4348
        %4396 = vst [vmem:[%s407 + $0xb0] sm:$0xff] %v4350
        %4397 = vst [vmem:[%s407 + $0xb8] sm:$0xff] %v4352
        %4398 = vst [vmem:[%s407 + $0xc0] sm:$0xff] %v4356
        %4399 = vst [vmem:[%s407 + $0xc8] sm:$0xff] %v4358
        %4400 = vst [vmem:[%s407 + $0xd0] sm:$0xff] %v4360
        %4401 = vst [vmem:[%s407 + $0xd8] sm:$0xff] %v4362
        %4402 = vst [vmem:[%s407 + $0xe0] sm:$0xff] %v4366
        %4403 = vst [vmem:[%s407 + $0xe8] sm:$0xff] %v4368
        %4404 = vst [vmem:[%s407 + $0xf0] sm:$0xff] %v4370
        %4405 = vst [vmem:[%s407 + $0xf8] sm:$0xff] %v4372
        %s4406 = sand.u32 %s204, 1
        %s4407 = scalar_lea.sflag [#allocation7], %s4406
        %s4408 = sand.u32 %s204, 1
        %s4409 = smul.addr %s4408, 256
        %s4410 = scalar_lea.vmem [#allocation17], %s4409
        %s4411 = sand.u32 %s232, 1
        %s4412 = scalar_lea.sflag [#allocation19], %s4411
        %s4413 = sand.u32 %s232, 1
        %s4414 = smul.addr %s4413, 128
        %s4415 = scalar_lea.vmem [#allocation18], %s4414
        // Predicated region
        $region81: #{global_context_layer.1} parent=47 // pred_check
          %p4416 = pneg %p214
        $region82: #{global_context_layer.1} parent=47 // pred_check_branch
          %4418 = sbr.rel (%p4416) target = $region84
        $region83: #{global_context_layer.1} parent=47 // pred_region
          %s4419 = smul.u32 16, %s35
          %s4421 = ssub.s32 4096, 4096
          %4422 = vsyncadd %s4407, %s4421
          %s4423 = smul.addr %s4419, 2
          %s4424 = smul.addr %s34, 32
          %s4425 = sadd.s32 %s4423, %s4424
          %s4426 = smul.addr %s4425, 128
          %s4427 = scalar_lea.hbm %s7, %s4426
          %s4428 = sshll.u32 %s4410, 4
          %s4429 = int_to_ptr.vmem [resolvable:$true] %s4428
          %4434 = dma.vmem_to_hbm [thread:$0]  %s4429, 4096, %s4427, %s4407, 256, 256, 16
        $region84: #{global_context_layer.1} parent=47 // pred_fallthru
          _
        // Predicated region
        $region85: #{global_context_layer.1} parent=47 // pred_check
          %p4435 = pneg %p242
        $region86: #{global_context_layer.1} parent=47 // pred_check_branch
          %4437 = sbr.rel (%p4435) target = $region88
        $region87: #{global_context_layer.1} parent=47 // pred_region
          %s4438 = smul.u32 16, %s35
          %s4440 = ssub.s32 2048, 2048
          %4441 = vsyncadd %s4412, %s4440
          %s4442 = smul.addr %s34, 16
          %s4443 = sadd.s32 %s4438, %s4442
          %s4444 = smul.addr %s4443, 128
          %s4445 = scalar_lea.hbm %s8, %s4444
          %s4446 = sshll.u32 %s4415, 4
          %s4447 = int_to_ptr.vmem [resolvable:$true] %s4446
          %4452 = dma.vmem_to_hbm [thread:$0]  %s4447, 2048, %s4445, %s4412, 128, 128, 8
        $region88: #{global_context_layer.1} parent=47 // pred_fallthru
          _
      $region48: #{global_context_layer.1} parent=5 // pred_fallthru
        _
      %p4453 = scmp.le.s32.totalorder 2, %s25
      // Predicated region
      $region89: #{global_context_layer.1} parent=5 // pred_check
        %p4454 = pneg %p4453
      $region90: #{global_context_layer.1} parent=5 // pred_check_branch
        %4456 = sbr.rel (%p4454) target = $region92
      $region91: #{global_context_layer.1} parent=5 // pred_region
        %s4457 = ssub.s32 %s25, 2
        // Predicated region
        $region93: #{global_context_layer.1} parent=91 // pred_check
          %p4458 = pneg %p220
        $region94: #{global_context_layer.1} parent=91 // pred_check_branch
          %4460 = sbr.rel (%p4458) target = $region96
        $region95: #{global_context_layer.1} parent=91 // pred_region
          %s4461 = sand.u32 %s205, 1
          %s4462 = scalar_lea.sflag [#allocation7], %s4461
          %s4463 = sand.u32 %s205, 1
          %s4464 = smul.addr %s4463, 256
          %s4465 = scalar_lea.vmem [#allocation17], %s4464
          %4466 = dma.done %s4462, 4096
        $region96: #{global_context_layer.1} parent=91 // pred_fallthru
          _
        // Predicated region
        $region97: #{global_context_layer.1} parent=91 // pred_check
          %p4467 = pneg %p248
        $region98: #{global_context_layer.1} parent=91 // pred_check_branch
          %4469 = sbr.rel (%p4467) target = $region100
        $region99: #{global_context_layer.1} parent=91 // pred_region
          %s4470 = sand.u32 %s233, 1
          %s4471 = scalar_lea.sflag [#allocation19], %s4470
          %s4472 = sand.u32 %s233, 1
          %s4473 = smul.addr %s4472, 128
          %s4474 = scalar_lea.vmem [#allocation18], %s4473
          %4475 = dma.done %s4471, 2048
        $region100: #{global_context_layer.1} parent=91 // pred_fallthru
          _
      $region92: #{global_context_layer.1} parent=5 // pred_fallthru
        _
    $region6: #{global_context_layer.1} parent=1 // loop_footer
      %s29 = sadd.s32 1, %s25
    $region7: #{global_context_layer.1} parent=1 // loop_footer_branch
      %24 = sbr.rel target = $region3
    $region8: #{global_context_layer.1} parent=1 // loop_exit
      _
    %4476 = vsyncpa [#allocation6], 1
    %s4477 = scalar_lea.sflag [#allocation6], 1
    %4478 = vsyncpa %s4477, 1
    %4479 = vsyncpa [#allocation9], 1
    %4480 = vsyncpa [#allocation12], 1
    %4481 = vsyncpa [#allocation15], 1
    %4482 = vsyncpa [#allocation7], 1
    %s4483 = scalar_lea.sflag [#allocation7], 1
    %4484 = vsyncpa %s4483, 1
    %4485 = vsyncpa [#allocation19], 1
    %s4486 = scalar_lea.sflag [#allocation19], 1
    %4487 = vsyncpa %s4486, 1

// kernel: global_context_layer.1
$region0: #{global_context_layer.1}
  #allocation0 [shape = 'u32[]', space=smem, size = 0x4, offset = 0x4, fixed_abs, tag = 'smem constant byte address 0x4 - core index']
  #allocation1 [shape = 'u32[144,128]{1,0:T(1,128)}', space=vmem, size = 0x12000, scoped, tag = 'internal scratch']
  #allocation2 [shape = 'bf16[128,256]{1,0:T(16,128)(2,1)}', space=vmem, size = 0x10000, scoped, tag = 'scratch operand']
  #allocation3 [shape = 'bf16[128,256]{1,0:T(16,128)(2,1)}', space=vmem, size = 0x10000, scoped, tag = 'scratch operand']
  #allocation4 [shape = 'f32[1,768]{1,0:T(1,128)}', space=vmem, size = 0xc00, scoped, tag = 'scratch operand']
  %s0 = inlined_call_operand.hbm [shape: bf16[2,128,256], index: 0, kind: input, shape index: {}]
  %s1 = inlined_call_operand.hbm [shape: bf16[256,512], index: 1, kind: input, shape index: {}]
  %s2 = inlined_call_operand.hbm [shape: f32[1,512], index: 2, kind: input, shape index: {}]
  %s3 = inlined_call_operand.hbm [shape: bf16[256,768], index: 3, kind: input, shape index: {}]
  %s4 = inlined_call_operand.hbm [shape: f32[1,768], index: 4, kind: input, shape index: {}]
  %s5 = inlined_call_operand.hbm [shape: bf16[256,768], index: 5, kind: input, shape index: {}]
  %s6 = inlined_call_operand.hbm [shape: f32[1,128], index: 6, kind: input, shape index: {}]
  %s7 = inlined_call_operand.hbm [shape: f32[2,128,256], index: 7, kind: output, shape index: {0}]
  %s8 = inlined_call_operand.hbm [shape: f32[2,128,128], index: 8, kind: output, shape index: {1}]
  %9 = xla_tuple %s7, %s8
  %s10 = sld [smem:[#allocation0]]
  $region101: #{global_context_layer.1} parent=0
    _
  %s12 = ssub.s32 1, %s10
  %s13 = scalar_select 0, %s12, %s10
  $region1: #{global_context_layer.1} parent=0
    #allocation5 [shape = 'u8[131072]{0}', space=vmem, size = 0x20000, scoped, tag = 'input window, operand 0']
    #allocation6 [shape = 's32[2]{0}', space=sflag, size = 0x8, scoped, tag = 'scoped memory for global_context_layer.1']
    #allocation7 [shape = 's32[2]{0}', space=sflag, size = 0x8, scoped, tag = 'scoped memory for global_context_layer.1']
    #allocation8 [shape = 'u8[262144]{0}', space=vmem, size = 0x40000, scoped, tag = 'input window, operand 1, single buffered']
    #allocation9 [shape = 's32[1]{0}', space=sflag, size = 0x4, scoped, tag = 'scoped memory for global_context_layer.1']
    #allocation10 [shape = 'u8[2048]{0}', space=vmem, size = 0x800, scoped, tag = 'input window, operand 2, single buffered']
    #allocation11 [shape = 'u8[393216]{0}', space=vmem, size = 0x60000, scoped, tag = 'input window, operand 3, single buffered']
    #allocation12 [shape = 's32[1]{0}', space=sflag, size = 0x4, scoped, tag = 'scoped memory for global_context_layer.1']
    #allocation13 [shape = 'u8[3072]{0}', space=vmem, size = 0xc00, scoped, tag = 'input window, operand 4, single buffered']
    #allocation14 [shape = 'u8[393216]{0}', space=vmem, size = 0x60000, scoped, tag = 'input window, operand 5, single buffered']
    #allocation15 [shape = 's32[1]{0}', space=sflag, size = 0x4, scoped, tag = 'scoped memory for global_context_layer.1']
    #allocation16 [shape = 'u8[512]{0}', space=vmem, size = 0x400, scoped, tag = 'input window, operand 6, single buffered']
    #allocation17 [shape = 'u8[262144]{0}', space=vmem, size = 0x40000, scoped, tag = 'output window, operand 0']
    #allocation18 [shape = 'u8[131072]{0}', space=vmem, size = 0x20000, scoped, tag = 'output window, operand 1']
    #allocation19 [shape = 's32[2]{0}', space=sflag, size = 0x8, scoped, tag = 'scoped memory for global_context_layer.1']
    %14 = vsyncpa [#allocation6], 0
    %s15 = scalar_lea.sflag [#allocation6], 1
    %16 = vsyncpa %s15, 0
    %17 = vsyncpa [#allocation9], 0
    %18 = vsyncpa [#allocation12], 0
    %19 = vsyncpa [#allocation15], 0
    %20 = vsyncpa [#allocation7], 0
    %s21 = scalar_lea.sflag [#allocation7], 1
    %22 = vsyncpa %s21, 0
    %23 = vsyncpa [#allocation19], 0
    %s24 = scalar_lea.sflag [#allocation19], 1
    %25 = vsyncpa %s24, 0
    loop: start=0, step=1, limit=4
    $region2: #{global_context_layer.1} parent=1 // loop_pre_header
      _
    $region3: #{global_context_layer.1} parent=1 // loop_header
      %s27 = sphi 0, %s31
      %p28 = scmp.ge.s32.totalorder %s27, 4
      %s34 = sphi 0, %s46
      %s35 = sphi 0, %s42
      %s36 = sphi 0, %s34
      %s37 = sphi 0, %s35
      %s38 = sphi 0, %s36
      %s39 = sphi 0, %s37
      %s49 = sphi 0, %s51
      %s52 = sphi 0, %s49
      %s53 = sphi 0, %s52
      %s69 = sphi 0, %s53
      %s73 = sphi 0, %s73
      %s75 = sphi 0, %s73
      %s76 = sphi 0, %s75
      %s90 = sphi 0, %s76
      %s94 = sphi 0, %s94
      %s96 = sphi 0, %s94
      %s97 = sphi 0, %s96
      %s111 = sphi 0, %s97
      %s115 = sphi 0, %s115
      %s117 = sphi 0, %s115
      %s118 = sphi 0, %s117
      %s132 = sphi 0, %s118
      %s136 = sphi 0, %s136
      %s138 = sphi 0, %s136
      %s139 = sphi 0, %s138
      %s153 = sphi 0, %s139
      %s157 = sphi 0, %s157
      %s159 = sphi 0, %s157
      %s160 = sphi 0, %s159
      %s174 = sphi 0, %s160
      %s178 = sphi 0, %s178
      %s180 = sphi 0, %s178
      %s181 = sphi 0, %s180
      %s195 = sphi 0, %s181
      %s203 = sphi 0, %s205
      %s206 = sphi 0, %s203
      %s207 = sphi 0, %s206
      %s223 = sphi 0, %s207
      %s231 = sphi 0, %s233
      %s234 = sphi 0, %s231
      %s235 = sphi 0, %s234
      %s251 = sphi 0, %s235
    $region4: #{global_context_layer.1} parent=1 // loop_header_branch
      %30 = sbr.rel (%p28) target = $region8
    $region5: #{global_context_layer.1} parent=1 // loop_body
      %s32 = ssub.s32 %s27, 1
      %s33 = ssub.s32 %s27, 2
      %s40 = sadd.s32 1, %s35
      %p41 = scmp.ge.s32.totalorder %s40, 1
      %s42 = scalar_select %p41, 0, %s40
      %s43 = sadd.s32 1, %s34
      %s44 = scalar_select %p41, %s43, %s34
      %p45 = scmp.ge.s32.totalorder %s44, 2
      %s46 = scalar_select %p45, 0, %s44
      %s47 = ssub.s32 %s34, %s46
      %p48 = scmp.eq.s32.totalorder %s47, 0
      %s50 = sadd.s32 %s49, 1
      %s51 = scalar_select %p48, %s49, %s50
      %p54 = pneg %p48
      %p55 = scmp.eq.s32.totalorder %s27, 1
      %p56 = por %p54, %p55
      %p57 = scmp.ne.s32.totalorder %s49, %s52
      %p58 = scmp.eq.s32.totalorder %s27, 0
      %p59 = por %p57, %p58
      %p60 = scmp.ne.s32.totalorder %s49, %s52
      %p61 = scmp.eq.s32.totalorder %s32, 1
      %p62 = por %p60, %p61
      %p63 = scmp.ne.s32.totalorder %s52, %s53
      %p64 = scmp.eq.s32.totalorder %s32, 0
      %p65 = por %p63, %p64
      %p66 = scmp.ne.s32.totalorder %s52, %s53
      %p67 = scmp.eq.s32.totalorder %s33, 1
      %p68 = por %p66, %p67
      %p70 = scmp.ne.s32.totalorder %s53, %s69
      %p71 = scmp.eq.s32.totalorder %s33, 0
      %p72 = por %p70, %p71
      %s74 = sadd.s32 %s73, 1
      %p77 = scmp.eq.s32.totalorder %s27, 1
      %p78 = scmp.ne.s32.totalorder %s73, %s75
      %p79 = scmp.eq.s32.totalorder %s27, 0
      %p80 = por %p78, %p79
      %p81 = scmp.ne.s32.totalorder %s73, %s75
      %p82 = scmp.eq.s32.totalorder %s32, 1
      %p83 = por %p81, %p82
      %p84 = scmp.ne.s32.totalorder %s75, %s76
      %p85 = scmp.eq.s32.totalorder %s32, 0
      %p86 = por %p84, %p85
      %p87 = scmp.ne.s32.totalorder %s75, %s76
      %p88 = scmp.eq.s32.totalorder %s33, 1
      %p89 = por %p87, %p88
      %p91 = scmp.ne.s32.totalorder %s76, %s90
      %p92 = scmp.eq.s32.totalorder %s33, 0
      %p93 = por %p91, %p92
      %s95 = sadd.s32 %s94, 1
      %p98 = scmp.eq.s32.totalorder %s27, 1
      %p99 = scmp.ne.s32.totalorder %s94, %s96
      %p100 = scmp.eq.s32.totalorder %s27, 0
      %p101 = por %p99, %p100
      %p102 = scmp.ne.s32.totalorder %s94, %s96
      %p103 = scmp.eq.s32.totalorder %s32, 1
      %p104 = por %p102, %p103
      %p105 = scmp.ne.s32.totalorder %s96, %s97
      %p106 = scmp.eq.s32.totalorder %s32, 0
      %p107 = por %p105, %p106
      %p108 = scmp.ne.s32.totalorder %s96, %s97
      %p109 = scmp.eq.s32.totalorder %s33, 1
      %p110 = por %p108, %p109
      %p112 = scmp.ne.s32.totalorder %s97, %s111
      %p113 = scmp.eq.s32.totalorder %s33, 0
      %p114 = por %p112, %p113
      %s116 = sadd.s32 %s115, 1
      %p119 = scmp.eq.s32.totalorder %s27, 1
      %p120 = scmp.ne.s32.totalorder %s115, %s117
      %p121 = scmp.eq.s32.totalorder %s27, 0
      %p122 = por %p120, %p121
      %p123 = scmp.ne.s32.totalorder %s115, %s117
      %p124 = scmp.eq.s32.totalorder %s32, 1
      %p125 = por %p123, %p124
      %p126 = scmp.ne.s32.totalorder %s117, %s118
      %p127 = scmp.eq.s32.totalorder %s32, 0
      %p128 = por %p126, %p127
      %p129 = scmp.ne.s32.totalorder %s117, %s118
      %p130 = scmp.eq.s32.totalorder %s33, 1
      %p131 = por %p129, %p130
      %p133 = scmp.ne.s32.totalorder %s118, %s132
      %p134 = scmp.eq.s32.totalorder %s33, 0
      %p135 = por %p133, %p134
      %s137 = sadd.s32 %s136, 1
      %p140 = scmp.eq.s32.totalorder %s27, 1
      %p141 = scmp.ne.s32.totalorder %s136, %s138
      %p142 = scmp.eq.s32.totalorder %s27, 0
      %p143 = por %p141, %p142
      %p144 = scmp.ne.s32.totalorder %s136, %s138
      %p145 = scmp.eq.s32.totalorder %s32, 1
      %p146 = por %p144, %p145
      %p147 = scmp.ne.s32.totalorder %s138, %s139
      %p148 = scmp.eq.s32.totalorder %s32, 0
      %p149 = por %p147, %p148
      %p150 = scmp.ne.s32.totalorder %s138, %s139
      %p151 = scmp.eq.s32.totalorder %s33, 1
      %p152 = por %p150, %p151
      %p154 = scmp.ne.s32.totalorder %s139, %s153
      %p155 = scmp.eq.s32.totalorder %s33, 0
      %p156 = por %p154, %p155
      %s158 = sadd.s32 %s157, 1
      %p161 = scmp.eq.s32.totalorder %s27, 1
      %p162 = scmp.ne.s32.totalorder %s157, %s159
      %p163 = scmp.eq.s32.totalorder %s27, 0
      %p164 = por %p162, %p163
      %p165 = scmp.ne.s32.totalorder %s157, %s159
      %p166 = scmp.eq.s32.totalorder %s32, 1
      %p167 = por %p165, %p166
      %p168 = scmp.ne.s32.totalorder %s159, %s160
      %p169 = scmp.eq.s32.totalorder %s32, 0
      %p170 = por %p168, %p169
      %p171 = scmp.ne.s32.totalorder %s159, %s160
      %p172 = scmp.eq.s32.totalorder %s33, 1
      %p173 = por %p171, %p172
      %p175 = scmp.ne.s32.totalorder %s160, %s174
      %p176 = scmp.eq.s32.totalorder %s33, 0
      %p177 = por %p175, %p176
      %s179 = sadd.s32 %s178, 1
      %p182 = scmp.eq.s32.totalorder %s27, 1
      %p183 = scmp.ne.s32.totalorder %s178, %s180
      %p184 = scmp.eq.s32.totalorder %s27, 0
      %p185 = por %p183, %p184
      %p186 = scmp.ne.s32.totalorder %s178, %s180
      %p187 = scmp.eq.s32.totalorder %s32, 1
      %p188 = por %p186, %p187
      %p189 = scmp.ne.s32.totalorder %s180, %s181
      %p190 = scmp.eq.s32.totalorder %s32, 0
      %p191 = por %p189, %p190
      %p192 = scmp.ne.s32.totalorder %s180, %s181
      %p193 = scmp.eq.s32.totalorder %s33, 1
      %p194 = por %p192, %p193
      %p196 = scmp.ne.s32.totalorder %s181, %s195
      %p197 = scmp.eq.s32.totalorder %s33, 0
      %p198 = por %p196, %p197
      %s199 = ssub.s32 %s34, %s46
      %s200 = ssub.s32 %s35, %s42
      %s201 = sor.u32 %s199, %s200
      %p202 = scmp.eq.s32.totalorder %s201, 0
      %s204 = sadd.s32 %s203, 1
      %s205 = scalar_select %p202, %s203, %s204
      %p208 = pneg %p202
      %p209 = scmp.eq.s32.totalorder %s27, 1
      %p210 = por %p208, %p209
      %p211 = scmp.ne.s32.totalorder %s203, %s206
      %p212 = scmp.eq.s32.totalorder %s27, 0
      %p213 = por %p211, %p212
      %p214 = scmp.ne.s32.totalorder %s203, %s206
      %p215 = scmp.eq.s32.totalorder %s32, 1
      %p216 = por %p214, %p215
      %p217 = scmp.ne.s32.totalorder %s206, %s207
      %p218 = scmp.eq.s32.totalorder %s32, 0
      %p219 = por %p217, %p218
      %p220 = scmp.ne.s32.totalorder %s206, %s207
      %p221 = scmp.eq.s32.totalorder %s33, 1
      %p222 = por %p220, %p221
      %p224 = scmp.ne.s32.totalorder %s207, %s223
      %p225 = scmp.eq.s32.totalorder %s33, 0
      %p226 = por %p224, %p225
      %s227 = ssub.s32 %s34, %s46
      %s228 = ssub.s32 %s35, %s42
      %s229 = sor.u32 %s227, %s228
      %p230 = scmp.eq.s32.totalorder %s229, 0
      %s232 = sadd.s32 %s231, 1
      %s233 = scalar_select %p230, %s231, %s232
      %p236 = pneg %p230
      %p237 = scmp.eq.s32.totalorder %s27, 1
      %p238 = por %p236, %p237
      %p239 = scmp.ne.s32.totalorder %s231, %s234
      %p240 = scmp.eq.s32.totalorder %s27, 0
      %p241 = por %p239, %p240
      %p242 = scmp.ne.s32.totalorder %s231, %s234
      %p243 = scmp.eq.s32.totalorder %s32, 1
      %p244 = por %p242, %p243
      %p245 = scmp.ne.s32.totalorder %s234, %s235
      %p246 = scmp.eq.s32.totalorder %s32, 0
      %p247 = por %p245, %p246
      %p248 = scmp.ne.s32.totalorder %s234, %s235
      %p249 = scmp.eq.s32.totalorder %s33, 1
      %p250 = por %p248, %p249
      %p252 = scmp.ne.s32.totalorder %s235, %s251
      %p253 = scmp.eq.s32.totalorder %s33, 0
      %p254 = por %p252, %p253
      %p255 = scmp.le.s32.totalorder 1, %s27
      %p256 = scmp.lt.s32.totalorder %s27, 3
      %p257 = pnand %p255, %p256
      %p258 = pneg %p257
      // Predicated region
      $region9: #{global_context_layer.1} parent=5 // pred_check
        _
      $region10: #{global_context_layer.1} parent=5 // pred_check_branch
        %260 = sbr.rel (%p257) target = $region12
      $region11: #{global_context_layer.1} parent=5 // pred_region
        %s261 = ssub.s32 %s27, 1
        // Predicated region
        $region13: #{global_context_layer.1} parent=11 // pred_check
          %p262 = pneg %p86
        $region14: #{global_context_layer.1} parent=11 // pred_check_branch
          %264 = sbr.rel (%p262) target = $region16
        $region15: #{global_context_layer.1} parent=11 // pred_region
          %s266 = ssub.s32 8192, 8192
          %267 = vsyncadd [#allocation9], %s266
          %s268 = sshll.u32 [#allocation8], 4
          %s269 = int_to_ptr.vmem [resolvable:$true] %s268
          %274 = dma.hbm_to_vmem [thread:$0]  %s1, 8192, %s269, [#allocation9], 256, 256, 16
        $region16: #{global_context_layer.1} parent=11 // pred_fallthru
          _
        // Predicated region
        $region17: #{global_context_layer.1} parent=11 // pred_check
          %p275 = pneg %p107
        $region18: #{global_context_layer.1} parent=11 // pred_check_branch
          %277 = sbr.rel (%p275) target = $region20
        $region19: #{global_context_layer.1} parent=11 // pred_region
          %s279 = ssub.s32 64, 64
          %280 = vsyncadd [#allocation9], %s279
          %s282 = sshll.u32 [#allocation10], 4
          %s283 = int_to_ptr.vmem [resolvable:$true] %s282
          %285 = dma.hbm_to_vmem [thread:$0]  %s2, 64, %s283, [#allocation9]
        $region20: #{global_context_layer.1} parent=11 // pred_fallthru
          _
        // Predicated region
        $region21: #{global_context_layer.1} parent=11 // pred_check
          %p286 = pneg %p128
        $region22: #{global_context_layer.1} parent=11 // pred_check_branch
          %288 = sbr.rel (%p286) target = $region24
        $region23: #{global_context_layer.1} parent=11 // pred_region
          %s290 = ssub.s32 12288, 12288
          %291 = vsyncadd [#allocation12], %s290
          %s292 = sshll.u32 [#allocation11], 4
          %s293 = int_to_ptr.vmem [resolvable:$true] %s292
          %298 = dma.hbm_to_vmem [thread:$0]  %s3, 12288, %s293, [#allocation12], 384, 384, 24
        $region24: #{global_context_layer.1} parent=11 // pred_fallthru
          _
        // Predicated region
        $region25: #{global_context_layer.1} parent=11 // pred_check
          %p299 = pneg %p149
        $region26: #{global_context_layer.1} parent=11 // pred_check_branch
          %301 = sbr.rel (%p299) target = $region28
        $region27: #{global_context_layer.1} parent=11 // pred_region
          %s303 = ssub.s32 96, 96
          %304 = vsyncadd [#allocation12], %s303
          %s306 = sshll.u32 [#allocation13], 4
          %s307 = int_to_ptr.vmem [resolvable:$true] %s306
          %309 = dma.hbm_to_vmem [thread:$0]  %s4, 96, %s307, [#allocation12]
        $region28: #{global_context_layer.1} parent=11 // pred_fallthru
          _
        // Predicated region
        $region29: #{global_context_layer.1} parent=11 // pred_check
          %p310 = pneg %p170
        $region30: #{global_context_layer.1} parent=11 // pred_check_branch
          %312 = sbr.rel (%p310) target = $region32
        $region31: #{global_context_layer.1} parent=11 // pred_region
          %s314 = ssub.s32 12288, 12288
          %315 = vsyncadd [#allocation15], %s314
          %s316 = sshll.u32 [#allocation14], 4
          %s317 = int_to_ptr.vmem [resolvable:$true] %s316
          %322 = dma.hbm_to_vmem [thread:$0]  %s5, 12288, %s317, [#allocation15], 384, 384, 24
        $region32: #{global_context_layer.1} parent=11 // pred_fallthru
          _
        // Predicated region
        $region33: #{global_context_layer.1} parent=11 // pred_check
          %p323 = pneg %p191
        $region34: #{global_context_layer.1} parent=11 // pred_check_branch
          %325 = sbr.rel (%p323) target = $region36
        $region35: #{global_context_layer.1} parent=11 // pred_region
          %s327 = ssub.s32 16, 16
          %328 = vsyncadd [#allocation15], %s327
          %s330 = sshll.u32 [#allocation16], 4
          %s331 = int_to_ptr.vmem [resolvable:$true] %s330
          %333 = dma.hbm_to_vmem [thread:$0]  %s6, 16, %s331, [#allocation15]
        $region36: #{global_context_layer.1} parent=11 // pred_fallthru
          _
      $region12: #{global_context_layer.1} parent=5 // pred_fallthru
        _
      %p334 = scmp.lt.s32.totalorder %s27, 2
      // Predicated region
      $region37: #{global_context_layer.1} parent=5 // pred_check
        %p335 = pneg %p334
      $region38: #{global_context_layer.1} parent=5 // pred_check_branch
        %337 = sbr.rel (%p335) target = $region40
      $region39: #{global_context_layer.1} parent=5 // pred_region
        // Predicated region
        $region41: #{global_context_layer.1} parent=39 // pred_check
          %p338 = pneg %p59
        $region42: #{global_context_layer.1} parent=39 // pred_check_branch
          %340 = sbr.rel (%p338) target = $region44
        $region43: #{global_context_layer.1} parent=39 // pred_region
          %s341 = sand.u32 %s49, 1
          %s342 = scalar_lea.sflag [#allocation6], %s341
          %s343 = sand.u32 %s49, 1
          %s344 = smul.addr %s343, 128
          %s345 = scalar_lea.vmem [#allocation5], %s344
          %s347 = ssub.s32 2048, 2048
          %348 = vsyncadd %s342, %s347
          %s349 = smul.addr %s34, 32
          %s350 = smul.addr %s349, 64
          %s351 = scalar_lea.hbm %s0, %s350
          %s352 = sshll.u32 %s345, 4
          %s353 = int_to_ptr.vmem [resolvable:$true] %s352
          %358 = dma.hbm_to_vmem [thread:$0]  %s351, 2048, %s353, %s342, 128, 128, 8
        $region44: #{global_context_layer.1} parent=39 // pred_fallthru
          _
      $region40: #{global_context_layer.1} parent=5 // pred_fallthru
        _
      %p359 = scmp.le.s32.totalorder 1, %s27
      %p360 = scmp.lt.s32.totalorder %s27, 3
      %p361 = pnand %p359, %p360
      %p362 = pneg %p361
      // Predicated region
      $region45: #{global_context_layer.1} parent=5 // pred_check
        _
      $region46: #{global_context_layer.1} parent=5 // pred_check_branch
        %364 = sbr.rel (%p361) target = $region48
      $region47: #{global_context_layer.1} parent=5 // pred_region
        %s365 = ssub.s32 %s27, 1
        %s366 = sand.u32 %s52, 1
        %s367 = scalar_lea.sflag [#allocation6], %s366
        %s368 = sand.u32 %s52, 1
        %s369 = smul.addr %s368, 128
        %s370 = scalar_lea.vmem [#allocation5], %s369
        // Predicated region
        $region49: #{global_context_layer.1} parent=47 // pred_check
          %p371 = pneg %p65
        $region50: #{global_context_layer.1} parent=47 // pred_check_branch
          %373 = sbr.rel (%p371) target = $region52
        $region51: #{global_context_layer.1} parent=47 // pred_region
          %374 = dma.done %s367, 2048
        $region52: #{global_context_layer.1} parent=47 // pred_fallthru
          _
        // Predicated region
        $region53: #{global_context_layer.1} parent=47 // pred_check
          %p375 = pneg %p86
        $region54: #{global_context_layer.1} parent=47 // pred_check_branch
          %377 = sbr.rel (%p375) target = $region56
        $region55: #{global_context_layer.1} parent=47 // pred_region
          %378 = dma.done [#allocation9], 8192
        $region56: #{global_context_layer.1} parent=47 // pred_fallthru
          _
        // Predicated region
        $region57: #{global_context_layer.1} parent=47 // pred_check
          %p379 = pneg %p107
        $region58: #{global_context_layer.1} parent=47 // pred_check_branch
          %381 = sbr.rel (%p379) target = $region60
        $region59: #{global_context_layer.1} parent=47 // pred_region
          %382 = dma.done [#allocation9], 64
        $region60: #{global_context_layer.1} parent=47 // pred_fallthru
          _
        // Predicated region
        $region61: #{global_context_layer.1} parent=47 // pred_check
          %p383 = pneg %p128
        $region62: #{global_context_layer.1} parent=47 // pred_check_branch
          %385 = sbr.rel (%p383) target = $region64
        $region63: #{global_context_layer.1} parent=47 // pred_region
          %386 = dma.done [#allocation12], 12288
        $region64: #{global_context_layer.1} parent=47 // pred_fallthru
          _
        // Predicated region
        $region65: #{global_context_layer.1} parent=47 // pred_check
          %p387 = pneg %p149
        $region66: #{global_context_layer.1} parent=47 // pred_check_branch
          %389 = sbr.rel (%p387) target = $region68
        $region67: #{global_context_layer.1} parent=47 // pred_region
          %390 = dma.done [#allocation12], 96
        $region68: #{global_context_layer.1} parent=47 // pred_fallthru
          _
        // Predicated region
        $region69: #{global_context_layer.1} parent=47 // pred_check
          %p391 = pneg %p170
        $region70: #{global_context_layer.1} parent=47 // pred_check_branch
          %393 = sbr.rel (%p391) target = $region72
        $region71: #{global_context_layer.1} parent=47 // pred_region
          %394 = dma.done [#allocation15], 12288
        $region72: #{global_context_layer.1} parent=47 // pred_fallthru
          _
        // Predicated region
        $region73: #{global_context_layer.1} parent=47 // pred_check
          %p395 = pneg %p191
        $region74: #{global_context_layer.1} parent=47 // pred_check_branch
          %397 = sbr.rel (%p395) target = $region76
        $region75: #{global_context_layer.1} parent=47 // pred_region
          %398 = dma.done [#allocation15], 16
        $region76: #{global_context_layer.1} parent=47 // pred_fallthru
          _
        %s399 = sand.u32 %s52, 1
        %s400 = scalar_lea.sflag [#allocation6], %s399
        %s401 = sand.u32 %s52, 1
        %s402 = smul.addr %s401, 128
        %s403 = scalar_lea.vmem [#allocation5], %s402
        %p404 = pneg %p65
        %p405 = pneg %p62
        %p406 = pneg %p86
        %p407 = pneg %p83
        %p408 = pneg %p107
        %p409 = pneg %p104
        %p410 = pneg %p128
        %p411 = pneg %p125
        %p412 = pneg %p149
        %p413 = pneg %p146
        %p414 = pneg %p170
        %p415 = pneg %p167
        %p416 = pneg %p191
        %p417 = pneg %p188
        %p418 = pneg %p219
        %p419 = pneg %p216
        %s420 = sand.u32 %s206, 1
        %s421 = scalar_lea.sflag [#allocation7], %s420
        %s422 = sand.u32 %s206, 1
        %s423 = smul.addr %s422, 256
        %s424 = scalar_lea.vmem [#allocation17], %s423
        %p425 = pneg %p247
        %p426 = pneg %p244
        %s427 = sand.u32 %s234, 1
        %s428 = scalar_lea.sflag [#allocation19], %s427
        %s429 = sand.u32 %s234, 1
        %s430 = smul.addr %s429, 128
        %s431 = scalar_lea.vmem [#allocation18], %s430
        %s432 = smul.u32 16, %s37
        %s433 = smul.u32 16, %s37
        %p436 = scmp.eq.s32.totalorder %s37, 0
        // Predicated region
        $region77: #{global_context_layer.1} parent=47 // pred_check
          %p437 = pneg %p436
        $region78: #{global_context_layer.1} parent=47 // pred_check_branch
          %439 = sbr.rel (%p437) target = $region80
        $region79: #{global_context_layer.1} parent=47 // pred_region
          %v440 = vld [vmem:[%s370] sm:$0xff]
          %v441 = vld [vmem:[%s370 + $0x8] sm:$0xff]
          %v442 = vld [vmem:[%s370 + $0x10] sm:$0xff]
          %v443 = vld [vmem:[%s370 + $0x18] sm:$0xff]
          %v444 = vld [vmem:[%s370 + $0x20] sm:$0xff]
          %v445 = vld [vmem:[%s370 + $0x28] sm:$0xff]
          %v446 = vld [vmem:[%s370 + $0x30] sm:$0xff]
          %v447 = vld [vmem:[%s370 + $0x38] sm:$0xff]
          %v448 = vld [vmem:[%s370 + $0x40] sm:$0xff]
          %v449 = vld [vmem:[%s370 + $0x48] sm:$0xff]
          %v450 = vld [vmem:[%s370 + $0x50] sm:$0xff]
          %v451 = vld [vmem:[%s370 + $0x58] sm:$0xff]
          %v452 = vld [vmem:[%s370 + $0x60] sm:$0xff]
          %v453 = vld [vmem:[%s370 + $0x68] sm:$0xff]
          %v454 = vld [vmem:[%s370 + $0x70] sm:$0xff]
          %v455 = vld [vmem:[%s370 + $0x78] sm:$0xff]
          %v472 = vunpack.c.l.b16 %v440
          %v473 = vunpack.c.h.b16 %v440
          %v474 = vunpack.c.l.b16 %v441
          %v475 = vunpack.c.h.b16 %v441
          %v476 = vunpack.c.l.b16 %v442
          %v477 = vunpack.c.h.b16 %v442
          %v478 = vunpack.c.l.b16 %v443
          %v479 = vunpack.c.h.b16 %v443
          %v480 = vunpack.c.l.b16 %v444
          %v481 = vunpack.c.h.b16 %v444
          %v482 = vunpack.c.l.b16 %v445
          %v483 = vunpack.c.h.b16 %v445
          %v484 = vunpack.c.l.b16 %v446
          %v485 = vunpack.c.h.b16 %v446
          %v486 = vunpack.c.l.b16 %v447
          %v487 = vunpack.c.h.b16 %v447
          %v488 = vunpack.c.l.b16 %v448
          %v489 = vunpack.c.h.b16 %v448
          %v490 = vunpack.c.l.b16 %v449
          %v491 = vunpack.c.h.b16 %v449
          %v492 = vunpack.c.l.b16 %v450
          %v493 = vunpack.c.h.b16 %v450
          %v494 = vunpack.c.l.b16 %v451
          %v495 = vunpack.c.h.b16 %v451
          %v496 = vunpack.c.l.b16 %v452
          %v497 = vunpack.c.h.b16 %v452
          %v498 = vunpack.c.l.b16 %v453
          %v499 = vunpack.c.h.b16 %v453
          %v500 = vunpack.c.l.b16 %v454
          %v501 = vunpack.c.h.b16 %v454
          %v502 = vunpack.c.l.b16 %v455
          %v503 = vunpack.c.h.b16 %v455
          %v504 = vpack.c.b16 %v474, %v472
          %v505 = vpack.c.b16 %v475, %v473
          %v506 = vpack.c.b16 %v478, %v476
          %v507 = vpack.c.b16 %v479, %v477
          %v508 = vpack.c.b16 %v482, %v480
          %v509 = vpack.c.b16 %v483, %v481
          %v510 = vpack.c.b16 %v486, %v484
          %v511 = vpack.c.b16 %v487, %v485
          %v512 = vpack.c.b16 %v490, %v488
          %v513 = vpack.c.b16 %v491, %v489
          %v514 = vpack.c.b16 %v494, %v492
          %v515 = vpack.c.b16 %v495, %v493
          %v516 = vpack.c.b16 %v498, %v496
          %v517 = vpack.c.b16 %v499, %v497
          %v518 = vpack.c.b16 %v502, %v500
          %v519 = vpack.c.b16 %v503, %v501
          %536 = vmatprep.subr.bf16.mxu0 %v505
          %537 = vmatpush1.bf16.msra.mxu0 %v504
          %538 = vmatprep.subr.bf16.mxu0 %v507
          %539 = vmatpush1.bf16.msra.mxu0 %v506
          %540 = vmatprep.subr.bf16.mxu0 %v509
          %541 = vmatpush1.bf16.msra.mxu0 %v508
          %542 = vmatprep.subr.bf16.mxu0 %v511
          %543 = vmatpush1.bf16.msra.mxu0 %v510
          %544 = vmatprep.subr.bf16.mxu0 %v513
          %545 = vmatpush1.bf16.msra.mxu0 %v512
          %546 = vmatprep.subr.bf16.mxu0 %v515
          %547 = vmatpush1.bf16.msra.mxu0 %v514
          %548 = vmatprep.subr.bf16.mxu0 %v517
          %549 = vmatpush1.bf16.msra.mxu0 %v516
          %550 = vmatprep.subr.bf16.mxu0 %v519
          %551 = vmatpush1.bf16.msra.mxu0 %v518
          %552 = vmatprep.subr.bf16.mxu0 0
          %553 = vmatpush1.bf16.msra.mxu0 0
          %554 = vmatprep.subr.bf16.mxu0 0
          %555 = vmatpush1.bf16.msra.mxu0 0
          %556 = vmatprep.subr.bf16.mxu0 0
          %557 = vmatpush1.bf16.msra.mxu0 0
          %558 = vmatprep.subr.bf16.mxu0 0
          %559 = vmatpush1.bf16.msra.mxu0 0
          %560 = vmatprep.subr.bf16.mxu0 0
          %561 = vmatpush1.bf16.msra.mxu0 0
          %562 = vmatprep.subr.bf16.mxu0 0
          %563 = vmatpush1.bf16.msra.mxu0 0
          %564 = vmatprep.subr.bf16.mxu0 0
          %565 = vmatpush1.bf16.msra.mxu0 0
          %566 = vmatprep.subr.bf16.mxu0 0
          %567 = vmatpush1.bf16.msra.mxu0 0
          %568 = vmatprep.mubr.bf16.mxu0 0
          %569 = vmatmul.mubr.bf16.gmra.mrb[0].mxu0 1065369472
          %v570 = vpop.f32.mrb[0].mxu0
          %v571 = vadd.f32 0.0, %v570
          %v572 = vpop.f32.mrb[0].mxu0
          %v573 = vadd.f32 0.0, %v572
          %v574 = vpop.f32.mrb[0].mxu0
          %v575 = vpop.f32.mrb[0].mxu0
          %576 = vdwg.mxu0
          %v577 = vmul.f32 %v571, 0.125
          %v578 = vmul.f32 %v573, 0.125
          %v579 = vpack.c.bf16 %v577, %v577
          %v580 = vpack.c.bf16 %v578, %v578
          %v581 = vld [vmem:[#allocation14] sm:$0xff]
          %v582 = vld [vmem:[#allocation14 + $0x8] sm:$0xff]
          %v583 = vld [vmem:[#allocation14 + $0x10] sm:$0xff]
          %v584 = vld [vmem:[#allocation14 + $0x18] sm:$0xff]
          %v585 = vld [vmem:[#allocation14 + $0x20] sm:$0xff]
          %v586 = vld [vmem:[#allocation14 + $0x28] sm:$0xff]
          %v587 = vld [vmem:[#allocation14 + $0x30] sm:$0xff]
          %v588 = vld [vmem:[#allocation14 + $0x38] sm:$0xff]
          %v589 = vld [vmem:[#allocation14 + $0x40] sm:$0xff]
          %v590 = vld [vmem:[#allocation14 + $0x48] sm:$0xff]
          %v591 = vld [vmem:[#allocation14 + $0x50] sm:$0xff]
          %v592 = vld [vmem:[#allocation14 + $0x58] sm:$0xff]
          %v593 = vld [vmem:[#allocation14 + $0x60] sm:$0xff]
          %v594 = vld [vmem:[#allocation14 + $0x68] sm:$0xff]
          %v595 = vld [vmem:[#allocation14 + $0x70] sm:$0xff]
          %v596 = vld [vmem:[#allocation14 + $0x78] sm:$0xff]
          %v597 = vld [vmem:[#allocation14 + $0x80] sm:$0xff]
          %v598 = vld [vmem:[#allocation14 + $0x88] sm:$0xff]
          %v599 = vld [vmem:[#allocation14 + $0x90] sm:$0xff]
          %v600 = vld [vmem:[#allocation14 + $0x98] sm:$0xff]
          %v601 = vld [vmem:[#allocation14 + $0xa0] sm:$0xff]
          %v602 = vld [vmem:[#allocation14 + $0xa8] sm:$0xff]
          %v603 = vld [vmem:[#allocation14 + $0xb0] sm:$0xff]
          %v604 = vld [vmem:[#allocation14 + $0xb8] sm:$0xff]
          %v605 = vld [vmem:[#allocation14 + $0xc0] sm:$0xff]
          %v606 = vld [vmem:[#allocation14 + $0xc8] sm:$0xff]
          %v607 = vld [vmem:[#allocation14 + $0xd0] sm:$0xff]
          %v608 = vld [vmem:[#allocation14 + $0xd8] sm:$0xff]
          %v609 = vld [vmem:[#allocation14 + $0xe0] sm:$0xff]
          %v610 = vld [vmem:[#allocation14 + $0xe8] sm:$0xff]
          %v611 = vld [vmem:[#allocation14 + $0xf0] sm:$0xff]
          %v612 = vld [vmem:[#allocation14 + $0xf8] sm:$0xff]
          %v613 = vld [vmem:[#allocation14 + $0x100] sm:$0xff]
          %v614 = vld [vmem:[#allocation14 + $0x108] sm:$0xff]
          %v615 = vld [vmem:[#allocation14 + $0x110] sm:$0xff]
          %v616 = vld [vmem:[#allocation14 + $0x118] sm:$0xff]
          %v617 = vld [vmem:[#allocation14 + $0x120] sm:$0xff]
          %v618 = vld [vmem:[#allocation14 + $0x128] sm:$0xff]
          %v619 = vld [vmem:[#allocation14 + $0x130] sm:$0xff]
          %v620 = vld [vmem:[#allocation14 + $0x138] sm:$0xff]
          %v621 = vld [vmem:[#allocation14 + $0x140] sm:$0xff]
          %v622 = vld [vmem:[#allocation14 + $0x148] sm:$0xff]
          %v623 = vld [vmem:[#allocation14 + $0x150] sm:$0xff]
          %v624 = vld [vmem:[#allocation14 + $0x158] sm:$0xff]
          %v625 = vld [vmem:[#allocation14 + $0x160] sm:$0xff]
          %v626 = vld [vmem:[#allocation14 + $0x168] sm:$0xff]
          %v627 = vld [vmem:[#allocation14 + $0x170] sm:$0xff]
          %v628 = vld [vmem:[#allocation14 + $0x178] sm:$0xff]
          %v629 = vld [vmem:[#allocation14 + $0x180] sm:$0xff]
          %v630 = vld [vmem:[#allocation14 + $0x188] sm:$0xff]
          %v631 = vld [vmem:[#allocation14 + $0x190] sm:$0xff]
          %v632 = vld [vmem:[#allocation14 + $0x198] sm:$0xff]
          %v633 = vld [vmem:[#allocation14 + $0x1a0] sm:$0xff]
          %v634 = vld [vmem:[#allocation14 + $0x1a8] sm:$0xff]
          %v635 = vld [vmem:[#allocation14 + $0x1b0] sm:$0xff]
          %v636 = vld [vmem:[#allocation14 + $0x1b8] sm:$0xff]
          %v637 = vld [vmem:[#allocation14 + $0x1c0] sm:$0xff]
          %v638 = vld [vmem:[#allocation14 + $0x1c8] sm:$0xff]
          %v639 = vld [vmem:[#allocation14 + $0x1d0] sm:$0xff]
          %v640 = vld [vmem:[#allocation14 + $0x1d8] sm:$0xff]
          %v641 = vld [vmem:[#allocation14 + $0x1e0] sm:$0xff]
          %v642 = vld [vmem:[#allocation14 + $0x1e8] sm:$0xff]
          %v643 = vld [vmem:[#allocation14 + $0x1f0] sm:$0xff]
          %v644 = vld [vmem:[#allocation14 + $0x1f8] sm:$0xff]
          %v645 = vld [vmem:[#allocation14 + $0x200] sm:$0xff]
          %v646 = vld [vmem:[#allocation14 + $0x208] sm:$0xff]
          %v647 = vld [vmem:[#allocation14 + $0x210] sm:$0xff]
          %v648 = vld [vmem:[#allocation14 + $0x218] sm:$0xff]
          %v649 = vld [vmem:[#allocation14 + $0x220] sm:$0xff]
          %v650 = vld [vmem:[#allocation14 + $0x228] sm:$0xff]
          %v651 = vld [vmem:[#allocation14 + $0x230] sm:$0xff]
          %v652 = vld [vmem:[#allocation14 + $0x238] sm:$0xff]
          %v653 = vld [vmem:[#allocation14 + $0x240] sm:$0xff]
          %v654 = vld [vmem:[#allocation14 + $0x248] sm:$0xff]
          %v655 = vld [vmem:[#allocation14 + $0x250] sm:$0xff]
          %v656 = vld [vmem:[#allocation14 + $0x258] sm:$0xff]
          %v657 = vld [vmem:[#allocation14 + $0x260] sm:$0xff]
          %v658 = vld [vmem:[#allocation14 + $0x268] sm:$0xff]
          %v659 = vld [vmem:[#allocation14 + $0x270] sm:$0xff]
          %v660 = vld [vmem:[#allocation14 + $0x278] sm:$0xff]
          %v661 = vld [vmem:[#allocation14 + $0x280] sm:$0xff]
          %v662 = vld [vmem:[#allocation14 + $0x288] sm:$0xff]
          %v663 = vld [vmem:[#allocation14 + $0x290] sm:$0xff]
          %v664 = vld [vmem:[#allocation14 + $0x298] sm:$0xff]
          %v665 = vld [vmem:[#allocation14 + $0x2a0] sm:$0xff]
          %v666 = vld [vmem:[#allocation14 + $0x2a8] sm:$0xff]
          %v667 = vld [vmem:[#allocation14 + $0x2b0] sm:$0xff]
          %v668 = vld [vmem:[#allocation14 + $0x2b8] sm:$0xff]
          %v669 = vld [vmem:[#allocation14 + $0x2c0] sm:$0xff]
          %v670 = vld [vmem:[#allocation14 + $0x2c8] sm:$0xff]
          %v671 = vld [vmem:[#allocation14 + $0x2d0] sm:$0xff]
          %v672 = vld [vmem:[#allocation14 + $0x2d8] sm:$0xff]
          %v673 = vld [vmem:[#allocation14 + $0x2e0] sm:$0xff]
          %v674 = vld [vmem:[#allocation14 + $0x2e8] sm:$0xff]
          %v675 = vld [vmem:[#allocation14 + $0x2f0] sm:$0xff]
          %v676 = vld [vmem:[#allocation14 + $0x2f8] sm:$0xff]
          %v773 = vunpack.c.l.b16 %v581
          %v774 = vunpack.c.h.b16 %v581
          %v775 = vunpack.c.l.b16 %v582
          %v776 = vunpack.c.h.b16 %v582
          %v777 = vunpack.c.l.b16 %v583
          %v778 = vunpack.c.h.b16 %v583
          %v779 = vunpack.c.l.b16 %v584
          %v780 = vunpack.c.h.b16 %v584
          %v781 = vunpack.c.l.b16 %v585
          %v782 = vunpack.c.h.b16 %v585
          %v783 = vunpack.c.l.b16 %v586
          %v784 = vunpack.c.h.b16 %v586
          %v785 = vunpack.c.l.b16 %v587
          %v786 = vunpack.c.h.b16 %v587
          %v787 = vunpack.c.l.b16 %v588
          %v788 = vunpack.c.h.b16 %v588
          %v789 = vunpack.c.l.b16 %v589
          %v790 = vunpack.c.h.b16 %v589
          %v791 = vunpack.c.l.b16 %v590
          %v792 = vunpack.c.h.b16 %v590
          %v793 = vunpack.c.l.b16 %v591
          %v794 = vunpack.c.h.b16 %v591
          %v795 = vunpack.c.l.b16 %v592
          %v796 = vunpack.c.h.b16 %v592
          %v797 = vunpack.c.l.b16 %v593
          %v798 = vunpack.c.h.b16 %v593
          %v799 = vunpack.c.l.b16 %v594
          %v800 = vunpack.c.h.b16 %v594
          %v801 = vunpack.c.l.b16 %v595
          %v802 = vunpack.c.h.b16 %v595
          %v803 = vunpack.c.l.b16 %v596
          %v804 = vunpack.c.h.b16 %v596
          %v805 = vunpack.c.l.b16 %v597
          %v806 = vunpack.c.h.b16 %v597
          %v807 = vunpack.c.l.b16 %v598
          %v808 = vunpack.c.h.b16 %v598
          %v809 = vunpack.c.l.b16 %v599
          %v810 = vunpack.c.h.b16 %v599
          %v811 = vunpack.c.l.b16 %v600
          %v812 = vunpack.c.h.b16 %v600
          %v813 = vunpack.c.l.b16 %v601
          %v814 = vunpack.c.h.b16 %v601
          %v815 = vunpack.c.l.b16 %v602
          %v816 = vunpack.c.h.b16 %v602
          %v817 = vunpack.c.l.b16 %v603
          %v818 = vunpack.c.h.b16 %v603
          %v819 = vunpack.c.l.b16 %v604
          %v820 = vunpack.c.h.b16 %v604
          %v821 = vunpack.c.l.b16 %v605
          %v822 = vunpack.c.h.b16 %v605
          %v823 = vunpack.c.l.b16 %v606
          %v824 = vunpack.c.h.b16 %v606
          %v825 = vunpack.c.l.b16 %v607
          %v826 = vunpack.c.h.b16 %v607
          %v827 = vunpack.c.l.b16 %v608
          %v828 = vunpack.c.h.b16 %v608
          %v829 = vunpack.c.l.b16 %v609
          %v830 = vunpack.c.h.b16 %v609
          %v831 = vunpack.c.l.b16 %v610
          %v832 = vunpack.c.h.b16 %v610
          %v833 = vunpack.c.l.b16 %v611
          %v834 = vunpack.c.h.b16 %v611
          %v835 = vunpack.c.l.b16 %v612
          %v836 = vunpack.c.h.b16 %v612
          %v837 = vunpack.c.l.b16 %v613
          %v838 = vunpack.c.h.b16 %v613
          %v839 = vunpack.c.l.b16 %v614
          %v840 = vunpack.c.h.b16 %v614
          %v841 = vunpack.c.l.b16 %v615
          %v842 = vunpack.c.h.b16 %v615
          %v843 = vunpack.c.l.b16 %v616
          %v844 = vunpack.c.h.b16 %v616
          %v845 = vunpack.c.l.b16 %v617
          %v846 = vunpack.c.h.b16 %v617
          %v847 = vunpack.c.l.b16 %v618
          %v848 = vunpack.c.h.b16 %v618
          %v849 = vunpack.c.l.b16 %v619
          %v850 = vunpack.c.h.b16 %v619
          %v851 = vunpack.c.l.b16 %v620
          %v852 = vunpack.c.h.b16 %v620
          %v853 = vunpack.c.l.b16 %v621
          %v854 = vunpack.c.h.b16 %v621
          %v855 = vunpack.c.l.b16 %v622
          %v856 = vunpack.c.h.b16 %v622
          %v857 = vunpack.c.l.b16 %v623
          %v858 = vunpack.c.h.b16 %v623
          %v859 = vunpack.c.l.b16 %v624
          %v860 = vunpack.c.h.b16 %v624
          %v861 = vunpack.c.l.b16 %v625
          %v862 = vunpack.c.h.b16 %v625
          %v863 = vunpack.c.l.b16 %v626
          %v864 = vunpack.c.h.b16 %v626
          %v865 = vunpack.c.l.b16 %v627
          %v866 = vunpack.c.h.b16 %v627
          %v867 = vunpack.c.l.b16 %v628
          %v868 = vunpack.c.h.b16 %v628
          %v869 = vunpack.c.l.b16 %v629
          %v870 = vunpack.c.h.b16 %v629
          %v871 = vunpack.c.l.b16 %v630
          %v872 = vunpack.c.h.b16 %v630
          %v873 = vunpack.c.l.b16 %v631
          %v874 = vunpack.c.h.b16 %v631
          %v875 = vunpack.c.l.b16 %v632
          %v876 = vunpack.c.h.b16 %v632
          %v877 = vunpack.c.l.b16 %v633
          %v878 = vunpack.c.h.b16 %v633
          %v879 = vunpack.c.l.b16 %v634
          %v880 = vunpack.c.h.b16 %v634
          %v881 = vunpack.c.l.b16 %v635
          %v882 = vunpack.c.h.b16 %v635
          %v883 = vunpack.c.l.b16 %v636
          %v884 = vunpack.c.h.b16 %v636
          %v885 = vunpack.c.l.b16 %v637
          %v886 = vunpack.c.h.b16 %v637
          %v887 = vunpack.c.l.b16 %v638
          %v888 = vunpack.c.h.b16 %v638
          %v889 = vunpack.c.l.b16 %v639
          %v890 = vunpack.c.h.b16 %v639
          %v891 = vunpack.c.l.b16 %v640
          %v892 = vunpack.c.h.b16 %v640
          %v893 = vunpack.c.l.b16 %v641
          %v894 = vunpack.c.h.b16 %v641
          %v895 = vunpack.c.l.b16 %v642
          %v896 = vunpack.c.h.b16 %v642
          %v897 = vunpack.c.l.b16 %v643
          %v898 = vunpack.c.h.b16 %v643
          %v899 = vunpack.c.l.b16 %v644
          %v900 = vunpack.c.h.b16 %v644
          %v901 = vunpack.c.l.b16 %v645
          %v902 = vunpack.c.h.b16 %v645
          %v903 = vunpack.c.l.b16 %v646
          %v904 = vunpack.c.h.b16 %v646
          %v905 = vunpack.c.l.b16 %v647
          %v906 = vunpack.c.h.b16 %v647
          %v907 = vunpack.c.l.b16 %v648
          %v908 = vunpack.c.h.b16 %v648
          %v909 = vunpack.c.l.b16 %v649
          %v910 = vunpack.c.h.b16 %v649
          %v911 = vunpack.c.l.b16 %v650
          %v912 = vunpack.c.h.b16 %v650
          %v913 = vunpack.c.l.b16 %v651
          %v914 = vunpack.c.h.b16 %v651
          %v915 = vunpack.c.l.b16 %v652
          %v916 = vunpack.c.h.b16 %v652
          %v917 = vunpack.c.l.b16 %v653
          %v918 = vunpack.c.h.b16 %v653
          %v919 = vunpack.c.l.b16 %v654
          %v920 = vunpack.c.h.b16 %v654
          %v921 = vunpack.c.l.b16 %v655
          %v922 = vunpack.c.h.b16 %v655
          %v923 = vunpack.c.l.b16 %v656
          %v924 = vunpack.c.h.b16 %v656
          %v925 = vunpack.c.l.b16 %v657
          %v926 = vunpack.c.h.b16 %v657
          %v927 = vunpack.c.l.b16 %v658
          %v928 = vunpack.c.h.b16 %v658
          %v929 = vunpack.c.l.b16 %v659
          %v930 = vunpack.c.h.b16 %v659
          %v931 = vunpack.c.l.b16 %v660
          %v932 = vunpack.c.h.b16 %v660
          %v933 = vunpack.c.l.b16 %v661
          %v934 = vunpack.c.h.b16 %v661
          %v935 = vunpack.c.l.b16 %v662
          %v936 = vunpack.c.h.b16 %v662
          %v937 = vunpack.c.l.b16 %v663
          %v938 = vunpack.c.h.b16 %v663
          %v939 = vunpack.c.l.b16 %v664
          %v940 = vunpack.c.h.b16 %v664
          %v941 = vunpack.c.l.b16 %v665
          %v942 = vunpack.c.h.b16 %v665
          %v943 = vunpack.c.l.b16 %v666
          %v944 = vunpack.c.h.b16 %v666
          %v945 = vunpack.c.l.b16 %v667
          %v946 = vunpack.c.h.b16 %v667
          %v947 = vunpack.c.l.b16 %v668
          %v948 = vunpack.c.h.b16 %v668
          %v949 = vunpack.c.l.b16 %v669
          %v950 = vunpack.c.h.b16 %v669
          %v951 = vunpack.c.l.b16 %v670
          %v952 = vunpack.c.h.b16 %v670
          %v953 = vunpack.c.l.b16 %v671
          %v954 = vunpack.c.h.b16 %v671
          %v955 = vunpack.c.l.b16 %v672
          %v956 = vunpack.c.h.b16 %v672
          %v957 = vunpack.c.l.b16 %v673
          %v958 = vunpack.c.h.b16 %v673
          %v959 = vunpack.c.l.b16 %v674
          %v960 = vunpack.c.h.b16 %v674
          %v961 = vunpack.c.l.b16 %v675
          %v962 = vunpack.c.h.b16 %v675
          %v963 = vunpack.c.l.b16 %v676
          %v964 = vunpack.c.h.b16 %v676
          %v965 = vpack.c.b16 %v779, %v773
          %v966 = vpack.c.b16 %v780, %v774
          %v967 = vpack.c.b16 %v781, %v775
          %v968 = vpack.c.b16 %v782, %v776
          %v969 = vpack.c.b16 %v783, %v777
          %v970 = vpack.c.b16 %v784, %v778
          %v971 = vpack.c.b16 %v791, %v785
          %v972 = vpack.c.b16 %v792, %v786
          %v973 = vpack.c.b16 %v793, %v787
          %v974 = vpack.c.b16 %v794, %v788
          %v975 = vpack.c.b16 %v795, %v789
          %v976 = vpack.c.b16 %v796, %v790
          %v977 = vpack.c.b16 %v803, %v797
          %v978 = vpack.c.b16 %v804, %v798
          %v979 = vpack.c.b16 %v805, %v799
          %v980 = vpack.c.b16 %v806, %v800
          %v981 = vpack.c.b16 %v807, %v801
          %v982 = vpack.c.b16 %v808, %v802
          %v983 = vpack.c.b16 %v815, %v809
          %v984 = vpack.c.b16 %v816, %v810
          %v985 = vpack.c.b16 %v817, %v811
          %v986 = vpack.c.b16 %v818, %v812
          %v987 = vpack.c.b16 %v819, %v813
          %v988 = vpack.c.b16 %v820, %v814
          %v989 = vpack.c.b16 %v827, %v821
          %v990 = vpack.c.b16 %v828, %v822
          %v991 = vpack.c.b16 %v829, %v823
          %v992 = vpack.c.b16 %v830, %v824
          %v993 = vpack.c.b16 %v831, %v825
          %v994 = vpack.c.b16 %v832, %v826
          %v995 = vpack.c.b16 %v839, %v833
          %v996 = vpack.c.b16 %v840, %v834
          %v997 = vpack.c.b16 %v841, %v835
          %v998 = vpack.c.b16 %v842, %v836
          %v999 = vpack.c.b16 %v843, %v837
          %v1000 = vpack.c.b16 %v844, %v838
          %v1001 = vpack.c.b16 %v851, %v845
          %v1002 = vpack.c.b16 %v852, %v846
          %v1003 = vpack.c.b16 %v853, %v847
          %v1004 = vpack.c.b16 %v854, %v848
          %v1005 = vpack.c.b16 %v855, %v849
          %v1006 = vpack.c.b16 %v856, %v850
          %v1007 = vpack.c.b16 %v863, %v857
          %v1008 = vpack.c.b16 %v864, %v858
          %v1009 = vpack.c.b16 %v865, %v859
          %v1010 = vpack.c.b16 %v866, %v860
          %v1011 = vpack.c.b16 %v867, %v861
          %v1012 = vpack.c.b16 %v868, %v862
          %v1013 = vpack.c.b16 %v875, %v869
          %v1014 = vpack.c.b16 %v876, %v870
          %v1015 = vpack.c.b16 %v877, %v871
          %v1016 = vpack.c.b16 %v878, %v872
          %v1017 = vpack.c.b16 %v879, %v873
          %v1018 = vpack.c.b16 %v880, %v874
          %v1019 = vpack.c.b16 %v887, %v881
          %v1020 = vpack.c.b16 %v888, %v882
          %v1021 = vpack.c.b16 %v889, %v883
          %v1022 = vpack.c.b16 %v890, %v884
          %v1023 = vpack.c.b16 %v891, %v885
          %v1024 = vpack.c.b16 %v892, %v886
          %v1025 = vpack.c.b16 %v899, %v893
          %v1026 = vpack.c.b16 %v900, %v894
          %v1027 = vpack.c.b16 %v901, %v895
          %v1028 = vpack.c.b16 %v902, %v896
          %v1029 = vpack.c.b16 %v903, %v897
          %v1030 = vpack.c.b16 %v904, %v898
          %v1031 = vpack.c.b16 %v911, %v905
          %v1032 = vpack.c.b16 %v912, %v906
          %v1033 = vpack.c.b16 %v913, %v907
          %v1034 = vpack.c.b16 %v914, %v908
          %v1035 = vpack.c.b16 %v915, %v909
          %v1036 = vpack.c.b16 %v916, %v910
          %v1037 = vpack.c.b16 %v923, %v917
          %v1038 = vpack.c.b16 %v924, %v918
          %v1039 = vpack.c.b16 %v925, %v919
          %v1040 = vpack.c.b16 %v926, %v920
          %v1041 = vpack.c.b16 %v927, %v921
          %v1042 = vpack.c.b16 %v928, %v922
          %v1043 = vpack.c.b16 %v935, %v929
          %v1044 = vpack.c.b16 %v936, %v930
          %v1045 = vpack.c.b16 %v937, %v931
          %v1046 = vpack.c.b16 %v938, %v932
          %v1047 = vpack.c.b16 %v939, %v933
          %v1048 = vpack.c.b16 %v940, %v934
          %v1049 = vpack.c.b16 %v947, %v941
          %v1050 = vpack.c.b16 %v948, %v942
          %v1051 = vpack.c.b16 %v949, %v943
          %v1052 = vpack.c.b16 %v950, %v944
          %v1053 = vpack.c.b16 %v951, %v945
          %v1054 = vpack.c.b16 %v952, %v946
          %v1055 = vpack.c.b16 %v959, %v953
          %v1056 = vpack.c.b16 %v960, %v954
          %v1057 = vpack.c.b16 %v961, %v955
          %v1058 = vpack.c.b16 %v962, %v956
          %v1059 = vpack.c.b16 %v963, %v957
          %v1060 = vpack.c.b16 %v964, %v958
          %1157 = vmatprep.subr.bf16.mxu0 %v966
          %1158 = vmatpush1.bf16.msra.mxu0 %v965
          %1159 = vmatprep.subr.bf16.mxu0 %v972
          %1160 = vmatpush1.bf16.msra.mxu0 %v971
          %1161 = vmatprep.subr.bf16.mxu0 %v978
          %1162 = vmatpush1.bf16.msra.mxu0 %v977
          %1163 = vmatprep.subr.bf16.mxu0 %v984
          %1164 = vmatpush1.bf16.msra.mxu0 %v983
          %1165 = vmatprep.subr.bf16.mxu0 %v990
          %1166 = vmatpush1.bf16.msra.mxu0 %v989
          %1167 = vmatprep.subr.bf16.mxu0 %v996
          %1168 = vmatpush1.bf16.msra.mxu0 %v995
          %1169 = vmatprep.subr.bf16.mxu0 %v1002
          %1170 = vmatpush1.bf16.msra.mxu0 %v1001
          %1171 = vmatprep.subr.bf16.mxu0 %v1008
          %1172 = vmatpush1.bf16.msra.mxu0 %v1007
          %1173 = vmatprep.subr.bf16.mxu0 %v1014
          %1174 = vmatpush1.bf16.msra.mxu0 %v1013
          %1175 = vmatprep.subr.bf16.mxu0 %v1020
          %1176 = vmatpush1.bf16.msra.mxu0 %v1019
          %1177 = vmatprep.subr.bf16.mxu0 %v1026
          %1178 = vmatpush1.bf16.msra.mxu0 %v1025
          %1179 = vmatprep.subr.bf16.mxu0 %v1032
          %1180 = vmatpush1.bf16.msra.mxu0 %v1031
          %1181 = vmatprep.subr.bf16.mxu0 %v1038
          %1182 = vmatpush1.bf16.msra.mxu0 %v1037
          %1183 = vmatprep.subr.bf16.mxu0 %v1044
          %1184 = vmatpush1.bf16.msra.mxu0 %v1043
          %1185 = vmatprep.subr.bf16.mxu0 %v1050
          %1186 = vmatpush1.bf16.msra.mxu0 %v1049
          %1187 = vmatprep.subr.bf16.mxu0 %v1056
          %1188 = vmatpush1.bf16.msra.mxu0 %v1055
          %1189 = vmatprep.mubr.bf16.mxu0 %v580
          %1190 = vmatmul.mubr.bf16.gmra.mrb[0].mxu0 %v579
          %v1191 = vpop.f32.mrb[0].mxu0
          %v1192 = vadd.f32 0.0, %v1191
          %v1193 = vpop.f32.mrb[0].mxu0
          %v1194 = vadd.f32 0.0, %v1193
          %v1195 = vpop.f32.mrb[0].mxu0
          %v1196 = vpop.f32.mrb[0].mxu0
          %1197 = vdwg.mxu0
          %1198 = vmatprep.subr.bf16.mxu0 %v968
          %1199 = vmatpush1.bf16.msra.mxu0 %v967
          %1200 = vmatprep.subr.bf16.mxu0 %v974
          %1201 = vmatpush1.bf16.msra.mxu0 %v973
          %1202 = vmatprep.subr.bf16.mxu0 %v980
          %1203 = vmatpush1.bf16.msra.mxu0 %v979
          %1204 = vmatprep.subr.bf16.mxu0 %v986
          %1205 = vmatpush1.bf16.msra.mxu0 %v985
          %1206 = vmatprep.subr.bf16.mxu0 %v992
          %1207 = vmatpush1.bf16.msra.mxu0 %v991
          %1208 = vmatprep.subr.bf16.mxu0 %v998
          %1209 = vmatpush1.bf16.msra.mxu0 %v997
          %1210 = vmatprep.subr.bf16.mxu0 %v1004
          %1211 = vmatpush1.bf16.msra.mxu0 %v1003
          %1212 = vmatprep.subr.bf16.mxu0 %v1010
          %1213 = vmatpush1.bf16.msra.mxu0 %v1009
          %1214 = vmatprep.subr.bf16.mxu0 %v1016
          %1215 = vmatpush1.bf16.msra.mxu0 %v1015
          %1216 = vmatprep.subr.bf16.mxu0 %v1022
          %1217 = vmatpush1.bf16.msra.mxu0 %v1021
          %1218 = vmatprep.subr.bf16.mxu0 %v1028
          %1219 = vmatpush1.bf16.msra.mxu0 %v1027
          %1220 = vmatprep.subr.bf16.mxu0 %v1034
          %1221 = vmatpush1.bf16.msra.mxu0 %v1033
          %1222 = vmatprep.subr.bf16.mxu0 %v1040
          %1223 = vmatpush1.bf16.msra.mxu0 %v1039
          %1224 = vmatprep.subr.bf16.mxu0 %v1046
          %1225 = vmatpush1.bf16.msra.mxu0 %v1045
          %1226 = vmatprep.subr.bf16.mxu0 %v1052
          %1227 = vmatpush1.bf16.msra.mxu0 %v1051
          %1228 = vmatprep.subr.bf16.mxu0 %v1058
          %1229 = vmatpush1.bf16.msra.mxu0 %v1057
          %1230 = vmatprep.mubr.bf16.mxu0 %v580
          %1231 = vmatmul.mubr.bf16.gmra.mrb[0].mxu0 %v579
          %v1232 = vpop.f32.mrb[0].mxu0
          %v1233 = vadd.f32 0.0, %v1232
          %v1234 = vpop.f32.mrb[0].mxu0
          %v1235 = vadd.f32 0.0, %v1234
          %v1236 = vpop.f32.mrb[0].mxu0
          %v1237 = vpop.f32.mrb[0].mxu0
          %1238 = vdwg.mxu0
          %1239 = vmatprep.subr.bf16.mxu0 %v970
          %1240 = vmatpush1.bf16.msra.mxu0 %v969
          %1241 = vmatprep.subr.bf16.mxu0 %v976
          %1242 = vmatpush1.bf16.msra.mxu0 %v975
          %1243 = vmatprep.subr.bf16.mxu0 %v982
          %1244 = vmatpush1.bf16.msra.mxu0 %v981
          %1245 = vmatprep.subr.bf16.mxu0 %v988
          %1246 = vmatpush1.bf16.msra.mxu0 %v987
          %1247 = vmatprep.subr.bf16.mxu0 %v994
          %1248 = vmatpush1.bf16.msra.mxu0 %v993
          %1249 = vmatprep.subr.bf16.mxu0 %v1000
          %1250 = vmatpush1.bf16.msra.mxu0 %v999
          %1251 = vmatprep.subr.bf16.mxu0 %v1006
          %1252 = vmatpush1.bf16.msra.mxu0 %v1005
          %1253 = vmatprep.subr.bf16.mxu0 %v1012
          %1254 = vmatpush1.bf16.msra.mxu0 %v1011
          %1255 = vmatprep.subr.bf16.mxu0 %v1018
          %1256 = vmatpush1.bf16.msra.mxu0 %v1017
          %1257 = vmatprep.subr.bf16.mxu0 %v1024
          %1258 = vmatpush1.bf16.msra.mxu0 %v1023
          %1259 = vmatprep.subr.bf16.mxu0 %v1030
          %1260 = vmatpush1.bf16.msra.mxu0 %v1029
          %1261 = vmatprep.subr.bf16.mxu0 %v1036
          %1262 = vmatpush1.bf16.msra.mxu0 %v1035
          %1263 = vmatprep.subr.bf16.mxu0 %v1042
          %1264 = vmatpush1.bf16.msra.mxu0 %v1041
          %1265 = vmatprep.subr.bf16.mxu0 %v1048
          %1266 = vmatpush1.bf16.msra.mxu0 %v1047
          %1267 = vmatprep.subr.bf16.mxu0 %v1054
          %1268 = vmatpush1.bf16.msra.mxu0 %v1053
          %1269 = vmatprep.subr.bf16.mxu0 %v1060
          %1270 = vmatpush1.bf16.msra.mxu0 %v1059
          %1271 = vmatprep.mubr.bf16.mxu0 %v580
          %1272 = vmatmul.mubr.bf16.gmra.mrb[0].mxu0 %v579
          %v1273 = vpop.f32.mrb[0].mxu0
          %v1274 = vadd.f32 0.0, %v1273
          %v1275 = vpop.f32.mrb[0].mxu0
          %v1276 = vadd.f32 0.0, %v1275
          %v1277 = vpop.f32.mrb[0].mxu0
          %v1278 = vpop.f32.mrb[0].mxu0
          %1279 = vdwg.mxu0
          %v1286 = vcombine.low %v1192, %v1194
          %v1287 = vcombine.low %v1233, %v1235
          %v1288 = vcombine.low %v1274, %v1276
          %v1290 = vunpack.c.l.s4 1966171168
          %v1291 = vunpack.c.0.s8 %v1290
          %v1292 = vlaneseq
          %v1293 = vshrl.u32 %v1292, 7
          %v1294 = vsub.s32 %v1291, %v1293
          %v1295 = vrot.slane %v1286, %v1294
          %v1297 = vunpack.c.l.s4 1966171168
          %v1298 = vunpack.c.0.s8 %v1297
          %v1299 = vlaneseq
          %v1300 = vshrl.u32 %v1299, 7
          %v1301 = vsub.s32 %v1298, %v1300
          %v1302 = vrot.slane %v1287, %v1301
          %v1304 = vunpack.c.l.s4 1966171168
          %v1305 = vunpack.c.0.s8 %v1304
          %v1306 = vlaneseq
          %v1307 = vshrl.u32 %v1306, 7
          %v1308 = vsub.s32 %v1305, %v1307
          %v1309 = vrot.slane %v1288, %v1308
          %v1310 = vcombine.low %v1295, %v1302
          %v1312 = vunpack.c.l.s4 1966171168
          %v1313 = vunpack.c.0.s8 %v1312
          %v1314 = vlaneseq
          %v1315 = vshrl.u32 %v1314, 7
          %v1316 = vsub.s32 %v1313, %v1315
          %v1317 = vrot.slane %v1310, %v1316
          %v1319 = vunpack.c.l.s4 1966171168
          %v1320 = vunpack.c.0.s8 %v1319
          %v1321 = vlaneseq
          %v1322 = vshrl.u32 %v1321, 7
          %v1323 = vsub.s32 %v1320, %v1322
          %v1324 = vrot.slane %v1309, %v1323
          %v1325 = vcombine.low %v1317, %v1324
          %v1327 = vlaneseq
          %vm1328 = vcmp.ge.s32.totalorder %v1327, 0
          %vm1329 = vcmp.lt.s32.totalorder %v1327, 768
          %vm1330 = vmand %vm1328, %vm1329
          %1331 = vst.msk [vmem:[#allocation4] sm:$0x3f] %vm1330, %v1325
          %v1332 = vld [vmem:[#allocation13] sm:$0x3f]
          %s1333 = smul.u32 0, 2
          %s1334 = smul.addr %s1333, 4
          %s1335 = scalar_lea.vmem %s370, %s1334 [#allocation5]
          %v1336 = vld [vmem:[%s1335] sm:$0xff]
          %v1337 = vld [vmem:[%s1335 + $0x8] sm:$0xff]
          %v1338 = vld [vmem:[%s1335 + $0x10] sm:$0xff]
          %v1339 = vld [vmem:[%s1335 + $0x18] sm:$0xff]
          %v1340 = vld [vmem:[%s1335 + $0x20] sm:$0xff]
          %v1341 = vld [vmem:[%s1335 + $0x28] sm:$0xff]
          %v1342 = vld [vmem:[%s1335 + $0x30] sm:$0xff]
          %v1343 = vld [vmem:[%s1335 + $0x38] sm:$0xff]
          %v1344 = vld [vmem:[%s1335 + $0x40] sm:$0xff]
          %v1345 = vld [vmem:[%s1335 + $0x48] sm:$0xff]
          %v1346 = vld [vmem:[%s1335 + $0x50] sm:$0xff]
          %v1347 = vld [vmem:[%s1335 + $0x58] sm:$0xff]
          %v1348 = vld [vmem:[%s1335 + $0x60] sm:$0xff]
          %v1349 = vld [vmem:[%s1335 + $0x68] sm:$0xff]
          %v1350 = vld [vmem:[%s1335 + $0x70] sm:$0xff]
          %v1351 = vld [vmem:[%s1335 + $0x78] sm:$0xff]
          %v1352 = vld [vmem:[#allocation11] sm:$0xff]
          %v1353 = vld [vmem:[#allocation11 + $0x8] sm:$0xff]
          %v1354 = vld [vmem:[#allocation11 + $0x10] sm:$0xff]
          %v1355 = vld [vmem:[#allocation11 + $0x18] sm:$0xff]
          %v1356 = vld [vmem:[#allocation11 + $0x20] sm:$0xff]
          %v1357 = vld [vmem:[#allocation11 + $0x28] sm:$0xff]
          %v1358 = vld [vmem:[#allocation11 + $0x30] sm:$0xff]
          %v1359 = vld [vmem:[#allocation11 + $0x38] sm:$0xff]
          %v1360 = vld [vmem:[#allocation11 + $0x40] sm:$0xff]
          %v1361 = vld [vmem:[#allocation11 + $0x48] sm:$0xff]
          %v1362 = vld [vmem:[#allocation11 + $0x50] sm:$0xff]
          %v1363 = vld [vmem:[#allocation11 + $0x58] sm:$0xff]
          %v1364 = vld [vmem:[#allocation11 + $0x60] sm:$0xff]
          %v1365 = vld [vmem:[#allocation11 + $0x68] sm:$0xff]
          %v1366 = vld [vmem:[#allocation11 + $0x70] sm:$0xff]
          %v1367 = vld [vmem:[#allocation11 + $0x78] sm:$0xff]
          %v1368 = vld [vmem:[#allocation11 + $0x80] sm:$0xff]
          %v1369 = vld [vmem:[#allocation11 + $0x88] sm:$0xff]
          %v1370 = vld [vmem:[#allocation11 + $0x90] sm:$0xff]
          %v1371 = vld [vmem:[#allocation11 + $0x98] sm:$0xff]
          %v1372 = vld [vmem:[#allocation11 + $0xa0] sm:$0xff]
          %v1373 = vld [vmem:[#allocation11 + $0xa8] sm:$0xff]
          %v1374 = vld [vmem:[#allocation11 + $0xb0] sm:$0xff]
          %v1375 = vld [vmem:[#allocation11 + $0xb8] sm:$0xff]
          %v1376 = vld [vmem:[#allocation11 + $0xc0] sm:$0xff]
          %v1377 = vld [vmem:[#allocation11 + $0xc8] sm:$0xff]
          %v1378 = vld [vmem:[#allocation11 + $0xd0] sm:$0xff]
          %v1379 = vld [vmem:[#allocation11 + $0xd8] sm:$0xff]
          %v1380 = vld [vmem:[#allocation11 + $0xe0] sm:$0xff]
          %v1381 = vld [vmem:[#allocation11 + $0xe8] sm:$0xff]
          %v1382 = vld [vmem:[#allocation11 + $0xf0] sm:$0xff]
          %v1383 = vld [vmem:[#allocation11 + $0xf8] sm:$0xff]
          %v1384 = vld [vmem:[#allocation11 + $0x100] sm:$0xff]
          %v1385 = vld [vmem:[#allocation11 + $0x108] sm:$0xff]
          %v1386 = vld [vmem:[#allocation11 + $0x110] sm:$0xff]
          %v1387 = vld [vmem:[#allocation11 + $0x118] sm:$0xff]
          %v1388 = vld [vmem:[#allocation11 + $0x120] sm:$0xff]
          %v1389 = vld [vmem:[#allocation11 + $0x128] sm:$0xff]
          %v1390 = vld [vmem:[#allocation11 + $0x130] sm:$0xff]
          %v1391 = vld [vmem:[#allocation11 + $0x138] sm:$0xff]
          %v1392 = vld [vmem:[#allocation11 + $0x140] sm:$0xff]
          %v1393 = vld [vmem:[#allocation11 + $0x148] sm:$0xff]
          %v1394 = vld [vmem:[#allocation11 + $0x150] sm:$0xff]
          %v1395 = vld [vmem:[#allocation11 + $0x158] sm:$0xff]
          %v1396 = vld [vmem:[#allocation11 + $0x160] sm:$0xff]
          %v1397 = vld [vmem:[#allocation11 + $0x168] sm:$0xff]
          %v1398 = vld [vmem:[#allocation11 + $0x170] sm:$0xff]
          %v1399 = vld [vmem:[#allocation11 + $0x178] sm:$0xff]
          %v1400 = vld [vmem:[#allocation11 + $0x180] sm:$0xff]
          %v1401 = vld [vmem:[#allocation11 + $0x188] sm:$0xff]
          %v1402 = vld [vmem:[#allocation11 + $0x190] sm:$0xff]
          %v1403 = vld [vmem:[#allocation11 + $0x198] sm:$0xff]
          %v1404 = vld [vmem:[#allocation11 + $0x1a0] sm:$0xff]
          %v1405 = vld [vmem:[#allocation11 + $0x1a8] sm:$0xff]
          %v1406 = vld [vmem:[#allocation11 + $0x1b0] sm:$0xff]
          %v1407 = vld [vmem:[#allocation11 + $0x1b8] sm:$0xff]
          %v1408 = vld [vmem:[#allocation11 + $0x1c0] sm:$0xff]
          %v1409 = vld [vmem:[#allocation11 + $0x1c8] sm:$0xff]
          %v1410 = vld [vmem:[#allocation11 + $0x1d0] sm:$0xff]
          %v1411 = vld [vmem:[#allocation11 + $0x1d8] sm:$0xff]
          %v1412 = vld [vmem:[#allocation11 + $0x1e0] sm:$0xff]
          %v1413 = vld [vmem:[#allocation11 + $0x1e8] sm:$0xff]
          %v1414 = vld [vmem:[#allocation11 + $0x1f0] sm:$0xff]
          %v1415 = vld [vmem:[#allocation11 + $0x1f8] sm:$0xff]
          %v1416 = vld [vmem:[#allocation11 + $0x200] sm:$0xff]
          %v1417 = vld [vmem:[#allocation11 + $0x208] sm:$0xff]
          %v1418 = vld [vmem:[#allocation11 + $0x210] sm:$0xff]
          %v1419 = vld [vmem:[#allocation11 + $0x218] sm:$0xff]
          %v1420 = vld [vmem:[#allocation11 + $0x220] sm:$0xff]
          %v1421 = vld [vmem:[#allocation11 + $0x228] sm:$0xff]
          %v1422 = vld [vmem:[#allocation11 + $0x230] sm:$0xff]
          %v1423 = vld [vmem:[#allocation11 + $0x238] sm:$0xff]
          %v1424 = vld [vmem:[#allocation11 + $0x240] sm:$0xff]
          %v1425 = vld [vmem:[#allocation11 + $0x248] sm:$0xff]
          %v1426 = vld [vmem:[#allocation11 + $0x250] sm:$0xff]
          %v1427 = vld [vmem:[#allocation11 + $0x258] sm:$0xff]
          %v1428 = vld [vmem:[#allocation11 + $0x260] sm:$0xff]
          %v1429 = vld [vmem:[#allocation11 + $0x268] sm:$0xff]
          %v1430 = vld [vmem:[#allocation11 + $0x270] sm:$0xff]
          %v1431 = vld [vmem:[#allocation11 + $0x278] sm:$0xff]
          %v1432 = vld [vmem:[#allocation11 + $0x280] sm:$0xff]
          %v1433 = vld [vmem:[#allocation11 + $0x288] sm:$0xff]
          %v1434 = vld [vmem:[#allocation11 + $0x290] sm:$0xff]
          %v1435 = vld [vmem:[#allocation11 + $0x298] sm:$0xff]
          %v1436 = vld [vmem:[#allocation11 + $0x2a0] sm:$0xff]
          %v1437 = vld [vmem:[#allocation11 + $0x2a8] sm:$0xff]
          %v1438 = vld [vmem:[#allocation11 + $0x2b0] sm:$0xff]
          %v1439 = vld [vmem:[#allocation11 + $0x2b8] sm:$0xff]
          %v1440 = vld [vmem:[#allocation11 + $0x2c0] sm:$0xff]
          %v1441 = vld [vmem:[#allocation11 + $0x2c8] sm:$0xff]
          %v1442 = vld [vmem:[#allocation11 + $0x2d0] sm:$0xff]
          %v1443 = vld [vmem:[#allocation11 + $0x2d8] sm:$0xff]
          %v1444 = vld [vmem:[#allocation11 + $0x2e0] sm:$0xff]
          %v1445 = vld [vmem:[#allocation11 + $0x2e8] sm:$0xff]
          %v1446 = vld [vmem:[#allocation11 + $0x2f0] sm:$0xff]
          %v1447 = vld [vmem:[#allocation11 + $0x2f8] sm:$0xff]
          %v1449 = vlaneseq
          %v1450 = vshrl.u32 %v1449, 7
          %v1451 = vsub.s32 0, %v1450
          %v1452 = vrot.slane %v1332, %v1451
          %v1453 = vlaneseq
          %v1454 = vshrl.u32 %v1453, 7
          %v1455 = vsub.s32 1, %v1454
          %v1456 = vrot.slane %v1332, %v1455
          %v1457 = vlaneseq
          %v1458 = vshrl.u32 %v1457, 7
          %v1459 = vsub.s32 2, %v1458
          %v1460 = vrot.slane %v1332, %v1459
          %v1461 = vlaneseq
          %v1462 = vshrl.u32 %v1461, 7
          %v1463 = vsub.s32 3, %v1462
          %v1464 = vrot.slane %v1332, %v1463
          %v1465 = vlaneseq
          %v1466 = vshrl.u32 %v1465, 7
          %v1467 = vsub.s32 4, %v1466
          %v1468 = vrot.slane %v1332, %v1467
          %v1490 = vunpack.c.l.b16 %v1336
          %v1491 = vunpack.c.h.b16 %v1336
          %v1492 = vunpack.c.l.b16 %v1337
          %v1493 = vunpack.c.h.b16 %v1337
          %v1494 = vunpack.c.l.b16 %v1338
          %v1495 = vunpack.c.h.b16 %v1338
          %v1496 = vunpack.c.l.b16 %v1339
          %v1497 = vunpack.c.h.b16 %v1339
          %v1498 = vunpack.c.l.b16 %v1340
          %v1499 = vunpack.c.h.b16 %v1340
          %v1500 = vunpack.c.l.b16 %v1341
          %v1501 = vunpack.c.h.b16 %v1341
          %v1502 = vunpack.c.l.b16 %v1342
          %v1503 = vunpack.c.h.b16 %v1342
          %v1504 = vunpack.c.l.b16 %v1343
          %v1505 = vunpack.c.h.b16 %v1343
          %v1506 = vunpack.c.l.b16 %v1344
          %v1507 = vunpack.c.h.b16 %v1344
          %v1508 = vunpack.c.l.b16 %v1345
          %v1509 = vunpack.c.h.b16 %v1345
          %v1510 = vunpack.c.l.b16 %v1346
          %v1511 = vunpack.c.h.b16 %v1346
          %v1512 = vunpack.c.l.b16 %v1347
          %v1513 = vunpack.c.h.b16 %v1347
          %v1514 = vunpack.c.l.b16 %v1348
          %v1515 = vunpack.c.h.b16 %v1348
          %v1516 = vunpack.c.l.b16 %v1349
          %v1517 = vunpack.c.h.b16 %v1349
          %v1518 = vunpack.c.l.b16 %v1350
          %v1519 = vunpack.c.h.b16 %v1350
          %v1520 = vunpack.c.l.b16 %v1351
          %v1521 = vunpack.c.h.b16 %v1351
          %v1522 = vpack.c.b16 %v1492, %v1490
          %v1523 = vpack.c.b16 %v1493, %v1491
          %v1524 = vpack.c.b16 %v1496, %v1494
          %v1525 = vpack.c.b16 %v1497, %v1495
          %v1526 = vpack.c.b16 %v1500, %v1498
          %v1527 = vpack.c.b16 %v1501, %v1499
          %v1528 = vpack.c.b16 %v1504, %v1502
          %v1529 = vpack.c.b16 %v1505, %v1503
          %v1530 = vpack.c.b16 %v1508, %v1506
          %v1531 = vpack.c.b16 %v1509, %v1507
          %v1532 = vpack.c.b16 %v1512, %v1510
          %v1533 = vpack.c.b16 %v1513, %v1511
          %v1534 = vpack.c.b16 %v1516, %v1514
          %v1535 = vpack.c.b16 %v1517, %v1515
          %v1536 = vpack.c.b16 %v1520, %v1518
          %v1537 = vpack.c.b16 %v1521, %v1519
          %v1650 = vunpack.c.l.b16 %v1352
          %v1651 = vunpack.c.h.b16 %v1352
          %v1652 = vunpack.c.l.b16 %v1353
          %v1653 = vunpack.c.h.b16 %v1353
          %v1654 = vunpack.c.l.b16 %v1354
          %v1655 = vunpack.c.h.b16 %v1354
          %v1656 = vunpack.c.l.b16 %v1355
          %v1657 = vunpack.c.h.b16 %v1355
          %v1658 = vunpack.c.l.b16 %v1356
          %v1659 = vunpack.c.h.b16 %v1356
          %v1660 = vunpack.c.l.b16 %v1357
          %v1661 = vunpack.c.h.b16 %v1357
          %v1662 = vunpack.c.l.b16 %v1358
          %v1663 = vunpack.c.h.b16 %v1358
          %v1664 = vunpack.c.l.b16 %v1359
          %v1665 = vunpack.c.h.b16 %v1359
          %v1666 = vunpack.c.l.b16 %v1360
          %v1667 = vunpack.c.h.b16 %v1360
          %v1668 = vunpack.c.l.b16 %v1361
          %v1669 = vunpack.c.h.b16 %v1361
          %v1670 = vunpack.c.l.b16 %v1362
          %v1671 = vunpack.c.h.b16 %v1362
          %v1672 = vunpack.c.l.b16 %v1363
          %v1673 = vunpack.c.h.b16 %v1363
          %v1674 = vunpack.c.l.b16 %v1364
          %v1675 = vunpack.c.h.b16 %v1364
          %v1676 = vunpack.c.l.b16 %v1365
          %v1677 = vunpack.c.h.b16 %v1365
          %v1678 = vunpack.c.l.b16 %v1366
          %v1679 = vunpack.c.h.b16 %v1366
          %v1680 = vunpack.c.l.b16 %v1367
          %v1681 = vunpack.c.h.b16 %v1367
          %v1682 = vunpack.c.l.b16 %v1368
          %v1683 = vunpack.c.h.b16 %v1368
          %v1684 = vunpack.c.l.b16 %v1369
          %v1685 = vunpack.c.h.b16 %v1369
          %v1686 = vunpack.c.l.b16 %v1370
          %v1687 = vunpack.c.h.b16 %v1370
          %v1688 = vunpack.c.l.b16 %v1371
          %v1689 = vunpack.c.h.b16 %v1371
          %v1690 = vunpack.c.l.b16 %v1372
          %v1691 = vunpack.c.h.b16 %v1372
          %v1692 = vunpack.c.l.b16 %v1373
          %v1693 = vunpack.c.h.b16 %v1373
          %v1694 = vunpack.c.l.b16 %v1374
          %v1695 = vunpack.c.h.b16 %v1374
          %v1696 = vunpack.c.l.b16 %v1375
          %v1697 = vunpack.c.h.b16 %v1375
          %v1698 = vunpack.c.l.b16 %v1376
          %v1699 = vunpack.c.h.b16 %v1376
          %v1700 = vunpack.c.l.b16 %v1377
          %v1701 = vunpack.c.h.b16 %v1377
          %v1702 = vunpack.c.l.b16 %v1378
          %v1703 = vunpack.c.h.b16 %v1378
          %v1704 = vunpack.c.l.b16 %v1379
          %v1705 = vunpack.c.h.b16 %v1379
          %v1706 = vunpack.c.l.b16 %v1380
          %v1707 = vunpack.c.h.b16 %v1380
          %v1708 = vunpack.c.l.b16 %v1381
          %v1709 = vunpack.c.h.b16 %v1381
          %v1710 = vunpack.c.l.b16 %v1382
          %v1711 = vunpack.c.h.b16 %v1382
          %v1712 = vunpack.c.l.b16 %v1383
          %v1713 = vunpack.c.h.b16 %v1383
          %v1714 = vunpack.c.l.b16 %v1384
          %v1715 = vunpack.c.h.b16 %v1384
          %v1716 = vunpack.c.l.b16 %v1385
          %v1717 = vunpack.c.h.b16 %v1385
          %v1718 = vunpack.c.l.b16 %v1386
          %v1719 = vunpack.c.h.b16 %v1386
          %v1720 = vunpack.c.l.b16 %v1387
          %v1721 = vunpack.c.h.b16 %v1387
          %v1722 = vunpack.c.l.b16 %v1388
          %v1723 = vunpack.c.h.b16 %v1388
          %v1724 = vunpack.c.l.b16 %v1389
          %v1725 = vunpack.c.h.b16 %v1389
          %v1726 = vunpack.c.l.b16 %v1390
          %v1727 = vunpack.c.h.b16 %v1390
          %v1728 = vunpack.c.l.b16 %v1391
          %v1729 = vunpack.c.h.b16 %v1391
          %v1730 = vunpack.c.l.b16 %v1392
          %v1731 = vunpack.c.h.b16 %v1392
          %v1732 = vunpack.c.l.b16 %v1393
          %v1733 = vunpack.c.h.b16 %v1393
          %v1734 = vunpack.c.l.b16 %v1394
          %v1735 = vunpack.c.h.b16 %v1394
          %v1736 = vunpack.c.l.b16 %v1395
          %v1737 = vunpack.c.h.b16 %v1395
          %v1738 = vunpack.c.l.b16 %v1396
          %v1739 = vunpack.c.h.b16 %v1396
          %v1740 = vunpack.c.l.b16 %v1397
          %v1741 = vunpack.c.h.b16 %v1397
          %v1742 = vunpack.c.l.b16 %v1398
          %v1743 = vunpack.c.h.b16 %v1398
          %v1744 = vunpack.c.l.b16 %v1399
          %v1745 = vunpack.c.h.b16 %v1399
          %v1746 = vunpack.c.l.b16 %v1400
          %v1747 = vunpack.c.h.b16 %v1400
          %v1748 = vunpack.c.l.b16 %v1401
          %v1749 = vunpack.c.h.b16 %v1401
          %v1750 = vunpack.c.l.b16 %v1402
          %v1751 = vunpack.c.h.b16 %v1402
          %v1752 = vunpack.c.l.b16 %v1403
          %v1753 = vunpack.c.h.b16 %v1403
          %v1754 = vunpack.c.l.b16 %v1404
          %v1755 = vunpack.c.h.b16 %v1404
          %v1756 = vunpack.c.l.b16 %v1405
          %v1757 = vunpack.c.h.b16 %v1405
          %v1758 = vunpack.c.l.b16 %v1406
          %v1759 = vunpack.c.h.b16 %v1406
          %v1760 = vunpack.c.l.b16 %v1407
          %v1761 = vunpack.c.h.b16 %v1407
          %v1762 = vunpack.c.l.b16 %v1408
          %v1763 = vunpack.c.h.b16 %v1408
          %v1764 = vunpack.c.l.b16 %v1409
          %v1765 = vunpack.c.h.b16 %v1409
          %v1766 = vunpack.c.l.b16 %v1410
          %v1767 = vunpack.c.h.b16 %v1410
          %v1768 = vunpack.c.l.b16 %v1411
          %v1769 = vunpack.c.h.b16 %v1411
          %v1770 = vunpack.c.l.b16 %v1412
          %v1771 = vunpack.c.h.b16 %v1412
          %v1772 = vunpack.c.l.b16 %v1413
          %v1773 = vunpack.c.h.b16 %v1413
          %v1774 = vunpack.c.l.b16 %v1414
          %v1775 = vunpack.c.h.b16 %v1414
          %v1776 = vunpack.c.l.b16 %v1415
          %v1777 = vunpack.c.h.b16 %v1415
          %v1778 = vunpack.c.l.b16 %v1416
          %v1779 = vunpack.c.h.b16 %v1416
          %v1780 = vunpack.c.l.b16 %v1417
          %v1781 = vunpack.c.h.b16 %v1417
          %v1782 = vunpack.c.l.b16 %v1418
          %v1783 = vunpack.c.h.b16 %v1418
          %v1784 = vunpack.c.l.b16 %v1419
          %v1785 = vunpack.c.h.b16 %v1419
          %v1786 = vunpack.c.l.b16 %v1420
          %v1787 = vunpack.c.h.b16 %v1420
          %v1788 = vunpack.c.l.b16 %v1421
          %v1789 = vunpack.c.h.b16 %v1421
          %v1790 = vunpack.c.l.b16 %v1422
          %v1791 = vunpack.c.h.b16 %v1422
          %v1792 = vunpack.c.l.b16 %v1423
          %v1793 = vunpack.c.h.b16 %v1423
          %v1794 = vunpack.c.l.b16 %v1424
          %v1795 = vunpack.c.h.b16 %v1424
          %v1796 = vunpack.c.l.b16 %v1425
          %v1797 = vunpack.c.h.b16 %v1425
          %v1798 = vunpack.c.l.b16 %v1426
          %v1799 = vunpack.c.h.b16 %v1426
          %v1800 = vunpack.c.l.b16 %v1427
          %v1801 = vunpack.c.h.b16 %v1427
          %v1802 = vunpack.c.l.b16 %v1428
          %v1803 = vunpack.c.h.b16 %v1428
          %v1804 = vunpack.c.l.b16 %v1429
          %v1805 = vunpack.c.h.b16 %v1429
          %v1806 = vunpack.c.l.b16 %v1430
          %v1807 = vunpack.c.h.b16 %v1430
          %v1808 = vunpack.c.l.b16 %v1431
          %v1809 = vunpack.c.h.b16 %v1431
          %v1810 = vunpack.c.l.b16 %v1432
          %v1811 = vunpack.c.h.b16 %v1432
          %v1812 = vunpack.c.l.b16 %v1433
          %v1813 = vunpack.c.h.b16 %v1433
          %v1814 = vunpack.c.l.b16 %v1434
          %v1815 = vunpack.c.h.b16 %v1434
          %v1816 = vunpack.c.l.b16 %v1435
          %v1817 = vunpack.c.h.b16 %v1435
          %v1818 = vunpack.c.l.b16 %v1436
          %v1819 = vunpack.c.h.b16 %v1436
          %v1820 = vunpack.c.l.b16 %v1437
          %v1821 = vunpack.c.h.b16 %v1437
          %v1822 = vunpack.c.l.b16 %v1438
          %v1823 = vunpack.c.h.b16 %v1438
          %v1824 = vunpack.c.l.b16 %v1439
          %v1825 = vunpack.c.h.b16 %v1439
          %v1826 = vunpack.c.l.b16 %v1440
          %v1827 = vunpack.c.h.b16 %v1440
          %v1828 = vunpack.c.l.b16 %v1441
          %v1829 = vunpack.c.h.b16 %v1441
          %v1830 = vunpack.c.l.b16 %v1442
          %v1831 = vunpack.c.h.b16 %v1442
          %v1832 = vunpack.c.l.b16 %v1443
          %v1833 = vunpack.c.h.b16 %v1443
          %v1834 = vunpack.c.l.b16 %v1444
          %v1835 = vunpack.c.h.b16 %v1444
          %v1836 = vunpack.c.l.b16 %v1445
          %v1837 = vunpack.c.h.b16 %v1445
          %v1838 = vunpack.c.l.b16 %v1446
          %v1839 = vunpack.c.h.b16 %v1446
          %v1840 = vunpack.c.l.b16 %v1447
          %v1841 = vunpack.c.h.b16 %v1447
          %v1842 = vpack.c.b16 %v1656, %v1650
          %v1843 = vpack.c.b16 %v1657, %v1651
          %v1844 = vpack.c.b16 %v1658, %v1652
          %v1845 = vpack.c.b16 %v1659, %v1653
          %v1846 = vpack.c.b16 %v1660, %v1654
          %v1847 = vpack.c.b16 %v1661, %v1655
          %v1848 = vpack.c.b16 %v1668, %v1662
          %v1849 = vpack.c.b16 %v1669, %v1663
          %v1850 = vpack.c.b16 %v1670, %v1664
          %v1851 = vpack.c.b16 %v1671, %v1665
          %v1852 = vpack.c.b16 %v1672, %v1666
          %v1853 = vpack.c.b16 %v1673, %v1667
          %v1854 = vpack.c.b16 %v1680, %v1674
          %v1855 = vpack.c.b16 %v1681, %v1675
          %v1856 = vpack.c.b16 %v1682, %v1676
          %v1857 = vpack.c.b16 %v1683, %v1677
          %v1858 = vpack.c.b16 %v1684, %v1678
          %v1859 = vpack.c.b16 %v1685, %v1679
          %v1860 = vpack.c.b16 %v1692, %v1686
          %v1861 = vpack.c.b16 %v1693, %v1687
          %v1862 = vpack.c.b16 %v1694, %v1688
          %v1863 = vpack.c.b16 %v1695, %v1689
          %v1864 = vpack.c.b16 %v1696, %v1690
          %v1865 = vpack.c.b16 %v1697, %v1691
          %v1866 = vpack.c.b16 %v1704, %v1698
          %v1867 = vpack.c.b16 %v1705, %v1699
          %v1868 = vpack.c.b16 %v1706, %v1700
          %v1869 = vpack.c.b16 %v1707, %v1701
          %v1870 = vpack.c.b16 %v1708, %v1702
          %v1871 = vpack.c.b16 %v1709, %v1703
          %v1872 = vpack.c.b16 %v1716, %v1710
          %v1873 = vpack.c.b16 %v1717, %v1711
          %v1874 = vpack.c.b16 %v1718, %v1712
          %v1875 = vpack.c.b16 %v1719, %v1713
          %v1876 = vpack.c.b16 %v1720, %v1714
          %v1877 = vpack.c.b16 %v1721, %v1715
          %v1878 = vpack.c.b16 %v1728, %v1722
          %v1879 = vpack.c.b16 %v1729, %v1723
          %v1880 = vpack.c.b16 %v1730, %v1724
          %v1881 = vpack.c.b16 %v1731, %v1725
          %v1882 = vpack.c.b16 %v1732, %v1726
          %v1883 = vpack.c.b16 %v1733, %v1727
          %v1884 = vpack.c.b16 %v1740, %v1734
          %v1885 = vpack.c.b16 %v1741, %v1735
          %v1886 = vpack.c.b16 %v1742, %v1736
          %v1887 = vpack.c.b16 %v1743, %v1737
          %v1888 = vpack.c.b16 %v1744, %v1738
          %v1889 = vpack.c.b16 %v1745, %v1739
          %v1890 = vpack.c.b16 %v1752, %v1746
          %v1891 = vpack.c.b16 %v1753, %v1747
          %v1892 = vpack.c.b16 %v1754, %v1748
          %v1893 = vpack.c.b16 %v1755, %v1749
          %v1894 = vpack.c.b16 %v1756, %v1750
          %v1895 = vpack.c.b16 %v1757, %v1751
          %v1896 = vpack.c.b16 %v1764, %v1758
          %v1897 = vpack.c.b16 %v1765, %v1759
          %v1898 = vpack.c.b16 %v1766, %v1760
          %v1899 = vpack.c.b16 %v1767, %v1761
          %v1900 = vpack.c.b16 %v1768, %v1762
          %v1901 = vpack.c.b16 %v1769, %v1763
          %v1902 = vpack.c.b16 %v1776, %v1770
          %v1903 = vpack.c.b16 %v1777, %v1771
          %v1904 = vpack.c.b16 %v1778, %v1772
          %v1905 = vpack.c.b16 %v1779, %v1773
          %v1906 = vpack.c.b16 %v1780, %v1774
          %v1907 = vpack.c.b16 %v1781, %v1775
          %v1908 = vpack.c.b16 %v1788, %v1782
          %v1909 = vpack.c.b16 %v1789, %v1783
          %v1910 = vpack.c.b16 %v1790, %v1784
          %v1911 = vpack.c.b16 %v1791, %v1785
          %v1912 = vpack.c.b16 %v1792, %v1786
          %v1913 = vpack.c.b16 %v1793, %v1787
          %v1914 = vpack.c.b16 %v1800, %v1794
          %v1915 = vpack.c.b16 %v1801, %v1795
          %v1916 = vpack.c.b16 %v1802, %v1796
          %v1917 = vpack.c.b16 %v1803, %v1797
          %v1918 = vpack.c.b16 %v1804, %v1798
          %v1919 = vpack.c.b16 %v1805, %v1799
          %v1920 = vpack.c.b16 %v1812, %v1806
          %v1921 = vpack.c.b16 %v1813, %v1807
          %v1922 = vpack.c.b16 %v1814, %v1808
          %v1923 = vpack.c.b16 %v1815, %v1809
          %v1924 = vpack.c.b16 %v1816, %v1810
          %v1925 = vpack.c.b16 %v1817, %v1811
          %v1926 = vpack.c.b16 %v1824, %v1818
          %v1927 = vpack.c.b16 %v1825, %v1819
          %v1928 = vpack.c.b16 %v1826, %v1820
          %v1929 = vpack.c.b16 %v1827, %v1821
          %v1930 = vpack.c.b16 %v1828, %v1822
          %v1931 = vpack.c.b16 %v1829, %v1823
          %v1932 = vpack.c.b16 %v1836, %v1830
          %v1933 = vpack.c.b16 %v1837, %v1831
          %v1934 = vpack.c.b16 %v1838, %v1832
          %v1935 = vpack.c.b16 %v1839, %v1833
          %v1936 = vpack.c.b16 %v1840, %v1834
          %v1937 = vpack.c.b16 %v1841, %v1835
          %2034 = vmatprep.subr.bf16.mxu0 %v1843
          %2035 = vmatpush1.bf16.msra.mxu0 %v1842
          %2036 = vmatprep.subr.bf16.mxu0 %v1849
          %2037 = vmatpush1.bf16.msra.mxu0 %v1848
          %2038 = vmatprep.subr.bf16.mxu0 %v1855
          %2039 = vmatpush1.bf16.msra.mxu0 %v1854
          %2040 = vmatprep.subr.bf16.mxu0 %v1861
          %2041 = vmatpush1.bf16.msra.mxu0 %v1860
          %2042 = vmatprep.subr.bf16.mxu0 %v1867
          %2043 = vmatpush1.bf16.msra.mxu0 %v1866
          %2044 = vmatprep.subr.bf16.mxu0 %v1873
          %2045 = vmatpush1.bf16.msra.mxu0 %v1872
          %2046 = vmatprep.subr.bf16.mxu0 %v1879
          %2047 = vmatpush1.bf16.msra.mxu0 %v1878
          %2048 = vmatprep.subr.bf16.mxu0 %v1885
          %2049 = vmatpush1.bf16.msra.mxu0 %v1884
          %2050 = vmatprep.subr.bf16.mxu0 %v1891
          %2051 = vmatpush1.bf16.msra.mxu0 %v1890
          %2052 = vmatprep.subr.bf16.mxu0 %v1897
          %2053 = vmatpush1.bf16.msra.mxu0 %v1896
          %2054 = vmatprep.subr.bf16.mxu0 %v1903
          %2055 = vmatpush1.bf16.msra.mxu0 %v1902
          %2056 = vmatprep.subr.bf16.mxu0 %v1909
          %2057 = vmatpush1.bf16.msra.mxu0 %v1908
          %2058 = vmatprep.subr.bf16.mxu0 %v1915
          %2059 = vmatpush1.bf16.msra.mxu0 %v1914
          %2060 = vmatprep.subr.bf16.mxu0 %v1921
          %2061 = vmatpush1.bf16.msra.mxu0 %v1920
          %2062 = vmatprep.subr.bf16.mxu0 %v1927
          %2063 = vmatpush1.bf16.msra.mxu0 %v1926
          %2064 = vmatprep.subr.bf16.mxu0 %v1933
          %2065 = vmatpush1.bf16.msra.mxu0 %v1932
          %2066 = vmatprep.mubr.bf16.mxu0 %v1523
          %2067 = vmatmul.mubr.bf16.gmra.mrb[0].mxu0 %v1522
          %v2068 = vpop.f32.mrb[0].mxu0
          %v2069 = vadd.f32 %v1452, %v2068
          %v2070 = vpop.f32.mrb[0].mxu0
          %v2071 = vadd.f32 %v1456, %v2070
          %v2072 = vpop.f32.mrb[0].mxu0
          %v2073 = vadd.f32 %v1452, %v2072
          %v2074 = vpop.f32.mrb[0].mxu0
          %v2075 = vadd.f32 %v1456, %v2074
          %2076 = vmatprep.mubr.bf16.mxu0 %v1525
          %2077 = vmatmul.mubr.bf16.gmra.mrb[0].mxu0 %v1524
          %v2078 = vpop.f32.mrb[0].mxu0
          %v2079 = vadd.f32 %v1452, %v2078
          %v2080 = vpop.f32.mrb[0].mxu0
          %v2081 = vadd.f32 %v1456, %v2080
          %v2082 = vpop.f32.mrb[0].mxu0
          %v2083 = vadd.f32 %v1452, %v2082
          %v2084 = vpop.f32.mrb[0].mxu0
          %v2085 = vadd.f32 %v1456, %v2084
          %2086 = vmatprep.mubr.bf16.mxu0 %v1527
          %2087 = vmatmul.mubr.bf16.gmra.mrb[0].mxu0 %v1526
          %v2088 = vpop.f32.mrb[0].mxu0
          %v2089 = vadd.f32 %v1452, %v2088
          %v2090 = vpop.f32.mrb[0].mxu0
          %v2091 = vadd.f32 %v1456, %v2090
          %v2092 = vpop.f32.mrb[0].mxu0
          %v2093 = vadd.f32 %v1452, %v2092
          %v2094 = vpop.f32.mrb[0].mxu0
          %v2095 = vadd.f32 %v1456, %v2094
          %2096 = vmatprep.mubr.bf16.mxu0 %v1529
          %2097 = vmatmul.mubr.bf16.gmra.mrb[0].mxu0 %v1528
          %v2098 = vpop.f32.mrb[0].mxu0
          %v2099 = vadd.f32 %v1452, %v2098
          %v2100 = vpop.f32.mrb[0].mxu0
          %v2101 = vadd.f32 %v1456, %v2100
          %v2102 = vpop.f32.mrb[0].mxu0
          %v2103 = vadd.f32 %v1452, %v2102
          %v2104 = vpop.f32.mrb[0].mxu0
          %v2105 = vadd.f32 %v1456, %v2104
          %2106 = vmatprep.mubr.bf16.mxu0 %v1531
          %2107 = vmatmul.mubr.bf16.gmra.mrb[0].mxu0 %v1530
          %v2108 = vpop.f32.mrb[0].mxu0
          %v2109 = vadd.f32 %v1452, %v2108
          %v2110 = vpop.f32.mrb[0].mxu0
          %v2111 = vadd.f32 %v1456, %v2110
          %v2112 = vpop.f32.mrb[0].mxu0
          %v2113 = vadd.f32 %v1452, %v2112
          %v2114 = vpop.f32.mrb[0].mxu0
          %v2115 = vadd.f32 %v1456, %v2114
          %2116 = vmatprep.mubr.bf16.mxu0 %v1533
          %2117 = vmatmul.mubr.bf16.gmra.mrb[0].mxu0 %v1532
          %v2118 = vpop.f32.mrb[0].mxu0
          %v2119 = vadd.f32 %v1452, %v2118
          %v2120 = vpop.f32.mrb[0].mxu0
          %v2121 = vadd.f32 %v1456, %v2120
          %v2122 = vpop.f32.mrb[0].mxu0
          %v2123 = vadd.f32 %v1452, %v2122
          %v2124 = vpop.f32.mrb[0].mxu0
          %v2125 = vadd.f32 %v1456, %v2124
          %2126 = vmatprep.mubr.bf16.mxu0 %v1535
          %2127 = vmatmul.mubr.bf16.gmra.mrb[0].mxu0 %v1534
          %v2128 = vpop.f32.mrb[0].mxu0
          %v2129 = vadd.f32 %v1452, %v2128
          %v2130 = vpop.f32.mrb[0].mxu0
          %v2131 = vadd.f32 %v1456, %v2130
          %v2132 = vpop.f32.mrb[0].mxu0
          %v2133 = vadd.f32 %v1452, %v2132
          %v2134 = vpop.f32.mrb[0].mxu0
          %v2135 = vadd.f32 %v1456, %v2134
          %2136 = vmatprep.mubr.bf16.mxu0 %v1537
          %2137 = vmatmul.mubr.bf16.gmra.mrb[0].mxu0 %v1536
          %v2138 = vpop.f32.mrb[0].mxu0
          %v2139 = vadd.f32 %v1452, %v2138
          %v2140 = vpop.f32.mrb[0].mxu0
          %v2141 = vadd.f32 %v1456, %v2140
          %v2142 = vpop.f32.mrb[0].mxu0
          %v2143 = vadd.f32 %v1452, %v2142
          %v2144 = vpop.f32.mrb[0].mxu0
          %v2145 = vadd.f32 %v1456, %v2144
          %2146 = vdwg.mxu0
          %2147 = vmatprep.subr.bf16.mxu0 %v1845
          %2148 = vmatpush1.bf16.msra.mxu0 %v1844
          %2149 = vmatprep.subr.bf16.mxu0 %v1851
          %2150 = vmatpush1.bf16.msra.mxu0 %v1850
          %2151 = vmatprep.subr.bf16.mxu0 %v1857
          %2152 = vmatpush1.bf16.msra.mxu0 %v1856
          %2153 = vmatprep.subr.bf16.mxu0 %v1863
          %2154 = vmatpush1.bf16.msra.mxu0 %v1862
          %2155 = vmatprep.subr.bf16.mxu0 %v1869
          %2156 = vmatpush1.bf16.msra.mxu0 %v1868
          %2157 = vmatprep.subr.bf16.mxu0 %v1875
          %2158 = vmatpush1.bf16.msra.mxu0 %v1874
          %2159 = vmatprep.subr.bf16.mxu0 %v1881
          %2160 = vmatpush1.bf16.msra.mxu0 %v1880
          %2161 = vmatprep.subr.bf16.mxu0 %v1887
          %2162 = vmatpush1.bf16.msra.mxu0 %v1886
          %2163 = vmatprep.subr.bf16.mxu0 %v1893
          %2164 = vmatpush1.bf16.msra.mxu0 %v1892
          %2165 = vmatprep.subr.bf16.mxu0 %v1899
          %2166 = vmatpush1.bf16.msra.mxu0 %v1898
          %2167 = vmatprep.subr.bf16.mxu0 %v1905
          %2168 = vmatpush1.bf16.msra.mxu0 %v1904
          %2169 = vmatprep.subr.bf16.mxu0 %v1911
          %2170 = vmatpush1.bf16.msra.mxu0 %v1910
          %2171 = vmatprep.subr.bf16.mxu0 %v1917
          %2172 = vmatpush1.bf16.msra.mxu0 %v1916
          %2173 = vmatprep.subr.bf16.mxu0 %v1923
          %2174 = vmatpush1.bf16.msra.mxu0 %v1922
          %2175 = vmatprep.subr.bf16.mxu0 %v1929
          %2176 = vmatpush1.bf16.msra.mxu0 %v1928
          %2177 = vmatprep.subr.bf16.mxu0 %v1935
          %2178 = vmatpush1.bf16.msra.mxu0 %v1934
          %2179 = vmatprep.mubr.bf16.mxu0 %v1523
          %2180 = vmatmul.mubr.bf16.gmra.mrb[0].mxu0 %v1522
          %v2181 = vpop.f32.mrb[0].mxu0
          %v2182 = vadd.f32 %v1460, %v2181
          %v2183 = vpop.f32.mrb[0].mxu0
          %v2184 = vadd.f32 %v1464, %v2183
          %v2185 = vpop.f32.mrb[0].mxu0
          %v2186 = vadd.f32 %v1460, %v2185
          %v2187 = vpop.f32.mrb[0].mxu0
          %v2188 = vadd.f32 %v1464, %v2187
          %2189 = vmatprep.mubr.bf16.mxu0 %v1525
          %2190 = vmatmul.mubr.bf16.gmra.mrb[0].mxu0 %v1524
          %v2191 = vpop.f32.mrb[0].mxu0
          %v2192 = vadd.f32 %v1460, %v2191
          %v2193 = vpop.f32.mrb[0].mxu0
          %v2194 = vadd.f32 %v1464, %v2193
          %v2195 = vpop.f32.mrb[0].mxu0
          %v2196 = vadd.f32 %v1460, %v2195
          %v2197 = vpop.f32.mrb[0].mxu0
          %v2198 = vadd.f32 %v1464, %v2197
          %2199 = vmatprep.mubr.bf16.mxu0 %v1527
          %2200 = vmatmul.mubr.bf16.gmra.mrb[0].mxu0 %v1526
          %v2201 = vpop.f32.mrb[0].mxu0
          %v2202 = vadd.f32 %v1460, %v2201
          %v2203 = vpop.f32.mrb[0].mxu0
          %v2204 = vadd.f32 %v1464, %v2203
          %v2205 = vpop.f32.mrb[0].mxu0
          %v2206 = vadd.f32 %v1460, %v2205
          %v2207 = vpop.f32.mrb[0].mxu0
          %v2208 = vadd.f32 %v1464, %v2207
          %2209 = vmatprep.mubr.bf16.mxu0 %v1529
          %2210 = vmatmul.mubr.bf16.gmra.mrb[0].mxu0 %v1528
          %v2211 = vpop.f32.mrb[0].mxu0
          %v2212 = vadd.f32 %v1460, %v2211
          %v2213 = vpop.f32.mrb[0].mxu0
          %v2214 = vadd.f32 %v1464, %v2213
          %v2215 = vpop.f32.mrb[0].mxu0
          %v2216 = vadd.f32 %v1460, %v2215
          %v2217 = vpop.f32.mrb[0].mxu0
          %v2218 = vadd.f32 %v1464, %v2217
          %2219 = vmatprep.mubr.bf16.mxu0 %v1531
          %2220 = vmatmul.mubr.bf16.gmra.mrb[0].mxu0 %v1530
          %v2221 = vpop.f32.mrb[0].mxu0
          %v2222 = vadd.f32 %v1460, %v2221
          %v2223 = vpop.f32.mrb[0].mxu0
          %v2224 = vadd.f32 %v1464, %v2223
          %v2225 = vpop.f32.mrb[0].mxu0
          %v2226 = vadd.f32 %v1460, %v2225
          %v2227 = vpop.f32.mrb[0].mxu0
          %v2228 = vadd.f32 %v1464, %v2227
          %2229 = vmatprep.mubr.bf16.mxu0 %v1533
          %2230 = vmatmul.mubr.bf16.gmra.mrb[0].mxu0 %v1532
          %v2231 = vpop.f32.mrb[0].mxu0
          %v2232 = vadd.f32 %v1460, %v2231
          %v2233 = vpop.f32.mrb[0].mxu0
          %v2234 = vadd.f32 %v1464, %v2233
          %v2235 = vpop.f32.mrb[0].mxu0
          %v2236 = vadd.f32 %v1460, %v2235
          %v2237 = vpop.f32.mrb[0].mxu0
          %v2238 = vadd.f32 %v1464, %v2237
          %2239 = vmatprep.mubr.bf16.mxu0 %v1535
          %2240 = vmatmul.mubr.bf16.gmra.mrb[0].mxu0 %v1534
          %v2241 = vpop.f32.mrb[0].mxu0
          %v2242 = vadd.f32 %v1460, %v2241
          %v2243 = vpop.f32.mrb[0].mxu0
          %v2244 = vadd.f32 %v1464, %v2243
          %v2245 = vpop.f32.mrb[0].mxu0
          %v2246 = vadd.f32 %v1460, %v2245
          %v2247 = vpop.f32.mrb[0].mxu0
          %v2248 = vadd.f32 %v1464, %v2247
          %2249 = vmatprep.mubr.bf16.mxu0 %v1537
          %2250 = vmatmul.mubr.bf16.gmra.mrb[0].mxu0 %v1536
          %v2251 = vpop.f32.mrb[0].mxu0
          %v2252 = vadd.f32 %v1460, %v2251
          %v2253 = vpop.f32.mrb[0].mxu0
          %v2254 = vadd.f32 %v1464, %v2253
          %v2255 = vpop.f32.mrb[0].mxu0
          %v2256 = vadd.f32 %v1460, %v2255
          %v2257 = vpop.f32.mrb[0].mxu0
          %v2258 = vadd.f32 %v1464, %v2257
          %2259 = vdwg.mxu0
          %2260 = vmatprep.subr.bf16.mxu0 %v1847
          %2261 = vmatpush1.bf16.msra.mxu0 %v1846
          %2262 = vmatprep.subr.bf16.mxu0 %v1853
          %2263 = vmatpush1.bf16.msra.mxu0 %v1852
          %2264 = vmatprep.subr.bf16.mxu0 %v1859
          %2265 = vmatpush1.bf16.msra.mxu0 %v1858
          %2266 = vmatprep.subr.bf16.mxu0 %v1865
          %2267 = vmatpush1.bf16.msra.mxu0 %v1864
          %2268 = vmatprep.subr.bf16.mxu0 %v1871
          %2269 = vmatpush1.bf16.msra.mxu0 %v1870
          %2270 = vmatprep.subr.bf16.mxu0 %v1877
          %2271 = vmatpush1.bf16.msra.mxu0 %v1876
          %2272 = vmatprep.subr.bf16.mxu0 %v1883
          %2273 = vmatpush1.bf16.msra.mxu0 %v1882
          %2274 = vmatprep.subr.bf16.mxu0 %v1889
          %2275 = vmatpush1.bf16.msra.mxu0 %v1888
          %2276 = vmatprep.subr.bf16.mxu0 %v1895
          %2277 = vmatpush1.bf16.msra.mxu0 %v1894
          %2278 = vmatprep.subr.bf16.mxu0 %v1901
          %2279 = vmatpush1.bf16.msra.mxu0 %v1900
          %2280 = vmatprep.subr.bf16.mxu0 %v1907
          %2281 = vmatpush1.bf16.msra.mxu0 %v1906
          %2282 = vmatprep.subr.bf16.mxu0 %v1913
          %2283 = vmatpush1.bf16.msra.mxu0 %v1912
          %2284 = vmatprep.subr.bf16.mxu0 %v1919
          %2285 = vmatpush1.bf16.msra.mxu0 %v1918
          %2286 = vmatprep.subr.bf16.mxu0 %v1925
          %2287 = vmatpush1.bf16.msra.mxu0 %v1924
          %2288 = vmatprep.subr.bf16.mxu0 %v1931
          %2289 = vmatpush1.bf16.msra.mxu0 %v1930
          %2290 = vmatprep.subr.bf16.mxu0 %v1937
          %2291 = vmatpush1.bf16.msra.mxu0 %v1936
          %2292 = vmatprep.mubr.bf16.mxu0 %v1523
          %2293 = vmatmul.mubr.bf16.gmra.mrb[0].mxu0 %v1522
          %v2294 = vpop.f32.mrb[0].mxu0
          %v2295 = vadd.f32 %v1468, %v2294
          %v2296 = vpop.f32.mrb[0].mxu0
          %v2297 = vpop.f32.mrb[0].mxu0
          %v2298 = vadd.f32 %v1468, %v2297
          %v2299 = vpop.f32.mrb[0].mxu0
          %2300 = vmatprep.mubr.bf16.mxu0 %v1525
          %2301 = vmatmul.mubr.bf16.gmra.mrb[0].mxu0 %v1524
          %v2302 = vpop.f32.mrb[0].mxu0
          %v2303 = vadd.f32 %v1468, %v2302
          %v2304 = vpop.f32.mrb[0].mxu0
          %v2305 = vpop.f32.mrb[0].mxu0
          %v2306 = vadd.f32 %v1468, %v2305
          %v2307 = vpop.f32.mrb[0].mxu0
          %2308 = vmatprep.mubr.bf16.mxu0 %v1527
          %2309 = vmatmul.mubr.bf16.gmra.mrb[0].mxu0 %v1526
          %v2310 = vpop.f32.mrb[0].mxu0
          %v2311 = vadd.f32 %v1468, %v2310
          %v2312 = vpop.f32.mrb[0].mxu0
          %v2313 = vpop.f32.mrb[0].mxu0
          %v2314 = vadd.f32 %v1468, %v2313
          %v2315 = vpop.f32.mrb[0].mxu0
          %2316 = vmatprep.mubr.bf16.mxu0 %v1529
          %2317 = vmatmul.mubr.bf16.gmra.mrb[0].mxu0 %v1528
          %v2318 = vpop.f32.mrb[0].mxu0
          %v2319 = vadd.f32 %v1468, %v2318
          %v2320 = vpop.f32.mrb[0].mxu0
          %v2321 = vpop.f32.mrb[0].mxu0
          %v2322 = vadd.f32 %v1468, %v2321
          %v2323 = vpop.f32.mrb[0].mxu0
          %2324 = vmatprep.mubr.bf16.mxu0 %v1531
          %2325 = vmatmul.mubr.bf16.gmra.mrb[0].mxu0 %v1530
          %v2326 = vpop.f32.mrb[0].mxu0
          %v2327 = vadd.f32 %v1468, %v2326
          %v2328 = vpop.f32.mrb[0].mxu0
          %v2329 = vpop.f32.mrb[0].mxu0
          %v2330 = vadd.f32 %v1468, %v2329
          %v2331 = vpop.f32.mrb[0].mxu0
          %2332 = vmatprep.mubr.bf16.mxu0 %v1533
          %2333 = vmatmul.mubr.bf16.gmra.mrb[0].mxu0 %v1532
          %v2334 = vpop.f32.mrb[0].mxu0
          %v2335 = vadd.f32 %v1468, %v2334
          %v2336 = vpop.f32.mrb[0].mxu0
          %v2337 = vpop.f32.mrb[0].mxu0
          %v2338 = vadd.f32 %v1468, %v2337
          %v2339 = vpop.f32.mrb[0].mxu0
          %2340 = vmatprep.mubr.bf16.mxu0 %v1535
          %2341 = vmatmul.mubr.bf16.gmra.mrb[0].mxu0 %v1534
          %v2342 = vpop.f32.mrb[0].mxu0
          %v2343 = vadd.f32 %v1468, %v2342
          %v2344 = vpop.f32.mrb[0].mxu0
          %v2345 = vpop.f32.mrb[0].mxu0
          %v2346 = vadd.f32 %v1468, %v2345
          %v2347 = vpop.f32.mrb[0].mxu0
          %2348 = vmatprep.mubr.bf16.mxu0 %v1537
          %2349 = vmatmul.mubr.bf16.gmra.mrb[0].mxu0 %v1536
          %v2350 = vpop.f32.mrb[0].mxu0
          %v2351 = vadd.f32 %v1468, %v2350
          %v2352 = vpop.f32.mrb[0].mxu0
          %v2353 = vpop.f32.mrb[0].mxu0
          %v2354 = vadd.f32 %v1468, %v2353
          %v2355 = vpop.f32.mrb[0].mxu0
          %2356 = vdwg.mxu0
          %v2357 = vlaneseq
          %v2358 = vshrl.u32 %v2357, 7
          %v2359 = vsub.s32 0, %v2358
          %v2360 = vrot.slane %v1274, %v2359
          %2362 = vrot.lane.b32.xlu0 %v2360, 127
          %v2363 = vpop.permute.xlu0 %2362
          %v2365 = vadd.f32 %v2295, %v2363
          %v2366 = vadd.f32 %v2298, %v2363
          %v2367 = vadd.f32 %v2303, %v2363
          %v2368 = vadd.f32 %v2306, %v2363
          %v2369 = vadd.f32 %v2311, %v2363
          %v2370 = vadd.f32 %v2314, %v2363
          %v2371 = vadd.f32 %v2319, %v2363
          %v2372 = vadd.f32 %v2322, %v2363
          %v2373 = vadd.f32 %v2327, %v2363
          %v2374 = vadd.f32 %v2330, %v2363
          %v2375 = vadd.f32 %v2335, %v2363
          %v2376 = vadd.f32 %v2338, %v2363
          %v2377 = vadd.f32 %v2343, %v2363
          %v2378 = vadd.f32 %v2346, %v2363
          %v2379 = vadd.f32 %v2351, %v2363
          %v2380 = vadd.f32 %v2354, %v2363
          %v2381 = vxor.u32 %v2365, 2147483648
          %v2382 = vxor.u32 %v2366, 2147483648
          %v2383 = vxor.u32 %v2367, 2147483648
          %v2384 = vxor.u32 %v2368, 2147483648
          %v2385 = vxor.u32 %v2369, 2147483648
          %v2386 = vxor.u32 %v2370, 2147483648
          %v2387 = vxor.u32 %v2371, 2147483648
          %v2388 = vxor.u32 %v2372, 2147483648
          %v2389 = vxor.u32 %v2373, 2147483648
          %v2390 = vxor.u32 %v2374, 2147483648
          %v2391 = vxor.u32 %v2375, 2147483648
          %v2392 = vxor.u32 %v2376, 2147483648
          %v2393 = vxor.u32 %v2377, 2147483648
          %v2394 = vxor.u32 %v2378, 2147483648
          %v2395 = vxor.u32 %v2379, 2147483648
          %v2396 = vxor.u32 %v2380, 2147483648
          %v2397 = vmul.f32 %v2381, 1.442695
          %v2398 = vpow.pop %v2397
          %v2399 = vmul.f32 %v2382, 1.442695
          %v2400 = vpow.pop %v2399
          %v2401 = vmul.f32 %v2383, 1.442695
          %v2402 = vpow.pop %v2401
          %v2403 = vmul.f32 %v2384, 1.442695
          %v2404 = vpow.pop %v2403
          %v2405 = vmul.f32 %v2385, 1.442695
          %v2406 = vpow.pop %v2405
          %v2407 = vmul.f32 %v2386, 1.442695
          %v2408 = vpow.pop %v2407
          %v2409 = vmul.f32 %v2387, 1.442695
          %v2410 = vpow.pop %v2409
          %v2411 = vmul.f32 %v2388, 1.442695
          %v2412 = vpow.pop %v2411
          %v2413 = vmul.f32 %v2389, 1.442695
          %v2414 = vpow.pop %v2413
          %v2415 = vmul.f32 %v2390, 1.442695
          %v2416 = vpow.pop %v2415
          %v2417 = vmul.f32 %v2391, 1.442695
          %v2418 = vpow.pop %v2417
          %v2419 = vmul.f32 %v2392, 1.442695
          %v2420 = vpow.pop %v2419
          %v2421 = vmul.f32 %v2393, 1.442695
          %v2422 = vpow.pop %v2421
          %v2423 = vmul.f32 %v2394, 1.442695
          %v2424 = vpow.pop %v2423
          %v2425 = vmul.f32 %v2395, 1.442695
          %v2426 = vpow.pop %v2425
          %v2427 = vmul.f32 %v2396, 1.442695
          %v2428 = vpow.pop %v2427
          %v2429 = vadd.f32 %v2398, 1.0
          %v2430 = vadd.f32 %v2400, 1.0
          %v2431 = vadd.f32 %v2402, 1.0
          %v2432 = vadd.f32 %v2404, 1.0
          %v2433 = vadd.f32 %v2406, 1.0
          %v2434 = vadd.f32 %v2408, 1.0
          %v2435 = vadd.f32 %v2410, 1.0
          %v2436 = vadd.f32 %v2412, 1.0
          %v2437 = vadd.f32 %v2414, 1.0
          %v2438 = vadd.f32 %v2416, 1.0
          %v2439 = vadd.f32 %v2418, 1.0
          %v2440 = vadd.f32 %v2420, 1.0
          %v2441 = vadd.f32 %v2422, 1.0
          %v2442 = vadd.f32 %v2424, 1.0
          %v2443 = vadd.f32 %v2426, 1.0
          %v2444 = vadd.f32 %v2428, 1.0
          %v2445 = vrcp.pop %v2429
          %v2446 = vmul.f32 1.0, %v2445
          %v2447 = vrcp.pop %v2430
          %v2448 = vmul.f32 1.0, %v2447
          %v2449 = vrcp.pop %v2431
          %v2450 = vmul.f32 1.0, %v2449
          %v2451 = vrcp.pop %v2432
          %v2452 = vmul.f32 1.0, %v2451
          %v2453 = vrcp.pop %v2433
          %v2454 = vmul.f32 1.0, %v2453
          %v2455 = vrcp.pop %v2434
          %v2456 = vmul.f32 1.0, %v2455
          %v2457 = vrcp.pop %v2435
          %v2458 = vmul.f32 1.0, %v2457
          %v2459 = vrcp.pop %v2436
          %v2460 = vmul.f32 1.0, %v2459
          %v2461 = vrcp.pop %v2437
          %v2462 = vmul.f32 1.0, %v2461
          %v2463 = vrcp.pop %v2438
          %v2464 = vmul.f32 1.0, %v2463
          %v2465 = vrcp.pop %v2439
          %v2466 = vmul.f32 1.0, %v2465
          %v2467 = vrcp.pop %v2440
          %v2468 = vmul.f32 1.0, %v2467
          %v2469 = vrcp.pop %v2441
          %v2470 = vmul.f32 1.0, %v2469
          %v2471 = vrcp.pop %v2442
          %v2472 = vmul.f32 1.0, %v2471
          %v2473 = vrcp.pop %v2443
          %v2474 = vmul.f32 1.0, %v2473
          %v2475 = vrcp.pop %v2444
          %v2476 = vmul.f32 1.0, %v2475
          %v2477 = vsub.f32 1.0, %v2446
          %v2478 = vsub.f32 1.0, %v2448
          %v2479 = vsub.f32 1.0, %v2450
          %v2480 = vsub.f32 1.0, %v2452
          %v2481 = vsub.f32 1.0, %v2454
          %v2482 = vsub.f32 1.0, %v2456
          %v2483 = vsub.f32 1.0, %v2458
          %v2484 = vsub.f32 1.0, %v2460
          %v2485 = vsub.f32 1.0, %v2462
          %v2486 = vsub.f32 1.0, %v2464
          %v2487 = vsub.f32 1.0, %v2466
          %v2488 = vsub.f32 1.0, %v2468
          %v2489 = vsub.f32 1.0, %v2470
          %v2490 = vsub.f32 1.0, %v2472
          %v2491 = vsub.f32 1.0, %v2474
          %v2492 = vsub.f32 1.0, %v2476
          %2494 = vset.pattern.permute.xlu0 0
          %2495 = vperm.xlu0 %2494, %v2477
          %v2496 = vpop.permute.xlu0 %2495
          %2499 = vset.pattern.permute.xlu0 0
          %2500 = vperm.xlu0 %2499, %v2478
          %v2501 = vpop.permute.xlu0 %2500
          %2504 = vset.pattern.permute.xlu0 0
          %2505 = vperm.xlu0 %2504, %v2479
          %v2506 = vpop.permute.xlu0 %2505
          %2509 = vset.pattern.permute.xlu0 0
          %2510 = vperm.xlu0 %2509, %v2480
          %v2511 = vpop.permute.xlu0 %2510
          %2514 = vset.pattern.permute.xlu0 0
          %2515 = vperm.xlu0 %2514, %v2481
          %v2516 = vpop.permute.xlu0 %2515
          %2519 = vset.pattern.permute.xlu0 0
          %2520 = vperm.xlu0 %2519, %v2482
          %v2521 = vpop.permute.xlu0 %2520
          %2524 = vset.pattern.permute.xlu0 0
          %2525 = vperm.xlu0 %2524, %v2483
          %v2526 = vpop.permute.xlu0 %2525
          %2529 = vset.pattern.permute.xlu0 0
          %2530 = vperm.xlu0 %2529, %v2484
          %v2531 = vpop.permute.xlu0 %2530
          %2534 = vset.pattern.permute.xlu0 0
          %2535 = vperm.xlu0 %2534, %v2485
          %v2536 = vpop.permute.xlu0 %2535
          %2539 = vset.pattern.permute.xlu0 0
          %2540 = vperm.xlu0 %2539, %v2486
          %v2541 = vpop.permute.xlu0 %2540
          %2544 = vset.pattern.permute.xlu0 0
          %2545 = vperm.xlu0 %2544, %v2487
          %v2546 = vpop.permute.xlu0 %2545
          %2549 = vset.pattern.permute.xlu0 0
          %2550 = vperm.xlu0 %2549, %v2488
          %v2551 = vpop.permute.xlu0 %2550
          %2554 = vset.pattern.permute.xlu0 0
          %2555 = vperm.xlu0 %2554, %v2489
          %v2556 = vpop.permute.xlu0 %2555
          %2559 = vset.pattern.permute.xlu0 0
          %2560 = vperm.xlu0 %2559, %v2490
          %v2561 = vpop.permute.xlu0 %2560
          %2564 = vset.pattern.permute.xlu0 0
          %2565 = vperm.xlu0 %2564, %v2491
          %v2566 = vpop.permute.xlu0 %2565
          %2569 = vset.pattern.permute.xlu0 0
          %2570 = vperm.xlu0 %2569, %v2492
          %v2571 = vpop.permute.xlu0 %2570
          %v2573 = vmul.f32 %v2496, %v2069
          %v2574 = vmul.f32 %v2496, %v2071
          %v2575 = vmul.f32 %v2501, %v2073
          %v2576 = vmul.f32 %v2501, %v2075
          %v2577 = vmul.f32 %v2506, %v2079
          %v2578 = vmul.f32 %v2506, %v2081
          %v2579 = vmul.f32 %v2511, %v2083
          %v2580 = vmul.f32 %v2511, %v2085
          %v2581 = vmul.f32 %v2516, %v2089
          %v2582 = vmul.f32 %v2516, %v2091
          %v2583 = vmul.f32 %v2521, %v2093
          %v2584 = vmul.f32 %v2521, %v2095
          %v2585 = vmul.f32 %v2526, %v2099
          %v2586 = vmul.f32 %v2526, %v2101
          %v2587 = vmul.f32 %v2531, %v2103
          %v2588 = vmul.f32 %v2531, %v2105
          %v2589 = vmul.f32 %v2536, %v2109
          %v2590 = vmul.f32 %v2536, %v2111
          %v2591 = vmul.f32 %v2541, %v2113
          %v2592 = vmul.f32 %v2541, %v2115
          %v2593 = vmul.f32 %v2546, %v2119
          %v2594 = vmul.f32 %v2546, %v2121
          %v2595 = vmul.f32 %v2551, %v2123
          %v2596 = vmul.f32 %v2551, %v2125
          %v2597 = vmul.f32 %v2556, %v2129
          %v2598 = vmul.f32 %v2556, %v2131
          %v2599 = vmul.f32 %v2561, %v2133
          %v2600 = vmul.f32 %v2561, %v2135
          %v2601 = vmul.f32 %v2566, %v2139
          %v2602 = vmul.f32 %v2566, %v2141
          %v2603 = vmul.f32 %v2571, %v2143
          %v2604 = vmul.f32 %v2571, %v2145
          %2606 = vset.pattern.permute.xlu0 0
          %2607 = vperm.xlu0 %2606, %v2446
          %v2608 = vpop.permute.xlu0 %2607
          %2611 = vset.pattern.permute.xlu0 0
          %2612 = vperm.xlu0 %2611, %v2448
          %v2613 = vpop.permute.xlu0 %2612
          %2616 = vset.pattern.permute.xlu0 0
          %2617 = vperm.xlu0 %2616, %v2450
          %v2618 = vpop.permute.xlu0 %2617
          %2621 = vset.pattern.permute.xlu0 0
          %2622 = vperm.xlu0 %2621, %v2452
          %v2623 = vpop.permute.xlu0 %2622
          %2626 = vset.pattern.permute.xlu0 0
          %2627 = vperm.xlu0 %2626, %v2454
          %v2628 = vpop.permute.xlu0 %2627
          %2631 = vset.pattern.permute.xlu0 0
          %2632 = vperm.xlu0 %2631, %v2456
          %v2633 = vpop.permute.xlu0 %2632
          %2636 = vset.pattern.permute.xlu0 0
          %2637 = vperm.xlu0 %2636, %v2458
          %v2638 = vpop.permute.xlu0 %2637
          %2641 = vset.pattern.permute.xlu0 0
          %2642 = vperm.xlu0 %2641, %v2460
          %v2643 = vpop.permute.xlu0 %2642
          %2646 = vset.pattern.permute.xlu0 0
          %2647 = vperm.xlu0 %2646, %v2462
          %v2648 = vpop.permute.xlu0 %2647
          %2651 = vset.pattern.permute.xlu0 0
          %2652 = vperm.xlu0 %2651, %v2464
          %v2653 = vpop.permute.xlu0 %2652
          %2656 = vset.pattern.permute.xlu0 0
          %2657 = vperm.xlu0 %2656, %v2466
          %v2658 = vpop.permute.xlu0 %2657
          %2661 = vset.pattern.permute.xlu0 0
          %2662 = vperm.xlu0 %2661, %v2468
          %v2663 = vpop.permute.xlu0 %2662
          %2666 = vset.pattern.permute.xlu0 0
          %2667 = vperm.xlu0 %2666, %v2470
          %v2668 = vpop.permute.xlu0 %2667
          %2671 = vset.pattern.permute.xlu0 0
          %2672 = vperm.xlu0 %2671, %v2472
          %v2673 = vpop.permute.xlu0 %2672
          %2676 = vset.pattern.permute.xlu0 0
          %2677 = vperm.xlu0 %2676, %v2474
          %v2678 = vpop.permute.xlu0 %2677
          %2681 = vset.pattern.permute.xlu0 0
          %2682 = vperm.xlu0 %2681, %v2476
          %v2683 = vpop.permute.xlu0 %2682
          %v2685 = vlaneseq
          %v2686 = vshrl.u32 %v2685, 7
          %v2687 = vsub.s32 0, %v2686
          %v2688 = vrot.slane %v1233, %v2687
          %v2689 = vlaneseq
          %v2690 = vshrl.u32 %v2689, 7
          %v2691 = vsub.s32 0, %v2690
          %v2692 = vrot.slane %v1235, %v2691
          %v2693 = vmul.f32 %v2608, %v2688
          %v2694 = vmul.f32 %v2608, %v2692
          %v2695 = vmul.f32 %v2613, %v2688
          %v2696 = vmul.f32 %v2613, %v2692
          %v2697 = vmul.f32 %v2618, %v2688
          %v2698 = vmul.f32 %v2618, %v2692
          %v2699 = vmul.f32 %v2623, %v2688
          %v2700 = vmul.f32 %v2623, %v2692
          %v2701 = vmul.f32 %v2628, %v2688
          %v2702 = vmul.f32 %v2628, %v2692
          %v2703 = vmul.f32 %v2633, %v2688
          %v2704 = vmul.f32 %v2633, %v2692
          %v2705 = vmul.f32 %v2638, %v2688
          %v2706 = vmul.f32 %v2638, %v2692
          %v2707 = vmul.f32 %v2643, %v2688
          %v2708 = vmul.f32 %v2643, %v2692
          %v2709 = vmul.f32 %v2648, %v2688
          %v2710 = vmul.f32 %v2648, %v2692
          %v2711 = vmul.f32 %v2653, %v2688
          %v2712 = vmul.f32 %v2653, %v2692
          %v2713 = vmul.f32 %v2658, %v2688
          %v2714 = vmul.f32 %v2658, %v2692
          %v2715 = vmul.f32 %v2663, %v2688
          %v2716 = vmul.f32 %v2663, %v2692
          %v2717 = vmul.f32 %v2668, %v2688
          %v2718 = vmul.f32 %v2668, %v2692
          %v2719 = vmul.f32 %v2673, %v2688
          %v2720 = vmul.f32 %v2673, %v2692
          %v2721 = vmul.f32 %v2678, %v2688
          %v2722 = vmul.f32 %v2678, %v2692
          %v2723 = vmul.f32 %v2683, %v2688
          %v2724 = vmul.f32 %v2683, %v2692
          %v2725 = vadd.f32 %v2573, %v2693
          %v2726 = vadd.f32 %v2574, %v2694
          %v2727 = vadd.f32 %v2575, %v2695
          %v2728 = vadd.f32 %v2576, %v2696
          %v2729 = vadd.f32 %v2577, %v2697
          %v2730 = vadd.f32 %v2578, %v2698
          %v2731 = vadd.f32 %v2579, %v2699
          %v2732 = vadd.f32 %v2580, %v2700
          %v2733 = vadd.f32 %v2581, %v2701
          %v2734 = vadd.f32 %v2582, %v2702
          %v2735 = vadd.f32 %v2583, %v2703
          %v2736 = vadd.f32 %v2584, %v2704
          %v2737 = vadd.f32 %v2585, %v2705
          %v2738 = vadd.f32 %v2586, %v2706
          %v2739 = vadd.f32 %v2587, %v2707
          %v2740 = vadd.f32 %v2588, %v2708
          %v2741 = vadd.f32 %v2589, %v2709
          %v2742 = vadd.f32 %v2590, %v2710
          %v2743 = vadd.f32 %v2591, %v2711
          %v2744 = vadd.f32 %v2592, %v2712
          %v2745 = vadd.f32 %v2593, %v2713
          %v2746 = vadd.f32 %v2594, %v2714
          %v2747 = vadd.f32 %v2595, %v2715
          %v2748 = vadd.f32 %v2596, %v2716
          %v2749 = vadd.f32 %v2597, %v2717
          %v2750 = vadd.f32 %v2598, %v2718
          %v2751 = vadd.f32 %v2599, %v2719
          %v2752 = vadd.f32 %v2600, %v2720
          %v2753 = vadd.f32 %v2601, %v2721
          %v2754 = vadd.f32 %v2602, %v2722
          %v2755 = vadd.f32 %v2603, %v2723
          %v2756 = vadd.f32 %v2604, %v2724
          %v2757 = vpack.c.bf16 %v2727, %v2725
          %v2758 = vpack.c.bf16 %v2728, %v2726
          %v2759 = vpack.c.bf16 %v2731, %v2729
          %v2760 = vpack.c.bf16 %v2732, %v2730
          %v2761 = vpack.c.bf16 %v2735, %v2733
          %v2762 = vpack.c.bf16 %v2736, %v2734
          %v2763 = vpack.c.bf16 %v2739, %v2737
          %v2764 = vpack.c.bf16 %v2740, %v2738
          %v2765 = vpack.c.bf16 %v2743, %v2741
          %v2766 = vpack.c.bf16 %v2744, %v2742
          %v2767 = vpack.c.bf16 %v2747, %v2745
          %v2768 = vpack.c.bf16 %v2748, %v2746
          %v2769 = vpack.c.bf16 %v2751, %v2749
          %v2770 = vpack.c.bf16 %v2752, %v2750
          %v2771 = vpack.c.bf16 %v2755, %v2753
          %v2772 = vpack.c.bf16 %v2756, %v2754
          %s2773 = smul.u32 0, 2
          %s2774 = smul.addr %s2773, 8
          %s2775 = scalar_lea.vmem [#allocation2], %s2774
          %2776 = vst [vmem:[%s2775] sm:$0xff] %v2757
          %2777 = vst [vmem:[%s2775 + $0x8] sm:$0xff] %v2758
          %2778 = vst [vmem:[%s2775 + $0x10] sm:$0xff] %v2759
          %2779 = vst [vmem:[%s2775 + $0x18] sm:$0xff] %v2760
          %2780 = vst [vmem:[%s2775 + $0x20] sm:$0xff] %v2761
          %2781 = vst [vmem:[%s2775 + $0x28] sm:$0xff] %v2762
          %2782 = vst [vmem:[%s2775 + $0x30] sm:$0xff] %v2763
          %2783 = vst [vmem:[%s2775 + $0x38] sm:$0xff] %v2764
          %2784 = vst [vmem:[%s2775 + $0x40] sm:$0xff] %v2765
          %2785 = vst [vmem:[%s2775 + $0x48] sm:$0xff] %v2766
          %2786 = vst [vmem:[%s2775 + $0x50] sm:$0xff] %v2767
          %2787 = vst [vmem:[%s2775 + $0x58] sm:$0xff] %v2768
          %2788 = vst [vmem:[%s2775 + $0x60] sm:$0xff] %v2769
          %2789 = vst [vmem:[%s2775 + $0x68] sm:$0xff] %v2770
          %2790 = vst [vmem:[%s2775 + $0x70] sm:$0xff] %v2771
          %2791 = vst [vmem:[%s2775 + $0x78] sm:$0xff] %v2772
          %v2792 = vpack.c.bf16 %v2186, %v2182
          %v2793 = vpack.c.bf16 %v2188, %v2184
          %v2794 = vpack.c.bf16 %v2196, %v2192
          %v2795 = vpack.c.bf16 %v2198, %v2194
          %v2796 = vpack.c.bf16 %v2206, %v2202
          %v2797 = vpack.c.bf16 %v2208, %v2204
          %v2798 = vpack.c.bf16 %v2216, %v2212
          %v2799 = vpack.c.bf16 %v2218, %v2214
          %v2800 = vpack.c.bf16 %v2226, %v2222
          %v2801 = vpack.c.bf16 %v2228, %v2224
          %v2802 = vpack.c.bf16 %v2236, %v2232
          %v2803 = vpack.c.bf16 %v2238, %v2234
          %v2804 = vpack.c.bf16 %v2246, %v2242
          %v2805 = vpack.c.bf16 %v2248, %v2244
          %v2806 = vpack.c.bf16 %v2256, %v2252
          %v2807 = vpack.c.bf16 %v2258, %v2254
          %s2808 = smul.addr %s2773, 8
          %s2809 = scalar_lea.vmem [#allocation3], %s2808
          %2810 = vst [vmem:[%s2809] sm:$0xff] %v2792
          %2811 = vst [vmem:[%s2809 + $0x8] sm:$0xff] %v2793
          %2812 = vst [vmem:[%s2809 + $0x10] sm:$0xff] %v2794
          %2813 = vst [vmem:[%s2809 + $0x18] sm:$0xff] %v2795
          %2814 = vst [vmem:[%s2809 + $0x20] sm:$0xff] %v2796
          %2815 = vst [vmem:[%s2809 + $0x28] sm:$0xff] %v2797
          %2816 = vst [vmem:[%s2809 + $0x30] sm:$0xff] %v2798
          %2817 = vst [vmem:[%s2809 + $0x38] sm:$0xff] %v2799
          %2818 = vst [vmem:[%s2809 + $0x40] sm:$0xff] %v2800
          %2819 = vst [vmem:[%s2809 + $0x48] sm:$0xff] %v2801
          %2820 = vst [vmem:[%s2809 + $0x50] sm:$0xff] %v2802
          %2821 = vst [vmem:[%s2809 + $0x58] sm:$0xff] %v2803
          %2822 = vst [vmem:[%s2809 + $0x60] sm:$0xff] %v2804
          %2823 = vst [vmem:[%s2809 + $0x68] sm:$0xff] %v2805
          %2824 = vst [vmem:[%s2809 + $0x70] sm:$0xff] %v2806
          %2825 = vst [vmem:[%s2809 + $0x78] sm:$0xff] %v2807
        $region80: #{global_context_layer.1} parent=47 // pred_fallthru
          _
        %s2826 = smul.u32 %s37, 128
        %s2827 = sshra.s32 %s2826, 3
        %s2828 = sand.u32 %s2826, 7
        %s2829 = smul.u32 %s2827, 2
        %s2830 = smul.addr %s2829, 4
        %s2831 = scalar_lea.vmem %s370, %s2830 [#allocation5]
        %v2832 = vld [vmem:[%s2831] sm:$0xff]
        %v2833 = vld [vmem:[%s2831 + $0x8] sm:$0xff]
        %v2834 = vld [vmem:[%s2831 + $0x10] sm:$0xff]
        %v2835 = vld [vmem:[%s2831 + $0x18] sm:$0xff]
        %v2836 = vld [vmem:[%s2831 + $0x20] sm:$0xff]
        %v2837 = vld [vmem:[%s2831 + $0x28] sm:$0xff]
        %v2838 = vld [vmem:[%s2831 + $0x30] sm:$0xff]
        %v2839 = vld [vmem:[%s2831 + $0x38] sm:$0xff]
        %v2840 = vld [vmem:[%s2831 + $0x40] sm:$0xff]
        %v2841 = vld [vmem:[%s2831 + $0x48] sm:$0xff]
        %v2842 = vld [vmem:[%s2831 + $0x50] sm:$0xff]
        %v2843 = vld [vmem:[%s2831 + $0x58] sm:$0xff]
        %v2844 = vld [vmem:[%s2831 + $0x60] sm:$0xff]
        %v2845 = vld [vmem:[%s2831 + $0x68] sm:$0xff]
        %v2846 = vld [vmem:[%s2831 + $0x70] sm:$0xff]
        %v2847 = vld [vmem:[%s2831 + $0x78] sm:$0xff]
        %v2848 = vld [vmem:[#allocation8] sm:$0xff]
        %v2849 = vld [vmem:[#allocation8 + $0x8] sm:$0xff]
        %v2850 = vld [vmem:[#allocation8 + $0x10] sm:$0xff]
        %v2851 = vld [vmem:[#allocation8 + $0x18] sm:$0xff]
        %v2852 = vld [vmem:[#allocation8 + $0x20] sm:$0xff]
        %v2853 = vld [vmem:[#allocation8 + $0x28] sm:$0xff]
        %v2854 = vld [vmem:[#allocation8 + $0x30] sm:$0xff]
        %v2855 = vld [vmem:[#allocation8 + $0x38] sm:$0xff]
        %v2856 = vld [vmem:[#allocation8 + $0x40] sm:$0xff]
        %v2857 = vld [vmem:[#allocation8 + $0x48] sm:$0xff]
        %v2858 = vld [vmem:[#allocation8 + $0x50] sm:$0xff]
        %v2859 = vld [vmem:[#allocation8 + $0x58] sm:$0xff]
        %v2860 = vld [vmem:[#allocation8 + $0x60] sm:$0xff]
        %v2861 = vld [vmem:[#allocation8 + $0x68] sm:$0xff]
        %v2862 = vld [vmem:[#allocation8 + $0x70] sm:$0xff]
        %v2863 = vld [vmem:[#allocation8 + $0x78] sm:$0xff]
        %v2864 = vld [vmem:[#allocation8 + $0x80] sm:$0xff]
        %v2865 = vld [vmem:[#allocation8 + $0x88] sm:$0xff]
        %v2866 = vld [vmem:[#allocation8 + $0x90] sm:$0xff]
        %v2867 = vld [vmem:[#allocation8 + $0x98] sm:$0xff]
        %v2868 = vld [vmem:[#allocation8 + $0xa0] sm:$0xff]
        %v2869 = vld [vmem:[#allocation8 + $0xa8] sm:$0xff]
        %v2870 = vld [vmem:[#allocation8 + $0xb0] sm:$0xff]
        %v2871 = vld [vmem:[#allocation8 + $0xb8] sm:$0xff]
        %v2872 = vld [vmem:[#allocation8 + $0xc0] sm:$0xff]
        %v2873 = vld [vmem:[#allocation8 + $0xc8] sm:$0xff]
        %v2874 = vld [vmem:[#allocation8 + $0xd0] sm:$0xff]
        %v2875 = vld [vmem:[#allocation8 + $0xd8] sm:$0xff]
        %v2876 = vld [vmem:[#allocation8 + $0xe0] sm:$0xff]
        %v2877 = vld [vmem:[#allocation8 + $0xe8] sm:$0xff]
        %v2878 = vld [vmem:[#allocation8 + $0xf0] sm:$0xff]
        %v2879 = vld [vmem:[#allocation8 + $0xf8] sm:$0xff]
        %v2880 = vld [vmem:[#allocation8 + $0x100] sm:$0xff]
        %v2881 = vld [vmem:[#allocation8 + $0x108] sm:$0xff]
        %v2882 = vld [vmem:[#allocation8 + $0x110] sm:$0xff]
        %v2883 = vld [vmem:[#allocation8 + $0x118] sm:$0xff]
        %v2884 = vld [vmem:[#allocation8 + $0x120] sm:$0xff]
        %v2885 = vld [vmem:[#allocation8 + $0x128] sm:$0xff]
        %v2886 = vld [vmem:[#allocation8 + $0x130] sm:$0xff]
        %v2887 = vld [vmem:[#allocation8 + $0x138] sm:$0xff]
        %v2888 = vld [vmem:[#allocation8 + $0x140] sm:$0xff]
        %v2889 = vld [vmem:[#allocation8 + $0x148] sm:$0xff]
        %v2890 = vld [vmem:[#allocation8 + $0x150] sm:$0xff]
        %v2891 = vld [vmem:[#allocation8 + $0x158] sm:$0xff]
        %v2892 = vld [vmem:[#allocation8 + $0x160] sm:$0xff]
        %v2893 = vld [vmem:[#allocation8 + $0x168] sm:$0xff]
        %v2894 = vld [vmem:[#allocation8 + $0x170] sm:$0xff]
        %v2895 = vld [vmem:[#allocation8 + $0x178] sm:$0xff]
        %v2896 = vld [vmem:[#allocation8 + $0x180] sm:$0xff]
        %v2897 = vld [vmem:[#allocation8 + $0x188] sm:$0xff]
        %v2898 = vld [vmem:[#allocation8 + $0x190] sm:$0xff]
        %v2899 = vld [vmem:[#allocation8 + $0x198] sm:$0xff]
        %v2900 = vld [vmem:[#allocation8 + $0x1a0] sm:$0xff]
        %v2901 = vld [vmem:[#allocation8 + $0x1a8] sm:$0xff]
        %v2902 = vld [vmem:[#allocation8 + $0x1b0] sm:$0xff]
        %v2903 = vld [vmem:[#allocation8 + $0x1b8] sm:$0xff]
        %v2904 = vld [vmem:[#allocation8 + $0x1c0] sm:$0xff]
        %v2905 = vld [vmem:[#allocation8 + $0x1c8] sm:$0xff]
        %v2906 = vld [vmem:[#allocation8 + $0x1d0] sm:$0xff]
        %v2907 = vld [vmem:[#allocation8 + $0x1d8] sm:$0xff]
        %v2908 = vld [vmem:[#allocation8 + $0x1e0] sm:$0xff]
        %v2909 = vld [vmem:[#allocation8 + $0x1e8] sm:$0xff]
        %v2910 = vld [vmem:[#allocation8 + $0x1f0] sm:$0xff]
        %v2911 = vld [vmem:[#allocation8 + $0x1f8] sm:$0xff]
        %v2912 = vld [vmem:[#allocation10] sm:$0xf]
        %v2914 = vlaneseq
        %v2915 = vshrl.u32 %v2914, 7
        %v2916 = vsub.s32 0, %v2915
        %v2917 = vrot.slane %v2912, %v2916
        %v2918 = vlaneseq
        %v2919 = vshrl.u32 %v2918, 7
        %v2920 = vsub.s32 1, %v2919
        %v2921 = vrot.slane %v2912, %v2920
        %v2922 = vlaneseq
        %v2923 = vshrl.u32 %v2922, 7
        %v2924 = vsub.s32 2, %v2923
        %v2925 = vrot.slane %v2912, %v2924
        %v2945 = vunpack.c.l.b16 %v2832
        %v2946 = vunpack.c.h.b16 %v2832
        %v2947 = vunpack.c.l.b16 %v2833
        %v2948 = vunpack.c.h.b16 %v2833
        %v2949 = vunpack.c.l.b16 %v2834
        %v2950 = vunpack.c.h.b16 %v2834
        %v2951 = vunpack.c.l.b16 %v2835
        %v2952 = vunpack.c.h.b16 %v2835
        %v2953 = vunpack.c.l.b16 %v2836
        %v2954 = vunpack.c.h.b16 %v2836
        %v2955 = vunpack.c.l.b16 %v2837
        %v2956 = vunpack.c.h.b16 %v2837
        %v2957 = vunpack.c.l.b16 %v2838
        %v2958 = vunpack.c.h.b16 %v2838
        %v2959 = vunpack.c.l.b16 %v2839
        %v2960 = vunpack.c.h.b16 %v2839
        %v2961 = vunpack.c.l.b16 %v2840
        %v2962 = vunpack.c.h.b16 %v2840
        %v2963 = vunpack.c.l.b16 %v2841
        %v2964 = vunpack.c.h.b16 %v2841
        %v2965 = vunpack.c.l.b16 %v2842
        %v2966 = vunpack.c.h.b16 %v2842
        %v2967 = vunpack.c.l.b16 %v2843
        %v2968 = vunpack.c.h.b16 %v2843
        %v2969 = vunpack.c.l.b16 %v2844
        %v2970 = vunpack.c.h.b16 %v2844
        %v2971 = vunpack.c.l.b16 %v2845
        %v2972 = vunpack.c.h.b16 %v2845
        %v2973 = vunpack.c.l.b16 %v2846
        %v2974 = vunpack.c.h.b16 %v2846
        %v2975 = vunpack.c.l.b16 %v2847
        %v2976 = vunpack.c.h.b16 %v2847
        %v2977 = vpack.c.b16 %v2947, %v2945
        %v2978 = vpack.c.b16 %v2948, %v2946
        %v2979 = vpack.c.b16 %v2951, %v2949
        %v2980 = vpack.c.b16 %v2952, %v2950
        %v2981 = vpack.c.b16 %v2955, %v2953
        %v2982 = vpack.c.b16 %v2956, %v2954
        %v2983 = vpack.c.b16 %v2959, %v2957
        %v2984 = vpack.c.b16 %v2960, %v2958
        %v2985 = vpack.c.b16 %v2963, %v2961
        %v2986 = vpack.c.b16 %v2964, %v2962
        %v2987 = vpack.c.b16 %v2967, %v2965
        %v2988 = vpack.c.b16 %v2968, %v2966
        %v2989 = vpack.c.b16 %v2971, %v2969
        %v2990 = vpack.c.b16 %v2972, %v2970
        %v2991 = vpack.c.b16 %v2975, %v2973
        %v2992 = vpack.c.b16 %v2976, %v2974
        %v3073 = vunpack.c.l.b16 %v2848
        %v3074 = vunpack.c.h.b16 %v2848
        %v3075 = vunpack.c.l.b16 %v2849
        %v3076 = vunpack.c.h.b16 %v2849
        %v3077 = vunpack.c.l.b16 %v2850
        %v3078 = vunpack.c.h.b16 %v2850
        %v3079 = vunpack.c.l.b16 %v2851
        %v3080 = vunpack.c.h.b16 %v2851
        %v3081 = vunpack.c.l.b16 %v2852
        %v3082 = vunpack.c.h.b16 %v2852
        %v3083 = vunpack.c.l.b16 %v2853
        %v3084 = vunpack.c.h.b16 %v2853
        %v3085 = vunpack.c.l.b16 %v2854
        %v3086 = vunpack.c.h.b16 %v2854
        %v3087 = vunpack.c.l.b16 %v2855
        %v3088 = vunpack.c.h.b16 %v2855
        %v3089 = vunpack.c.l.b16 %v2856
        %v3090 = vunpack.c.h.b16 %v2856
        %v3091 = vunpack.c.l.b16 %v2857
        %v3092 = vunpack.c.h.b16 %v2857
        %v3093 = vunpack.c.l.b16 %v2858
        %v3094 = vunpack.c.h.b16 %v2858
        %v3095 = vunpack.c.l.b16 %v2859
        %v3096 = vunpack.c.h.b16 %v2859
        %v3097 = vunpack.c.l.b16 %v2860
        %v3098 = vunpack.c.h.b16 %v2860
        %v3099 = vunpack.c.l.b16 %v2861
        %v3100 = vunpack.c.h.b16 %v2861
        %v3101 = vunpack.c.l.b16 %v2862
        %v3102 = vunpack.c.h.b16 %v2862
        %v3103 = vunpack.c.l.b16 %v2863
        %v3104 = vunpack.c.h.b16 %v2863
        %v3105 = vunpack.c.l.b16 %v2864
        %v3106 = vunpack.c.h.b16 %v2864
        %v3107 = vunpack.c.l.b16 %v2865
        %v3108 = vunpack.c.h.b16 %v2865
        %v3109 = vunpack.c.l.b16 %v2866
        %v3110 = vunpack.c.h.b16 %v2866
        %v3111 = vunpack.c.l.b16 %v2867
        %v3112 = vunpack.c.h.b16 %v2867
        %v3113 = vunpack.c.l.b16 %v2868
        %v3114 = vunpack.c.h.b16 %v2868
        %v3115 = vunpack.c.l.b16 %v2869
        %v3116 = vunpack.c.h.b16 %v2869
        %v3117 = vunpack.c.l.b16 %v2870
        %v3118 = vunpack.c.h.b16 %v2870
        %v3119 = vunpack.c.l.b16 %v2871
        %v3120 = vunpack.c.h.b16 %v2871
        %v3121 = vunpack.c.l.b16 %v2872
        %v3122 = vunpack.c.h.b16 %v2872
        %v3123 = vunpack.c.l.b16 %v2873
        %v3124 = vunpack.c.h.b16 %v2873
        %v3125 = vunpack.c.l.b16 %v2874
        %v3126 = vunpack.c.h.b16 %v2874
        %v3127 = vunpack.c.l.b16 %v2875
        %v3128 = vunpack.c.h.b16 %v2875
        %v3129 = vunpack.c.l.b16 %v2876
        %v3130 = vunpack.c.h.b16 %v2876
        %v3131 = vunpack.c.l.b16 %v2877
        %v3132 = vunpack.c.h.b16 %v2877
        %v3133 = vunpack.c.l.b16 %v2878
        %v3134 = vunpack.c.h.b16 %v2878
        %v3135 = vunpack.c.l.b16 %v2879
        %v3136 = vunpack.c.h.b16 %v2879
        %v3137 = vunpack.c.l.b16 %v2880
        %v3138 = vunpack.c.h.b16 %v2880
        %v3139 = vunpack.c.l.b16 %v2881
        %v3140 = vunpack.c.h.b16 %v2881
        %v3141 = vunpack.c.l.b16 %v2882
        %v3142 = vunpack.c.h.b16 %v2882
        %v3143 = vunpack.c.l.b16 %v2883
        %v3144 = vunpack.c.h.b16 %v2883
        %v3145 = vunpack.c.l.b16 %v2884
        %v3146 = vunpack.c.h.b16 %v2884
        %v3147 = vunpack.c.l.b16 %v2885
        %v3148 = vunpack.c.h.b16 %v2885
        %v3149 = vunpack.c.l.b16 %v2886
        %v3150 = vunpack.c.h.b16 %v2886
        %v3151 = vunpack.c.l.b16 %v2887
        %v3152 = vunpack.c.h.b16 %v2887
        %v3153 = vunpack.c.l.b16 %v2888
        %v3154 = vunpack.c.h.b16 %v2888
        %v3155 = vunpack.c.l.b16 %v2889
        %v3156 = vunpack.c.h.b16 %v2889
        %v3157 = vunpack.c.l.b16 %v2890
        %v3158 = vunpack.c.h.b16 %v2890
        %v3159 = vunpack.c.l.b16 %v2891
        %v3160 = vunpack.c.h.b16 %v2891
        %v3161 = vunpack.c.l.b16 %v2892
        %v3162 = vunpack.c.h.b16 %v2892
        %v3163 = vunpack.c.l.b16 %v2893
        %v3164 = vunpack.c.h.b16 %v2893
        %v3165 = vunpack.c.l.b16 %v2894
        %v3166 = vunpack.c.h.b16 %v2894
        %v3167 = vunpack.c.l.b16 %v2895
        %v3168 = vunpack.c.h.b16 %v2895
        %v3169 = vunpack.c.l.b16 %v2896
        %v3170 = vunpack.c.h.b16 %v2896
        %v3171 = vunpack.c.l.b16 %v2897
        %v3172 = vunpack.c.h.b16 %v2897
        %v3173 = vunpack.c.l.b16 %v2898
        %v3174 = vunpack.c.h.b16 %v2898
        %v3175 = vunpack.c.l.b16 %v2899
        %v3176 = vunpack.c.h.b16 %v2899
        %v3177 = vunpack.c.l.b16 %v2900
        %v3178 = vunpack.c.h.b16 %v2900
        %v3179 = vunpack.c.l.b16 %v2901
        %v3180 = vunpack.c.h.b16 %v2901
        %v3181 = vunpack.c.l.b16 %v2902
        %v3182 = vunpack.c.h.b16 %v2902
        %v3183 = vunpack.c.l.b16 %v2903
        %v3184 = vunpack.c.h.b16 %v2903
        %v3185 = vunpack.c.l.b16 %v2904
        %v3186 = vunpack.c.h.b16 %v2904
        %v3187 = vunpack.c.l.b16 %v2905
        %v3188 = vunpack.c.h.b16 %v2905
        %v3189 = vunpack.c.l.b16 %v2906
        %v3190 = vunpack.c.h.b16 %v2906
        %v3191 = vunpack.c.l.b16 %v2907
        %v3192 = vunpack.c.h.b16 %v2907
        %v3193 = vunpack.c.l.b16 %v2908
        %v3194 = vunpack.c.h.b16 %v2908
        %v3195 = vunpack.c.l.b16 %v2909
        %v3196 = vunpack.c.h.b16 %v2909
        %v3197 = vunpack.c.l.b16 %v2910
        %v3198 = vunpack.c.h.b16 %v2910
        %v3199 = vunpack.c.l.b16 %v2911
        %v3200 = vunpack.c.h.b16 %v2911
        %v3201 = vpack.c.b16 %v3077, %v3073
        %v3202 = vpack.c.b16 %v3078, %v3074
        %v3203 = vpack.c.b16 %v3079, %v3075
        %v3204 = vpack.c.b16 %v3080, %v3076
        %v3205 = vpack.c.b16 %v3085, %v3081
        %v3206 = vpack.c.b16 %v3086, %v3082
        %v3207 = vpack.c.b16 %v3087, %v3083
        %v3208 = vpack.c.b16 %v3088, %v3084
        %v3209 = vpack.c.b16 %v3093, %v3089
        %v3210 = vpack.c.b16 %v3094, %v3090
        %v3211 = vpack.c.b16 %v3095, %v3091
        %v3212 = vpack.c.b16 %v3096, %v3092
        %v3213 = vpack.c.b16 %v3101, %v3097
        %v3214 = vpack.c.b16 %v3102, %v3098
        %v3215 = vpack.c.b16 %v3103, %v3099
        %v3216 = vpack.c.b16 %v3104, %v3100
        %v3217 = vpack.c.b16 %v3109, %v3105
        %v3218 = vpack.c.b16 %v3110, %v3106
        %v3219 = vpack.c.b16 %v3111, %v3107
        %v3220 = vpack.c.b16 %v3112, %v3108
        %v3221 = vpack.c.b16 %v3117, %v3113
        %v3222 = vpack.c.b16 %v3118, %v3114
        %v3223 = vpack.c.b16 %v3119, %v3115
        %v3224 = vpack.c.b16 %v3120, %v3116
        %v3225 = vpack.c.b16 %v3125, %v3121
        %v3226 = vpack.c.b16 %v3126, %v3122
        %v3227 = vpack.c.b16 %v3127, %v3123
        %v3228 = vpack.c.b16 %v3128, %v3124
        %v3229 = vpack.c.b16 %v3133, %v3129
        %v3230 = vpack.c.b16 %v3134, %v3130
        %v3231 = vpack.c.b16 %v3135, %v3131
        %v3232 = vpack.c.b16 %v3136, %v3132
        %v3233 = vpack.c.b16 %v3141, %v3137
        %v3234 = vpack.c.b16 %v3142, %v3138
        %v3235 = vpack.c.b16 %v3143, %v3139
        %v3236 = vpack.c.b16 %v3144, %v3140
        %v3237 = vpack.c.b16 %v3149, %v3145
        %v3238 = vpack.c.b16 %v3150, %v3146
        %v3239 = vpack.c.b16 %v3151, %v3147
        %v3240 = vpack.c.b16 %v3152, %v3148
        %v3241 = vpack.c.b16 %v3157, %v3153
        %v3242 = vpack.c.b16 %v3158, %v3154
        %v3243 = vpack.c.b16 %v3159, %v3155
        %v3244 = vpack.c.b16 %v3160, %v3156
        %v3245 = vpack.c.b16 %v3165, %v3161
        %v3246 = vpack.c.b16 %v3166, %v3162
        %v3247 = vpack.c.b16 %v3167, %v3163
        %v3248 = vpack.c.b16 %v3168, %v3164
        %v3249 = vpack.c.b16 %v3173, %v3169
        %v3250 = vpack.c.b16 %v3174, %v3170
        %v3251 = vpack.c.b16 %v3175, %v3171
        %v3252 = vpack.c.b16 %v3176, %v3172
        %v3253 = vpack.c.b16 %v3181, %v3177
        %v3254 = vpack.c.b16 %v3182, %v3178
        %v3255 = vpack.c.b16 %v3183, %v3179
        %v3256 = vpack.c.b16 %v3184, %v3180
        %v3257 = vpack.c.b16 %v3189, %v3185
        %v3258 = vpack.c.b16 %v3190, %v3186
        %v3259 = vpack.c.b16 %v3191, %v3187
        %v3260 = vpack.c.b16 %v3192, %v3188
        %v3261 = vpack.c.b16 %v3197, %v3193
        %v3262 = vpack.c.b16 %v3198, %v3194
        %v3263 = vpack.c.b16 %v3199, %v3195
        %v3264 = vpack.c.b16 %v3200, %v3196
        %3329 = vmatprep.subr.bf16.mxu0 %v3202
        %3330 = vmatpush1.bf16.msra.mxu0 %v3201
        %3331 = vmatprep.subr.bf16.mxu0 %v3206
        %3332 = vmatpush1.bf16.msra.mxu0 %v3205
        %3333 = vmatprep.subr.bf16.mxu0 %v3210
        %3334 = vmatpush1.bf16.msra.mxu0 %v3209
        %3335 = vmatprep.subr.bf16.mxu0 %v3214
        %3336 = vmatpush1.bf16.msra.mxu0 %v3213
        %3337 = vmatprep.subr.bf16.mxu0 %v3218
        %3338 = vmatpush1.bf16.msra.mxu0 %v3217
        %3339 = vmatprep.subr.bf16.mxu0 %v3222
        %3340 = vmatpush1.bf16.msra.mxu0 %v3221
        %3341 = vmatprep.subr.bf16.mxu0 %v3226
        %3342 = vmatpush1.bf16.msra.mxu0 %v3225
        %3343 = vmatprep.subr.bf16.mxu0 %v3230
        %3344 = vmatpush1.bf16.msra.mxu0 %v3229
        %3345 = vmatprep.subr.bf16.mxu0 %v3234
        %3346 = vmatpush1.bf16.msra.mxu0 %v3233
        %3347 = vmatprep.subr.bf16.mxu0 %v3238
        %3348 = vmatpush1.bf16.msra.mxu0 %v3237
        %3349 = vmatprep.subr.bf16.mxu0 %v3242
        %3350 = vmatpush1.bf16.msra.mxu0 %v3241
        %3351 = vmatprep.subr.bf16.mxu0 %v3246
        %3352 = vmatpush1.bf16.msra.mxu0 %v3245
        %3353 = vmatprep.subr.bf16.mxu0 %v3250
        %3354 = vmatpush1.bf16.msra.mxu0 %v3249
        %3355 = vmatprep.subr.bf16.mxu0 %v3254
        %3356 = vmatpush1.bf16.msra.mxu0 %v3253
        %3357 = vmatprep.subr.bf16.mxu0 %v3258
        %3358 = vmatpush1.bf16.msra.mxu0 %v3257
        %3359 = vmatprep.subr.bf16.mxu0 %v3262
        %3360 = vmatpush1.bf16.msra.mxu0 %v3261
        %3361 = vmatprep.mubr.bf16.mxu0 %v2978
        %3362 = vmatmul.mubr.bf16.gmra.mrb[0].mxu0 %v2977
        %v3363 = vpop.f32.mrb[0].mxu0
        %v3364 = vadd.f32 %v2917, %v3363
        %v3365 = vpop.f32.mrb[0].mxu0
        %v3366 = vadd.f32 %v2921, %v3365
        %v3367 = vpop.f32.mrb[0].mxu0
        %v3368 = vadd.f32 %v2917, %v3367
        %v3369 = vpop.f32.mrb[0].mxu0
        %v3370 = vadd.f32 %v2921, %v3369
        %3371 = vmatprep.mubr.bf16.mxu0 %v2980
        %3372 = vmatmul.mubr.bf16.gmra.mrb[0].mxu0 %v2979
        %v3373 = vpop.f32.mrb[0].mxu0
        %v3374 = vadd.f32 %v2917, %v3373
        %v3375 = vpop.f32.mrb[0].mxu0
        %v3376 = vadd.f32 %v2921, %v3375
        %v3377 = vpop.f32.mrb[0].mxu0
        %v3378 = vadd.f32 %v2917, %v3377
        %v3379 = vpop.f32.mrb[0].mxu0
        %v3380 = vadd.f32 %v2921, %v3379
        %3381 = vmatprep.mubr.bf16.mxu0 %v2982
        %3382 = vmatmul.mubr.bf16.gmra.mrb[0].mxu0 %v2981
        %v3383 = vpop.f32.mrb[0].mxu0
        %v3384 = vadd.f32 %v2917, %v3383
        %v3385 = vpop.f32.mrb[0].mxu0
        %v3386 = vadd.f32 %v2921, %v3385
        %v3387 = vpop.f32.mrb[0].mxu0
        %v3388 = vadd.f32 %v2917, %v3387
        %v3389 = vpop.f32.mrb[0].mxu0
        %v3390 = vadd.f32 %v2921, %v3389
        %3391 = vmatprep.mubr.bf16.mxu0 %v2984
        %3392 = vmatmul.mubr.bf16.gmra.mrb[0].mxu0 %v2983
        %v3393 = vpop.f32.mrb[0].mxu0
        %v3394 = vadd.f32 %v2917, %v3393
        %v3395 = vpop.f32.mrb[0].mxu0
        %v3396 = vadd.f32 %v2921, %v3395
        %v3397 = vpop.f32.mrb[0].mxu0
        %v3398 = vadd.f32 %v2917, %v3397
        %v3399 = vpop.f32.mrb[0].mxu0
        %v3400 = vadd.f32 %v2921, %v3399
        %3401 = vmatprep.mubr.bf16.mxu0 %v2986
        %3402 = vmatmul.mubr.bf16.gmra.mrb[0].mxu0 %v2985
        %v3403 = vpop.f32.mrb[0].mxu0
        %v3404 = vadd.f32 %v2917, %v3403
        %v3405 = vpop.f32.mrb[0].mxu0
        %v3406 = vadd.f32 %v2921, %v3405
        %v3407 = vpop.f32.mrb[0].mxu0
        %v3408 = vadd.f32 %v2917, %v3407
        %v3409 = vpop.f32.mrb[0].mxu0
        %v3410 = vadd.f32 %v2921, %v3409
        %3411 = vmatprep.mubr.bf16.mxu0 %v2988
        %3412 = vmatmul.mubr.bf16.gmra.mrb[0].mxu0 %v2987
        %v3413 = vpop.f32.mrb[0].mxu0
        %v3414 = vadd.f32 %v2917, %v3413
        %v3415 = vpop.f32.mrb[0].mxu0
        %v3416 = vadd.f32 %v2921, %v3415
        %v3417 = vpop.f32.mrb[0].mxu0
        %v3418 = vadd.f32 %v2917, %v3417
        %v3419 = vpop.f32.mrb[0].mxu0
        %v3420 = vadd.f32 %v2921, %v3419
        %3421 = vmatprep.mubr.bf16.mxu0 %v2990
        %3422 = vmatmul.mubr.bf16.gmra.mrb[0].mxu0 %v2989
        %v3423 = vpop.f32.mrb[0].mxu0
        %v3424 = vadd.f32 %v2917, %v3423
        %v3425 = vpop.f32.mrb[0].mxu0
        %v3426 = vadd.f32 %v2921, %v3425
        %v3427 = vpop.f32.mrb[0].mxu0
        %v3428 = vadd.f32 %v2917, %v3427
        %v3429 = vpop.f32.mrb[0].mxu0
        %v3430 = vadd.f32 %v2921, %v3429
        %3431 = vmatprep.mubr.bf16.mxu0 %v2992
        %3432 = vmatmul.mubr.bf16.gmra.mrb[0].mxu0 %v2991
        %v3433 = vpop.f32.mrb[0].mxu0
        %v3434 = vadd.f32 %v2917, %v3433
        %v3435 = vpop.f32.mrb[0].mxu0
        %v3436 = vadd.f32 %v2921, %v3435
        %v3437 = vpop.f32.mrb[0].mxu0
        %v3438 = vadd.f32 %v2917, %v3437
        %v3439 = vpop.f32.mrb[0].mxu0
        %v3440 = vadd.f32 %v2921, %v3439
        %3441 = vdwg.mxu0
        %3442 = vmatprep.subr.bf16.mxu0 %v3204
        %3443 = vmatpush1.bf16.msra.mxu0 %v3203
        %3444 = vmatprep.subr.bf16.mxu0 %v3208
        %3445 = vmatpush1.bf16.msra.mxu0 %v3207
        %3446 = vmatprep.subr.bf16.mxu0 %v3212
        %3447 = vmatpush1.bf16.msra.mxu0 %v3211
        %3448 = vmatprep.subr.bf16.mxu0 %v3216
        %3449 = vmatpush1.bf16.msra.mxu0 %v3215
        %3450 = vmatprep.subr.bf16.mxu0 %v3220
        %3451 = vmatpush1.bf16.msra.mxu0 %v3219
        %3452 = vmatprep.subr.bf16.mxu0 %v3224
        %3453 = vmatpush1.bf16.msra.mxu0 %v3223
        %3454 = vmatprep.subr.bf16.mxu0 %v3228
        %3455 = vmatpush1.bf16.msra.mxu0 %v3227
        %3456 = vmatprep.subr.bf16.mxu0 %v3232
        %3457 = vmatpush1.bf16.msra.mxu0 %v3231
        %3458 = vmatprep.subr.bf16.mxu0 %v3236
        %3459 = vmatpush1.bf16.msra.mxu0 %v3235
        %3460 = vmatprep.subr.bf16.mxu0 %v3240
        %3461 = vmatpush1.bf16.msra.mxu0 %v3239
        %3462 = vmatprep.subr.bf16.mxu0 %v3244
        %3463 = vmatpush1.bf16.msra.mxu0 %v3243
        %3464 = vmatprep.subr.bf16.mxu0 %v3248
        %3465 = vmatpush1.bf16.msra.mxu0 %v3247
        %3466 = vmatprep.subr.bf16.mxu0 %v3252
        %3467 = vmatpush1.bf16.msra.mxu0 %v3251
        %3468 = vmatprep.subr.bf16.mxu0 %v3256
        %3469 = vmatpush1.bf16.msra.mxu0 %v3255
        %3470 = vmatprep.subr.bf16.mxu0 %v3260
        %3471 = vmatpush1.bf16.msra.mxu0 %v3259
        %3472 = vmatprep.subr.bf16.mxu0 %v3264
        %3473 = vmatpush1.bf16.msra.mxu0 %v3263
        %3474 = vmatprep.mubr.bf16.mxu0 %v2978
        %3475 = vmatmul.mubr.bf16.gmra.mrb[0].mxu0 %v2977
        %v3476 = vpop.f32.mrb[0].mxu0
        %v3477 = vadd.f32 %v2925, %v3476
        %v3478 = vpop.f32.mrb[0].mxu0
        %v3479 = vpop.f32.mrb[0].mxu0
        %v3480 = vadd.f32 %v2925, %v3479
        %v3481 = vpop.f32.mrb[0].mxu0
        %3482 = vmatprep.mubr.bf16.mxu0 %v2980
        %3483 = vmatmul.mubr.bf16.gmra.mrb[0].mxu0 %v2979
        %v3484 = vpop.f32.mrb[0].mxu0
        %v3485 = vadd.f32 %v2925, %v3484
        %v3486 = vpop.f32.mrb[0].mxu0
        %v3487 = vpop.f32.mrb[0].mxu0
        %v3488 = vadd.f32 %v2925, %v3487
        %v3489 = vpop.f32.mrb[0].mxu0
        %3490 = vmatprep.mubr.bf16.mxu0 %v2982
        %3491 = vmatmul.mubr.bf16.gmra.mrb[0].mxu0 %v2981
        %v3492 = vpop.f32.mrb[0].mxu0
        %v3493 = vadd.f32 %v2925, %v3492
        %v3494 = vpop.f32.mrb[0].mxu0
        %v3495 = vpop.f32.mrb[0].mxu0
        %v3496 = vadd.f32 %v2925, %v3495
        %v3497 = vpop.f32.mrb[0].mxu0
        %3498 = vmatprep.mubr.bf16.mxu0 %v2984
        %3499 = vmatmul.mubr.bf16.gmra.mrb[0].mxu0 %v2983
        %v3500 = vpop.f32.mrb[0].mxu0
        %v3501 = vadd.f32 %v2925, %v3500
        %v3502 = vpop.f32.mrb[0].mxu0
        %v3503 = vpop.f32.mrb[0].mxu0
        %v3504 = vadd.f32 %v2925, %v3503
        %v3505 = vpop.f32.mrb[0].mxu0
        %3506 = vmatprep.mubr.bf16.mxu0 %v2986
        %3507 = vmatmul.mubr.bf16.gmra.mrb[0].mxu0 %v2985
        %v3508 = vpop.f32.mrb[0].mxu0
        %v3509 = vadd.f32 %v2925, %v3508
        %v3510 = vpop.f32.mrb[0].mxu0
        %v3511 = vpop.f32.mrb[0].mxu0
        %v3512 = vadd.f32 %v2925, %v3511
        %v3513 = vpop.f32.mrb[0].mxu0
        %3514 = vmatprep.mubr.bf16.mxu0 %v2988
        %3515 = vmatmul.mubr.bf16.gmra.mrb[0].mxu0 %v2987
        %v3516 = vpop.f32.mrb[0].mxu0
        %v3517 = vadd.f32 %v2925, %v3516
        %v3518 = vpop.f32.mrb[0].mxu0
        %v3519 = vpop.f32.mrb[0].mxu0
        %v3520 = vadd.f32 %v2925, %v3519
        %v3521 = vpop.f32.mrb[0].mxu0
        %3522 = vmatprep.mubr.bf16.mxu0 %v2990
        %3523 = vmatmul.mubr.bf16.gmra.mrb[0].mxu0 %v2989
        %v3524 = vpop.f32.mrb[0].mxu0
        %v3525 = vadd.f32 %v2925, %v3524
        %v3526 = vpop.f32.mrb[0].mxu0
        %v3527 = vpop.f32.mrb[0].mxu0
        %v3528 = vadd.f32 %v2925, %v3527
        %v3529 = vpop.f32.mrb[0].mxu0
        %3530 = vmatprep.mubr.bf16.mxu0 %v2992
        %3531 = vmatmul.mubr.bf16.gmra.mrb[0].mxu0 %v2991
        %v3532 = vpop.f32.mrb[0].mxu0
        %v3533 = vadd.f32 %v2925, %v3532
        %v3534 = vpop.f32.mrb[0].mxu0
        %v3535 = vpop.f32.mrb[0].mxu0
        %v3536 = vadd.f32 %v2925, %v3535
        %v3537 = vpop.f32.mrb[0].mxu0
        %3538 = vdwg.mxu0
        %v3539 = vld [vmem:[#allocation4 + $0x4] sm:$0x1]
        %v3541 = vlaneseq
        %v3542 = vshrl.u32 %v3541, 7
        %v3543 = vsub.s32 0, %v3542
        %v3544 = vrot.slane %v3539, %v3543
        %v3546 = vadd.f32 %v3477, %v3544
        %v3547 = vadd.f32 %v3480, %v3544
        %v3548 = vadd.f32 %v3485, %v3544
        %v3549 = vadd.f32 %v3488, %v3544
        %v3550 = vadd.f32 %v3493, %v3544
        %v3551 = vadd.f32 %v3496, %v3544
        %v3552 = vadd.f32 %v3501, %v3544
        %v3553 = vadd.f32 %v3504, %v3544
        %v3554 = vadd.f32 %v3509, %v3544
        %v3555 = vadd.f32 %v3512, %v3544
        %v3556 = vadd.f32 %v3517, %v3544
        %v3557 = vadd.f32 %v3520, %v3544
        %v3558 = vadd.f32 %v3525, %v3544
        %v3559 = vadd.f32 %v3528, %v3544
        %v3560 = vadd.f32 %v3533, %v3544
        %v3561 = vadd.f32 %v3536, %v3544
        %v3562 = vxor.u32 %v3546, 2147483648
        %v3563 = vxor.u32 %v3547, 2147483648
        %v3564 = vxor.u32 %v3548, 2147483648
        %v3565 = vxor.u32 %v3549, 2147483648
        %v3566 = vxor.u32 %v3550, 2147483648
        %v3567 = vxor.u32 %v3551, 2147483648
        %v3568 = vxor.u32 %v3552, 2147483648
        %v3569 = vxor.u32 %v3553, 2147483648
        %v3570 = vxor.u32 %v3554, 2147483648
        %v3571 = vxor.u32 %v3555, 2147483648
        %v3572 = vxor.u32 %v3556, 2147483648
        %v3573 = vxor.u32 %v3557, 2147483648
        %v3574 = vxor.u32 %v3558, 2147483648
        %v3575 = vxor.u32 %v3559, 2147483648
        %v3576 = vxor.u32 %v3560, 2147483648
        %v3577 = vxor.u32 %v3561, 2147483648
        %v3578 = vmul.f32 %v3562, 1.442695
        %v3579 = vpow.pop %v3578
        %v3580 = vmul.f32 %v3563, 1.442695
        %v3581 = vpow.pop %v3580
        %v3582 = vmul.f32 %v3564, 1.442695
        %v3583 = vpow.pop %v3582
        %v3584 = vmul.f32 %v3565, 1.442695
        %v3585 = vpow.pop %v3584
        %v3586 = vmul.f32 %v3566, 1.442695
        %v3587 = vpow.pop %v3586
        %v3588 = vmul.f32 %v3567, 1.442695
        %v3589 = vpow.pop %v3588
        %v3590 = vmul.f32 %v3568, 1.442695
        %v3591 = vpow.pop %v3590
        %v3592 = vmul.f32 %v3569, 1.442695
        %v3593 = vpow.pop %v3592
        %v3594 = vmul.f32 %v3570, 1.442695
        %v3595 = vpow.pop %v3594
        %v3596 = vmul.f32 %v3571, 1.442695
        %v3597 = vpow.pop %v3596
        %v3598 = vmul.f32 %v3572, 1.442695
        %v3599 = vpow.pop %v3598
        %v3600 = vmul.f32 %v3573, 1.442695
        %v3601 = vpow.pop %v3600
        %v3602 = vmul.f32 %v3574, 1.442695
        %v3603 = vpow.pop %v3602
        %v3604 = vmul.f32 %v3575, 1.442695
        %v3605 = vpow.pop %v3604
        %v3606 = vmul.f32 %v3576, 1.442695
        %v3607 = vpow.pop %v3606
        %v3608 = vmul.f32 %v3577, 1.442695
        %v3609 = vpow.pop %v3608
        %v3610 = vadd.f32 %v3579, 1.0
        %v3611 = vadd.f32 %v3581, 1.0
        %v3612 = vadd.f32 %v3583, 1.0
        %v3613 = vadd.f32 %v3585, 1.0
        %v3614 = vadd.f32 %v3587, 1.0
        %v3615 = vadd.f32 %v3589, 1.0
        %v3616 = vadd.f32 %v3591, 1.0
        %v3617 = vadd.f32 %v3593, 1.0
        %v3618 = vadd.f32 %v3595, 1.0
        %v3619 = vadd.f32 %v3597, 1.0
        %v3620 = vadd.f32 %v3599, 1.0
        %v3621 = vadd.f32 %v3601, 1.0
        %v3622 = vadd.f32 %v3603, 1.0
        %v3623 = vadd.f32 %v3605, 1.0
        %v3624 = vadd.f32 %v3607, 1.0
        %v3625 = vadd.f32 %v3609, 1.0
        %v3626 = vrcp.pop %v3610
        %v3627 = vmul.f32 1.0, %v3626
        %v3628 = vrcp.pop %v3611
        %v3629 = vmul.f32 1.0, %v3628
        %v3630 = vrcp.pop %v3612
        %v3631 = vmul.f32 1.0, %v3630
        %v3632 = vrcp.pop %v3613
        %v3633 = vmul.f32 1.0, %v3632
        %v3634 = vrcp.pop %v3614
        %v3635 = vmul.f32 1.0, %v3634
        %v3636 = vrcp.pop %v3615
        %v3637 = vmul.f32 1.0, %v3636
        %v3638 = vrcp.pop %v3616
        %v3639 = vmul.f32 1.0, %v3638
        %v3640 = vrcp.pop %v3617
        %v3641 = vmul.f32 1.0, %v3640
        %v3642 = vrcp.pop %v3618
        %v3643 = vmul.f32 1.0, %v3642
        %v3644 = vrcp.pop %v3619
        %v3645 = vmul.f32 1.0, %v3644
        %v3646 = vrcp.pop %v3620
        %v3647 = vmul.f32 1.0, %v3646
        %v3648 = vrcp.pop %v3621
        %v3649 = vmul.f32 1.0, %v3648
        %v3650 = vrcp.pop %v3622
        %v3651 = vmul.f32 1.0, %v3650
        %v3652 = vrcp.pop %v3623
        %v3653 = vmul.f32 1.0, %v3652
        %v3654 = vrcp.pop %v3624
        %v3655 = vmul.f32 1.0, %v3654
        %v3656 = vrcp.pop %v3625
        %v3657 = vmul.f32 1.0, %v3656
        %v3658 = vsub.f32 1.0, %v3627
        %v3659 = vsub.f32 1.0, %v3629
        %v3660 = vsub.f32 1.0, %v3631
        %v3661 = vsub.f32 1.0, %v3633
        %v3662 = vsub.f32 1.0, %v3635
        %v3663 = vsub.f32 1.0, %v3637
        %v3664 = vsub.f32 1.0, %v3639
        %v3665 = vsub.f32 1.0, %v3641
        %v3666 = vsub.f32 1.0, %v3643
        %v3667 = vsub.f32 1.0, %v3645
        %v3668 = vsub.f32 1.0, %v3647
        %v3669 = vsub.f32 1.0, %v3649
        %v3670 = vsub.f32 1.0, %v3651
        %v3671 = vsub.f32 1.0, %v3653
        %v3672 = vsub.f32 1.0, %v3655
        %v3673 = vsub.f32 1.0, %v3657
        %3675 = vset.pattern.permute.xlu0 0
        %3676 = vperm.xlu0 %3675, %v3658
        %v3677 = vpop.permute.xlu0 %3676
        %3680 = vset.pattern.permute.xlu0 0
        %3681 = vperm.xlu0 %3680, %v3659
        %v3682 = vpop.permute.xlu0 %3681
        %3685 = vset.pattern.permute.xlu0 0
        %3686 = vperm.xlu0 %3685, %v3660
        %v3687 = vpop.permute.xlu0 %3686
        %3690 = vset.pattern.permute.xlu0 0
        %3691 = vperm.xlu0 %3690, %v3661
        %v3692 = vpop.permute.xlu0 %3691
        %3695 = vset.pattern.permute.xlu0 0
        %3696 = vperm.xlu0 %3695, %v3662
        %v3697 = vpop.permute.xlu0 %3696
        %3700 = vset.pattern.permute.xlu0 0
        %3701 = vperm.xlu0 %3700, %v3663
        %v3702 = vpop.permute.xlu0 %3701
        %3705 = vset.pattern.permute.xlu0 0
        %3706 = vperm.xlu0 %3705, %v3664
        %v3707 = vpop.permute.xlu0 %3706
        %3710 = vset.pattern.permute.xlu0 0
        %3711 = vperm.xlu0 %3710, %v3665
        %v3712 = vpop.permute.xlu0 %3711
        %3715 = vset.pattern.permute.xlu0 0
        %3716 = vperm.xlu0 %3715, %v3666
        %v3717 = vpop.permute.xlu0 %3716
        %3720 = vset.pattern.permute.xlu0 0
        %3721 = vperm.xlu0 %3720, %v3667
        %v3722 = vpop.permute.xlu0 %3721
        %3725 = vset.pattern.permute.xlu0 0
        %3726 = vperm.xlu0 %3725, %v3668
        %v3727 = vpop.permute.xlu0 %3726
        %3730 = vset.pattern.permute.xlu0 0
        %3731 = vperm.xlu0 %3730, %v3669
        %v3732 = vpop.permute.xlu0 %3731
        %3735 = vset.pattern.permute.xlu0 0
        %3736 = vperm.xlu0 %3735, %v3670
        %v3737 = vpop.permute.xlu0 %3736
        %3740 = vset.pattern.permute.xlu0 0
        %3741 = vperm.xlu0 %3740, %v3671
        %v3742 = vpop.permute.xlu0 %3741
        %3745 = vset.pattern.permute.xlu0 0
        %3746 = vperm.xlu0 %3745, %v3672
        %v3747 = vpop.permute.xlu0 %3746
        %3750 = vset.pattern.permute.xlu0 0
        %3751 = vperm.xlu0 %3750, %v3673
        %v3752 = vpop.permute.xlu0 %3751
        %v3754 = vmul.f32 %v3677, %v3364
        %v3755 = vmul.f32 %v3677, %v3366
        %v3756 = vmul.f32 %v3682, %v3368
        %v3757 = vmul.f32 %v3682, %v3370
        %v3758 = vmul.f32 %v3687, %v3374
        %v3759 = vmul.f32 %v3687, %v3376
        %v3760 = vmul.f32 %v3692, %v3378
        %v3761 = vmul.f32 %v3692, %v3380
        %v3762 = vmul.f32 %v3697, %v3384
        %v3763 = vmul.f32 %v3697, %v3386
        %v3764 = vmul.f32 %v3702, %v3388
        %v3765 = vmul.f32 %v3702, %v3390
        %v3766 = vmul.f32 %v3707, %v3394
        %v3767 = vmul.f32 %v3707, %v3396
        %v3768 = vmul.f32 %v3712, %v3398
        %v3769 = vmul.f32 %v3712, %v3400
        %v3770 = vmul.f32 %v3717, %v3404
        %v3771 = vmul.f32 %v3717, %v3406
        %v3772 = vmul.f32 %v3722, %v3408
        %v3773 = vmul.f32 %v3722, %v3410
        %v3774 = vmul.f32 %v3727, %v3414
        %v3775 = vmul.f32 %v3727, %v3416
        %v3776 = vmul.f32 %v3732, %v3418
        %v3777 = vmul.f32 %v3732, %v3420
        %v3778 = vmul.f32 %v3737, %v3424
        %v3779 = vmul.f32 %v3737, %v3426
        %v3780 = vmul.f32 %v3742, %v3428
        %v3781 = vmul.f32 %v3742, %v3430
        %v3782 = vmul.f32 %v3747, %v3434
        %v3783 = vmul.f32 %v3747, %v3436
        %v3784 = vmul.f32 %v3752, %v3438
        %v3785 = vmul.f32 %v3752, %v3440
        %v3786 = vld [vmem:[#allocation4] sm:$0x3]
        %3788 = vset.pattern.permute.xlu0 0
        %3789 = vperm.xlu0 %3788, %v3627
        %v3790 = vpop.permute.xlu0 %3789
        %3793 = vset.pattern.permute.xlu0 0
        %3794 = vperm.xlu0 %3793, %v3629
        %v3795 = vpop.permute.xlu0 %3794
        %3798 = vset.pattern.permute.xlu0 0
        %3799 = vperm.xlu0 %3798, %v3631
        %v3800 = vpop.permute.xlu0 %3799
        %3803 = vset.pattern.permute.xlu0 0
        %3804 = vperm.xlu0 %3803, %v3633
        %v3805 = vpop.permute.xlu0 %3804
        %3808 = vset.pattern.permute.xlu0 0
        %3809 = vperm.xlu0 %3808, %v3635
        %v3810 = vpop.permute.xlu0 %3809
        %3813 = vset.pattern.permute.xlu0 0
        %3814 = vperm.xlu0 %3813, %v3637
        %v3815 = vpop.permute.xlu0 %3814
        %3818 = vset.pattern.permute.xlu0 0
        %3819 = vperm.xlu0 %3818, %v3639
        %v3820 = vpop.permute.xlu0 %3819
        %3823 = vset.pattern.permute.xlu0 0
        %3824 = vperm.xlu0 %3823, %v3641
        %v3825 = vpop.permute.xlu0 %3824
        %3828 = vset.pattern.permute.xlu0 0
        %3829 = vperm.xlu0 %3828, %v3643
        %v3830 = vpop.permute.xlu0 %3829
        %3833 = vset.pattern.permute.xlu0 0
        %3834 = vperm.xlu0 %3833, %v3645
        %v3835 = vpop.permute.xlu0 %3834
        %3838 = vset.pattern.permute.xlu0 0
        %3839 = vperm.xlu0 %3838, %v3647
        %v3840 = vpop.permute.xlu0 %3839
        %3843 = vset.pattern.permute.xlu0 0
        %3844 = vperm.xlu0 %3843, %v3649
        %v3845 = vpop.permute.xlu0 %3844
        %3848 = vset.pattern.permute.xlu0 0
        %3849 = vperm.xlu0 %3848, %v3651
        %v3850 = vpop.permute.xlu0 %3849
        %3853 = vset.pattern.permute.xlu0 0
        %3854 = vperm.xlu0 %3853, %v3653
        %v3855 = vpop.permute.xlu0 %3854
        %3858 = vset.pattern.permute.xlu0 0
        %3859 = vperm.xlu0 %3858, %v3655
        %v3860 = vpop.permute.xlu0 %3859
        %3863 = vset.pattern.permute.xlu0 0
        %3864 = vperm.xlu0 %3863, %v3657
        %v3865 = vpop.permute.xlu0 %3864
        %v3868 = vlaneseq
        %v3869 = vshrl.u32 %v3868, 7
        %v3870 = vsub.s32 0, %v3869
        %v3871 = vrot.slane %v3786, %v3870
        %v3872 = vlaneseq
        %v3873 = vshrl.u32 %v3872, 7
        %v3874 = vsub.s32 1, %v3873
        %v3875 = vrot.slane %v3786, %v3874
        %v3878 = vmul.f32 %v3790, %v3871
        %v3879 = vmul.f32 %v3790, %v3875
        %v3880 = vmul.f32 %v3795, %v3871
        %v3881 = vmul.f32 %v3795, %v3875
        %v3882 = vmul.f32 %v3800, %v3871
        %v3883 = vmul.f32 %v3800, %v3875
        %v3884 = vmul.f32 %v3805, %v3871
        %v3885 = vmul.f32 %v3805, %v3875
        %v3886 = vmul.f32 %v3810, %v3871
        %v3887 = vmul.f32 %v3810, %v3875
        %v3888 = vmul.f32 %v3815, %v3871
        %v3889 = vmul.f32 %v3815, %v3875
        %v3890 = vmul.f32 %v3820, %v3871
        %v3891 = vmul.f32 %v3820, %v3875
        %v3892 = vmul.f32 %v3825, %v3871
        %v3893 = vmul.f32 %v3825, %v3875
        %v3894 = vmul.f32 %v3830, %v3871
        %v3895 = vmul.f32 %v3830, %v3875
        %v3896 = vmul.f32 %v3835, %v3871
        %v3897 = vmul.f32 %v3835, %v3875
        %v3898 = vmul.f32 %v3840, %v3871
        %v3899 = vmul.f32 %v3840, %v3875
        %v3900 = vmul.f32 %v3845, %v3871
        %v3901 = vmul.f32 %v3845, %v3875
        %v3902 = vmul.f32 %v3850, %v3871
        %v3903 = vmul.f32 %v3850, %v3875
        %v3904 = vmul.f32 %v3855, %v3871
        %v3905 = vmul.f32 %v3855, %v3875
        %v3906 = vmul.f32 %v3860, %v3871
        %v3907 = vmul.f32 %v3860, %v3875
        %v3908 = vmul.f32 %v3865, %v3871
        %v3909 = vmul.f32 %v3865, %v3875
        %v3910 = vadd.f32 %v3754, %v3878
        %v3911 = vadd.f32 %v3755, %v3879
        %v3912 = vadd.f32 %v3756, %v3880
        %v3913 = vadd.f32 %v3757, %v3881
        %v3914 = vadd.f32 %v3758, %v3882
        %v3915 = vadd.f32 %v3759, %v3883
        %v3916 = vadd.f32 %v3760, %v3884
        %v3917 = vadd.f32 %v3761, %v3885
        %v3918 = vadd.f32 %v3762, %v3886
        %v3919 = vadd.f32 %v3763, %v3887
        %v3920 = vadd.f32 %v3764, %v3888
        %v3921 = vadd.f32 %v3765, %v3889
        %v3922 = vadd.f32 %v3766, %v3890
        %v3923 = vadd.f32 %v3767, %v3891
        %v3924 = vadd.f32 %v3768, %v3892
        %v3925 = vadd.f32 %v3769, %v3893
        %v3926 = vadd.f32 %v3770, %v3894
        %v3927 = vadd.f32 %v3771, %v3895
        %v3928 = vadd.f32 %v3772, %v3896
        %v3929 = vadd.f32 %v3773, %v3897
        %v3930 = vadd.f32 %v3774, %v3898
        %v3931 = vadd.f32 %v3775, %v3899
        %v3932 = vadd.f32 %v3776, %v3900
        %v3933 = vadd.f32 %v3777, %v3901
        %v3934 = vadd.f32 %v3778, %v3902
        %v3935 = vadd.f32 %v3779, %v3903
        %v3936 = vadd.f32 %v3780, %v3904
        %v3937 = vadd.f32 %v3781, %v3905
        %v3938 = vadd.f32 %v3782, %v3906
        %v3939 = vadd.f32 %v3783, %v3907
        %v3940 = vadd.f32 %v3784, %v3908
        %v3941 = vadd.f32 %v3785, %v3909
        %v3942 = vpack.c.bf16 %v3912, %v3910
        %v3943 = vpack.c.bf16 %v3913, %v3911
        %v3944 = vpack.c.bf16 %v3916, %v3914
        %v3945 = vpack.c.bf16 %v3917, %v3915
        %v3946 = vpack.c.bf16 %v3920, %v3918
        %v3947 = vpack.c.bf16 %v3921, %v3919
        %v3948 = vpack.c.bf16 %v3924, %v3922
        %v3949 = vpack.c.bf16 %v3925, %v3923
        %v3950 = vpack.c.bf16 %v3928, %v3926
        %v3951 = vpack.c.bf16 %v3929, %v3927
        %v3952 = vpack.c.bf16 %v3932, %v3930
        %v3953 = vpack.c.bf16 %v3933, %v3931
        %v3954 = vpack.c.bf16 %v3936, %v3934
        %v3955 = vpack.c.bf16 %v3937, %v3935
        %v3956 = vpack.c.bf16 %v3940, %v3938
        %v3957 = vpack.c.bf16 %v3941, %v3939
        %v3958 = vld [vmem:[#allocation2] sm:$0xff]
        %v3959 = vld [vmem:[#allocation2 + $0x8] sm:$0xff]
        %v3960 = vld [vmem:[#allocation2 + $0x10] sm:$0xff]
        %v3961 = vld [vmem:[#allocation2 + $0x18] sm:$0xff]
        %v3962 = vld [vmem:[#allocation2 + $0x20] sm:$0xff]
        %v3963 = vld [vmem:[#allocation2 + $0x28] sm:$0xff]
        %v3964 = vld [vmem:[#allocation2 + $0x30] sm:$0xff]
        %v3965 = vld [vmem:[#allocation2 + $0x38] sm:$0xff]
        %v3966 = vld [vmem:[#allocation2 + $0x40] sm:$0xff]
        %v3967 = vld [vmem:[#allocation2 + $0x48] sm:$0xff]
        %v3968 = vld [vmem:[#allocation2 + $0x50] sm:$0xff]
        %v3969 = vld [vmem:[#allocation2 + $0x58] sm:$0xff]
        %v3970 = vld [vmem:[#allocation2 + $0x60] sm:$0xff]
        %v3971 = vld [vmem:[#allocation2 + $0x68] sm:$0xff]
        %v3972 = vld [vmem:[#allocation2 + $0x70] sm:$0xff]
        %v3973 = vld [vmem:[#allocation2 + $0x78] sm:$0xff]
        %3974 = vmatprep.subr.bf16.mxu0 %v3959
        %3975 = vmatpush1.bf16.xpose.msra.mxu0 %v3958
        %3976 = vmatprep.subr.bf16.mxu0 %v3961
        %3977 = vmatpush1.bf16.xpose.msra.mxu0 %v3960
        %3978 = vmatprep.subr.bf16.mxu0 %v3963
        %3979 = vmatpush1.bf16.xpose.msra.mxu0 %v3962
        %3980 = vmatprep.subr.bf16.mxu0 %v3965
        %3981 = vmatpush1.bf16.xpose.msra.mxu0 %v3964
        %3982 = vmatprep.subr.bf16.mxu0 %v3967
        %3983 = vmatpush1.bf16.xpose.msra.mxu0 %v3966
        %3984 = vmatprep.subr.bf16.mxu0 %v3969
        %3985 = vmatpush1.bf16.xpose.msra.mxu0 %v3968
        %3986 = vmatprep.subr.bf16.mxu0 %v3971
        %3987 = vmatpush1.bf16.xpose.msra.mxu0 %v3970
        %3988 = vmatprep.subr.bf16.mxu0 %v3973
        %3989 = vmatpush1.bf16.xpose.msra.mxu0 %v3972
        %3990 = vmatprep.subr.bf16.mxu0 0
        %3991 = vmatpush1.bf16.xpose.msra.mxu0 0
        %3992 = vmatprep.subr.bf16.mxu0 0
        %3993 = vmatpush1.bf16.xpose.msra.mxu0 0
        %3994 = vmatprep.subr.bf16.mxu0 0
        %3995 = vmatpush1.bf16.xpose.msra.mxu0 0
        %3996 = vmatprep.subr.bf16.mxu0 0
        %3997 = vmatpush1.bf16.xpose.msra.mxu0 0
        %3998 = vmatprep.subr.bf16.mxu0 0
        %3999 = vmatpush1.bf16.xpose.msra.mxu0 0
        %4000 = vmatprep.subr.bf16.mxu0 0
        %4001 = vmatpush1.bf16.xpose.msra.mxu0 0
        %4002 = vmatprep.subr.bf16.mxu0 0
        %4003 = vmatpush1.bf16.xpose.msra.mxu0 0
        %4004 = vmatprep.subr.bf16.mxu0 0
        %4005 = vmatpush1.bf16.xpose.msra.mxu0 0
        %4006 = vmatprep.mubr.bf16.mxu0 %v3943
        %4007 = vmatmul.mubr.bf16.gmra.mrb[0].mxu0 %v3942
        %v4008 = vpop.f32.mrb[0].mxu0
        %v4009 = vadd.f32 0.0, %v4008
        %v4010 = vpop.f32.mrb[0].mxu0
        %v4011 = vpop.f32.mrb[0].mxu0
        %v4012 = vadd.f32 0.0, %v4011
        %v4013 = vpop.f32.mrb[0].mxu0
        %4014 = vmatprep.mubr.bf16.mxu0 %v3945
        %4015 = vmatmul.mubr.bf16.gmra.mrb[0].mxu0 %v3944
        %v4016 = vpop.f32.mrb[0].mxu0
        %v4017 = vadd.f32 0.0, %v4016
        %v4018 = vpop.f32.mrb[0].mxu0
        %v4019 = vpop.f32.mrb[0].mxu0
        %v4020 = vadd.f32 0.0, %v4019
        %v4021 = vpop.f32.mrb[0].mxu0
        %4022 = vmatprep.mubr.bf16.mxu0 %v3947
        %4023 = vmatmul.mubr.bf16.gmra.mrb[0].mxu0 %v3946
        %v4024 = vpop.f32.mrb[0].mxu0
        %v4025 = vadd.f32 0.0, %v4024
        %v4026 = vpop.f32.mrb[0].mxu0
        %v4027 = vpop.f32.mrb[0].mxu0
        %v4028 = vadd.f32 0.0, %v4027
        %v4029 = vpop.f32.mrb[0].mxu0
        %4030 = vmatprep.mubr.bf16.mxu0 %v3949
        %4031 = vmatmul.mubr.bf16.gmra.mrb[0].mxu0 %v3948
        %v4032 = vpop.f32.mrb[0].mxu0
        %v4033 = vadd.f32 0.0, %v4032
        %v4034 = vpop.f32.mrb[0].mxu0
        %v4035 = vpop.f32.mrb[0].mxu0
        %v4036 = vadd.f32 0.0, %v4035
        %v4037 = vpop.f32.mrb[0].mxu0
        %4038 = vmatprep.mubr.bf16.mxu0 %v3951
        %4039 = vmatmul.mubr.bf16.gmra.mrb[0].mxu0 %v3950
        %v4040 = vpop.f32.mrb[0].mxu0
        %v4041 = vadd.f32 0.0, %v4040
        %v4042 = vpop.f32.mrb[0].mxu0
        %v4043 = vpop.f32.mrb[0].mxu0
        %v4044 = vadd.f32 0.0, %v4043
        %v4045 = vpop.f32.mrb[0].mxu0
        %4046 = vmatprep.mubr.bf16.mxu0 %v3953
        %4047 = vmatmul.mubr.bf16.gmra.mrb[0].mxu0 %v3952
        %v4048 = vpop.f32.mrb[0].mxu0
        %v4049 = vadd.f32 0.0, %v4048
        %v4050 = vpop.f32.mrb[0].mxu0
        %v4051 = vpop.f32.mrb[0].mxu0
        %v4052 = vadd.f32 0.0, %v4051
        %v4053 = vpop.f32.mrb[0].mxu0
        %4054 = vmatprep.mubr.bf16.mxu0 %v3955
        %4055 = vmatmul.mubr.bf16.gmra.mrb[0].mxu0 %v3954
        %v4056 = vpop.f32.mrb[0].mxu0
        %v4057 = vadd.f32 0.0, %v4056
        %v4058 = vpop.f32.mrb[0].mxu0
        %v4059 = vpop.f32.mrb[0].mxu0
        %v4060 = vadd.f32 0.0, %v4059
        %v4061 = vpop.f32.mrb[0].mxu0
        %4062 = vmatprep.mubr.bf16.mxu0 %v3957
        %4063 = vmatmul.mubr.bf16.gmra.mrb[0].mxu0 %v3956
        %v4064 = vpop.f32.mrb[0].mxu0
        %v4065 = vadd.f32 0.0, %v4064
        %v4066 = vpop.f32.mrb[0].mxu0
        %v4067 = vpop.f32.mrb[0].mxu0
        %v4068 = vadd.f32 0.0, %v4067
        %v4069 = vpop.f32.mrb[0].mxu0
        %4070 = vdwg.mxu0
        %4071 = vst [vmem:[%s431] sm:$0xff] %v4009
        %4072 = vst [vmem:[%s431 + $0x8] sm:$0xff] %v4012
        %4073 = vst [vmem:[%s431 + $0x10] sm:$0xff] %v4017
        %4074 = vst [vmem:[%s431 + $0x18] sm:$0xff] %v4020
        %4075 = vst [vmem:[%s431 + $0x20] sm:$0xff] %v4025
        %4076 = vst [vmem:[%s431 + $0x28] sm:$0xff] %v4028
        %4077 = vst [vmem:[%s431 + $0x30] sm:$0xff] %v4033
        %4078 = vst [vmem:[%s431 + $0x38] sm:$0xff] %v4036
        %4079 = vst [vmem:[%s431 + $0x40] sm:$0xff] %v4041
        %4080 = vst [vmem:[%s431 + $0x48] sm:$0xff] %v4044
        %4081 = vst [vmem:[%s431 + $0x50] sm:$0xff] %v4049
        %4082 = vst [vmem:[%s431 + $0x58] sm:$0xff] %v4052
        %4083 = vst [vmem:[%s431 + $0x60] sm:$0xff] %v4057
        %4084 = vst [vmem:[%s431 + $0x68] sm:$0xff] %v4060
        %4085 = vst [vmem:[%s431 + $0x70] sm:$0xff] %v4065
        %4086 = vst [vmem:[%s431 + $0x78] sm:$0xff] %v4068
        %v4087 = vld [vmem:[#allocation16] sm:$0x1]
        %v4089 = vlaneseq
        %v4090 = vshrl.u32 %v4089, 7
        %v4091 = vsub.s32 0, %v4090
        %v4092 = vrot.slane %v4087, %v4091
        %v4094 = vadd.f32 %v4009, %v4092
        %v4095 = vadd.f32 %v4012, %v4092
        %v4096 = vadd.f32 %v4017, %v4092
        %v4097 = vadd.f32 %v4020, %v4092
        %v4098 = vadd.f32 %v4025, %v4092
        %v4099 = vadd.f32 %v4028, %v4092
        %v4100 = vadd.f32 %v4033, %v4092
        %v4101 = vadd.f32 %v4036, %v4092
        %v4102 = vadd.f32 %v4041, %v4092
        %v4103 = vadd.f32 %v4044, %v4092
        %v4104 = vadd.f32 %v4049, %v4092
        %v4105 = vadd.f32 %v4052, %v4092
        %v4106 = vadd.f32 %v4057, %v4092
        %v4107 = vadd.f32 %v4060, %v4092
        %v4108 = vadd.f32 %v4065, %v4092
        %v4109 = vadd.f32 %v4068, %v4092
        %4110 = vmax.xlane.f32.xlu0 %v4094
        %v4111 = vpop.xlane.xlu0 %4110
        %4112 = vmax.xlane.f32.xlu0 %v4095
        %v4113 = vpop.xlane.xlu0 %4112
        %4114 = vmax.xlane.f32.xlu0 %v4096
        %v4115 = vpop.xlane.xlu0 %4114
        %4116 = vmax.xlane.f32.xlu0 %v4097
        %v4117 = vpop.xlane.xlu0 %4116
        %4118 = vmax.xlane.f32.xlu0 %v4098
        %v4119 = vpop.xlane.xlu0 %4118
        %4120 = vmax.xlane.f32.xlu0 %v4099
        %v4121 = vpop.xlane.xlu0 %4120
        %4122 = vmax.xlane.f32.xlu0 %v4100
        %v4123 = vpop.xlane.xlu0 %4122
        %4124 = vmax.xlane.f32.xlu0 %v4101
        %v4125 = vpop.xlane.xlu0 %4124
        %4126 = vmax.xlane.f32.xlu0 %v4102
        %v4127 = vpop.xlane.xlu0 %4126
        %4128 = vmax.xlane.f32.xlu0 %v4103
        %v4129 = vpop.xlane.xlu0 %4128
        %4130 = vmax.xlane.f32.xlu0 %v4104
        %v4131 = vpop.xlane.xlu0 %4130
        %4132 = vmax.xlane.f32.xlu0 %v4105
        %v4133 = vpop.xlane.xlu0 %4132
        %4134 = vmax.xlane.f32.xlu0 %v4106
        %v4135 = vpop.xlane.xlu0 %4134
        %4136 = vmax.xlane.f32.xlu0 %v4107
        %v4137 = vpop.xlane.xlu0 %4136
        %4138 = vmax.xlane.f32.xlu0 %v4108
        %v4139 = vpop.xlane.xlu0 %4138
        %4140 = vmax.xlane.f32.xlu0 %v4109
        %v4141 = vpop.xlane.xlu0 %4140
        %v4142 = vsub.f32 %v4094, %v4111
        %v4143 = vsub.f32 %v4095, %v4113
        %v4144 = vsub.f32 %v4096, %v4115
        %v4145 = vsub.f32 %v4097, %v4117
        %v4146 = vsub.f32 %v4098, %v4119
        %v4147 = vsub.f32 %v4099, %v4121
        %v4148 = vsub.f32 %v4100, %v4123
        %v4149 = vsub.f32 %v4101, %v4125
        %v4150 = vsub.f32 %v4102, %v4127
        %v4151 = vsub.f32 %v4103, %v4129
        %v4152 = vsub.f32 %v4104, %v4131
        %v4153 = vsub.f32 %v4105, %v4133
        %v4154 = vsub.f32 %v4106, %v4135
        %v4155 = vsub.f32 %v4107, %v4137
        %v4156 = vsub.f32 %v4108, %v4139
        %v4157 = vsub.f32 %v4109, %v4141
        %v4158 = vmul.f32 %v4142, 1.442695
        %v4159 = vpow.pop %v4158
        %v4160 = vmul.f32 %v4143, 1.442695
        %v4161 = vpow.pop %v4160
        %v4162 = vmul.f32 %v4144, 1.442695
        %v4163 = vpow.pop %v4162
        %v4164 = vmul.f32 %v4145, 1.442695
        %v4165 = vpow.pop %v4164
        %v4166 = vmul.f32 %v4146, 1.442695
        %v4167 = vpow.pop %v4166
        %v4168 = vmul.f32 %v4147, 1.442695
        %v4169 = vpow.pop %v4168
        %v4170 = vmul.f32 %v4148, 1.442695
        %v4171 = vpow.pop %v4170
        %v4172 = vmul.f32 %v4149, 1.442695
        %v4173 = vpow.pop %v4172
        %v4174 = vmul.f32 %v4150, 1.442695
        %v4175 = vpow.pop %v4174
        %v4176 = vmul.f32 %v4151, 1.442695
        %v4177 = vpow.pop %v4176
        %v4178 = vmul.f32 %v4152, 1.442695
        %v4179 = vpow.pop %v4178
        %v4180 = vmul.f32 %v4153, 1.442695
        %v4181 = vpow.pop %v4180
        %v4182 = vmul.f32 %v4154, 1.442695
        %v4183 = vpow.pop %v4182
        %v4184 = vmul.f32 %v4155, 1.442695
        %v4185 = vpow.pop %v4184
        %v4186 = vmul.f32 %v4156, 1.442695
        %v4187 = vpow.pop %v4186
        %v4188 = vmul.f32 %v4157, 1.442695
        %v4189 = vpow.pop %v4188
        %4190 = vadd.xlane.f32.xlu0 %v4159
        %v4191 = vpop.xlane.xlu0 %4190
        %4192 = vadd.xlane.f32.xlu0 %v4161
        %v4193 = vpop.xlane.xlu0 %4192
        %4194 = vadd.xlane.f32.xlu0 %v4163
        %v4195 = vpop.xlane.xlu0 %4194
        %4196 = vadd.xlane.f32.xlu0 %v4165
        %v4197 = vpop.xlane.xlu0 %4196
        %4198 = vadd.xlane.f32.xlu0 %v4167
        %v4199 = vpop.xlane.xlu0 %4198
        %4200 = vadd.xlane.f32.xlu0 %v4169
        %v4201 = vpop.xlane.xlu0 %4200
        %4202 = vadd.xlane.f32.xlu0 %v4171
        %v4203 = vpop.xlane.xlu0 %4202
        %4204 = vadd.xlane.f32.xlu0 %v4173
        %v4205 = vpop.xlane.xlu0 %4204
        %4206 = vadd.xlane.f32.xlu0 %v4175
        %v4207 = vpop.xlane.xlu0 %4206
        %4208 = vadd.xlane.f32.xlu0 %v4177
        %v4209 = vpop.xlane.xlu0 %4208
        %4210 = vadd.xlane.f32.xlu0 %v4179
        %v4211 = vpop.xlane.xlu0 %4210
        %4212 = vadd.xlane.f32.xlu0 %v4181
        %v4213 = vpop.xlane.xlu0 %4212
        %4214 = vadd.xlane.f32.xlu0 %v4183
        %v4215 = vpop.xlane.xlu0 %4214
        %4216 = vadd.xlane.f32.xlu0 %v4185
        %v4217 = vpop.xlane.xlu0 %4216
        %4218 = vadd.xlane.f32.xlu0 %v4187
        %v4219 = vpop.xlane.xlu0 %4218
        %4220 = vadd.xlane.f32.xlu0 %v4189
        %v4221 = vpop.xlane.xlu0 %4220
        %v4222 = vrcp.pop %v4191
        %v4223 = vrcp.pop %v4193
        %v4224 = vrcp.pop %v4195
        %v4225 = vrcp.pop %v4197
        %v4226 = vrcp.pop %v4199
        %v4227 = vrcp.pop %v4201
        %v4228 = vrcp.pop %v4203
        %v4229 = vrcp.pop %v4205
        %v4230 = vrcp.pop %v4207
        %v4231 = vrcp.pop %v4209
        %v4232 = vrcp.pop %v4211
        %v4233 = vrcp.pop %v4213
        %v4234 = vrcp.pop %v4215
        %v4235 = vrcp.pop %v4217
        %v4236 = vrcp.pop %v4219
        %v4237 = vrcp.pop %v4221
        %v4238 = vmul.f32 %v4159, %v4222
        %v4239 = vmul.f32 %v4161, %v4223
        %v4240 = vmul.f32 %v4163, %v4224
        %v4241 = vmul.f32 %v4165, %v4225
        %v4242 = vmul.f32 %v4167, %v4226
        %v4243 = vmul.f32 %v4169, %v4227
        %v4244 = vmul.f32 %v4171, %v4228
        %v4245 = vmul.f32 %v4173, %v4229
        %v4246 = vmul.f32 %v4175, %v4230
        %v4247 = vmul.f32 %v4177, %v4231
        %v4248 = vmul.f32 %v4179, %v4232
        %v4249 = vmul.f32 %v4181, %v4233
        %v4250 = vmul.f32 %v4183, %v4234
        %v4251 = vmul.f32 %v4185, %v4235
        %v4252 = vmul.f32 %v4187, %v4236
        %v4253 = vmul.f32 %v4189, %v4237
        %v4254 = vpack.c.bf16 %v4239, %v4238
        %v4255 = vpack.c.bf16 %v4241, %v4240
        %v4256 = vpack.c.bf16 %v4243, %v4242
        %v4257 = vpack.c.bf16 %v4245, %v4244
        %v4258 = vpack.c.bf16 %v4247, %v4246
        %v4259 = vpack.c.bf16 %v4249, %v4248
        %v4260 = vpack.c.bf16 %v4251, %v4250
        %v4261 = vpack.c.bf16 %v4253, %v4252
        %v4262 = vld [vmem:[#allocation3] sm:$0xff]
        %v4263 = vld [vmem:[#allocation3 + $0x8] sm:$0xff]
        %v4264 = vld [vmem:[#allocation3 + $0x10] sm:$0xff]
        %v4265 = vld [vmem:[#allocation3 + $0x18] sm:$0xff]
        %v4266 = vld [vmem:[#allocation3 + $0x20] sm:$0xff]
        %v4267 = vld [vmem:[#allocation3 + $0x28] sm:$0xff]
        %v4268 = vld [vmem:[#allocation3 + $0x30] sm:$0xff]
        %v4269 = vld [vmem:[#allocation3 + $0x38] sm:$0xff]
        %v4270 = vld [vmem:[#allocation3 + $0x40] sm:$0xff]
        %v4271 = vld [vmem:[#allocation3 + $0x48] sm:$0xff]
        %v4272 = vld [vmem:[#allocation3 + $0x50] sm:$0xff]
        %v4273 = vld [vmem:[#allocation3 + $0x58] sm:$0xff]
        %v4274 = vld [vmem:[#allocation3 + $0x60] sm:$0xff]
        %v4275 = vld [vmem:[#allocation3 + $0x68] sm:$0xff]
        %v4276 = vld [vmem:[#allocation3 + $0x70] sm:$0xff]
        %v4277 = vld [vmem:[#allocation3 + $0x78] sm:$0xff]
        %4278 = vmatprep.subr.bf16.mxu0 %v4263
        %4279 = vmatpush1.bf16.msra.mxu0 %v4262
        %4280 = vmatprep.subr.bf16.mxu0 %v4265
        %4281 = vmatpush1.bf16.msra.mxu0 %v4264
        %4282 = vmatprep.subr.bf16.mxu0 %v4267
        %4283 = vmatpush1.bf16.msra.mxu0 %v4266
        %4284 = vmatprep.subr.bf16.mxu0 %v4269
        %4285 = vmatpush1.bf16.msra.mxu0 %v4268
        %4286 = vmatprep.subr.bf16.mxu0 %v4271
        %4287 = vmatpush1.bf16.msra.mxu0 %v4270
        %4288 = vmatprep.subr.bf16.mxu0 %v4273
        %4289 = vmatpush1.bf16.msra.mxu0 %v4272
        %4290 = vmatprep.subr.bf16.mxu0 %v4275
        %4291 = vmatpush1.bf16.msra.mxu0 %v4274
        %4292 = vmatprep.subr.bf16.mxu0 %v4277
        %4293 = vmatpush1.bf16.msra.mxu0 %v4276
        %4294 = vmatprep.subr.bf16.mxu0 0
        %4295 = vmatpush1.bf16.msra.mxu0 0
        %4296 = vmatprep.subr.bf16.mxu0 0
        %4297 = vmatpush1.bf16.msra.mxu0 0
        %4298 = vmatprep.subr.bf16.mxu0 0
        %4299 = vmatpush1.bf16.msra.mxu0 0
        %4300 = vmatprep.subr.bf16.mxu0 0
        %4301 = vmatpush1.bf16.msra.mxu0 0
        %4302 = vmatprep.subr.bf16.mxu0 0
        %4303 = vmatpush1.bf16.msra.mxu0 0
        %4304 = vmatprep.subr.bf16.mxu0 0
        %4305 = vmatpush1.bf16.msra.mxu0 0
        %4306 = vmatprep.subr.bf16.mxu0 0
        %4307 = vmatpush1.bf16.msra.mxu0 0
        %4308 = vmatprep.subr.bf16.mxu0 0
        %4309 = vmatpush1.bf16.msra.mxu0 0
        %4310 = vmatprep.mubr.bf16.mxu0 0
        %4311 = vmatmul.mubr.bf16.gmra.mrb[0].mxu0 %v4254
        %v4312 = vpop.f32.mrb[0].mxu0
        %v4313 = vadd.f32 0.0, %v4312
        %v4314 = vpop.f32.mrb[0].mxu0
        %v4315 = vadd.f32 0.0, %v4314
        %v4316 = vpop.f32.mrb[0].mxu0
        %v4317 = vadd.f32 0.0, %v4316
        %v4318 = vpop.f32.mrb[0].mxu0
        %v4319 = vadd.f32 0.0, %v4318
        %4320 = vmatprep.mubr.bf16.mxu0 0
        %4321 = vmatmul.mubr.bf16.gmra.mrb[0].mxu0 %v4255
        %v4322 = vpop.f32.mrb[0].mxu0
        %v4323 = vadd.f32 0.0, %v4322
        %v4324 = vpop.f32.mrb[0].mxu0
        %v4325 = vadd.f32 0.0, %v4324
        %v4326 = vpop.f32.mrb[0].mxu0
        %v4327 = vadd.f32 0.0, %v4326
        %v4328 = vpop.f32.mrb[0].mxu0
        %v4329 = vadd.f32 0.0, %v4328
        %4330 = vmatprep.mubr.bf16.mxu0 0
        %4331 = vmatmul.mubr.bf16.gmra.mrb[0].mxu0 %v4256
        %v4332 = vpop.f32.mrb[0].mxu0
        %v4333 = vadd.f32 0.0, %v4332
        %v4334 = vpop.f32.mrb[0].mxu0
        %v4335 = vadd.f32 0.0, %v4334
        %v4336 = vpop.f32.mrb[0].mxu0
        %v4337 = vadd.f32 0.0, %v4336
        %v4338 = vpop.f32.mrb[0].mxu0
        %v4339 = vadd.f32 0.0, %v4338
        %4340 = vmatprep.mubr.bf16.mxu0 0
        %4341 = vmatmul.mubr.bf16.gmra.mrb[0].mxu0 %v4257
        %v4342 = vpop.f32.mrb[0].mxu0
        %v4343 = vadd.f32 0.0, %v4342
        %v4344 = vpop.f32.mrb[0].mxu0
        %v4345 = vadd.f32 0.0, %v4344
        %v4346 = vpop.f32.mrb[0].mxu0
        %v4347 = vadd.f32 0.0, %v4346
        %v4348 = vpop.f32.mrb[0].mxu0
        %v4349 = vadd.f32 0.0, %v4348
        %4350 = vmatprep.mubr.bf16.mxu0 0
        %4351 = vmatmul.mubr.bf16.gmra.mrb[0].mxu0 %v4258
        %v4352 = vpop.f32.mrb[0].mxu0
        %v4353 = vadd.f32 0.0, %v4352
        %v4354 = vpop.f32.mrb[0].mxu0
        %v4355 = vadd.f32 0.0, %v4354
        %v4356 = vpop.f32.mrb[0].mxu0
        %v4357 = vadd.f32 0.0, %v4356
        %v4358 = vpop.f32.mrb[0].mxu0
        %v4359 = vadd.f32 0.0, %v4358
        %4360 = vmatprep.mubr.bf16.mxu0 0
        %4361 = vmatmul.mubr.bf16.gmra.mrb[0].mxu0 %v4259
        %v4362 = vpop.f32.mrb[0].mxu0
        %v4363 = vadd.f32 0.0, %v4362
        %v4364 = vpop.f32.mrb[0].mxu0
        %v4365 = vadd.f32 0.0, %v4364
        %v4366 = vpop.f32.mrb[0].mxu0
        %v4367 = vadd.f32 0.0, %v4366
        %v4368 = vpop.f32.mrb[0].mxu0
        %v4369 = vadd.f32 0.0, %v4368
        %4370 = vmatprep.mubr.bf16.mxu0 0
        %4371 = vmatmul.mubr.bf16.gmra.mrb[0].mxu0 %v4260
        %v4372 = vpop.f32.mrb[0].mxu0
        %v4373 = vadd.f32 0.0, %v4372
        %v4374 = vpop.f32.mrb[0].mxu0
        %v4375 = vadd.f32 0.0, %v4374
        %v4376 = vpop.f32.mrb[0].mxu0
        %v4377 = vadd.f32 0.0, %v4376
        %v4378 = vpop.f32.mrb[0].mxu0
        %v4379 = vadd.f32 0.0, %v4378
        %4380 = vmatprep.mubr.bf16.mxu0 0
        %4381 = vmatmul.mubr.bf16.gmra.mrb[0].mxu0 %v4261
        %v4382 = vpop.f32.mrb[0].mxu0
        %v4383 = vadd.f32 0.0, %v4382
        %v4384 = vpop.f32.mrb[0].mxu0
        %v4385 = vadd.f32 0.0, %v4384
        %v4386 = vpop.f32.mrb[0].mxu0
        %v4387 = vadd.f32 0.0, %v4386
        %v4388 = vpop.f32.mrb[0].mxu0
        %v4389 = vadd.f32 0.0, %v4388
        %4390 = vdwg.mxu0
        %4391 = vst [vmem:[%s424] sm:$0xff] %v4313
        %4392 = vst [vmem:[%s424 + $0x8] sm:$0xff] %v4315
        %4393 = vst [vmem:[%s424 + $0x10] sm:$0xff] %v4317
        %4394 = vst [vmem:[%s424 + $0x18] sm:$0xff] %v4319
        %4395 = vst [vmem:[%s424 + $0x20] sm:$0xff] %v4323
        %4396 = vst [vmem:[%s424 + $0x28] sm:$0xff] %v4325
        %4397 = vst [vmem:[%s424 + $0x30] sm:$0xff] %v4327
        %4398 = vst [vmem:[%s424 + $0x38] sm:$0xff] %v4329
        %4399 = vst [vmem:[%s424 + $0x40] sm:$0xff] %v4333
        %4400 = vst [vmem:[%s424 + $0x48] sm:$0xff] %v4335
        %4401 = vst [vmem:[%s424 + $0x50] sm:$0xff] %v4337
        %4402 = vst [vmem:[%s424 + $0x58] sm:$0xff] %v4339
        %4403 = vst [vmem:[%s424 + $0x60] sm:$0xff] %v4343
        %4404 = vst [vmem:[%s424 + $0x68] sm:$0xff] %v4345
        %4405 = vst [vmem:[%s424 + $0x70] sm:$0xff] %v4347
        %4406 = vst [vmem:[%s424 + $0x78] sm:$0xff] %v4349
        %4407 = vst [vmem:[%s424 + $0x80] sm:$0xff] %v4353
        %4408 = vst [vmem:[%s424 + $0x88] sm:$0xff] %v4355
        %4409 = vst [vmem:[%s424 + $0x90] sm:$0xff] %v4357
        %4410 = vst [vmem:[%s424 + $0x98] sm:$0xff] %v4359
        %4411 = vst [vmem:[%s424 + $0xa0] sm:$0xff] %v4363
        %4412 = vst [vmem:[%s424 + $0xa8] sm:$0xff] %v4365
        %4413 = vst [vmem:[%s424 + $0xb0] sm:$0xff] %v4367
        %4414 = vst [vmem:[%s424 + $0xb8] sm:$0xff] %v4369
        %4415 = vst [vmem:[%s424 + $0xc0] sm:$0xff] %v4373
        %4416 = vst [vmem:[%s424 + $0xc8] sm:$0xff] %v4375
        %4417 = vst [vmem:[%s424 + $0xd0] sm:$0xff] %v4377
        %4418 = vst [vmem:[%s424 + $0xd8] sm:$0xff] %v4379
        %4419 = vst [vmem:[%s424 + $0xe0] sm:$0xff] %v4383
        %4420 = vst [vmem:[%s424 + $0xe8] sm:$0xff] %v4385
        %4421 = vst [vmem:[%s424 + $0xf0] sm:$0xff] %v4387
        %4422 = vst [vmem:[%s424 + $0xf8] sm:$0xff] %v4389
        %s4423 = sand.u32 %s206, 1
        %s4424 = scalar_lea.sflag [#allocation7], %s4423
        %s4425 = sand.u32 %s206, 1
        %s4426 = smul.addr %s4425, 256
        %s4427 = scalar_lea.vmem [#allocation17], %s4426
        %s4428 = sand.u32 %s234, 1
        %s4429 = scalar_lea.sflag [#allocation19], %s4428
        %s4430 = sand.u32 %s234, 1
        %s4431 = smul.addr %s4430, 128
        %s4432 = scalar_lea.vmem [#allocation18], %s4431
        // Predicated region
        $region81: #{global_context_layer.1} parent=47 // pred_check
          %p4433 = pneg %p216
        $region82: #{global_context_layer.1} parent=47 // pred_check_branch
          %4435 = sbr.rel (%p4433) target = $region84
        $region83: #{global_context_layer.1} parent=47 // pred_region
          %s4436 = smul.u32 16, %s37
          %s4438 = ssub.s32 4096, 4096
          %4439 = vsyncadd %s4424, %s4438
          %s4440 = smul.addr %s4436, 2
          %s4441 = smul.addr %s36, 32
          %s4442 = sadd.s32 %s4440, %s4441
          %s4443 = smul.addr %s4442, 128
          %s4444 = scalar_lea.hbm %s7, %s4443
          %s4445 = sshll.u32 %s4427, 4
          %s4446 = int_to_ptr.vmem [resolvable:$true] %s4445
          %4451 = dma.vmem_to_hbm [thread:$0]  %s4446, 4096, %s4444, %s4424, 256, 256, 16
        $region84: #{global_context_layer.1} parent=47 // pred_fallthru
          _
        // Predicated region
        $region85: #{global_context_layer.1} parent=47 // pred_check
          %p4452 = pneg %p244
        $region86: #{global_context_layer.1} parent=47 // pred_check_branch
          %4454 = sbr.rel (%p4452) target = $region88
        $region87: #{global_context_layer.1} parent=47 // pred_region
          %s4455 = smul.u32 16, %s37
          %s4457 = ssub.s32 2048, 2048
          %4458 = vsyncadd %s4429, %s4457
          %s4459 = smul.addr %s36, 16
          %s4460 = sadd.s32 %s4455, %s4459
          %s4461 = smul.addr %s4460, 128
          %s4462 = scalar_lea.hbm %s8, %s4461
          %s4463 = sshll.u32 %s4432, 4
          %s4464 = int_to_ptr.vmem [resolvable:$true] %s4463
          %4469 = dma.vmem_to_hbm [thread:$0]  %s4464, 2048, %s4462, %s4429, 128, 128, 8
        $region88: #{global_context_layer.1} parent=47 // pred_fallthru
          _
      $region48: #{global_context_layer.1} parent=5 // pred_fallthru
        _
      %p4470 = scmp.le.s32.totalorder 2, %s27
      // Predicated region
      $region89: #{global_context_layer.1} parent=5 // pred_check
        %p4471 = pneg %p4470
      $region90: #{global_context_layer.1} parent=5 // pred_check_branch
        %4473 = sbr.rel (%p4471) target = $region92
      $region91: #{global_context_layer.1} parent=5 // pred_region
        %s4474 = ssub.s32 %s27, 2
        // Predicated region
        $region93: #{global_context_layer.1} parent=91 // pred_check
          %p4475 = pneg %p222
        $region94: #{global_context_layer.1} parent=91 // pred_check_branch
          %4477 = sbr.rel (%p4475) target = $region96
        $region95: #{global_context_layer.1} parent=91 // pred_region
          %s4478 = sand.u32 %s207, 1
          %s4479 = scalar_lea.sflag [#allocation7], %s4478
          %s4480 = sand.u32 %s207, 1
          %s4481 = smul.addr %s4480, 256
          %s4482 = scalar_lea.vmem [#allocation17], %s4481
          %4483 = dma.done %s4479, 4096
        $region96: #{global_context_layer.1} parent=91 // pred_fallthru
          _
        // Predicated region
        $region97: #{global_context_layer.1} parent=91 // pred_check
          %p4484 = pneg %p250
        $region98: #{global_context_layer.1} parent=91 // pred_check_branch
          %4486 = sbr.rel (%p4484) target = $region100
        $region99: #{global_context_layer.1} parent=91 // pred_region
          %s4487 = sand.u32 %s235, 1
          %s4488 = scalar_lea.sflag [#allocation19], %s4487
          %s4489 = sand.u32 %s235, 1
          %s4490 = smul.addr %s4489, 128
          %s4491 = scalar_lea.vmem [#allocation18], %s4490
          %4492 = dma.done %s4488, 2048
        $region100: #{global_context_layer.1} parent=91 // pred_fallthru
          _
      $region92: #{global_context_layer.1} parent=5 // pred_fallthru
        _
    $region6: #{global_context_layer.1} parent=1 // loop_footer
      %s31 = sadd.s32 1, %s27
    $region7: #{global_context_layer.1} parent=1 // loop_footer_branch
      %26 = sbr.rel target = $region3
    $region8: #{global_context_layer.1} parent=1 // loop_exit
      _
    %4493 = vsyncpa [#allocation6], 1
    %s4494 = scalar_lea.sflag [#allocation6], 1
    %4495 = vsyncpa %s4494, 1
    %4496 = vsyncpa [#allocation9], 1
    %4497 = vsyncpa [#allocation12], 1
    %4498 = vsyncpa [#allocation15], 1
    %4499 = vsyncpa [#allocation7], 1
    %s4500 = scalar_lea.sflag [#allocation7], 1
    %4501 = vsyncpa %s4500, 1
    %4502 = vsyncpa [#allocation19], 1
    %s4503 = scalar_lea.sflag [#allocation19], 1
    %4504 = vsyncpa %s4503, 1

</llo_original>
